<compile_context>
chip_gen: v7x
topology: tpu7x:2x2x1
jax: 0.10.0
libtpu: 0.0.40
codegen_flags: <defaults>
</compile_context>

<pallas_src>
import functools

import numpy as np
import jax
import jax.numpy as jnp
from jax.experimental import pallas as pl
from jax.experimental.pallas import tpu as pltpu


def _round_up(x, m):
    return ((x + m - 1) // m) * m


# ----------------------------------------------------------------------------
# Pallas kernel: fused im2col conv (phase-split input, per-tap MXU accumulation)
# ----------------------------------------------------------------------------
def _conv_kernel(ph_ref, w_ref, b_ref, o_ref, *, taps, Ho, Wo, relu):
    """One image per grid step.

    ph_ref: (S*S, Hph, Wph, Cin_p) bf16  phase-split, zero-padded activation
    w_ref : (kh*kw, Cin_p, Cp)     bf16  per-tap weight slabs (Cp lane-dense = 128k)
    b_ref : (1, Cp)                f32   bias
    o_ref : (1, Ho*Wo, Cp)               lane-dense output block
    """
    M = Ho * Wo
    cp = o_ref.shape[-1]
    nphase = ph_ref.shape[0]
    # Load each phase once.  Slice / collapse bookkeeping is done in f32 so the
    # (Ho, Wo, C) -> (Ho*Wo, C) collapse is layout-preserving (Wo % 8 == 0 here);
    # operands are cast back to bf16 right at the MXU (same numerics as storing
    # bf16 activations directly).
    phases = [ph_ref[s].astype(jnp.float32) for s in range(nphase)]
    acc = jnp.zeros((M, cp), jnp.float32)
    for t, (s, oi, oj) in enumerate(taps):
        sl = phases[s][oi:oi + Ho, oj:oj + Wo, :]            # (Ho, Wo, Cin_p), unit-stride
        lhs = sl.reshape(M, sl.shape[-1]).astype(jnp.bfloat16)
        acc = acc + jnp.dot(lhs, w_ref[t], preferred_element_type=jnp.float32)
    acc = acc + b_ref[...]
    if relu:
        acc = jnp.maximum(acc, 0.0)
    o_ref[0] = acc.astype(o_ref.dtype)


# ----------------------------------------------------------------------------
# Pallas kernel: full pairwise IoU for one image in a single grid step
# ----------------------------------------------------------------------------
def _iou_kernel(rows_ref, cols_ref, iou_ref, *, n_valid):
    """rows_ref: (1, 8, Np) f32 planar coords as rows (x1,y1,x2,y2 in sublanes 0..3)
    cols_ref: (1, Np, 8) f32 same data, transposed (coords as single-lane columns)
    iou_ref : (1, Np, Np) f32; padded rows/cols are masked to 0 in-kernel.
    """
    rows = rows_ref[0]                      # (8, Np)
    cols = cols_ref[0]                      # (Np, 8)
    x1r, y1r, x2r, y2r = rows[0:1, :], rows[1:2, :], rows[2:3, :], rows[3:4, :]   # (1, Np)
    x1c, y1c, x2c, y2c = cols[:, 0:1], cols[:, 1:2], cols[:, 2:3], cols[:, 3:4]   # (Np, 1)
    area_r = (x2r - x1r + 0.01) * (y2r - y1r + 0.01)
    area_c = (x2c - x1c + 0.01) * (y2c - y1c + 0.01)
    # standard intersection (min for the far corner), as in the previously
    # validated version of this kernel
    xx1 = jnp.maximum(x1c, x1r)
    yy1 = jnp.maximum(y1c, y1r)
    xx2 = jnp.minimum(x2c, x2r)
    yy2 = jnp.minimum(y2c, y2r)
    w = jnp.maximum(0.0, xx2 - xx1 + 0.01)
    h = jnp.maximum(0.0, yy2 - yy1 + 0.01)
    inter = w * h
    # exact divide (keep-set parity with the reference; no approx reciprocal)
    iou = inter / (area_c + area_r - inter)
    npad = iou_ref.shape[-1]
    col_i = jax.lax.broadcasted_iota(jnp.int32, (npad, npad), 1)
    row_i = jax.lax.broadcasted_iota(jnp.int32, (npad, npad), 0)
    valid = (col_i < n_valid) & (row_i < n_valid)
    iou_ref[0] = jnp.where(valid, iou, 0.0)


# ----------------------------------------------------------------------------
# Conv layer wrapper: host-side phase split (no expansion) + Pallas kernel
# ----------------------------------------------------------------------------
def _prep_conv(w_oihw, bias, *, stride, pad, relu):
    """(Cout,Cin,kh,kw) torch-layout weight -> per-tap (kh*kw, Cin_p, Cp) bf16 + (1,Cp) f32 bias."""
    cout, cin, kh, kw = w_oihw.shape
    cin_p = _round_up(cin, 16)          # bf16 sublane pack only; NOT padded to 128 (K dim)
    cp = _round_up(cout, 128)           # lane-dense outputs
    w = jnp.transpose(w_oihw, (2, 3, 1, 0))                              # (kh,kw,cin,cout)
    w = jnp.pad(w, ((0, 0), (0, 0), (0, cin_p - cin), (0, cp - cout)))
    w = w.reshape(kh * kw, cin_p, cp).astype(jnp.bfloat16)
    b = jnp.pad(bias.astype(jnp.float32), (0, cp - cout)).reshape(1, cp)
    return dict(w=w, b=b, kh=kh, kw=kw, cin=cin, cin_p=cin_p, cout=cout, cp=cp,
                stride=stride, pad=pad, relu=relu)


def conv2d_pallas(x_nhwc, layer, *, out_dtype=jnp.bfloat16):
    """x: (B,H,W,Cin); layer: dict from _prep_conv.  Returns (B,Ho,Wo,Cout)."""
    kh, kw = layer["kh"], layer["kw"]
    stride, pad = layer["stride"], layer["pad"]
    cin, cin_p, cout, cp = layer["cin"], layer["cin_p"], layer["cout"], layer["cp"]
    B, H, W, C = x_nhwc.shape
    assert C == cin, (C, cin)
    Ho = (H + 2 * pad - kh) // stride + 1
    Wo = (W + 2 * pad - kw) // stride + 1
    S = stride
    S2 = S * S

    # Phase-split the zero-padded input so every in-kernel tap read is a
    # unit-stride slice (no strided access, no 9x im2col expansion in HBM).
    Hph = max(-(-(H + 2 * pad) // S), (kh - 1) // S + Ho)
    Wph = max(-(-(W + 2 * pad) // S), (kw - 1) // S + Wo)
    xp = jnp.pad(x_nhwc.astype(jnp.bfloat16),
                 ((0, 0), (pad, Hph * S - H - pad), (pad, Wph * S - W - pad),
                  (0, cin_p - cin)))
    if S == 1:
        phases = xp                                                       # (B, Hph, Wph, Cin_p)
    else:
        phases = xp.reshape(B, Hph, S, Wph, S, cin_p)
        phases = phases.transpose(0, 2, 4, 1, 3, 5).reshape(B * S2, Hph, Wph, cin_p)

    # tap (di,dj) -> (phase index, row offset, col offset); order matches weight packing
    taps = tuple(((di % S) * S + (dj % S), di // S, dj // S)
                 for di in range(kh) for dj in range(kw))

    M = Ho * Wo
    kernel = functools.partial(_conv_kernel, taps=taps, Ho=Ho, Wo=Wo, relu=layer["relu"])

    # One image per grid step: M = Ho*Wo <= 256 here so no row split (review: don't
    # split below 256 rows); the batch axis is "parallel" so it shards across v7x's
    # two TensorCores, and is only 2 cheap steps on single-TC v5e/v6e.
    # TODO(synk): at real image sizes / ResNet-50 channel counts add row- and K-tiling
    # grid axes with an f32 accumulator scratch and set vmem_limit_bytes (v7x: 64 MiB VMEM).
    out = pl.pallas_call(
        kernel,
        out_shape=jax.ShapeDtypeStruct((B, M, cp), out_dtype),
        grid=(B,),
        in_specs=[
            pl.BlockSpec((S2, Hph, Wph, cin_p), lambda b: (b, 0, 0, 0)),
            pl.BlockSpec((kh * kw, cin_p, cp), lambda b: (0, 0, 0)),
            pl.BlockSpec((1, cp), lambda b: (0, 0)),
        ],
        out_specs=pl.BlockSpec((1, M, cp), lambda b: (b, 0, 0)),
        compiler_params=pltpu.CompilerParams(dimension_semantics=("parallel",)),
    )(phases, layer["w"], layer["b"])

    # zero-padded output channels sliced off here (fuses into consumers under jit)
    return out[:, :, :cout].reshape(B, Ho, Wo, cout)


# ----------------------------------------------------------------------------
# IoU (batched, one grid step per image) + device-side greedy NMS keep mask
# ----------------------------------------------------------------------------
def pairwise_iou_batched(boxes, n_valid):
    """boxes: (B, N, 4) f32 -> (B, Np, Np) IoU (padded region zeroed in-kernel)."""
    boxes = boxes.astype(jnp.float32)
    B, N, _ = boxes.shape
    Np = _round_up(max(N, 128), 128)
    cols = jnp.pad(boxes, ((0, 0), (0, Np - N), (0, 4)))      # (B, Np, 8) planar columns
    rows = jnp.transpose(cols, (0, 2, 1))                     # (B, 8, Np) planar rows
    return pl.pallas_call(
        functools.partial(_iou_kernel, n_valid=n_valid),
        out_shape=jax.ShapeDtypeStruct((B, Np, Np), jnp.float32),
        grid=(B,),
        in_specs=[pl.BlockSpec((1, 8, Np), lambda b: (b, 0, 0)),
                  pl.BlockSpec((1, Np, 8), lambda b: (b, 0, 0))],
        out_specs=pl.BlockSpec((1, Np, Np), lambda b: (b, 0, 0)),
        compiler_params=pltpu.CompilerParams(dimension_semantics=("parallel",)),
    )(rows, cols)


def pairwise_iou_pallas(boxes):
    """boxes: (N,4) -> (N,N) IoU matrix (single-image convenience wrapper)."""
    N = int(boxes.shape[0])
    iou = pairwise_iou_batched(jnp.asarray(boxes, dtype=jnp.float32)[None], N)
    return iou[0, :N, :N]


def _nms_keep_mask_device(iou_padded, n_valid, threshold):
    """Greedy NMS keep mask over score-sorted boxes, fully on device (batched over B).

    Equivalent to the reference greedy loop when boxes are pre-sorted by descending
    score.  Only the (B, n_valid) bool mask ever leaves the device.
    """
    # TODO(synk): this runs as an XLA fori_loop inside the jit; a dedicated Pallas
    # suppression kernel could shave the remaining per-iteration while-loop overhead.
    B, npad, _ = iou_padded.shape
    col_idx = jnp.arange(npad, dtype=jnp.int32)

    def body(i, keep):
        row = jax.lax.dynamic_slice_in_dim(iou_padded, i, 1, axis=1)[:, 0, :]   # (B, Np)
        k_i = jax.lax.dynamic_slice_in_dim(keep, i, 1, axis=1)                  # (B, 1)
        sup = (row > threshold) & (col_idx[None, :] > i) & k_i
        return keep & jnp.logical_not(sup)

    keep = jax.lax.fori_loop(0, n_valid, body, jnp.ones((B, npad), dtype=jnp.bool_))
    return keep[:, :n_valid]


def _make_anchors(Ho, Wo, stride, sizes=(4.0, 8.0, 12.0)):
    ys = (jnp.arange(Ho, dtype=jnp.float32) + 0.5) * stride
    xs = (jnp.arange(Wo, dtype=jnp.float32) + 0.5) * stride
    cy, cx = jnp.meshgrid(ys, xs, indexing="ij")
    centers = jnp.stack([cx, cy, cx, cy], axis=-1).reshape(-1, 1, 4)    # (HW,1,4)
    half = jnp.asarray(sizes, jnp.float32).reshape(1, -1, 1) / 2.0      # (1,A,1)
    offs = jnp.concatenate([-half, -half, half, half], axis=-1)         # (1,A,4)
    return (centers + offs).reshape(-1, 4)                              # (HW*A,4)


# ----------------------------------------------------------------------------
# Detection model (synthetic, deterministic weights)
# ----------------------------------------------------------------------------
class DetectionPallas:
    # TODO(synk): full torchvision fasterrcnn_resnet50_fpn (pretrained ResNet-50,
    # FPN, RoIAlign, proposal sampling) has no small self-contained equivalent;
    # a compact conv backbone + RPN-style heads stands in for it here.
    def __init__(self, num_classes=8, num_anchors=3, key=jax.random.PRNGKey(0),
                 pre_nms_topk=1024, nms_threshold=0.5):
        self.num_classes = num_classes
        self.A = num_anchors
        self.pre_nms_topk = pre_nms_topk
        self.nms_threshold = nms_threshold
        ks = jax.random.split(key, 12)

        def w(k, shape, scale=0.05):
            return scale * jax.random.normal(k, shape, dtype=jnp.float32)

        A, C = num_anchors, num_classes
        # stem conv 3x3, 3->16
        w1, b1 = w(ks[0], (16, 3, 3, 3)), w(ks[1], (16,))
        # downsample conv 3x3 stride 2, 16->32
        w2, b2 = w(ks[2], (32, 16, 3, 3)), w(ks[3], (32,))
        # RPN head conv 3x3, 32->32
        wr, br = w(ks[4], (32, 32, 3, 3)), w(ks[5], (32,))
        # objectness 1x1 (32->A), box regression 1x1 (32->4A), classification 1x1 (32->A*C)
        wo, bo = w(ks[6], (A, 32, 1, 1)), w(ks[7], (A,))
        wb, bb = w(ks[8], (4 * A, 32, 1, 1)), w(ks[9], (4 * A,))
        wc, bc = w(ks[10], (A * C, 32, 1, 1)), w(ks[11], (A * C,))

        # Weights pre-packed ONCE as per-tap (kh*kw, Cin_p, Cp) bf16 slabs; the three
        # 1x1 heads are fused along Cout so the head pass is a single matmul.
        self.l1 = _prep_conv(w1, b1, stride=1, pad=1, relu=True)
        self.l2 = _prep_conv(w2, b2, stride=2, pad=1, relu=True)
        self.lr = _prep_conv(wr, br, stride=1, pad=1, relu=True)
        self.lhead = _prep_conv(jnp.concatenate([wo, wb, wc], axis=0),
                                jnp.concatenate([bo, bb, bc], axis=0),
                                stride=1, pad=0, relu=False)

        # whole device-side forward under one jit (convs, heads, top_k, IoU, NMS mask)
        self._forward = jax.jit(self._build_forward())

    def _build_forward(self):
        l1, l2, lr, lhead = self.l1, self.l2, self.lr, self.lhead
        A, C = self.A, self.num_classes
        topk, thr = self.pre_nms_topk, self.nms_threshold

        def fwd(X_nchw):
            B, _, H, W = X_nchw.shape
            x = jnp.transpose(X_nchw, (0, 2, 3, 1)).astype(jnp.float32)      # -> NHWC

            f1 = conv2d_pallas(x, l1)                          # (B,H,W,16)     bf16
            f2 = conv2d_pallas(f1, l2)                         # (B,H/2,W/2,32) bf16
            h = conv2d_pallas(f2, lr)                          # (B,H/2,W/2,32) bf16
            heads = conv2d_pallas(h, lhead, out_dtype=jnp.float32)   # (B,h,w,5A+AC) f32

            Ho, Wo = h.shape[1], h.shape[2]
            obj = heads[..., :A]
            reg = heads[..., A:5 * A]
            cls = heads[..., 5 * A:5 * A + A * C]

            anchors = _make_anchors(Ho, Wo, stride=float(H) / Ho)            # (Ho*Wo*A,4)
            scores_all = jax.nn.sigmoid(obj.reshape(B, Ho * Wo * A))
            deltas_all = reg.reshape(B, Ho * Wo * A, 4)
            labels_all = jnp.argmax(cls.reshape(B, Ho * Wo * A, C), axis=-1)
            boxes_all = jnp.clip(anchors[None] + deltas_all, 0.0, float(max(H, W)))

            # device-side, score-sorted top-k prefilter; at these shapes k == N so
            # reference semantics are preserved exactly.
            k = min(Ho * Wo * A, topk)
            top_scores, top_idx = jax.lax.top_k(scores_all, k)               # descending
            boxes_s = jnp.take_along_axis(boxes_all, top_idx[..., None], axis=1)
            labels_s = jnp.take_along_axis(labels_all, top_idx, axis=1)

            iou = pairwise_iou_batched(boxes_s, k)                           # (B,Np,Np)
            keep = _nms_keep_mask_device(iou, k, thr)                        # (B,k) bool
            return boxes_s, top_scores, labels_s, keep

        return fwd

    def nms_postprocess(self, bboxs, scores, threshold=0.5):
        """Greedy NMS (host loop mirroring the reference); IoU from the Pallas kernel."""
        iou = np.asarray(pairwise_iou_pallas(jnp.asarray(bboxs, dtype=jnp.float32)))
        scores = np.asarray(scores)
        order = scores.argsort()[::-1]
        rest = []
        while order.size > 0:
            i = order[0]
            rest.append(i)
            iou_row = iou[i, order[1:]]
            inds = np.where(iou_row <= threshold)[0]
            order = order[inds + 1]
        return np.array(rest)

    def __call__(self, X_nchw):
        """X_nchw: (B,3,H,W) float32 image batch (PyTorch NCHW convention)."""
        boxes, scores, labels, keep = self._forward(jnp.asarray(X_nchw, jnp.float32))
        # Single small D2H transfer (sorted boxes/scores/labels + keep mask); the
        # data-dependent boolean gather has to happen outside jit.
        boxes_h, scores_h, labels_h, keep_h = jax.device_get((boxes, scores, labels, keep))
        outputs = []
        for b in range(boxes_h.shape[0]):
            kb = keep_h[b].astype(bool)
            outputs.append({
                "boxes": jnp.asarray(boxes_h[b][kb]),
                "scores": jnp.asarray(scores_h[b][kb]),
                "labels": jnp.asarray(labels_h[b][kb]),
            })
        return outputs


# ----------------------------------------------------------------------------
if __name__ == "__main__":
    key = jax.random.PRNGKey(0)
    k_img, k_model = jax.random.split(key)
    X = jax.random.normal(k_img, (2, 3, 16, 16), dtype=jnp.float32)  # NCHW, batch=2

    model = DetectionPallas(num_classes=8, num_anchors=3, key=k_model)
    outputs = model(X)

    for det in outputs:
        jax.block_until_ready(det["boxes"])
        jax.block_until_ready(det["scores"])
        jax.block_until_ready(det["labels"])

    print("KERNEL_OK")
</pallas_src>

<mosaic_0001>
module attributes {stable_mosaic.version = 11 : i64} {
  func.func @_conv_kernel(%arg0: i32, %arg1: memref<1x18x18x16xbf16, #tpu.memory_space<vmem>>, %arg2: memref<9x16x128xbf16, #tpu.memory_space<vmem>>, %arg3: memref<1x128xf32, #tpu.memory_space<vmem>>, %arg4: memref<1x256x128xbf16, #tpu.memory_space<vmem>>) attributes {dimension_semantics = [#tpu.dimension_semantics<parallel>], iteration_bounds = array<i64: 2>, scalar_prefetch = 0 : i64, scratch_operands = 0 : i64, tpu.core_type = #tpu.core_type<tc>, window_params = [{transform_indices = @transform_0, window_bounds = array<i64: 1, 18, 18, 16>}, {pipeline_mode = #tpu.pipeline_mode<synchronous>, transform_indices = @transform_1, window_bounds = array<i64: 9, 16, 128>}, {pipeline_mode = #tpu.pipeline_mode<synchronous>, transform_indices = @transform_2, window_bounds = array<i64: 1, 128>}, {transform_indices = @transform_3, window_bounds = array<i64: 1, 256, 128>}]} {
    %c0 = arith.constant 0 : index
    %c0_0 = arith.constant 0 : index
    %c0_1 = arith.constant 0 : index
    %c0_2 = arith.constant 0 : index
    %0 = vector.load %arg1[%c0, %c0_0, %c0_1, %c0_2] : memref<1x18x18x16xbf16, #tpu.memory_space<vmem>>, vector<1x18x18x16xbf16>
    %1 = vector.shape_cast %0 : vector<1x18x18x16xbf16> to vector<18x18x16xbf16>
    %2 = arith.extf %1 : vector<18x18x16xbf16> to vector<18x18x16xf32>
    %cst = arith.constant 0.000000e+00 : f32
    %3 = vector.broadcast %cst : f32 to vector<256x128xf32>
    %4 = vector.extract_strided_slice %2 {offsets = [0, 0, 0], sizes = [16, 16, 16], strides = [1, 1, 1]} : vector<18x18x16xf32> to vector<16x16x16xf32>
    %5 = vector.shape_cast %4 : vector<16x16x16xf32> to vector<256x16xf32>
    %6 = arith.truncf %5 : vector<256x16xf32> to vector<256x16xbf16>
    %c0_3 = arith.constant 0 : index
    %c0_4 = arith.constant 0 : index
    %c0_5 = arith.constant 0 : index
    %7 = vector.load %arg2[%c0_3, %c0_4, %c0_5] : memref<9x16x128xbf16, #tpu.memory_space<vmem>>, vector<1x16x128xbf16>
    %8 = vector.shape_cast %7 : vector<1x16x128xbf16> to vector<16x128xbf16>
    %cst_6 = arith.constant dense<0.000000e+00> : vector<256x128xf32>
    %9 = tpu.matmul %6, %8, %cst_6 {dimension_numbers = #tpu.dot_dimension_numbers<[1], [0], [0], [1], [0, 0, 1, 1], [], []>} : vector<256x16xbf16>, vector<16x128xbf16>, vector<256x128xf32> -> vector<256x128xf32>
    %10 = arith.addf %3, %9 : vector<256x128xf32>
    %11 = vector.extract_strided_slice %2 {offsets = [0, 1, 0], sizes = [16, 16, 16], strides = [1, 1, 1]} : vector<18x18x16xf32> to vector<16x16x16xf32>
    %12 = vector.shape_cast %11 : vector<16x16x16xf32> to vector<256x16xf32>
    %13 = arith.truncf %12 : vector<256x16xf32> to vector<256x16xbf16>
    %c1 = arith.constant 1 : index
    %c0_7 = arith.constant 0 : index
    %c0_8 = arith.constant 0 : index
    %14 = vector.load %arg2[%c1, %c0_7, %c0_8] : memref<9x16x128xbf16, #tpu.memory_space<vmem>>, vector<1x16x128xbf16>
    %15 = vector.shape_cast %14 : vector<1x16x128xbf16> to vector<16x128xbf16>
    %cst_9 = arith.constant dense<0.000000e+00> : vector<256x128xf32>
    %16 = tpu.matmul %13, %15, %cst_9 {dimension_numbers = #tpu.dot_dimension_numbers<[1], [0], [0], [1], [0, 0, 1, 1], [], []>} : vector<256x16xbf16>, vector<16x128xbf16>, vector<256x128xf32> -> vector<256x128xf32>
    %17 = arith.addf %10, %16 : vector<256x128xf32>
    %18 = vector.extract_strided_slice %2 {offsets = [0, 2, 0], sizes = [16, 16, 16], strides = [1, 1, 1]} : vector<18x18x16xf32> to vector<16x16x16xf32>
    %19 = vector.shape_cast %18 : vector<16x16x16xf32> to vector<256x16xf32>
    %20 = arith.truncf %19 : vector<256x16xf32> to vector<256x16xbf16>
    %c2 = arith.constant 2 : index
    %c0_10 = arith.constant 0 : index
    %c0_11 = arith.constant 0 : index
    %21 = vector.load %arg2[%c2, %c0_10, %c0_11] : memref<9x16x128xbf16, #tpu.memory_space<vmem>>, vector<1x16x128xbf16>
    %22 = vector.shape_cast %21 : vector<1x16x128xbf16> to vector<16x128xbf16>
    %cst_12 = arith.constant dense<0.000000e+00> : vector<256x128xf32>
    %23 = tpu.matmul %20, %22, %cst_12 {dimension_numbers = #tpu.dot_dimension_numbers<[1], [0], [0], [1], [0, 0, 1, 1], [], []>} : vector<256x16xbf16>, vector<16x128xbf16>, vector<256x128xf32> -> vector<256x128xf32>
    %24 = arith.addf %17, %23 : vector<256x128xf32>
    %25 = vector.extract_strided_slice %2 {offsets = [1, 0, 0], sizes = [16, 16, 16], strides = [1, 1, 1]} : vector<18x18x16xf32> to vector<16x16x16xf32>
    %26 = vector.shape_cast %25 : vector<16x16x16xf32> to vector<256x16xf32>
    %27 = arith.truncf %26 : vector<256x16xf32> to vector<256x16xbf16>
    %c3 = arith.constant 3 : index
    %c0_13 = arith.constant 0 : index
    %c0_14 = arith.constant 0 : index
    %28 = vector.load %arg2[%c3, %c0_13, %c0_14] : memref<9x16x128xbf16, #tpu.memory_space<vmem>>, vector<1x16x128xbf16>
    %29 = vector.shape_cast %28 : vector<1x16x128xbf16> to vector<16x128xbf16>
    %cst_15 = arith.constant dense<0.000000e+00> : vector<256x128xf32>
    %30 = tpu.matmul %27, %29, %cst_15 {dimension_numbers = #tpu.dot_dimension_numbers<[1], [0], [0], [1], [0, 0, 1, 1], [], []>} : vector<256x16xbf16>, vector<16x128xbf16>, vector<256x128xf32> -> vector<256x128xf32>
    %31 = arith.addf %24, %30 : vector<256x128xf32>
    %32 = vector.extract_strided_slice %2 {offsets = [1, 1, 0], sizes = [16, 16, 16], strides = [1, 1, 1]} : vector<18x18x16xf32> to vector<16x16x16xf32>
    %33 = vector.shape_cast %32 : vector<16x16x16xf32> to vector<256x16xf32>
    %34 = arith.truncf %33 : vector<256x16xf32> to vector<256x16xbf16>
    %c4 = arith.constant 4 : index
    %c0_16 = arith.constant 0 : index
    %c0_17 = arith.constant 0 : index
    %35 = vector.load %arg2[%c4, %c0_16, %c0_17] : memref<9x16x128xbf16, #tpu.memory_space<vmem>>, vector<1x16x128xbf16>
    %36 = vector.shape_cast %35 : vector<1x16x128xbf16> to vector<16x128xbf16>
    %cst_18 = arith.constant dense<0.000000e+00> : vector<256x128xf32>
    %37 = tpu.matmul %34, %36, %cst_18 {dimension_numbers = #tpu.dot_dimension_numbers<[1], [0], [0], [1], [0, 0, 1, 1], [], []>} : vector<256x16xbf16>, vector<16x128xbf16>, vector<256x128xf32> -> vector<256x128xf32>
    %38 = arith.addf %31, %37 : vector<256x128xf32>
    %39 = vector.extract_strided_slice %2 {offsets = [1, 2, 0], sizes = [16, 16, 16], strides = [1, 1, 1]} : vector<18x18x16xf32> to vector<16x16x16xf32>
    %40 = vector.shape_cast %39 : vector<16x16x16xf32> to vector<256x16xf32>
    %41 = arith.truncf %40 : vector<256x16xf32> to vector<256x16xbf16>
    %c5 = arith.constant 5 : index
    %c0_19 = arith.constant 0 : index
    %c0_20 = arith.constant 0 : index
    %42 = vector.load %arg2[%c5, %c0_19, %c0_20] : memref<9x16x128xbf16, #tpu.memory_space<vmem>>, vector<1x16x128xbf16>
    %43 = vector.shape_cast %42 : vector<1x16x128xbf16> to vector<16x128xbf16>
    %cst_21 = arith.constant dense<0.000000e+00> : vector<256x128xf32>
    %44 = tpu.matmul %41, %43, %cst_21 {dimension_numbers = #tpu.dot_dimension_numbers<[1], [0], [0], [1], [0, 0, 1, 1], [], []>} : vector<256x16xbf16>, vector<16x128xbf16>, vector<256x128xf32> -> vector<256x128xf32>
    %45 = arith.addf %38, %44 : vector<256x128xf32>
    %46 = vector.extract_strided_slice %2 {offsets = [2, 0, 0], sizes = [16, 16, 16], strides = [1, 1, 1]} : vector<18x18x16xf32> to vector<16x16x16xf32>
    %47 = vector.shape_cast %46 : vector<16x16x16xf32> to vector<256x16xf32>
    %48 = arith.truncf %47 : vector<256x16xf32> to vector<256x16xbf16>
    %c6 = arith.constant 6 : index
    %c0_22 = arith.constant 0 : index
    %c0_23 = arith.constant 0 : index
    %49 = vector.load %arg2[%c6, %c0_22, %c0_23] : memref<9x16x128xbf16, #tpu.memory_space<vmem>>, vector<1x16x128xbf16>
    %50 = vector.shape_cast %49 : vector<1x16x128xbf16> to vector<16x128xbf16>
    %cst_24 = arith.constant dense<0.000000e+00> : vector<256x128xf32>
    %51 = tpu.matmul %48, %50, %cst_24 {dimension_numbers = #tpu.dot_dimension_numbers<[1], [0], [0], [1], [0, 0, 1, 1], [], []>} : vector<256x16xbf16>, vector<16x128xbf16>, vector<256x128xf32> -> vector<256x128xf32>
    %52 = arith.addf %45, %51 : vector<256x128xf32>
    %53 = vector.extract_strided_slice %2 {offsets = [2, 1, 0], sizes = [16, 16, 16], strides = [1, 1, 1]} : vector<18x18x16xf32> to vector<16x16x16xf32>
    %54 = vector.shape_cast %53 : vector<16x16x16xf32> to vector<256x16xf32>
    %55 = arith.truncf %54 : vector<256x16xf32> to vector<256x16xbf16>
    %c7 = arith.constant 7 : index
    %c0_25 = arith.constant 0 : index
    %c0_26 = arith.constant 0 : index
    %56 = vector.load %arg2[%c7, %c0_25, %c0_26] : memref<9x16x128xbf16, #tpu.memory_space<vmem>>, vector<1x16x128xbf16>
    %57 = vector.shape_cast %56 : vector<1x16x128xbf16> to vector<16x128xbf16>
    %cst_27 = arith.constant dense<0.000000e+00> : vector<256x128xf32>
    %58 = tpu.matmul %55, %57, %cst_27 {dimension_numbers = #tpu.dot_dimension_numbers<[1], [0], [0], [1], [0, 0, 1, 1], [], []>} : vector<256x16xbf16>, vector<16x128xbf16>, vector<256x128xf32> -> vector<256x128xf32>
    %59 = arith.addf %52, %58 : vector<256x128xf32>
    %60 = vector.extract_strided_slice %2 {offsets = [2, 2, 0], sizes = [16, 16, 16], strides = [1, 1, 1]} : vector<18x18x16xf32> to vector<16x16x16xf32>
    %61 = vector.shape_cast %60 : vector<16x16x16xf32> to vector<256x16xf32>
    %62 = arith.truncf %61 : vector<256x16xf32> to vector<256x16xbf16>
    %c8 = arith.constant 8 : index
    %c0_28 = arith.constant 0 : index
    %c0_29 = arith.constant 0 : index
    %63 = vector.load %arg2[%c8, %c0_28, %c0_29] : memref<9x16x128xbf16, #tpu.memory_space<vmem>>, vector<1x16x128xbf16>
    %64 = vector.shape_cast %63 : vector<1x16x128xbf16> to vector<16x128xbf16>
    %cst_30 = arith.constant dense<0.000000e+00> : vector<256x128xf32>
    %65 = tpu.matmul %62, %64, %cst_30 {dimension_numbers = #tpu.dot_dimension_numbers<[1], [0], [0], [1], [0, 0, 1, 1], [], []>} : vector<256x16xbf16>, vector<16x128xbf16>, vector<256x128xf32> -> vector<256x128xf32>
    %66 = arith.addf %59, %65 : vector<256x128xf32>
    %c0_31 = arith.constant 0 : index
    %c0_32 = arith.constant 0 : index
    %67 = vector.load %arg3[%c0_31, %c0_32] : memref<1x128xf32, #tpu.memory_space<vmem>>, vector<1x128xf32>
    %68 = vector.broadcast %67 : vector<1x128xf32> to vector<256x128xf32>
    %69 = arith.addf %66, %68 : vector<256x128xf32>
    %cst_33 = arith.constant 0.000000e+00 : f32
    %70 = vector.broadcast %cst_33 : f32 to vector<256x128xf32>
    %71 = arith.maximumf %69, %70 : vector<256x128xf32>
    %72 = arith.truncf %71 : vector<256x128xf32> to vector<256x128xbf16>
    %c0_34 = arith.constant 0 : index
    %c0_35 = arith.constant 0 : index
    %c0_36 = arith.constant 0 : index
    %73 = vector.load %arg4[%c0_34, %c0_35, %c0_36] : memref<1x256x128xbf16, #tpu.memory_space<vmem>>, vector<1x256x128xbf16>
    %74 = vector.shape_cast %73 : vector<1x256x128xbf16> to vector<256x128xbf16>
    %75 = vector.shape_cast %72 : vector<256x128xbf16> to vector<1x256x128xbf16>
    tpu.vector_store %arg4[%c0_34, %c0_35, %c0_36], %75 {strides = array<i32>} : memref<1x256x128xbf16, #tpu.memory_space<vmem>>, vector<1x256x128xbf16>,
    return
  }
  func.func @transform_0(%arg0: i32) -> (i32, i32, i32, i32) {
    %c0_i32 = arith.constant 0 : i32
    %c0_i32_0 = arith.constant 0 : i32
    %c0_i32_1 = arith.constant 0 : i32
    %c0_i32_2 = arith.constant 0 : i32
    return %arg0, %c0_i32, %c0_i32_0, %c0_i32_1 : i32, i32, i32, i32
  }
  func.func @transform_1(%arg0: i32) -> (i32, i32, i32) {
    %c0_i32 = arith.constant 0 : i32
    %c0_i32_0 = arith.constant 0 : i32
    %c0_i32_1 = arith.constant 0 : i32
    %c0_i32_2 = arith.constant 0 : i32
    return %c0_i32, %c0_i32_0, %c0_i32_1 : i32, i32, i32
  }
  func.func @transform_2(%arg0: i32) -> (i32, i32) {
    %c0_i32 = arith.constant 0 : i32
    %c0_i32_0 = arith.constant 0 : i32
    %c0_i32_1 = arith.constant 0 : i32
    return %c0_i32, %c0_i32_0 : i32, i32
  }
  func.func @transform_3(%arg0: i32) -> (i32, i32, i32) {
    %c0_i32 = arith.constant 0 : i32
    %c0_i32_0 = arith.constant 0 : i32
    %c0_i32_1 = arith.constant 0 : i32
    return %arg0, %c0_i32, %c0_i32_0 : i32, i32, i32
  }
}

module attributes {stable_mosaic.version = 11 : i64} {
  func.func @_conv_kernel(%arg0: i32, %arg1: memref<4x9x9x16xbf16, #tpu.memory_space<vmem>>, %arg2: memref<9x16x128xbf16, #tpu.memory_space<vmem>>, %arg3: memref<1x128xf32, #tpu.memory_space<vmem>>, %arg4: memref<1x64x128xbf16, #tpu.memory_space<vmem>>) attributes {dimension_semantics = [#tpu.dimension_semantics<parallel>], iteration_bounds = array<i64: 2>, scalar_prefetch = 0 : i64, scratch_operands = 0 : i64, tpu.core_type = #tpu.core_type<tc>, window_params = [{transform_indices = @transform_0, window_bounds = array<i64: 4, 9, 9, 16>}, {pipeline_mode = #tpu.pipeline_mode<synchronous>, transform_indices = @transform_1, window_bounds = array<i64: 9, 16, 128>}, {pipeline_mode = #tpu.pipeline_mode<synchronous>, transform_indices = @transform_2, window_bounds = array<i64: 1, 128>}, {transform_indices = @transform_3, window_bounds = array<i64: 1, 64, 128>}]} {
    %c0 = arith.constant 0 : index
    %c0_0 = arith.constant 0 : index
    %c0_1 = arith.constant 0 : index
    %c0_2 = arith.constant 0 : index
    %0 = vector.load %arg1[%c0, %c0_0, %c0_1, %c0_2] : memref<4x9x9x16xbf16, #tpu.memory_space<vmem>>, vector<1x9x9x16xbf16>
    %1 = vector.shape_cast %0 : vector<1x9x9x16xbf16> to vector<9x9x16xbf16>
    %2 = arith.extf %1 : vector<9x9x16xbf16> to vector<9x9x16xf32>
    %c1 = arith.constant 1 : index
    %c0_3 = arith.constant 0 : index
    %c0_4 = arith.constant 0 : index
    %c0_5 = arith.constant 0 : index
    %3 = vector.load %arg1[%c1, %c0_3, %c0_4, %c0_5] : memref<4x9x9x16xbf16, #tpu.memory_space<vmem>>, vector<1x9x9x16xbf16>
    %4 = vector.shape_cast %3 : vector<1x9x9x16xbf16> to vector<9x9x16xbf16>
    %5 = arith.extf %4 : vector<9x9x16xbf16> to vector<9x9x16xf32>
    %c2 = arith.constant 2 : index
    %c0_6 = arith.constant 0 : index
    %c0_7 = arith.constant 0 : index
    %c0_8 = arith.constant 0 : index
    %6 = vector.load %arg1[%c2, %c0_6, %c0_7, %c0_8] : memref<4x9x9x16xbf16, #tpu.memory_space<vmem>>, vector<1x9x9x16xbf16>
    %7 = vector.shape_cast %6 : vector<1x9x9x16xbf16> to vector<9x9x16xbf16>
    %8 = arith.extf %7 : vector<9x9x16xbf16> to vector<9x9x16xf32>
    %c3 = arith.constant 3 : index
    %c0_9 = arith.constant 0 : index
    %c0_10 = arith.constant 0 : index
    %c0_11 = arith.constant 0 : index
    %9 = vector.load %arg1[%c3, %c0_9, %c0_10, %c0_11] : memref<4x9x9x16xbf16, #tpu.memory_space<vmem>>, vector<1x9x9x16xbf16>
    %10 = vector.shape_cast %9 : vector<1x9x9x16xbf16> to vector<9x9x16xbf16>
    %11 = arith.extf %10 : vector<9x9x16xbf16> to vector<9x9x16xf32>
    %cst = arith.constant 0.000000e+00 : f32
    %12 = vector.broadcast %cst : f32 to vector<64x128xf32>
    %13 = vector.extract_strided_slice %2 {offsets = [0, 0, 0], sizes = [8, 8, 16], strides = [1, 1, 1]} : vector<9x9x16xf32> to vector<8x8x16xf32>
    %14 = vector.shape_cast %13 : vector<8x8x16xf32> to vector<64x16xf32>
    %15 = arith.truncf %14 : vector<64x16xf32> to vector<64x16xbf16>
    %c0_12 = arith.constant 0 : index
    %c0_13 = arith.constant 0 : index
    %c0_14 = arith.constant 0 : index
    %16 = vector.load %arg2[%c0_12, %c0_13, %c0_14] : memref<9x16x128xbf16, #tpu.memory_space<vmem>>, vector<1x16x128xbf16>
    %17 = vector.shape_cast %16 : vector<1x16x128xbf16> to vector<16x128xbf16>
    %cst_15 = arith.constant dense<0.000000e+00> : vector<64x128xf32>
    %18 = tpu.matmul %15, %17, %cst_15 {dimension_numbers = #tpu.dot_dimension_numbers<[1], [0], [0], [1], [0, 0, 1, 1], [], []>} : vector<64x16xbf16>, vector<16x128xbf16>, vector<64x128xf32> -> vector<64x128xf32>
    %19 = arith.addf %12, %18 : vector<64x128xf32>
    %20 = vector.extract_strided_slice %5 {offsets = [0, 0, 0], sizes = [8, 8, 16], strides = [1, 1, 1]} : vector<9x9x16xf32> to vector<8x8x16xf32>
    %21 = vector.shape_cast %20 : vector<8x8x16xf32> to vector<64x16xf32>
    %22 = arith.truncf %21 : vector<64x16xf32> to vector<64x16xbf16>
    %c1_16 = arith.constant 1 : index
    %c0_17 = arith.constant 0 : index
    %c0_18 = arith.constant 0 : index
    %23 = vector.load %arg2[%c1_16, %c0_17, %c0_18] : memref<9x16x128xbf16, #tpu.memory_space<vmem>>, vector<1x16x128xbf16>
    %24 = vector.shape_cast %23 : vector<1x16x128xbf16> to vector<16x128xbf16>
    %cst_19 = arith.constant dense<0.000000e+00> : vector<64x128xf32>
    %25 = tpu.matmul %22, %24, %cst_19 {dimension_numbers = #tpu.dot_dimension_numbers<[1], [0], [0], [1], [0, 0, 1, 1], [], []>} : vector<64x16xbf16>, vector<16x128xbf16>, vector<64x128xf32> -> vector<64x128xf32>
    %26 = arith.addf %19, %25 : vector<64x128xf32>
    %27 = vector.extract_strided_slice %2 {offsets = [0, 1, 0], sizes = [8, 8, 16], strides = [1, 1, 1]} : vector<9x9x16xf32> to vector<8x8x16xf32>
    %28 = vector.shape_cast %27 : vector<8x8x16xf32> to vector<64x16xf32>
    %29 = arith.truncf %28 : vector<64x16xf32> to vector<64x16xbf16>
    %c2_20 = arith.constant 2 : index
    %c0_21 = arith.constant 0 : index
    %c0_22 = arith.constant 0 : index
    %30 = vector.load %arg2[%c2_20, %c0_21, %c0_22] : memref<9x16x128xbf16, #tpu.memory_space<vmem>>, vector<1x16x128xbf16>
    %31 = vector.shape_cast %30 : vector<1x16x128xbf16> to vector<16x128xbf16>
    %cst_23 = arith.constant dense<0.000000e+00> : vector<64x128xf32>
    %32 = tpu.matmul %29, %31, %cst_23 {dimension_numbers = #tpu.dot_dimension_numbers<[1], [0], [0], [1], [0, 0, 1, 1], [], []>} : vector<64x16xbf16>, vector<16x128xbf16>, vector<64x128xf32> -> vector<64x128xf32>
    %33 = arith.addf %26, %32 : vector<64x128xf32>
    %34 = vector.extract_strided_slice %8 {offsets = [0, 0, 0], sizes = [8, 8, 16], strides = [1, 1, 1]} : vector<9x9x16xf32> to vector<8x8x16xf32>
    %35 = vector.shape_cast %34 : vector<8x8x16xf32> to vector<64x16xf32>
    %36 = arith.truncf %35 : vector<64x16xf32> to vector<64x16xbf16>
    %c3_24 = arith.constant 3 : index
    %c0_25 = arith.constant 0 : index
    %c0_26 = arith.constant 0 : index
    %37 = vector.load %arg2[%c3_24, %c0_25, %c0_26] : memref<9x16x128xbf16, #tpu.memory_space<vmem>>, vector<1x16x128xbf16>
    %38 = vector.shape_cast %37 : vector<1x16x128xbf16> to vector<16x128xbf16>
    %cst_27 = arith.constant dense<0.000000e+00> : vector<64x128xf32>
    %39 = tpu.matmul %36, %38, %cst_27 {dimension_numbers = #tpu.dot_dimension_numbers<[1], [0], [0], [1], [0, 0, 1, 1], [], []>} : vector<64x16xbf16>, vector<16x128xbf16>, vector<64x128xf32> -> vector<64x128xf32>
    %40 = arith.addf %33, %39 : vector<64x128xf32>
    %41 = vector.extract_strided_slice %11 {offsets = [0, 0, 0], sizes = [8, 8, 16], strides = [1, 1, 1]} : vector<9x9x16xf32> to vector<8x8x16xf32>
    %42 = vector.shape_cast %41 : vector<8x8x16xf32> to vector<64x16xf32>
    %43 = arith.truncf %42 : vector<64x16xf32> to vector<64x16xbf16>
    %c4 = arith.constant 4 : index
    %c0_28 = arith.constant 0 : index
    %c0_29 = arith.constant 0 : index
    %44 = vector.load %arg2[%c4, %c0_28, %c0_29] : memref<9x16x128xbf16, #tpu.memory_space<vmem>>, vector<1x16x128xbf16>
    %45 = vector.shape_cast %44 : vector<1x16x128xbf16> to vector<16x128xbf16>
    %cst_30 = arith.constant dense<0.000000e+00> : vector<64x128xf32>
    %46 = tpu.matmul %43, %45, %cst_30 {dimension_numbers = #tpu.dot_dimension_numbers<[1], [0], [0], [1], [0, 0, 1, 1], [], []>} : vector<64x16xbf16>, vector<16x128xbf16>, vector<64x128xf32> -> vector<64x128xf32>
    %47 = arith.addf %40, %46 : vector<64x128xf32>
    %48 = vector.extract_strided_slice %8 {offsets = [0, 1, 0], sizes = [8, 8, 16], strides = [1, 1, 1]} : vector<9x9x16xf32> to vector<8x8x16xf32>
    %49 = vector.shape_cast %48 : vector<8x8x16xf32> to vector<64x16xf32>
    %50 = arith.truncf %49 : vector<64x16xf32> to vector<64x16xbf16>
    %c5 = arith.constant 5 : index
    %c0_31 = arith.constant 0 : index
    %c0_32 = arith.constant 0 : index
    %51 = vector.load %arg2[%c5, %c0_31, %c0_32] : memref<9x16x128xbf16, #tpu.memory_space<vmem>>, vector<1x16x128xbf16>
    %52 = vector.shape_cast %51 : vector<1x16x128xbf16> to vector<16x128xbf16>
    %cst_33 = arith.constant dense<0.000000e+00> : vector<64x128xf32>
    %53 = tpu.matmul %50, %52, %cst_33 {dimension_numbers = #tpu.dot_dimension_numbers<[1], [0], [0], [1], [0, 0, 1, 1], [], []>} : vector<64x16xbf16>, vector<16x128xbf16>, vector<64x128xf32> -> vector<64x128xf32>
    %54 = arith.addf %47, %53 : vector<64x128xf32>
    %55 = vector.extract_strided_slice %2 {offsets = [1, 0, 0], sizes = [8, 8, 16], strides = [1, 1, 1]} : vector<9x9x16xf32> to vector<8x8x16xf32>
    %56 = vector.shape_cast %55 : vector<8x8x16xf32> to vector<64x16xf32>
    %57 = arith.truncf %56 : vector<64x16xf32> to vector<64x16xbf16>
    %c6 = arith.constant 6 : index
    %c0_34 = arith.constant 0 : index
    %c0_35 = arith.constant 0 : index
    %58 = vector.load %arg2[%c6, %c0_34, %c0_35] : memref<9x16x128xbf16, #tpu.memory_space<vmem>>, vector<1x16x128xbf16>
    %59 = vector.shape_cast %58 : vector<1x16x128xbf16> to vector<16x128xbf16>
    %cst_36 = arith.constant dense<0.000000e+00> : vector<64x128xf32>
    %60 = tpu.matmul %57, %59, %cst_36 {dimension_numbers = #tpu.dot_dimension_numbers<[1], [0], [0], [1], [0, 0, 1, 1], [], []>} : vector<64x16xbf16>, vector<16x128xbf16>, vector<64x128xf32> -> vector<64x128xf32>
    %61 = arith.addf %54, %60 : vector<64x128xf32>
    %62 = vector.extract_strided_slice %5 {offsets = [1, 0, 0], sizes = [8, 8, 16], strides = [1, 1, 1]} : vector<9x9x16xf32> to vector<8x8x16xf32>
    %63 = vector.shape_cast %62 : vector<8x8x16xf32> to vector<64x16xf32>
    %64 = arith.truncf %63 : vector<64x16xf32> to vector<64x16xbf16>
    %c7 = arith.constant 7 : index
    %c0_37 = arith.constant 0 : index
    %c0_38 = arith.constant 0 : index
    %65 = vector.load %arg2[%c7, %c0_37, %c0_38] : memref<9x16x128xbf16, #tpu.memory_space<vmem>>, vector<1x16x128xbf16>
    %66 = vector.shape_cast %65 : vector<1x16x128xbf16> to vector<16x128xbf16>
    %cst_39 = arith.constant dense<0.000000e+00> : vector<64x128xf32>
    %67 = tpu.matmul %64, %66, %cst_39 {dimension_numbers = #tpu.dot_dimension_numbers<[1], [0], [0], [1], [0, 0, 1, 1], [], []>} : vector<64x16xbf16>, vector<16x128xbf16>, vector<64x128xf32> -> vector<64x128xf32>
    %68 = arith.addf %61, %67 : vector<64x128xf32>
    %69 = vector.extract_strided_slice %2 {offsets = [1, 1, 0], sizes = [8, 8, 16], strides = [1, 1, 1]} : vector<9x9x16xf32> to vector<8x8x16xf32>
    %70 = vector.shape_cast %69 : vector<8x8x16xf32> to vector<64x16xf32>
    %71 = arith.truncf %70 : vector<64x16xf32> to vector<64x16xbf16>
    %c8 = arith.constant 8 : index
    %c0_40 = arith.constant 0 : index
    %c0_41 = arith.constant 0 : index
    %72 = vector.load %arg2[%c8, %c0_40, %c0_41] : memref<9x16x128xbf16, #tpu.memory_space<vmem>>, vector<1x16x128xbf16>
    %73 = vector.shape_cast %72 : vector<1x16x128xbf16> to vector<16x128xbf16>
    %cst_42 = arith.constant dense<0.000000e+00> : vector<64x128xf32>
    %74 = tpu.matmul %71, %73, %cst_42 {dimension_numbers = #tpu.dot_dimension_numbers<[1], [0], [0], [1], [0, 0, 1, 1], [], []>} : vector<64x16xbf16>, vector<16x128xbf16>, vector<64x128xf32> -> vector<64x128xf32>
    %75 = arith.addf %68, %74 : vector<64x128xf32>
    %c0_43 = arith.constant 0 : index
    %c0_44 = arith.constant 0 : index
    %76 = vector.load %arg3[%c0_43, %c0_44] : memref<1x128xf32, #tpu.memory_space<vmem>>, vector<1x128xf32>
    %77 = vector.broadcast %76 : vector<1x128xf32> to vector<64x128xf32>
    %78 = arith.addf %75, %77 : vector<64x128xf32>
    %cst_45 = arith.constant 0.000000e+00 : f32
    %79 = vector.broadcast %cst_45 : f32 to vector<64x128xf32>
    %80 = arith.maximumf %78, %79 : vector<64x128xf32>
    %81 = arith.truncf %80 : vector<64x128xf32> to vector<64x128xbf16>
    %c0_46 = arith.constant 0 : index
    %c0_47 = arith.constant 0 : index
    %c0_48 = arith.constant 0 : index
    %82 = vector.load %arg4[%c0_46, %c0_47, %c0_48] : memref<1x64x128xbf16, #tpu.memory_space<vmem>>, vector<1x64x128xbf16>
    %83 = vector.shape_cast %82 : vector<1x64x128xbf16> to vector<64x128xbf16>
    %84 = vector.shape_cast %81 : vector<64x128xbf16> to vector<1x64x128xbf16>
    tpu.vector_store %arg4[%c0_46, %c0_47, %c0_48], %84 {strides = array<i32>} : memref<1x64x128xbf16, #tpu.memory_space<vmem>>, vector<1x64x128xbf16>,
    return
  }
  func.func @transform_0(%arg0: i32) -> (i32, i32, i32, i32) {
    %c0_i32 = arith.constant 0 : i32
    %c0_i32_0 = arith.constant 0 : i32
    %c0_i32_1 = arith.constant 0 : i32
    %c0_i32_2 = arith.constant 0 : i32
    return %arg0, %c0_i32, %c0_i32_0, %c0_i32_1 : i32, i32, i32, i32
  }
  func.func @transform_1(%arg0: i32) -> (i32, i32, i32) {
    %c0_i32 = arith.constant 0 : i32
    %c0_i32_0 = arith.constant 0 : i32
    %c0_i32_1 = arith.constant 0 : i32
    %c0_i32_2 = arith.constant 0 : i32
    return %c0_i32, %c0_i32_0, %c0_i32_1 : i32, i32, i32
  }
  func.func @transform_2(%arg0: i32) -> (i32, i32) {
    %c0_i32 = arith.constant 0 : i32
    %c0_i32_0 = arith.constant 0 : i32
    %c0_i32_1 = arith.constant 0 : i32
    return %c0_i32, %c0_i32_0 : i32, i32
  }
  func.func @transform_3(%arg0: i32) -> (i32, i32, i32) {
    %c0_i32 = arith.constant 0 : i32
    %c0_i32_0 = arith.constant 0 : i32
    %c0_i32_1 = arith.constant 0 : i32
    return %arg0, %c0_i32, %c0_i32_0 : i32, i32, i32
  }
}

module attributes {stable_mosaic.version = 11 : i64} {
  func.func @_conv_kernel(%arg0: i32, %arg1: memref<1x10x10x32xbf16, #tpu.memory_space<vmem>>, %arg2: memref<9x32x128xbf16, #tpu.memory_space<vmem>>, %arg3: memref<1x128xf32, #tpu.memory_space<vmem>>, %arg4: memref<1x64x128xbf16, #tpu.memory_space<vmem>>) attributes {dimension_semantics = [#tpu.dimension_semantics<parallel>], iteration_bounds = array<i64: 2>, scalar_prefetch = 0 : i64, scratch_operands = 0 : i64, tpu.core_type = #tpu.core_type<tc>, window_params = [{transform_indices = @transform_0, window_bounds = array<i64: 1, 10, 10, 32>}, {pipeline_mode = #tpu.pipeline_mode<synchronous>, transform_indices = @transform_1, window_bounds = array<i64: 9, 32, 128>}, {pipeline_mode = #tpu.pipeline_mode<synchronous>, transform_indices = @transform_2, window_bounds = array<i64: 1, 128>}, {transform_indices = @transform_3, window_bounds = array<i64: 1, 64, 128>}]} {
    %c0 = arith.constant 0 : index
    %c0_0 = arith.constant 0 : index
    %c0_1 = arith.constant 0 : index
    %c0_2 = arith.constant 0 : index
    %0 = vector.load %arg1[%c0, %c0_0, %c0_1, %c0_2] : memref<1x10x10x32xbf16, #tpu.memory_space<vmem>>, vector<1x10x10x32xbf16>
    %1 = vector.shape_cast %0 : vector<1x10x10x32xbf16> to vector<10x10x32xbf16>
    %2 = arith.extf %1 : vector<10x10x32xbf16> to vector<10x10x32xf32>
    %cst = arith.constant 0.000000e+00 : f32
    %3 = vector.broadcast %cst : f32 to vector<64x128xf32>
    %4 = vector.extract_strided_slice %2 {offsets = [0, 0, 0], sizes = [8, 8, 32], strides = [1, 1, 1]} : vector<10x10x32xf32> to vector<8x8x32xf32>
    %5 = vector.shape_cast %4 : vector<8x8x32xf32> to vector<64x32xf32>
    %6 = arith.truncf %5 : vector<64x32xf32> to vector<64x32xbf16>
    %c0_3 = arith.constant 0 : index
    %c0_4 = arith.constant 0 : index
    %c0_5 = arith.constant 0 : index
    %7 = vector.load %arg2[%c0_3, %c0_4, %c0_5] : memref<9x32x128xbf16, #tpu.memory_space<vmem>>, vector<1x32x128xbf16>
    %8 = vector.shape_cast %7 : vector<1x32x128xbf16> to vector<32x128xbf16>
    %cst_6 = arith.constant dense<0.000000e+00> : vector<64x128xf32>
    %9 = tpu.matmul %6, %8, %cst_6 {dimension_numbers = #tpu.dot_dimension_numbers<[1], [0], [0], [1], [0, 0, 1, 1], [], []>} : vector<64x32xbf16>, vector<32x128xbf16>, vector<64x128xf32> -> vector<64x128xf32>
    %10 = arith.addf %3, %9 : vector<64x128xf32>
    %11 = vector.extract_strided_slice %2 {offsets = [0, 1, 0], sizes = [8, 8, 32], strides = [1, 1, 1]} : vector<10x10x32xf32> to vector<8x8x32xf32>
    %12 = vector.shape_cast %11 : vector<8x8x32xf32> to vector<64x32xf32>
    %13 = arith.truncf %12 : vector<64x32xf32> to vector<64x32xbf16>
    %c1 = arith.constant 1 : index
    %c0_7 = arith.constant 0 : index
    %c0_8 = arith.constant 0 : index
    %14 = vector.load %arg2[%c1, %c0_7, %c0_8] : memref<9x32x128xbf16, #tpu.memory_space<vmem>>, vector<1x32x128xbf16>
    %15 = vector.shape_cast %14 : vector<1x32x128xbf16> to vector<32x128xbf16>
    %cst_9 = arith.constant dense<0.000000e+00> : vector<64x128xf32>
    %16 = tpu.matmul %13, %15, %cst_9 {dimension_numbers = #tpu.dot_dimension_numbers<[1], [0], [0], [1], [0, 0, 1, 1], [], []>} : vector<64x32xbf16>, vector<32x128xbf16>, vector<64x128xf32> -> vector<64x128xf32>
    %17 = arith.addf %10, %16 : vector<64x128xf32>
    %18 = vector.extract_strided_slice %2 {offsets = [0, 2, 0], sizes = [8, 8, 32], strides = [1, 1, 1]} : vector<10x10x32xf32> to vector<8x8x32xf32>
    %19 = vector.shape_cast %18 : vector<8x8x32xf32> to vector<64x32xf32>
    %20 = arith.truncf %19 : vector<64x32xf32> to vector<64x32xbf16>
    %c2 = arith.constant 2 : index
    %c0_10 = arith.constant 0 : index
    %c0_11 = arith.constant 0 : index
    %21 = vector.load %arg2[%c2, %c0_10, %c0_11] : memref<9x32x128xbf16, #tpu.memory_space<vmem>>, vector<1x32x128xbf16>
    %22 = vector.shape_cast %21 : vector<1x32x128xbf16> to vector<32x128xbf16>
    %cst_12 = arith.constant dense<0.000000e+00> : vector<64x128xf32>
    %23 = tpu.matmul %20, %22, %cst_12 {dimension_numbers = #tpu.dot_dimension_numbers<[1], [0], [0], [1], [0, 0, 1, 1], [], []>} : vector<64x32xbf16>, vector<32x128xbf16>, vector<64x128xf32> -> vector<64x128xf32>
    %24 = arith.addf %17, %23 : vector<64x128xf32>
    %25 = vector.extract_strided_slice %2 {offsets = [1, 0, 0], sizes = [8, 8, 32], strides = [1, 1, 1]} : vector<10x10x32xf32> to vector<8x8x32xf32>
    %26 = vector.shape_cast %25 : vector<8x8x32xf32> to vector<64x32xf32>
    %27 = arith.truncf %26 : vector<64x32xf32> to vector<64x32xbf16>
    %c3 = arith.constant 3 : index
    %c0_13 = arith.constant 0 : index
    %c0_14 = arith.constant 0 : index
    %28 = vector.load %arg2[%c3, %c0_13, %c0_14] : memref<9x32x128xbf16, #tpu.memory_space<vmem>>, vector<1x32x128xbf16>
    %29 = vector.shape_cast %28 : vector<1x32x128xbf16> to vector<32x128xbf16>
    %cst_15 = arith.constant dense<0.000000e+00> : vector<64x128xf32>
    %30 = tpu.matmul %27, %29, %cst_15 {dimension_numbers = #tpu.dot_dimension_numbers<[1], [0], [0], [1], [0, 0, 1, 1], [], []>} : vector<64x32xbf16>, vector<32x128xbf16>, vector<64x128xf32> -> vector<64x128xf32>
    %31 = arith.addf %24, %30 : vector<64x128xf32>
    %32 = vector.extract_strided_slice %2 {offsets = [1, 1, 0], sizes = [8, 8, 32], strides = [1, 1, 1]} : vector<10x10x32xf32> to vector<8x8x32xf32>
    %33 = vector.shape_cast %32 : vector<8x8x32xf32> to vector<64x32xf32>
    %34 = arith.truncf %33 : vector<64x32xf32> to vector<64x32xbf16>
    %c4 = arith.constant 4 : index
    %c0_16 = arith.constant 0 : index
    %c0_17 = arith.constant 0 : index
    %35 = vector.load %arg2[%c4, %c0_16, %c0_17] : memref<9x32x128xbf16, #tpu.memory_space<vmem>>, vector<1x32x128xbf16>
    %36 = vector.shape_cast %35 : vector<1x32x128xbf16> to vector<32x128xbf16>
    %cst_18 = arith.constant dense<0.000000e+00> : vector<64x128xf32>
    %37 = tpu.matmul %34, %36, %cst_18 {dimension_numbers = #tpu.dot_dimension_numbers<[1], [0], [0], [1], [0, 0, 1, 1], [], []>} : vector<64x32xbf16>, vector<32x128xbf16>, vector<64x128xf32> -> vector<64x128xf32>
    %38 = arith.addf %31, %37 : vector<64x128xf32>
    %39 = vector.extract_strided_slice %2 {offsets = [1, 2, 0], sizes = [8, 8, 32], strides = [1, 1, 1]} : vector<10x10x32xf32> to vector<8x8x32xf32>
    %40 = vector.shape_cast %39 : vector<8x8x32xf32> to vector<64x32xf32>
    %41 = arith.truncf %40 : vector<64x32xf32> to vector<64x32xbf16>
    %c5 = arith.constant 5 : index
    %c0_19 = arith.constant 0 : index
    %c0_20 = arith.constant 0 : index
    %42 = vector.load %arg2[%c5, %c0_19, %c0_20] : memref<9x32x128xbf16, #tpu.memory_space<vmem>>, vector<1x32x128xbf16>
    %43 = vector.shape_cast %42 : vector<1x32x128xbf16> to vector<32x128xbf16>
    %cst_21 = arith.constant dense<0.000000e+00> : vector<64x128xf32>
    %44 = tpu.matmul %41, %43, %cst_21 {dimension_numbers = #tpu.dot_dimension_numbers<[1], [0], [0], [1], [0, 0, 1, 1], [], []>} : vector<64x32xbf16>, vector<32x128xbf16>, vector<64x128xf32> -> vector<64x128xf32>
    %45 = arith.addf %38, %44 : vector<64x128xf32>
    %46 = vector.extract_strided_slice %2 {offsets = [2, 0, 0], sizes = [8, 8, 32], strides = [1, 1, 1]} : vector<10x10x32xf32> to vector<8x8x32xf32>
    %47 = vector.shape_cast %46 : vector<8x8x32xf32> to vector<64x32xf32>
    %48 = arith.truncf %47 : vector<64x32xf32> to vector<64x32xbf16>
    %c6 = arith.constant 6 : index
    %c0_22 = arith.constant 0 : index
    %c0_23 = arith.constant 0 : index
    %49 = vector.load %arg2[%c6, %c0_22, %c0_23] : memref<9x32x128xbf16, #tpu.memory_space<vmem>>, vector<1x32x128xbf16>
    %50 = vector.shape_cast %49 : vector<1x32x128xbf16> to vector<32x128xbf16>
    %cst_24 = arith.constant dense<0.000000e+00> : vector<64x128xf32>
    %51 = tpu.matmul %48, %50, %cst_24 {dimension_numbers = #tpu.dot_dimension_numbers<[1], [0], [0], [1], [0, 0, 1, 1], [], []>} : vector<64x32xbf16>, vector<32x128xbf16>, vector<64x128xf32> -> vector<64x128xf32>
    %52 = arith.addf %45, %51 : vector<64x128xf32>
    %53 = vector.extract_strided_slice %2 {offsets = [2, 1, 0], sizes = [8, 8, 32], strides = [1, 1, 1]} : vector<10x10x32xf32> to vector<8x8x32xf32>
    %54 = vector.shape_cast %53 : vector<8x8x32xf32> to vector<64x32xf32>
    %55 = arith.truncf %54 : vector<64x32xf32> to vector<64x32xbf16>
    %c7 = arith.constant 7 : index
    %c0_25 = arith.constant 0 : index
    %c0_26 = arith.constant 0 : index
    %56 = vector.load %arg2[%c7, %c0_25, %c0_26] : memref<9x32x128xbf16, #tpu.memory_space<vmem>>, vector<1x32x128xbf16>
    %57 = vector.shape_cast %56 : vector<1x32x128xbf16> to vector<32x128xbf16>
    %cst_27 = arith.constant dense<0.000000e+00> : vector<64x128xf32>
    %58 = tpu.matmul %55, %57, %cst_27 {dimension_numbers = #tpu.dot_dimension_numbers<[1], [0], [0], [1], [0, 0, 1, 1], [], []>} : vector<64x32xbf16>, vector<32x128xbf16>, vector<64x128xf32> -> vector<64x128xf32>
    %59 = arith.addf %52, %58 : vector<64x128xf32>
    %60 = vector.extract_strided_slice %2 {offsets = [2, 2, 0], sizes = [8, 8, 32], strides = [1, 1, 1]} : vector<10x10x32xf32> to vector<8x8x32xf32>
    %61 = vector.shape_cast %60 : vector<8x8x32xf32> to vector<64x32xf32>
    %62 = arith.truncf %61 : vector<64x32xf32> to vector<64x32xbf16>
    %c8 = arith.constant 8 : index
    %c0_28 = arith.constant 0 : index
    %c0_29 = arith.constant 0 : index
    %63 = vector.load %arg2[%c8, %c0_28, %c0_29] : memref<9x32x128xbf16, #tpu.memory_space<vmem>>, vector<1x32x128xbf16>
    %64 = vector.shape_cast %63 : vector<1x32x128xbf16> to vector<32x128xbf16>
    %cst_30 = arith.constant dense<0.000000e+00> : vector<64x128xf32>
    %65 = tpu.matmul %62, %64, %cst_30 {dimension_numbers = #tpu.dot_dimension_numbers<[1], [0], [0], [1], [0, 0, 1, 1], [], []>} : vector<64x32xbf16>, vector<32x128xbf16>, vector<64x128xf32> -> vector<64x128xf32>
    %66 = arith.addf %59, %65 : vector<64x128xf32>
    %c0_31 = arith.constant 0 : index
    %c0_32 = arith.constant 0 : index
    %67 = vector.load %arg3[%c0_31, %c0_32] : memref<1x128xf32, #tpu.memory_space<vmem>>, vector<1x128xf32>
    %68 = vector.broadcast %67 : vector<1x128xf32> to vector<64x128xf32>
    %69 = arith.addf %66, %68 : vector<64x128xf32>
    %cst_33 = arith.constant 0.000000e+00 : f32
    %70 = vector.broadcast %cst_33 : f32 to vector<64x128xf32>
    %71 = arith.maximumf %69, %70 : vector<64x128xf32>
    %72 = arith.truncf %71 : vector<64x128xf32> to vector<64x128xbf16>
    %c0_34 = arith.constant 0 : index
    %c0_35 = arith.constant 0 : index
    %c0_36 = arith.constant 0 : index
    %73 = vector.load %arg4[%c0_34, %c0_35, %c0_36] : memref<1x64x128xbf16, #tpu.memory_space<vmem>>, vector<1x64x128xbf16>
    %74 = vector.shape_cast %73 : vector<1x64x128xbf16> to vector<64x128xbf16>
    %75 = vector.shape_cast %72 : vector<64x128xbf16> to vector<1x64x128xbf16>
    tpu.vector_store %arg4[%c0_34, %c0_35, %c0_36], %75 {strides = array<i32>} : memref<1x64x128xbf16, #tpu.memory_space<vmem>>, vector<1x64x128xbf16>,
    return
  }
  func.func @transform_0(%arg0: i32) -> (i32, i32, i32, i32) {
    %c0_i32 = arith.constant 0 : i32
    %c0_i32_0 = arith.constant 0 : i32
    %c0_i32_1 = arith.constant 0 : i32
    %c0_i32_2 = arith.constant 0 : i32
    return %arg0, %c0_i32, %c0_i32_0, %c0_i32_1 : i32, i32, i32, i32
  }
  func.func @transform_1(%arg0: i32) -> (i32, i32, i32) {
    %c0_i32 = arith.constant 0 : i32
    %c0_i32_0 = arith.constant 0 : i32
    %c0_i32_1 = arith.constant 0 : i32
    %c0_i32_2 = arith.constant 0 : i32
    return %c0_i32, %c0_i32_0, %c0_i32_1 : i32, i32, i32
  }
  func.func @transform_2(%arg0: i32) -> (i32, i32) {
    %c0_i32 = arith.constant 0 : i32
    %c0_i32_0 = arith.constant 0 : i32
    %c0_i32_1 = arith.constant 0 : i32
    return %c0_i32, %c0_i32_0 : i32, i32
  }
  func.func @transform_3(%arg0: i32) -> (i32, i32, i32) {
    %c0_i32 = arith.constant 0 : i32
    %c0_i32_0 = arith.constant 0 : i32
    %c0_i32_1 = arith.constant 0 : i32
    return %arg0, %c0_i32, %c0_i32_0 : i32, i32, i32
  }
}

module attributes {stable_mosaic.version = 11 : i64} {
  func.func @_conv_kernel(%arg0: i32, %arg1: memref<1x8x8x32xbf16, #tpu.memory_space<vmem>>, %arg2: memref<1x32x128xbf16, #tpu.memory_space<vmem>>, %arg3: memref<1x128xf32, #tpu.memory_space<vmem>>, %arg4: memref<1x64x128xf32, #tpu.memory_space<vmem>>) attributes {dimension_semantics = [#tpu.dimension_semantics<parallel>], iteration_bounds = array<i64: 2>, scalar_prefetch = 0 : i64, scratch_operands = 0 : i64, tpu.core_type = #tpu.core_type<tc>, window_params = [{transform_indices = @transform_0, window_bounds = array<i64: 1, 8, 8, 32>}, {pipeline_mode = #tpu.pipeline_mode<synchronous>, transform_indices = @transform_1, window_bounds = array<i64: 1, 32, 128>}, {pipeline_mode = #tpu.pipeline_mode<synchronous>, transform_indices = @transform_2, window_bounds = array<i64: 1, 128>}, {transform_indices = @transform_3, window_bounds = array<i64: 1, 64, 128>}]} {
    %c0 = arith.constant 0 : index
    %c0_0 = arith.constant 0 : index
    %c0_1 = arith.constant 0 : index
    %c0_2 = arith.constant 0 : index
    %0 = vector.load %arg1[%c0, %c0_0, %c0_1, %c0_2] : memref<1x8x8x32xbf16, #tpu.memory_space<vmem>>, vector<1x8x8x32xbf16>
    %1 = vector.shape_cast %0 : vector<1x8x8x32xbf16> to vector<8x8x32xbf16>
    %2 = arith.extf %1 : vector<8x8x32xbf16> to vector<8x8x32xf32>
    %cst = arith.constant 0.000000e+00 : f32
    %3 = vector.broadcast %cst : f32 to vector<64x128xf32>
    %4 = vector.shape_cast %2 : vector<8x8x32xf32> to vector<64x32xf32>
    %5 = arith.truncf %4 : vector<64x32xf32> to vector<64x32xbf16>
    %c0_3 = arith.constant 0 : index
    %c0_4 = arith.constant 0 : index
    %c0_5 = arith.constant 0 : index
    %6 = vector.load %arg2[%c0_3, %c0_4, %c0_5] : memref<1x32x128xbf16, #tpu.memory_space<vmem>>, vector<1x32x128xbf16>
    %7 = vector.shape_cast %6 : vector<1x32x128xbf16> to vector<32x128xbf16>
    %cst_6 = arith.constant dense<0.000000e+00> : vector<64x128xf32>
    %8 = tpu.matmul %5, %7, %cst_6 {dimension_numbers = #tpu.dot_dimension_numbers<[1], [0], [0], [1], [0, 0, 1, 1], [], []>} : vector<64x32xbf16>, vector<32x128xbf16>, vector<64x128xf32> -> vector<64x128xf32>
    %9 = arith.addf %3, %8 : vector<64x128xf32>
    %c0_7 = arith.constant 0 : index
    %c0_8 = arith.constant 0 : index
    %10 = vector.load %arg3[%c0_7, %c0_8] : memref<1x128xf32, #tpu.memory_space<vmem>>, vector<1x128xf32>
    %11 = vector.broadcast %10 : vector<1x128xf32> to vector<64x128xf32>
    %12 = arith.addf %9, %11 : vector<64x128xf32>
    %c0_9 = arith.constant 0 : index
    %c0_10 = arith.constant 0 : index
    %c0_11 = arith.constant 0 : index
    %13 = vector.load %arg4[%c0_9, %c0_10, %c0_11] : memref<1x64x128xf32, #tpu.memory_space<vmem>>, vector<1x64x128xf32>
    %14 = vector.shape_cast %13 : vector<1x64x128xf32> to vector<64x128xf32>
    %15 = vector.shape_cast %12 : vector<64x128xf32> to vector<1x64x128xf32>
    tpu.vector_store %arg4[%c0_9, %c0_10, %c0_11], %15 {strides = array<i32>} : memref<1x64x128xf32, #tpu.memory_space<vmem>>, vector<1x64x128xf32>,
    return
  }
  func.func @transform_0(%arg0: i32) -> (i32, i32, i32, i32) {
    %c0_i32 = arith.constant 0 : i32
    %c0_i32_0 = arith.constant 0 : i32
    %c0_i32_1 = arith.constant 0 : i32
    %c0_i32_2 = arith.constant 0 : i32
    return %arg0, %c0_i32, %c0_i32_0, %c0_i32_1 : i32, i32, i32, i32
  }
  func.func @transform_1(%arg0: i32) -> (i32, i32, i32) {
    %c0_i32 = arith.constant 0 : i32
    %c0_i32_0 = arith.constant 0 : i32
    %c0_i32_1 = arith.constant 0 : i32
    %c0_i32_2 = arith.constant 0 : i32
    return %c0_i32, %c0_i32_0, %c0_i32_1 : i32, i32, i32
  }
  func.func @transform_2(%arg0: i32) -> (i32, i32) {
    %c0_i32 = arith.constant 0 : i32
    %c0_i32_0 = arith.constant 0 : i32
    %c0_i32_1 = arith.constant 0 : i32
    return %c0_i32, %c0_i32_0 : i32, i32
  }
  func.func @transform_3(%arg0: i32) -> (i32, i32, i32) {
    %c0_i32 = arith.constant 0 : i32
    %c0_i32_0 = arith.constant 0 : i32
    %c0_i32_1 = arith.constant 0 : i32
    return %arg0, %c0_i32, %c0_i32_0 : i32, i32, i32
  }
}

module attributes {stable_mosaic.version = 11 : i64} {
  func.func @_iou_kernel(%arg0: i32, %arg1: memref<1x8x256xf32, #tpu.memory_space<vmem>>, %arg2: memref<1x256x8xf32, #tpu.memory_space<vmem>>, %arg3: memref<1x256x256xf32, #tpu.memory_space<vmem>>) attributes {dimension_semantics = [#tpu.dimension_semantics<parallel>], iteration_bounds = array<i64: 2>, scalar_prefetch = 0 : i64, scratch_operands = 0 : i64, tpu.core_type = #tpu.core_type<tc>, window_params = [{transform_indices = @transform_0, window_bounds = array<i64: 1, 8, 256>}, {transform_indices = @transform_1, window_bounds = array<i64: 1, 256, 8>}, {transform_indices = @transform_2, window_bounds = array<i64: 1, 256, 256>}]} {
    %c0 = arith.constant 0 : index
    %c0_0 = arith.constant 0 : index
    %c0_1 = arith.constant 0 : index
    %0 = vector.load %arg1[%c0, %c0_0, %c0_1] : memref<1x8x256xf32, #tpu.memory_space<vmem>>, vector<1x8x256xf32>
    %1 = vector.shape_cast %0 : vector<1x8x256xf32> to vector<8x256xf32>
    %c0_2 = arith.constant 0 : index
    %c0_3 = arith.constant 0 : index
    %c0_4 = arith.constant 0 : index
    %2 = vector.load %arg2[%c0_2, %c0_3, %c0_4] : memref<1x256x8xf32, #tpu.memory_space<vmem>>, vector<1x256x8xf32>
    %3 = vector.shape_cast %2 : vector<1x256x8xf32> to vector<256x8xf32>
    %4 = vector.extract_strided_slice %1 {offsets = [0, 0], sizes = [1, 256], strides = [1, 1]} : vector<8x256xf32> to vector<1x256xf32>
    %5 = vector.extract_strided_slice %1 {offsets = [1, 0], sizes = [1, 256], strides = [1, 1]} : vector<8x256xf32> to vector<1x256xf32>
    %6 = vector.extract_strided_slice %1 {offsets = [2, 0], sizes = [1, 256], strides = [1, 1]} : vector<8x256xf32> to vector<1x256xf32>
    %7 = vector.extract_strided_slice %1 {offsets = [3, 0], sizes = [1, 256], strides = [1, 1]} : vector<8x256xf32> to vector<1x256xf32>
    %8 = vector.extract_strided_slice %3 {offsets = [0, 0], sizes = [256, 1], strides = [1, 1]} : vector<256x8xf32> to vector<256x1xf32>
    %9 = vector.extract_strided_slice %3 {offsets = [0, 1], sizes = [256, 1], strides = [1, 1]} : vector<256x8xf32> to vector<256x1xf32>
    %10 = vector.extract_strided_slice %3 {offsets = [0, 2], sizes = [256, 1], strides = [1, 1]} : vector<256x8xf32> to vector<256x1xf32>
    %11 = vector.extract_strided_slice %3 {offsets = [0, 3], sizes = [256, 1], strides = [1, 1]} : vector<256x8xf32> to vector<256x1xf32>
    %12 = arith.subf %6, %4 : vector<1x256xf32>
    %cst = arith.constant 0.00999999977 : f32
    %13 = vector.broadcast %cst : f32 to vector<1x256xf32>
    %14 = arith.addf %12, %13 : vector<1x256xf32>
    %15 = arith.subf %7, %5 : vector<1x256xf32>
    %cst_5 = arith.constant 0.00999999977 : f32
    %16 = vector.broadcast %cst_5 : f32 to vector<1x256xf32>
    %17 = arith.addf %15, %16 : vector<1x256xf32>
    %18 = arith.mulf %14, %17 : vector<1x256xf32>
    %19 = arith.subf %10, %8 : vector<256x1xf32>
    %cst_6 = arith.constant 0.00999999977 : f32
    %20 = vector.broadcast %cst_6 : f32 to vector<256x1xf32>
    %21 = arith.addf %19, %20 : vector<256x1xf32>
    %22 = arith.subf %11, %9 : vector<256x1xf32>
    %cst_7 = arith.constant 0.00999999977 : f32
    %23 = vector.broadcast %cst_7 : f32 to vector<256x1xf32>
    %24 = arith.addf %22, %23 : vector<256x1xf32>
    %25 = arith.mulf %21, %24 : vector<256x1xf32>
    %26 = vector.broadcast %8 : vector<256x1xf32> to vector<256x256xf32>
    %27 = vector.broadcast %4 : vector<1x256xf32> to vector<256x256xf32>
    %28 = arith.maximumf %26, %27 : vector<256x256xf32>
    %29 = vector.broadcast %9 : vector<256x1xf32> to vector<256x256xf32>
    %30 = vector.broadcast %5 : vector<1x256xf32> to vector<256x256xf32>
    %31 = arith.maximumf %29, %30 : vector<256x256xf32>
    %32 = vector.broadcast %10 : vector<256x1xf32> to vector<256x256xf32>
    %33 = vector.broadcast %6 : vector<1x256xf32> to vector<256x256xf32>
    %34 = arith.minimumf %32, %33 : vector<256x256xf32>
    %35 = vector.broadcast %11 : vector<256x1xf32> to vector<256x256xf32>
    %36 = vector.broadcast %7 : vector<1x256xf32> to vector<256x256xf32>
    %37 = arith.minimumf %35, %36 : vector<256x256xf32>
    %38 = arith.subf %34, %28 : vector<256x256xf32>
    %cst_8 = arith.constant 0.00999999977 : f32
    %39 = vector.broadcast %cst_8 : f32 to vector<256x256xf32>
    %40 = arith.addf %38, %39 : vector<256x256xf32>
    %cst_9 = arith.constant 0.000000e+00 : f32
    %41 = vector.broadcast %cst_9 : f32 to vector<256x256xf32>
    %42 = arith.maximumf %41, %40 : vector<256x256xf32>
    %43 = arith.subf %37, %31 : vector<256x256xf32>
    %cst_10 = arith.constant 0.00999999977 : f32
    %44 = vector.broadcast %cst_10 : f32 to vector<256x256xf32>
    %45 = arith.addf %43, %44 : vector<256x256xf32>
    %cst_11 = arith.constant 0.000000e+00 : f32
    %46 = vector.broadcast %cst_11 : f32 to vector<256x256xf32>
    %47 = arith.maximumf %46, %45 : vector<256x256xf32>
    %48 = arith.mulf %42, %47 : vector<256x256xf32>
    %49 = vector.broadcast %25 : vector<256x1xf32> to vector<256x256xf32>
    %50 = vector.broadcast %18 : vector<1x256xf32> to vector<256x256xf32>
    %51 = arith.addf %49, %50 : vector<256x256xf32>
    %52 = arith.subf %51, %48 : vector<256x256xf32>
    %53 = arith.divf %48, %52 : vector<256x256xf32>
    %54 = tpu.iota {dimensions = array<i32: 1>} : vector<256x256xi32>
    %55 = tpu.iota {dimensions = array<i32: 0>} : vector<256x256xi32>
    %c192_i32 = arith.constant 192 : i32
    %56 = vector.broadcast %c192_i32 : i32 to vector<256x256xi32>
    %57 = arith.cmpi slt, %54, %56 : vector<256x256xi32>
    %c192_i32_12 = arith.constant 192 : i32
    %58 = vector.broadcast %c192_i32_12 : i32 to vector<256x256xi32>
    %59 = arith.cmpi slt, %55, %58 : vector<256x256xi32>
    %60 = arith.andi %57, %59 : vector<256x256xi1>
    %cst_13 = arith.constant 0.000000e+00 : f32
    %61 = vector.broadcast %cst_13 : f32 to vector<256x256xf32>
    %62 = arith.select %60, %53, %61 : vector<256x256xi1>, vector<256x256xf32>
    %c0_14 = arith.constant 0 : index
    %c0_15 = arith.constant 0 : index
    %c0_16 = arith.constant 0 : index
    %63 = vector.load %arg3[%c0_14, %c0_15, %c0_16] : memref<1x256x256xf32, #tpu.memory_space<vmem>>, vector<1x256x256xf32>
    %64 = vector.shape_cast %63 : vector<1x256x256xf32> to vector<256x256xf32>
    %65 = vector.shape_cast %62 : vector<256x256xf32> to vector<1x256x256xf32>
    tpu.vector_store %arg3[%c0_14, %c0_15, %c0_16], %65 {strides = array<i32>} : memref<1x256x256xf32, #tpu.memory_space<vmem>>, vector<1x256x256xf32>,
    return
  }
  func.func @transform_0(%arg0: i32) -> (i32, i32, i32) {
    %c0_i32 = arith.constant 0 : i32
    %c0_i32_0 = arith.constant 0 : i32
    %c0_i32_1 = arith.constant 0 : i32
    return %arg0, %c0_i32, %c0_i32_0 : i32, i32, i32
  }
  func.func @transform_1(%arg0: i32) -> (i32, i32, i32) {
    %c0_i32 = arith.constant 0 : i32
    %c0_i32_0 = arith.constant 0 : i32
    %c0_i32_1 = arith.constant 0 : i32
    return %arg0, %c0_i32, %c0_i32_0 : i32, i32, i32
  }
  func.func @transform_2(%arg0: i32) -> (i32, i32, i32) {
    %c0_i32 = arith.constant 0 : i32
    %c0_i32_0 = arith.constant 0 : i32
    %c0_i32_1 = arith.constant 0 : i32
    return %arg0, %c0_i32, %c0_i32_0 : i32, i32, i32
  }
}

</mosaic_0001>

<llo_original>
// kernel: custom-call.4
$region0: #{custom-call.4}
  %s0 = inlined_call_operand.vmem [shape: pred[2,256], index: 0, kind: output, shape index: {}]

// kernel: fwd.6
$region0: #{fwd.6}
  #allocation0 [shape = 'u32[]', space=smem, size = 0x4, offset = 0x4, fixed_abs, tag = 'smem constant byte address 0x4 - core index']
  #allocation1 [shape = 'u32[144,128]{1,0:T(1,128)}', space=vmem, size = 0x12000, scoped, tag = 'internal scratch']
  %s0 = inlined_call_operand.vmem [shape: bf16[8,9,9,16], index: 0, kind: input, shape index: {}]
  %s1 = inlined_call_operand.vmem [shape: bf16[9,16,128], index: 1, kind: input, shape index: {}]
  %s2 = inlined_call_operand.vmem [shape: f32[1,128], index: 2, kind: input, shape index: {}]
  %s3 = inlined_call_operand.vmem [shape: bf16[2,64,128], index: 3, kind: output, shape index: {}]
  %s4 = sld [smem:[#allocation0]]
  $region45: #{fwd.6} parent=0
    _
  %s6 = ssub.s32 1, %s4
  %s7 = scalar_select 0, %s6, %s4
  loop: start=0, step=1, limit=4
  $region2: #{fwd.6} parent=0 // loop_pre_header
    _
  $region3: #{fwd.6} parent=0 // loop_header
    %s9 = sphi 0, %s13
    %p10 = scmp.ge.s32.totalorder %s9, 4
    %s19 = sphi 0, %s21
    %s22 = sphi 0, %s19
    %s23 = sphi 0, %s22
    %s39 = sphi 0, %s23
    %s43 = sphi 0, %s43
    %s45 = sphi 0, %s43
    %s46 = sphi 0, %s45
    %s60 = sphi 0, %s46
    %s64 = sphi 0, %s64
    %s66 = sphi 0, %s64
    %s67 = sphi 0, %s66
    %s81 = sphi 0, %s67
    %s87 = sphi 0, %s89
    %s90 = sphi 0, %s87
    %s91 = sphi 0, %s90
    %s107 = sphi 0, %s91
  $region4: #{fwd.6} parent=0 // loop_header_branch
    %12 = sbr.rel (%p10) target = $region8
  $region5: #{fwd.6} parent=0 // loop_body
    %s14 = ssub.s32 %s9, 1
    %s15 = ssub.s32 %s9, 2
    %s16 = sadd.s32 %s9, 1
    %s17 = ssub.s32 %s9, %s16
    %p18 = scmp.eq.s32.totalorder %s17, 0
    %s20 = sadd.s32 %s19, 1
    %s21 = scalar_select %p18, %s19, %s20
    %p24 = pneg %p18
    %p25 = scmp.eq.s32.totalorder %s9, 1
    %p26 = por %p24, %p25
    %p27 = scmp.ne.s32.totalorder %s19, %s22
    %p28 = scmp.eq.s32.totalorder %s9, 0
    %p29 = por %p27, %p28
    %p30 = scmp.ne.s32.totalorder %s19, %s22
    %p31 = scmp.eq.s32.totalorder %s14, 1
    %p32 = por %p30, %p31
    %p33 = scmp.ne.s32.totalorder %s22, %s23
    %p34 = scmp.eq.s32.totalorder %s14, 0
    %p35 = por %p33, %p34
    %p36 = scmp.ne.s32.totalorder %s22, %s23
    %p37 = scmp.eq.s32.totalorder %s15, 1
    %p38 = por %p36, %p37
    %p40 = scmp.ne.s32.totalorder %s23, %s39
    %p41 = scmp.eq.s32.totalorder %s15, 0
    %p42 = por %p40, %p41
    %s44 = sadd.s32 %s43, 1
    %p47 = scmp.eq.s32.totalorder %s9, 1
    %p48 = scmp.ne.s32.totalorder %s43, %s45
    %p49 = scmp.eq.s32.totalorder %s9, 0
    %p50 = por %p48, %p49
    %p51 = scmp.ne.s32.totalorder %s43, %s45
    %p52 = scmp.eq.s32.totalorder %s14, 1
    %p53 = por %p51, %p52
    %p54 = scmp.ne.s32.totalorder %s45, %s46
    %p55 = scmp.eq.s32.totalorder %s14, 0
    %p56 = por %p54, %p55
    %p57 = scmp.ne.s32.totalorder %s45, %s46
    %p58 = scmp.eq.s32.totalorder %s15, 1
    %p59 = por %p57, %p58
    %p61 = scmp.ne.s32.totalorder %s46, %s60
    %p62 = scmp.eq.s32.totalorder %s15, 0
    %p63 = por %p61, %p62
    %s65 = sadd.s32 %s64, 1
    %p68 = scmp.eq.s32.totalorder %s9, 1
    %p69 = scmp.ne.s32.totalorder %s64, %s66
    %p70 = scmp.eq.s32.totalorder %s9, 0
    %p71 = por %p69, %p70
    %p72 = scmp.ne.s32.totalorder %s64, %s66
    %p73 = scmp.eq.s32.totalorder %s14, 1
    %p74 = por %p72, %p73
    %p75 = scmp.ne.s32.totalorder %s66, %s67
    %p76 = scmp.eq.s32.totalorder %s14, 0
    %p77 = por %p75, %p76
    %p78 = scmp.ne.s32.totalorder %s66, %s67
    %p79 = scmp.eq.s32.totalorder %s15, 1
    %p80 = por %p78, %p79
    %p82 = scmp.ne.s32.totalorder %s67, %s81
    %p83 = scmp.eq.s32.totalorder %s15, 0
    %p84 = por %p82, %p83
    %s85 = ssub.s32 %s9, %s16
    %p86 = scmp.eq.s32.totalorder %s85, 0
    %s88 = sadd.s32 %s87, 1
    %s89 = scalar_select %p86, %s87, %s88
    %p92 = pneg %p86
    %p93 = scmp.eq.s32.totalorder %s9, 1
    %p94 = por %p92, %p93
    %p95 = scmp.ne.s32.totalorder %s87, %s90
    %p96 = scmp.eq.s32.totalorder %s9, 0
    %p97 = por %p95, %p96
    %p98 = scmp.ne.s32.totalorder %s87, %s90
    %p99 = scmp.eq.s32.totalorder %s14, 1
    %p100 = por %p98, %p99
    %p101 = scmp.ne.s32.totalorder %s90, %s91
    %p102 = scmp.eq.s32.totalorder %s14, 0
    %p103 = por %p101, %p102
    %p104 = scmp.ne.s32.totalorder %s90, %s91
    %p105 = scmp.eq.s32.totalorder %s15, 1
    %p106 = por %p104, %p105
    %p108 = scmp.ne.s32.totalorder %s91, %s107
    %p109 = scmp.eq.s32.totalorder %s15, 0
    %p110 = por %p108, %p109
    %p111 = scmp.le.s32.totalorder 1, %s9
    %p112 = scmp.lt.s32.totalorder %s9, 3
    %p113 = pnand %p111, %p112
    %p114 = pneg %p113
    // Predicated region
    $region9: #{fwd.6} parent=5 // pred_check
      _
    $region10: #{fwd.6} parent=5 // pred_check_branch
      %116 = sbr.rel (%p113) target = $region12
    $region11: #{fwd.6} parent=5 // pred_region
      %s117 = ssub.s32 %s9, 1
      // Predicated region
      $region13: #{fwd.6} parent=11 // pred_check
        %p118 = pneg %p56
      $region14: #{fwd.6} parent=11 // pred_check_branch
        %120 = sbr.rel (%p118) target = $region16
      $region15: #{fwd.6} parent=11 // pred_region
        _
      $region16: #{fwd.6} parent=11 // pred_fallthru
        _
      // Predicated region
      $region17: #{fwd.6} parent=11 // pred_check
        %p121 = pneg %p77
      $region18: #{fwd.6} parent=11 // pred_check_branch
        %123 = sbr.rel (%p121) target = $region20
      $region19: #{fwd.6} parent=11 // pred_region
        _
      $region20: #{fwd.6} parent=11 // pred_fallthru
        _
    $region12: #{fwd.6} parent=5 // pred_fallthru
      _
    %p124 = scmp.lt.s32.totalorder %s9, 2
    // Predicated region
    $region21: #{fwd.6} parent=5 // pred_check
      %p125 = pneg %p124
    $region22: #{fwd.6} parent=5 // pred_check_branch
      %127 = sbr.rel (%p125) target = $region24
    $region23: #{fwd.6} parent=5 // pred_region
      // Predicated region
      $region25: #{fwd.6} parent=23 // pred_check
        %p128 = pneg %p29
      $region26: #{fwd.6} parent=23 // pred_check_branch
        %130 = sbr.rel (%p128) target = $region28
      $region27: #{fwd.6} parent=23 // pred_region
        %s131 = smul.u32 4, %s9
        %p132 = scmp.lt.s32.totalorder %s131, 7
        %s133 = scalar_select %p132, %s131, 7
        %s134 = smul.addr %s133, 18
        %s135 = smul.addr %s134, 4
        %s136 = scalar_lea.vmem %s0, %s135
        %s137 = smul.u32 4, %s9
      $region28: #{fwd.6} parent=23 // pred_fallthru
        _
    $region24: #{fwd.6} parent=5 // pred_fallthru
      _
    %p138 = scmp.le.s32.totalorder 1, %s9
    %p139 = scmp.lt.s32.totalorder %s9, 3
    %p140 = pnand %p138, %p139
    %p141 = pneg %p140
    // Predicated region
    $region29: #{fwd.6} parent=5 // pred_check
      _
    $region30: #{fwd.6} parent=5 // pred_check_branch
      %143 = sbr.rel (%p140) target = $region32
    $region31: #{fwd.6} parent=5 // pred_region
      %s144 = ssub.s32 %s9, 1
      %s145 = smul.u32 4, %s14
      %p146 = scmp.lt.s32.totalorder %s145, 7
      %s147 = scalar_select %p146, %s145, 7
      %s148 = smul.addr %s147, 18
      %s149 = smul.addr %s148, 4
      %s150 = scalar_lea.vmem %s0, %s149
      %p151 = pneg %p35
      %p152 = pneg %p32
      %p153 = pneg %p56
      %p154 = pneg %p53
      %p155 = pneg %p77
      %p156 = pneg %p74
      %p157 = pneg %p103
      %p158 = pneg %p100
      %p159 = scmp.lt.s32.totalorder %s14, 1
      %s160 = scalar_select %p159, %s14, 1
      %s161 = smul.addr %s160, 8
      %s162 = smul.addr %s161, 4
      %s163 = scalar_lea.vmem %s3, %s162
      %s164 = smul.u32 4, %s14
      %p165 = scmp.lt.s32.totalorder %s164, 7
      %s166 = scalar_select %p165, %s164, 7
      %s167 = smul.addr %s166, 18
      %s168 = smul.addr %s167, 4
      %s169 = scalar_lea.vmem %s0, %s168
      %s170 = smul.u32 4, %s14
      %p171 = scmp.lt.s32.totalorder %s14, 1
      %s172 = scalar_select %p171, %s14, 1
      %s173 = smul.addr %s172, 8
      %s174 = smul.addr %s173, 4
      %s175 = scalar_lea.vmem %s3, %s174
      %v177 = vld [vmem:[%s169] sm:$0xf]
      %v178 = vld [vmem:[%s169 + $0x4] sm:$0x1]
      %v179 = vld [vmem:[%s169 + $0x8] sm:$0xf]
      %v180 = vld [vmem:[%s169 + $0xc] sm:$0x1]
      %v181 = vld [vmem:[%s169 + $0x10] sm:$0xf]
      %v182 = vld [vmem:[%s169 + $0x14] sm:$0x1]
      %v183 = vld [vmem:[%s169 + $0x18] sm:$0xf]
      %v184 = vld [vmem:[%s169 + $0x1c] sm:$0x1]
      %v185 = vld [vmem:[%s169 + $0x20] sm:$0xf]
      %v186 = vld [vmem:[%s169 + $0x24] sm:$0x1]
      %v187 = vld [vmem:[%s169 + $0x28] sm:$0xf]
      %v188 = vld [vmem:[%s169 + $0x2c] sm:$0x1]
      %v189 = vld [vmem:[%s169 + $0x30] sm:$0xf]
      %v190 = vld [vmem:[%s169 + $0x34] sm:$0x1]
      %v191 = vld [vmem:[%s169 + $0x38] sm:$0xf]
      %v192 = vld [vmem:[%s169 + $0x3c] sm:$0x1]
      %v193 = vld [vmem:[%s169 + $0x40] sm:$0xf]
      %v194 = vld [vmem:[%s169 + $0x44] sm:$0x1]
      %v195 = vunpack.c.l.bf16 %v177
      %v196 = vunpack.c.l.bf16 %v178
      %v197 = vunpack.c.l.bf16 %v179
      %v198 = vunpack.c.l.bf16 %v180
      %v199 = vunpack.c.l.bf16 %v181
      %v200 = vunpack.c.l.bf16 %v182
      %v201 = vunpack.c.l.bf16 %v183
      %v202 = vunpack.c.l.bf16 %v184
      %v203 = vunpack.c.l.bf16 %v185
      %v204 = vunpack.c.l.bf16 %v186
      %v205 = vunpack.c.l.bf16 %v187
      %v206 = vunpack.c.l.bf16 %v188
      %v207 = vunpack.c.l.bf16 %v189
      %v208 = vunpack.c.l.bf16 %v190
      %v209 = vunpack.c.l.bf16 %v191
      %v210 = vunpack.c.l.bf16 %v192
      %v211 = vunpack.c.l.bf16 %v193
      %v212 = vunpack.c.l.bf16 %v194
      %s213 = scalar_lea.vmem %s169, 72
      %v214 = vld [vmem:[%s213] sm:$0xf]
      %v215 = vld [vmem:[%s213 + $0x8] sm:$0xf]
      %v216 = vld [vmem:[%s213 + $0x10] sm:$0xf]
      %v217 = vld [vmem:[%s213 + $0x18] sm:$0xf]
      %v218 = vld [vmem:[%s213 + $0x20] sm:$0xf]
      %v219 = vld [vmem:[%s213 + $0x28] sm:$0xf]
      %v220 = vld [vmem:[%s213 + $0x30] sm:$0xf]
      %v221 = vld [vmem:[%s213 + $0x38] sm:$0xf]
      %v222 = vld [vmem:[%s213 + $0x40] sm:$0xf]
      %v223 = vunpack.c.l.bf16 %v214
      %v224 = vunpack.c.l.bf16 %v215
      %v225 = vunpack.c.l.bf16 %v216
      %v226 = vunpack.c.l.bf16 %v217
      %v227 = vunpack.c.l.bf16 %v218
      %v228 = vunpack.c.l.bf16 %v219
      %v229 = vunpack.c.l.bf16 %v220
      %v230 = vunpack.c.l.bf16 %v221
      %v231 = vunpack.c.l.bf16 %v222
      %s232 = scalar_lea.vmem %s169, 144
      %v233 = vld [vmem:[%s232] sm:$0xf]
      %v234 = vld [vmem:[%s232 + $0x4] sm:$0x1]
      %v235 = vld [vmem:[%s232 + $0x8] sm:$0xf]
      %v236 = vld [vmem:[%s232 + $0xc] sm:$0x1]
      %v237 = vld [vmem:[%s232 + $0x10] sm:$0xf]
      %v238 = vld [vmem:[%s232 + $0x14] sm:$0x1]
      %v239 = vld [vmem:[%s232 + $0x18] sm:$0xf]
      %v240 = vld [vmem:[%s232 + $0x1c] sm:$0x1]
      %v241 = vld [vmem:[%s232 + $0x20] sm:$0xf]
      %v242 = vld [vmem:[%s232 + $0x24] sm:$0x1]
      %v243 = vld [vmem:[%s232 + $0x28] sm:$0xf]
      %v244 = vld [vmem:[%s232 + $0x2c] sm:$0x1]
      %v245 = vld [vmem:[%s232 + $0x30] sm:$0xf]
      %v246 = vld [vmem:[%s232 + $0x34] sm:$0x1]
      %v247 = vld [vmem:[%s232 + $0x38] sm:$0xf]
      %v248 = vld [vmem:[%s232 + $0x3c] sm:$0x1]
      %v249 = vunpack.c.l.bf16 %v233
      %v250 = vunpack.c.l.bf16 %v234
      %v251 = vunpack.c.l.bf16 %v235
      %v252 = vunpack.c.l.bf16 %v236
      %v253 = vunpack.c.l.bf16 %v237
      %v254 = vunpack.c.l.bf16 %v238
      %v255 = vunpack.c.l.bf16 %v239
      %v256 = vunpack.c.l.bf16 %v240
      %v257 = vunpack.c.l.bf16 %v241
      %v258 = vunpack.c.l.bf16 %v242
      %v259 = vunpack.c.l.bf16 %v243
      %v260 = vunpack.c.l.bf16 %v244
      %v261 = vunpack.c.l.bf16 %v245
      %v262 = vunpack.c.l.bf16 %v246
      %v263 = vunpack.c.l.bf16 %v247
      %v264 = vunpack.c.l.bf16 %v248
      %s265 = scalar_lea.vmem %s169, 216
      %v266 = vld [vmem:[%s265] sm:$0xf]
      %v267 = vld [vmem:[%s265 + $0x8] sm:$0xf]
      %v268 = vld [vmem:[%s265 + $0x10] sm:$0xf]
      %v269 = vld [vmem:[%s265 + $0x18] sm:$0xf]
      %v270 = vld [vmem:[%s265 + $0x20] sm:$0xf]
      %v271 = vld [vmem:[%s265 + $0x28] sm:$0xf]
      %v272 = vld [vmem:[%s265 + $0x30] sm:$0xf]
      %v273 = vld [vmem:[%s265 + $0x38] sm:$0xf]
      %v274 = vunpack.c.l.bf16 %v266
      %v275 = vunpack.c.l.bf16 %v267
      %v276 = vunpack.c.l.bf16 %v268
      %v277 = vunpack.c.l.bf16 %v269
      %v278 = vunpack.c.l.bf16 %v270
      %v279 = vunpack.c.l.bf16 %v271
      %v280 = vunpack.c.l.bf16 %v272
      %v281 = vunpack.c.l.bf16 %v273
      %v282 = vpack.c.bf16 %v197, %v195
      %v283 = vpack.c.bf16 %v201, %v199
      %v284 = vpack.c.bf16 %v205, %v203
      %v285 = vpack.c.bf16 %v209, %v207
      %v286 = vld [vmem:[%s1] sm:$0xf]
      %v287 = vld [vmem:[%s1 + $0x4] sm:$0xf]
      %v288 = vpack.c.bf16 %v224, %v223
      %v289 = vpack.c.bf16 %v226, %v225
      %v290 = vpack.c.bf16 %v228, %v227
      %v291 = vpack.c.bf16 %v230, %v229
      %s292 = scalar_lea.vmem %s1, 8
      %v293 = vld [vmem:[%s292] sm:$0xf]
      %v294 = vld [vmem:[%s292 + $0x4] sm:$0xf]
      %v297 = vunpack.c.l.b16 %v293
      %v298 = vunpack.c.l.b16 %v294
      %v299 = vpack.c.b16 %v298, %v297
      %vm301 = vcmask 130048
      %v303 = vsel %vm301, %v288, 0
      %v306 = vsel %vm301, %v289, 0
      %v309 = vsel %vm301, %v290, 0
      %v312 = vsel %vm301, %v291, 0
      %314 = vmatprep.subr.bf16.mxu0 0
      %315 = vmatpush1.bf16.msra.mxu0 %v299
      %316 = vmatprep.subr.bf16.mxu0 0
      %317 = vmatpush1.bf16.msra.mxu0 0
      %318 = vmatprep.subr.bf16.mxu0 0
      %319 = vmatpush1.bf16.msra.mxu0 0
      %320 = vmatprep.subr.bf16.mxu0 0
      %321 = vmatpush1.bf16.msra.mxu0 0
      %322 = vmatprep.subr.bf16.mxu0 0
      %323 = vmatpush1.bf16.msra.mxu0 0
      %324 = vmatprep.subr.bf16.mxu0 0
      %325 = vmatpush1.bf16.msra.mxu0 0
      %326 = vmatprep.subr.bf16.mxu0 0
      %327 = vmatpush1.bf16.msra.mxu0 0
      %328 = vmatprep.subr.bf16.mxu0 0
      %329 = vmatpush1.bf16.msra.mxu0 0
      %330 = vmatprep.subr.bf16.mxu0 0
      %331 = vmatpush1.bf16.msra.mxu0 0
      %332 = vmatprep.subr.bf16.mxu0 0
      %333 = vmatpush1.bf16.msra.mxu0 0
      %334 = vmatprep.subr.bf16.mxu0 0
      %335 = vmatpush1.bf16.msra.mxu0 0
      %336 = vmatprep.subr.bf16.mxu0 0
      %337 = vmatpush1.bf16.msra.mxu0 0
      %338 = vmatprep.subr.bf16.mxu0 0
      %339 = vmatpush1.bf16.msra.mxu0 0
      %340 = vmatprep.subr.bf16.mxu0 0
      %341 = vmatpush1.bf16.msra.mxu0 0
      %342 = vmatprep.subr.bf16.mxu0 0
      %343 = vmatpush1.bf16.msra.mxu0 0
      %344 = vmatprep.subr.bf16.mxu0 0
      %345 = vmatpush1.bf16.msra.mxu0 0
      %346 = vmatprep.mubr.bf16.mxu0 0
      %347 = vmatmul.mubr.bf16.gmra.mrb[0].mxu0 %v303
      %v348 = vpop.f32.mrb[0].mxu0
      %v349 = vadd.f32 0.0, %v348
      %v350 = vpop.f32.mrb[0].mxu0
      %v351 = vpop.f32.mrb[0].mxu0
      %v352 = vadd.f32 0.0, %v351
      %v353 = vpop.f32.mrb[0].mxu0
      %354 = vmatprep.mubr.bf16.mxu0 0
      %355 = vmatmul.mubr.bf16.gmra.mrb[0].mxu0 %v306
      %v356 = vpop.f32.mrb[0].mxu0
      %v357 = vadd.f32 0.0, %v356
      %v358 = vpop.f32.mrb[0].mxu0
      %v359 = vpop.f32.mrb[0].mxu0
      %v360 = vadd.f32 0.0, %v359
      %v361 = vpop.f32.mrb[0].mxu0
      %362 = vmatprep.mubr.bf16.mxu0 0
      %363 = vmatmul.mubr.bf16.gmra.mrb[0].mxu0 %v309
      %v364 = vpop.f32.mrb[0].mxu0
      %v365 = vadd.f32 0.0, %v364
      %v366 = vpop.f32.mrb[0].mxu0
      %v367 = vpop.f32.mrb[0].mxu0
      %v368 = vadd.f32 0.0, %v367
      %v369 = vpop.f32.mrb[0].mxu0
      %370 = vmatprep.mubr.bf16.mxu0 0
      %371 = vmatmul.mubr.bf16.gmra.mrb[0].mxu0 %v312
      %v372 = vpop.f32.mrb[0].mxu0
      %v373 = vadd.f32 0.0, %v372
      %v374 = vpop.f32.mrb[0].mxu0
      %v375 = vpop.f32.mrb[0].mxu0
      %v376 = vadd.f32 0.0, %v375
      %v377 = vpop.f32.mrb[0].mxu0
      %378 = vdwg.mxu0
      %v381 = vunpack.c.l.b16 %v286
      %v382 = vunpack.c.l.b16 %v287
      %v383 = vpack.c.b16 %v382, %v381
      %v386 = vsel %vm301, %v282, 0
      %v389 = vsel %vm301, %v283, 0
      %v392 = vsel %vm301, %v284, 0
      %v395 = vsel %vm301, %v285, 0
      %397 = vmatprep.subr.bf16.mxu0 0
      %398 = vmatpush1.bf16.msra.mxu0 %v383
      %399 = vmatprep.subr.bf16.mxu0 0
      %400 = vmatpush1.bf16.msra.mxu0 0
      %401 = vmatprep.subr.bf16.mxu0 0
      %402 = vmatpush1.bf16.msra.mxu0 0
      %403 = vmatprep.subr.bf16.mxu0 0
      %404 = vmatpush1.bf16.msra.mxu0 0
      %405 = vmatprep.subr.bf16.mxu0 0
      %406 = vmatpush1.bf16.msra.mxu0 0
      %407 = vmatprep.subr.bf16.mxu0 0
      %408 = vmatpush1.bf16.msra.mxu0 0
      %409 = vmatprep.subr.bf16.mxu0 0
      %410 = vmatpush1.bf16.msra.mxu0 0
      %411 = vmatprep.subr.bf16.mxu0 0
      %412 = vmatpush1.bf16.msra.mxu0 0
      %413 = vmatprep.subr.bf16.mxu0 0
      %414 = vmatpush1.bf16.msra.mxu0 0
      %415 = vmatprep.subr.bf16.mxu0 0
      %416 = vmatpush1.bf16.msra.mxu0 0
      %417 = vmatprep.subr.bf16.mxu0 0
      %418 = vmatpush1.bf16.msra.mxu0 0
      %419 = vmatprep.subr.bf16.mxu0 0
      %420 = vmatpush1.bf16.msra.mxu0 0
      %421 = vmatprep.subr.bf16.mxu0 0
      %422 = vmatpush1.bf16.msra.mxu0 0
      %423 = vmatprep.subr.bf16.mxu0 0
      %424 = vmatpush1.bf16.msra.mxu0 0
      %425 = vmatprep.subr.bf16.mxu0 0
      %426 = vmatpush1.bf16.msra.mxu0 0
      %427 = vmatprep.subr.bf16.mxu0 0
      %428 = vmatpush1.bf16.msra.mxu0 0
      %429 = vmatprep.mubr.bf16.mxu0 0
      %430 = vmatmul.mubr.bf16.gmra.mrb[0].mxu0 %v386
      %v431 = vpop.f32.mrb[0].mxu0
      %v432 = vadd.f32 %v349, %v431
      %v433 = vpop.f32.mrb[0].mxu0
      %v434 = vpop.f32.mrb[0].mxu0
      %v435 = vadd.f32 %v352, %v434
      %v436 = vpop.f32.mrb[0].mxu0
      %437 = vmatprep.mubr.bf16.mxu0 0
      %438 = vmatmul.mubr.bf16.gmra.mrb[0].mxu0 %v389
      %v439 = vpop.f32.mrb[0].mxu0
      %v440 = vadd.f32 %v357, %v439
      %v441 = vpop.f32.mrb[0].mxu0
      %v442 = vpop.f32.mrb[0].mxu0
      %v443 = vadd.f32 %v360, %v442
      %v444 = vpop.f32.mrb[0].mxu0
      %445 = vmatprep.mubr.bf16.mxu0 0
      %446 = vmatmul.mubr.bf16.gmra.mrb[0].mxu0 %v392
      %v447 = vpop.f32.mrb[0].mxu0
      %v448 = vadd.f32 %v365, %v447
      %v449 = vpop.f32.mrb[0].mxu0
      %v450 = vpop.f32.mrb[0].mxu0
      %v451 = vadd.f32 %v368, %v450
      %v452 = vpop.f32.mrb[0].mxu0
      %453 = vmatprep.mubr.bf16.mxu0 0
      %454 = vmatmul.mubr.bf16.gmra.mrb[0].mxu0 %v395
      %v455 = vpop.f32.mrb[0].mxu0
      %v456 = vadd.f32 %v373, %v455
      %v457 = vpop.f32.mrb[0].mxu0
      %v458 = vpop.f32.mrb[0].mxu0
      %v459 = vadd.f32 %v376, %v458
      %v460 = vpop.f32.mrb[0].mxu0
      %461 = vdwg.mxu0
      %vm478 = vcmask 1046528
      %v479 = vrot.slane %v195, 1
      %v480 = vrot.slane %v196, 1
      %v481 = vsel %vm478, %v479, %v480
      %v482 = vrot.slane %v197, 1
      %v483 = vrot.slane %v198, 1
      %v484 = vsel %vm478, %v482, %v483
      %v485 = vrot.slane %v199, 1
      %v486 = vrot.slane %v200, 1
      %v487 = vsel %vm478, %v485, %v486
      %v488 = vrot.slane %v201, 1
      %v489 = vrot.slane %v202, 1
      %v490 = vsel %vm478, %v488, %v489
      %v491 = vrot.slane %v203, 1
      %v492 = vrot.slane %v204, 1
      %v493 = vsel %vm478, %v491, %v492
      %v494 = vrot.slane %v205, 1
      %v495 = vrot.slane %v206, 1
      %v496 = vsel %vm478, %v494, %v495
      %v497 = vrot.slane %v207, 1
      %v498 = vrot.slane %v208, 1
      %v499 = vsel %vm478, %v497, %v498
      %v500 = vrot.slane %v209, 1
      %v501 = vrot.slane %v210, 1
      %v502 = vsel %vm478, %v500, %v501
      %v511 = vpack.c.bf16 %v484, %v481
      %v512 = vpack.c.bf16 %v490, %v487
      %v513 = vpack.c.bf16 %v496, %v493
      %v514 = vpack.c.bf16 %v502, %v499
      %s515 = scalar_lea.vmem %s1, 16
      %v516 = vld [vmem:[%s515] sm:$0xf]
      %v517 = vld [vmem:[%s515 + $0x4] sm:$0xf]
      %v520 = vunpack.c.l.b16 %v516
      %v521 = vunpack.c.l.b16 %v517
      %v522 = vpack.c.b16 %v521, %v520
      %v525 = vsel %vm301, %v511, 0
      %v528 = vsel %vm301, %v512, 0
      %v531 = vsel %vm301, %v513, 0
      %v534 = vsel %vm301, %v514, 0
      %536 = vmatprep.subr.bf16.mxu0 0
      %537 = vmatpush1.bf16.msra.mxu0 %v522
      %538 = vmatprep.subr.bf16.mxu0 0
      %539 = vmatpush1.bf16.msra.mxu0 0
      %540 = vmatprep.subr.bf16.mxu0 0
      %541 = vmatpush1.bf16.msra.mxu0 0
      %542 = vmatprep.subr.bf16.mxu0 0
      %543 = vmatpush1.bf16.msra.mxu0 0
      %544 = vmatprep.subr.bf16.mxu0 0
      %545 = vmatpush1.bf16.msra.mxu0 0
      %546 = vmatprep.subr.bf16.mxu0 0
      %547 = vmatpush1.bf16.msra.mxu0 0
      %548 = vmatprep.subr.bf16.mxu0 0
      %549 = vmatpush1.bf16.msra.mxu0 0
      %550 = vmatprep.subr.bf16.mxu0 0
      %551 = vmatpush1.bf16.msra.mxu0 0
      %552 = vmatprep.subr.bf16.mxu0 0
      %553 = vmatpush1.bf16.msra.mxu0 0
      %554 = vmatprep.subr.bf16.mxu0 0
      %555 = vmatpush1.bf16.msra.mxu0 0
      %556 = vmatprep.subr.bf16.mxu0 0
      %557 = vmatpush1.bf16.msra.mxu0 0
      %558 = vmatprep.subr.bf16.mxu0 0
      %559 = vmatpush1.bf16.msra.mxu0 0
      %560 = vmatprep.subr.bf16.mxu0 0
      %561 = vmatpush1.bf16.msra.mxu0 0
      %562 = vmatprep.subr.bf16.mxu0 0
      %563 = vmatpush1.bf16.msra.mxu0 0
      %564 = vmatprep.subr.bf16.mxu0 0
      %565 = vmatpush1.bf16.msra.mxu0 0
      %566 = vmatprep.subr.bf16.mxu0 0
      %567 = vmatpush1.bf16.msra.mxu0 0
      %568 = vmatprep.mubr.bf16.mxu0 0
      %569 = vmatmul.mubr.bf16.gmra.mrb[0].mxu0 %v525
      %v570 = vpop.f32.mrb[0].mxu0
      %v571 = vadd.f32 0.0, %v570
      %v572 = vpop.f32.mrb[0].mxu0
      %v573 = vpop.f32.mrb[0].mxu0
      %v574 = vadd.f32 0.0, %v573
      %v575 = vpop.f32.mrb[0].mxu0
      %576 = vmatprep.mubr.bf16.mxu0 0
      %577 = vmatmul.mubr.bf16.gmra.mrb[0].mxu0 %v528
      %v578 = vpop.f32.mrb[0].mxu0
      %v579 = vadd.f32 0.0, %v578
      %v580 = vpop.f32.mrb[0].mxu0
      %v581 = vpop.f32.mrb[0].mxu0
      %v582 = vadd.f32 0.0, %v581
      %v583 = vpop.f32.mrb[0].mxu0
      %584 = vmatprep.mubr.bf16.mxu0 0
      %585 = vmatmul.mubr.bf16.gmra.mrb[0].mxu0 %v531
      %v586 = vpop.f32.mrb[0].mxu0
      %v587 = vadd.f32 0.0, %v586
      %v588 = vpop.f32.mrb[0].mxu0
      %v589 = vpop.f32.mrb[0].mxu0
      %v590 = vadd.f32 0.0, %v589
      %v591 = vpop.f32.mrb[0].mxu0
      %592 = vmatprep.mubr.bf16.mxu0 0
      %593 = vmatmul.mubr.bf16.gmra.mrb[0].mxu0 %v534
      %v594 = vpop.f32.mrb[0].mxu0
      %v595 = vadd.f32 0.0, %v594
      %v596 = vpop.f32.mrb[0].mxu0
      %v597 = vpop.f32.mrb[0].mxu0
      %v598 = vadd.f32 0.0, %v597
      %v599 = vpop.f32.mrb[0].mxu0
      %600 = vdwg.mxu0
      %v601 = vadd.f32 %v432, %v571
      %v602 = vadd.f32 %v435, %v574
      %v603 = vadd.f32 %v440, %v579
      %v604 = vadd.f32 %v443, %v582
      %v605 = vadd.f32 %v448, %v587
      %v606 = vadd.f32 %v451, %v590
      %v607 = vadd.f32 %v456, %v595
      %v608 = vadd.f32 %v459, %v598
      %v609 = vpack.c.bf16 %v251, %v249
      %v610 = vpack.c.bf16 %v255, %v253
      %v611 = vpack.c.bf16 %v259, %v257
      %v612 = vpack.c.bf16 %v263, %v261
      %s613 = scalar_lea.vmem %s1, 24
      %v614 = vld [vmem:[%s613] sm:$0xf]
      %v615 = vld [vmem:[%s613 + $0x4] sm:$0xf]
      %v618 = vunpack.c.l.b16 %v614
      %v619 = vunpack.c.l.b16 %v615
      %v620 = vpack.c.b16 %v619, %v618
      %v623 = vsel %vm301, %v609, 0
      %v626 = vsel %vm301, %v610, 0
      %v629 = vsel %vm301, %v611, 0
      %v632 = vsel %vm301, %v612, 0
      %634 = vmatprep.subr.bf16.mxu0 0
      %635 = vmatpush1.bf16.msra.mxu0 %v620
      %636 = vmatprep.subr.bf16.mxu0 0
      %637 = vmatpush1.bf16.msra.mxu0 0
      %638 = vmatprep.subr.bf16.mxu0 0
      %639 = vmatpush1.bf16.msra.mxu0 0
      %640 = vmatprep.subr.bf16.mxu0 0
      %641 = vmatpush1.bf16.msra.mxu0 0
      %642 = vmatprep.subr.bf16.mxu0 0
      %643 = vmatpush1.bf16.msra.mxu0 0
      %644 = vmatprep.subr.bf16.mxu0 0
      %645 = vmatpush1.bf16.msra.mxu0 0
      %646 = vmatprep.subr.bf16.mxu0 0
      %647 = vmatpush1.bf16.msra.mxu0 0
      %648 = vmatprep.subr.bf16.mxu0 0
      %649 = vmatpush1.bf16.msra.mxu0 0
      %650 = vmatprep.subr.bf16.mxu0 0
      %651 = vmatpush1.bf16.msra.mxu0 0
      %652 = vmatprep.subr.bf16.mxu0 0
      %653 = vmatpush1.bf16.msra.mxu0 0
      %654 = vmatprep.subr.bf16.mxu0 0
      %655 = vmatpush1.bf16.msra.mxu0 0
      %656 = vmatprep.subr.bf16.mxu0 0
      %657 = vmatpush1.bf16.msra.mxu0 0
      %658 = vmatprep.subr.bf16.mxu0 0
      %659 = vmatpush1.bf16.msra.mxu0 0
      %660 = vmatprep.subr.bf16.mxu0 0
      %661 = vmatpush1.bf16.msra.mxu0 0
      %662 = vmatprep.subr.bf16.mxu0 0
      %663 = vmatpush1.bf16.msra.mxu0 0
      %664 = vmatprep.subr.bf16.mxu0 0
      %665 = vmatpush1.bf16.msra.mxu0 0
      %666 = vmatprep.mubr.bf16.mxu0 0
      %667 = vmatmul.mubr.bf16.gmra.mrb[0].mxu0 %v623
      %v668 = vpop.f32.mrb[0].mxu0
      %v669 = vadd.f32 0.0, %v668
      %v670 = vpop.f32.mrb[0].mxu0
      %v671 = vpop.f32.mrb[0].mxu0
      %v672 = vadd.f32 0.0, %v671
      %v673 = vpop.f32.mrb[0].mxu0
      %674 = vmatprep.mubr.bf16.mxu0 0
      %675 = vmatmul.mubr.bf16.gmra.mrb[0].mxu0 %v626
      %v676 = vpop.f32.mrb[0].mxu0
      %v677 = vadd.f32 0.0, %v676
      %v678 = vpop.f32.mrb[0].mxu0
      %v679 = vpop.f32.mrb[0].mxu0
      %v680 = vadd.f32 0.0, %v679
      %v681 = vpop.f32.mrb[0].mxu0
      %682 = vmatprep.mubr.bf16.mxu0 0
      %683 = vmatmul.mubr.bf16.gmra.mrb[0].mxu0 %v629
      %v684 = vpop.f32.mrb[0].mxu0
      %v685 = vadd.f32 0.0, %v684
      %v686 = vpop.f32.mrb[0].mxu0
      %v687 = vpop.f32.mrb[0].mxu0
      %v688 = vadd.f32 0.0, %v687
      %v689 = vpop.f32.mrb[0].mxu0
      %690 = vmatprep.mubr.bf16.mxu0 0
      %691 = vmatmul.mubr.bf16.gmra.mrb[0].mxu0 %v632
      %v692 = vpop.f32.mrb[0].mxu0
      %v693 = vadd.f32 0.0, %v692
      %v694 = vpop.f32.mrb[0].mxu0
      %v695 = vpop.f32.mrb[0].mxu0
      %v696 = vadd.f32 0.0, %v695
      %v697 = vpop.f32.mrb[0].mxu0
      %698 = vdwg.mxu0
      %v699 = vadd.f32 %v601, %v669
      %v700 = vadd.f32 %v602, %v672
      %v701 = vadd.f32 %v603, %v677
      %v702 = vadd.f32 %v604, %v680
      %v703 = vadd.f32 %v605, %v685
      %v704 = vadd.f32 %v606, %v688
      %v705 = vadd.f32 %v607, %v693
      %v706 = vadd.f32 %v608, %v696
      %v707 = vpack.c.bf16 %v275, %v274
      %v708 = vpack.c.bf16 %v277, %v276
      %v709 = vpack.c.bf16 %v279, %v278
      %v710 = vpack.c.bf16 %v281, %v280
      %s711 = scalar_lea.vmem %s1, 32
      %v712 = vld [vmem:[%s711] sm:$0xf]
      %v713 = vld [vmem:[%s711 + $0x4] sm:$0xf]
      %v716 = vunpack.c.l.b16 %v712
      %v717 = vunpack.c.l.b16 %v713
      %v718 = vpack.c.b16 %v717, %v716
      %v721 = vsel %vm301, %v707, 0
      %v724 = vsel %vm301, %v708, 0
      %v727 = vsel %vm301, %v709, 0
      %v730 = vsel %vm301, %v710, 0
      %732 = vmatprep.subr.bf16.mxu0 0
      %733 = vmatpush1.bf16.msra.mxu0 %v718
      %734 = vmatprep.subr.bf16.mxu0 0
      %735 = vmatpush1.bf16.msra.mxu0 0
      %736 = vmatprep.subr.bf16.mxu0 0
      %737 = vmatpush1.bf16.msra.mxu0 0
      %738 = vmatprep.subr.bf16.mxu0 0
      %739 = vmatpush1.bf16.msra.mxu0 0
      %740 = vmatprep.subr.bf16.mxu0 0
      %741 = vmatpush1.bf16.msra.mxu0 0
      %742 = vmatprep.subr.bf16.mxu0 0
      %743 = vmatpush1.bf16.msra.mxu0 0
      %744 = vmatprep.subr.bf16.mxu0 0
      %745 = vmatpush1.bf16.msra.mxu0 0
      %746 = vmatprep.subr.bf16.mxu0 0
      %747 = vmatpush1.bf16.msra.mxu0 0
      %748 = vmatprep.subr.bf16.mxu0 0
      %749 = vmatpush1.bf16.msra.mxu0 0
      %750 = vmatprep.subr.bf16.mxu0 0
      %751 = vmatpush1.bf16.msra.mxu0 0
      %752 = vmatprep.subr.bf16.mxu0 0
      %753 = vmatpush1.bf16.msra.mxu0 0
      %754 = vmatprep.subr.bf16.mxu0 0
      %755 = vmatpush1.bf16.msra.mxu0 0
      %756 = vmatprep.subr.bf16.mxu0 0
      %757 = vmatpush1.bf16.msra.mxu0 0
      %758 = vmatprep.subr.bf16.mxu0 0
      %759 = vmatpush1.bf16.msra.mxu0 0
      %760 = vmatprep.subr.bf16.mxu0 0
      %761 = vmatpush1.bf16.msra.mxu0 0
      %762 = vmatprep.subr.bf16.mxu0 0
      %763 = vmatpush1.bf16.msra.mxu0 0
      %764 = vmatprep.mubr.bf16.mxu0 0
      %765 = vmatmul.mubr.bf16.gmra.mrb[0].mxu0 %v721
      %v766 = vpop.f32.mrb[0].mxu0
      %v767 = vadd.f32 0.0, %v766
      %v768 = vpop.f32.mrb[0].mxu0
      %v769 = vpop.f32.mrb[0].mxu0
      %v770 = vadd.f32 0.0, %v769
      %v771 = vpop.f32.mrb[0].mxu0
      %772 = vmatprep.mubr.bf16.mxu0 0
      %773 = vmatmul.mubr.bf16.gmra.mrb[0].mxu0 %v724
      %v774 = vpop.f32.mrb[0].mxu0
      %v775 = vadd.f32 0.0, %v774
      %v776 = vpop.f32.mrb[0].mxu0
      %v777 = vpop.f32.mrb[0].mxu0
      %v778 = vadd.f32 0.0, %v777
      %v779 = vpop.f32.mrb[0].mxu0
      %780 = vmatprep.mubr.bf16.mxu0 0
      %781 = vmatmul.mubr.bf16.gmra.mrb[0].mxu0 %v727
      %v782 = vpop.f32.mrb[0].mxu0
      %v783 = vadd.f32 0.0, %v782
      %v784 = vpop.f32.mrb[0].mxu0
      %v785 = vpop.f32.mrb[0].mxu0
      %v786 = vadd.f32 0.0, %v785
      %v787 = vpop.f32.mrb[0].mxu0
      %788 = vmatprep.mubr.bf16.mxu0 0
      %789 = vmatmul.mubr.bf16.gmra.mrb[0].mxu0 %v730
      %v790 = vpop.f32.mrb[0].mxu0
      %v791 = vadd.f32 0.0, %v790
      %v792 = vpop.f32.mrb[0].mxu0
      %v793 = vpop.f32.mrb[0].mxu0
      %v794 = vadd.f32 0.0, %v793
      %v795 = vpop.f32.mrb[0].mxu0
      %796 = vdwg.mxu0
      %v797 = vadd.f32 %v699, %v767
      %v798 = vadd.f32 %v700, %v770
      %v799 = vadd.f32 %v701, %v775
      %v800 = vadd.f32 %v702, %v778
      %v801 = vadd.f32 %v703, %v783
      %v802 = vadd.f32 %v704, %v786
      %v803 = vadd.f32 %v705, %v791
      %v804 = vadd.f32 %v706, %v794
      %v821 = vrot.slane %v249, 1
      %v822 = vrot.slane %v250, 1
      %v823 = vsel %vm478, %v821, %v822
      %v824 = vrot.slane %v251, 1
      %v825 = vrot.slane %v252, 1
      %v826 = vsel %vm478, %v824, %v825
      %v827 = vrot.slane %v253, 1
      %v828 = vrot.slane %v254, 1
      %v829 = vsel %vm478, %v827, %v828
      %v830 = vrot.slane %v255, 1
      %v831 = vrot.slane %v256, 1
      %v832 = vsel %vm478, %v830, %v831
      %v833 = vrot.slane %v257, 1
      %v834 = vrot.slane %v258, 1
      %v835 = vsel %vm478, %v833, %v834
      %v836 = vrot.slane %v259, 1
      %v837 = vrot.slane %v260, 1
      %v838 = vsel %vm478, %v836, %v837
      %v839 = vrot.slane %v261, 1
      %v840 = vrot.slane %v262, 1
      %v841 = vsel %vm478, %v839, %v840
      %v842 = vrot.slane %v263, 1
      %v843 = vrot.slane %v264, 1
      %v844 = vsel %vm478, %v842, %v843
      %v853 = vpack.c.bf16 %v826, %v823
      %v854 = vpack.c.bf16 %v832, %v829
      %v855 = vpack.c.bf16 %v838, %v835
      %v856 = vpack.c.bf16 %v844, %v841
      %s857 = scalar_lea.vmem %s1, 40
      %v858 = vld [vmem:[%s857] sm:$0xf]
      %v859 = vld [vmem:[%s857 + $0x4] sm:$0xf]
      %v862 = vunpack.c.l.b16 %v858
      %v863 = vunpack.c.l.b16 %v859
      %v864 = vpack.c.b16 %v863, %v862
      %v867 = vsel %vm301, %v853, 0
      %v870 = vsel %vm301, %v854, 0
      %v873 = vsel %vm301, %v855, 0
      %v876 = vsel %vm301, %v856, 0
      %878 = vmatprep.subr.bf16.mxu0 0
      %879 = vmatpush1.bf16.msra.mxu0 %v864
      %880 = vmatprep.subr.bf16.mxu0 0
      %881 = vmatpush1.bf16.msra.mxu0 0
      %882 = vmatprep.subr.bf16.mxu0 0
      %883 = vmatpush1.bf16.msra.mxu0 0
      %884 = vmatprep.subr.bf16.mxu0 0
      %885 = vmatpush1.bf16.msra.mxu0 0
      %886 = vmatprep.subr.bf16.mxu0 0
      %887 = vmatpush1.bf16.msra.mxu0 0
      %888 = vmatprep.subr.bf16.mxu0 0
      %889 = vmatpush1.bf16.msra.mxu0 0
      %890 = vmatprep.subr.bf16.mxu0 0
      %891 = vmatpush1.bf16.msra.mxu0 0
      %892 = vmatprep.subr.bf16.mxu0 0
      %893 = vmatpush1.bf16.msra.mxu0 0
      %894 = vmatprep.subr.bf16.mxu0 0
      %895 = vmatpush1.bf16.msra.mxu0 0
      %896 = vmatprep.subr.bf16.mxu0 0
      %897 = vmatpush1.bf16.msra.mxu0 0
      %898 = vmatprep.subr.bf16.mxu0 0
      %899 = vmatpush1.bf16.msra.mxu0 0
      %900 = vmatprep.subr.bf16.mxu0 0
      %901 = vmatpush1.bf16.msra.mxu0 0
      %902 = vmatprep.subr.bf16.mxu0 0
      %903 = vmatpush1.bf16.msra.mxu0 0
      %904 = vmatprep.subr.bf16.mxu0 0
      %905 = vmatpush1.bf16.msra.mxu0 0
      %906 = vmatprep.subr.bf16.mxu0 0
      %907 = vmatpush1.bf16.msra.mxu0 0
      %908 = vmatprep.subr.bf16.mxu0 0
      %909 = vmatpush1.bf16.msra.mxu0 0
      %910 = vmatprep.mubr.bf16.mxu0 0
      %911 = vmatmul.mubr.bf16.gmra.mrb[0].mxu0 %v867
      %v912 = vpop.f32.mrb[0].mxu0
      %v913 = vadd.f32 0.0, %v912
      %v914 = vpop.f32.mrb[0].mxu0
      %v915 = vpop.f32.mrb[0].mxu0
      %v916 = vadd.f32 0.0, %v915
      %v917 = vpop.f32.mrb[0].mxu0
      %918 = vmatprep.mubr.bf16.mxu0 0
      %919 = vmatmul.mubr.bf16.gmra.mrb[0].mxu0 %v870
      %v920 = vpop.f32.mrb[0].mxu0
      %v921 = vadd.f32 0.0, %v920
      %v922 = vpop.f32.mrb[0].mxu0
      %v923 = vpop.f32.mrb[0].mxu0
      %v924 = vadd.f32 0.0, %v923
      %v925 = vpop.f32.mrb[0].mxu0
      %926 = vmatprep.mubr.bf16.mxu0 0
      %927 = vmatmul.mubr.bf16.gmra.mrb[0].mxu0 %v873
      %v928 = vpop.f32.mrb[0].mxu0
      %v929 = vadd.f32 0.0, %v928
      %v930 = vpop.f32.mrb[0].mxu0
      %v931 = vpop.f32.mrb[0].mxu0
      %v932 = vadd.f32 0.0, %v931
      %v933 = vpop.f32.mrb[0].mxu0
      %934 = vmatprep.mubr.bf16.mxu0 0
      %935 = vmatmul.mubr.bf16.gmra.mrb[0].mxu0 %v876
      %v936 = vpop.f32.mrb[0].mxu0
      %v937 = vadd.f32 0.0, %v936
      %v938 = vpop.f32.mrb[0].mxu0
      %v939 = vpop.f32.mrb[0].mxu0
      %v940 = vadd.f32 0.0, %v939
      %v941 = vpop.f32.mrb[0].mxu0
      %942 = vdwg.mxu0
      %v943 = vadd.f32 %v797, %v913
      %v944 = vadd.f32 %v798, %v916
      %v945 = vadd.f32 %v799, %v921
      %v946 = vadd.f32 %v800, %v924
      %v947 = vadd.f32 %v801, %v929
      %v948 = vadd.f32 %v802, %v932
      %v949 = vadd.f32 %v803, %v937
      %v950 = vadd.f32 %v804, %v940
      %v951 = vpack.c.bf16 %v199, %v197
      %v952 = vpack.c.bf16 %v203, %v201
      %v953 = vpack.c.bf16 %v207, %v205
      %v954 = vpack.c.bf16 %v211, %v209
      %s955 = scalar_lea.vmem %s1, 48
      %v956 = vld [vmem:[%s955] sm:$0xf]
      %v957 = vld [vmem:[%s955 + $0x4] sm:$0xf]
      %v960 = vunpack.c.l.b16 %v956
      %v961 = vunpack.c.l.b16 %v957
      %v962 = vpack.c.b16 %v961, %v960
      %v965 = vsel %vm301, %v951, 0
      %v968 = vsel %vm301, %v952, 0
      %v971 = vsel %vm301, %v953, 0
      %v974 = vsel %vm301, %v954, 0
      %976 = vmatprep.subr.bf16.mxu0 0
      %977 = vmatpush1.bf16.msra.mxu0 %v962
      %978 = vmatprep.subr.bf16.mxu0 0
      %979 = vmatpush1.bf16.msra.mxu0 0
      %980 = vmatprep.subr.bf16.mxu0 0
      %981 = vmatpush1.bf16.msra.mxu0 0
      %982 = vmatprep.subr.bf16.mxu0 0
      %983 = vmatpush1.bf16.msra.mxu0 0
      %984 = vmatprep.subr.bf16.mxu0 0
      %985 = vmatpush1.bf16.msra.mxu0 0
      %986 = vmatprep.subr.bf16.mxu0 0
      %987 = vmatpush1.bf16.msra.mxu0 0
      %988 = vmatprep.subr.bf16.mxu0 0
      %989 = vmatpush1.bf16.msra.mxu0 0
      %990 = vmatprep.subr.bf16.mxu0 0
      %991 = vmatpush1.bf16.msra.mxu0 0
      %992 = vmatprep.subr.bf16.mxu0 0
      %993 = vmatpush1.bf16.msra.mxu0 0
      %994 = vmatprep.subr.bf16.mxu0 0
      %995 = vmatpush1.bf16.msra.mxu0 0
      %996 = vmatprep.subr.bf16.mxu0 0
      %997 = vmatpush1.bf16.msra.mxu0 0
      %998 = vmatprep.subr.bf16.mxu0 0
      %999 = vmatpush1.bf16.msra.mxu0 0
      %1000 = vmatprep.subr.bf16.mxu0 0
      %1001 = vmatpush1.bf16.msra.mxu0 0
      %1002 = vmatprep.subr.bf16.mxu0 0
      %1003 = vmatpush1.bf16.msra.mxu0 0
      %1004 = vmatprep.subr.bf16.mxu0 0
      %1005 = vmatpush1.bf16.msra.mxu0 0
      %1006 = vmatprep.subr.bf16.mxu0 0
      %1007 = vmatpush1.bf16.msra.mxu0 0
      %1008 = vmatprep.mubr.bf16.mxu0 0
      %1009 = vmatmul.mubr.bf16.gmra.mrb[0].mxu0 %v965
      %v1010 = vpop.f32.mrb[0].mxu0
      %v1011 = vadd.f32 0.0, %v1010
      %v1012 = vpop.f32.mrb[0].mxu0
      %v1013 = vpop.f32.mrb[0].mxu0
      %v1014 = vadd.f32 0.0, %v1013
      %v1015 = vpop.f32.mrb[0].mxu0
      %1016 = vmatprep.mubr.bf16.mxu0 0
      %1017 = vmatmul.mubr.bf16.gmra.mrb[0].mxu0 %v968
      %v1018 = vpop.f32.mrb[0].mxu0
      %v1019 = vadd.f32 0.0, %v1018
      %v1020 = vpop.f32.mrb[0].mxu0
      %v1021 = vpop.f32.mrb[0].mxu0
      %v1022 = vadd.f32 0.0, %v1021
      %v1023 = vpop.f32.mrb[0].mxu0
      %1024 = vmatprep.mubr.bf16.mxu0 0
      %1025 = vmatmul.mubr.bf16.gmra.mrb[0].mxu0 %v971
      %v1026 = vpop.f32.mrb[0].mxu0
      %v1027 = vadd.f32 0.0, %v1026
      %v1028 = vpop.f32.mrb[0].mxu0
      %v1029 = vpop.f32.mrb[0].mxu0
      %v1030 = vadd.f32 0.0, %v1029
      %v1031 = vpop.f32.mrb[0].mxu0
      %1032 = vmatprep.mubr.bf16.mxu0 0
      %1033 = vmatmul.mubr.bf16.gmra.mrb[0].mxu0 %v974
      %v1034 = vpop.f32.mrb[0].mxu0
      %v1035 = vadd.f32 0.0, %v1034
      %v1036 = vpop.f32.mrb[0].mxu0
      %v1037 = vpop.f32.mrb[0].mxu0
      %v1038 = vadd.f32 0.0, %v1037
      %v1039 = vpop.f32.mrb[0].mxu0
      %1040 = vdwg.mxu0
      %v1041 = vadd.f32 %v943, %v1011
      %v1042 = vadd.f32 %v944, %v1014
      %v1043 = vadd.f32 %v945, %v1019
      %v1044 = vadd.f32 %v946, %v1022
      %v1045 = vadd.f32 %v947, %v1027
      %v1046 = vadd.f32 %v948, %v1030
      %v1047 = vadd.f32 %v949, %v1035
      %v1048 = vadd.f32 %v950, %v1038
      %v1049 = vpack.c.bf16 %v225, %v224
      %v1050 = vpack.c.bf16 %v227, %v226
      %v1051 = vpack.c.bf16 %v229, %v228
      %v1052 = vpack.c.bf16 %v231, %v230
      %s1053 = scalar_lea.vmem %s1, 56
      %v1054 = vld [vmem:[%s1053] sm:$0xf]
      %v1055 = vld [vmem:[%s1053 + $0x4] sm:$0xf]
      %v1058 = vunpack.c.l.b16 %v1054
      %v1059 = vunpack.c.l.b16 %v1055
      %v1060 = vpack.c.b16 %v1059, %v1058
      %v1063 = vsel %vm301, %v1049, 0
      %v1066 = vsel %vm301, %v1050, 0
      %v1069 = vsel %vm301, %v1051, 0
      %v1072 = vsel %vm301, %v1052, 0
      %1074 = vmatprep.subr.bf16.mxu0 0
      %1075 = vmatpush1.bf16.msra.mxu0 %v1060
      %1076 = vmatprep.subr.bf16.mxu0 0
      %1077 = vmatpush1.bf16.msra.mxu0 0
      %1078 = vmatprep.subr.bf16.mxu0 0
      %1079 = vmatpush1.bf16.msra.mxu0 0
      %1080 = vmatprep.subr.bf16.mxu0 0
      %1081 = vmatpush1.bf16.msra.mxu0 0
      %1082 = vmatprep.subr.bf16.mxu0 0
      %1083 = vmatpush1.bf16.msra.mxu0 0
      %1084 = vmatprep.subr.bf16.mxu0 0
      %1085 = vmatpush1.bf16.msra.mxu0 0
      %1086 = vmatprep.subr.bf16.mxu0 0
      %1087 = vmatpush1.bf16.msra.mxu0 0
      %1088 = vmatprep.subr.bf16.mxu0 0
      %1089 = vmatpush1.bf16.msra.mxu0 0
      %1090 = vmatprep.subr.bf16.mxu0 0
      %1091 = vmatpush1.bf16.msra.mxu0 0
      %1092 = vmatprep.subr.bf16.mxu0 0
      %1093 = vmatpush1.bf16.msra.mxu0 0
      %1094 = vmatprep.subr.bf16.mxu0 0
      %1095 = vmatpush1.bf16.msra.mxu0 0
      %1096 = vmatprep.subr.bf16.mxu0 0
      %1097 = vmatpush1.bf16.msra.mxu0 0
      %1098 = vmatprep.subr.bf16.mxu0 0
      %1099 = vmatpush1.bf16.msra.mxu0 0
      %1100 = vmatprep.subr.bf16.mxu0 0
      %1101 = vmatpush1.bf16.msra.mxu0 0
      %1102 = vmatprep.subr.bf16.mxu0 0
      %1103 = vmatpush1.bf16.msra.mxu0 0
      %1104 = vmatprep.subr.bf16.mxu0 0
      %1105 = vmatpush1.bf16.msra.mxu0 0
      %1106 = vmatprep.mubr.bf16.mxu0 0
      %1107 = vmatmul.mubr.bf16.gmra.mrb[0].mxu0 %v1063
      %v1108 = vpop.f32.mrb[0].mxu0
      %v1109 = vadd.f32 0.0, %v1108
      %v1110 = vpop.f32.mrb[0].mxu0
      %v1111 = vpop.f32.mrb[0].mxu0
      %v1112 = vadd.f32 0.0, %v1111
      %v1113 = vpop.f32.mrb[0].mxu0
      %1114 = vmatprep.mubr.bf16.mxu0 0
      %1115 = vmatmul.mubr.bf16.gmra.mrb[0].mxu0 %v1066
      %v1116 = vpop.f32.mrb[0].mxu0
      %v1117 = vadd.f32 0.0, %v1116
      %v1118 = vpop.f32.mrb[0].mxu0
      %v1119 = vpop.f32.mrb[0].mxu0
      %v1120 = vadd.f32 0.0, %v1119
      %v1121 = vpop.f32.mrb[0].mxu0
      %1122 = vmatprep.mubr.bf16.mxu0 0
      %1123 = vmatmul.mubr.bf16.gmra.mrb[0].mxu0 %v1069
      %v1124 = vpop.f32.mrb[0].mxu0
      %v1125 = vadd.f32 0.0, %v1124
      %v1126 = vpop.f32.mrb[0].mxu0
      %v1127 = vpop.f32.mrb[0].mxu0
      %v1128 = vadd.f32 0.0, %v1127
      %v1129 = vpop.f32.mrb[0].mxu0
      %1130 = vmatprep.mubr.bf16.mxu0 0
      %1131 = vmatmul.mubr.bf16.gmra.mrb[0].mxu0 %v1072
      %v1132 = vpop.f32.mrb[0].mxu0
      %v1133 = vadd.f32 0.0, %v1132
      %v1134 = vpop.f32.mrb[0].mxu0
      %v1135 = vpop.f32.mrb[0].mxu0
      %v1136 = vadd.f32 0.0, %v1135
      %v1137 = vpop.f32.mrb[0].mxu0
      %1138 = vdwg.mxu0
      %v1139 = vadd.f32 %v1041, %v1109
      %v1140 = vadd.f32 %v1042, %v1112
      %v1141 = vadd.f32 %v1043, %v1117
      %v1142 = vadd.f32 %v1044, %v1120
      %v1143 = vadd.f32 %v1045, %v1125
      %v1144 = vadd.f32 %v1046, %v1128
      %v1145 = vadd.f32 %v1047, %v1133
      %v1146 = vadd.f32 %v1048, %v1136
      %v1149 = vrot.slane %v211, 1
      %v1150 = vrot.slane %v212, 1
      %v1151 = vsel %vm478, %v1149, %v1150
      %v1153 = vpack.c.bf16 %v487, %v484
      %v1154 = vpack.c.bf16 %v493, %v490
      %v1155 = vpack.c.bf16 %v499, %v496
      %v1156 = vpack.c.bf16 %v1151, %v502
      %s1157 = scalar_lea.vmem %s1, 64
      %v1158 = vld [vmem:[%s1157] sm:$0xf]
      %v1159 = vld [vmem:[%s1157 + $0x4] sm:$0xf]
      %v1162 = vunpack.c.l.b16 %v1158
      %v1163 = vunpack.c.l.b16 %v1159
      %v1164 = vpack.c.b16 %v1163, %v1162
      %v1167 = vsel %vm301, %v1153, 0
      %v1170 = vsel %vm301, %v1154, 0
      %v1173 = vsel %vm301, %v1155, 0
      %v1176 = vsel %vm301, %v1156, 0
      %1178 = vmatprep.subr.bf16.mxu0 0
      %1179 = vmatpush1.bf16.msra.mxu0 %v1164
      %1180 = vmatprep.subr.bf16.mxu0 0
      %1181 = vmatpush1.bf16.msra.mxu0 0
      %1182 = vmatprep.subr.bf16.mxu0 0
      %1183 = vmatpush1.bf16.msra.mxu0 0
      %1184 = vmatprep.subr.bf16.mxu0 0
      %1185 = vmatpush1.bf16.msra.mxu0 0
      %1186 = vmatprep.subr.bf16.mxu0 0
      %1187 = vmatpush1.bf16.msra.mxu0 0
      %1188 = vmatprep.subr.bf16.mxu0 0
      %1189 = vmatpush1.bf16.msra.mxu0 0
      %1190 = vmatprep.subr.bf16.mxu0 0
      %1191 = vmatpush1.bf16.msra.mxu0 0
      %1192 = vmatprep.subr.bf16.mxu0 0
      %1193 = vmatpush1.bf16.msra.mxu0 0
      %1194 = vmatprep.subr.bf16.mxu0 0
      %1195 = vmatpush1.bf16.msra.mxu0 0
      %1196 = vmatprep.subr.bf16.mxu0 0
      %1197 = vmatpush1.bf16.msra.mxu0 0
      %1198 = vmatprep.subr.bf16.mxu0 0
      %1199 = vmatpush1.bf16.msra.mxu0 0
      %1200 = vmatprep.subr.bf16.mxu0 0
      %1201 = vmatpush1.bf16.msra.mxu0 0
      %1202 = vmatprep.subr.bf16.mxu0 0
      %1203 = vmatpush1.bf16.msra.mxu0 0
      %1204 = vmatprep.subr.bf16.mxu0 0
      %1205 = vmatpush1.bf16.msra.mxu0 0
      %1206 = vmatprep.subr.bf16.mxu0 0
      %1207 = vmatpush1.bf16.msra.mxu0 0
      %1208 = vmatprep.subr.bf16.mxu0 0
      %1209 = vmatpush1.bf16.msra.mxu0 0
      %1210 = vmatprep.mubr.bf16.mxu0 0
      %1211 = vmatmul.mubr.bf16.gmra.mrb[0].mxu0 %v1167
      %v1212 = vpop.f32.mrb[0].mxu0
      %v1213 = vadd.f32 0.0, %v1212
      %v1214 = vpop.f32.mrb[0].mxu0
      %v1215 = vpop.f32.mrb[0].mxu0
      %v1216 = vadd.f32 0.0, %v1215
      %v1217 = vpop.f32.mrb[0].mxu0
      %1218 = vmatprep.mubr.bf16.mxu0 0
      %1219 = vmatmul.mubr.bf16.gmra.mrb[0].mxu0 %v1170
      %v1220 = vpop.f32.mrb[0].mxu0
      %v1221 = vadd.f32 0.0, %v1220
      %v1222 = vpop.f32.mrb[0].mxu0
      %v1223 = vpop.f32.mrb[0].mxu0
      %v1224 = vadd.f32 0.0, %v1223
      %v1225 = vpop.f32.mrb[0].mxu0
      %1226 = vmatprep.mubr.bf16.mxu0 0
      %1227 = vmatmul.mubr.bf16.gmra.mrb[0].mxu0 %v1173
      %v1228 = vpop.f32.mrb[0].mxu0
      %v1229 = vadd.f32 0.0, %v1228
      %v1230 = vpop.f32.mrb[0].mxu0
      %v1231 = vpop.f32.mrb[0].mxu0
      %v1232 = vadd.f32 0.0, %v1231
      %v1233 = vpop.f32.mrb[0].mxu0
      %1234 = vmatprep.mubr.bf16.mxu0 0
      %1235 = vmatmul.mubr.bf16.gmra.mrb[0].mxu0 %v1176
      %v1236 = vpop.f32.mrb[0].mxu0
      %v1237 = vadd.f32 0.0, %v1236
      %v1238 = vpop.f32.mrb[0].mxu0
      %v1239 = vpop.f32.mrb[0].mxu0
      %v1240 = vadd.f32 0.0, %v1239
      %v1241 = vpop.f32.mrb[0].mxu0
      %1242 = vdwg.mxu0
      %v1243 = vadd.f32 %v1139, %v1213
      %v1244 = vadd.f32 %v1140, %v1216
      %v1245 = vadd.f32 %v1141, %v1221
      %v1246 = vadd.f32 %v1142, %v1224
      %v1247 = vadd.f32 %v1143, %v1229
      %v1248 = vadd.f32 %v1144, %v1232
      %v1249 = vadd.f32 %v1145, %v1237
      %v1250 = vadd.f32 %v1146, %v1240
      %v1251 = vld [vmem:[%s2] sm:$0x1]
      %v1253 = vlaneseq
      %v1254 = vshrl.u32 %v1253, 7
      %v1255 = vsub.s32 0, %v1254
      %v1256 = vrot.slane %v1251, %v1255
      %v1258 = vadd.f32 %v1243, %v1256
      %v1259 = vadd.f32 %v1244, %v1256
      %v1260 = vadd.f32 %v1245, %v1256
      %v1261 = vadd.f32 %v1246, %v1256
      %v1262 = vadd.f32 %v1247, %v1256
      %v1263 = vadd.f32 %v1248, %v1256
      %v1264 = vadd.f32 %v1249, %v1256
      %v1265 = vadd.f32 %v1250, %v1256
      %v1266 = vmax.f32 %v1258, 0.0
      %v1267 = vmax.f32 %v1259, 0.0
      %v1268 = vmax.f32 %v1260, 0.0
      %v1269 = vmax.f32 %v1261, 0.0
      %v1270 = vmax.f32 %v1262, 0.0
      %v1271 = vmax.f32 %v1263, 0.0
      %v1272 = vmax.f32 %v1264, 0.0
      %v1273 = vmax.f32 %v1265, 0.0
      %v1274 = vpack.c.bf16 %v1267, %v1266
      %v1275 = vpack.c.bf16 %v1269, %v1268
      %v1276 = vpack.c.bf16 %v1271, %v1270
      %v1277 = vpack.c.bf16 %v1273, %v1272
      %v1282 = vunpack.c.l.b16 %v1274
      %v1283 = vunpack.c.h.b16 %v1274
      %v1284 = vunpack.c.l.b16 %v1275
      %v1285 = vunpack.c.h.b16 %v1275
      %v1286 = vunpack.c.l.b16 %v1276
      %v1287 = vunpack.c.h.b16 %v1276
      %v1288 = vunpack.c.l.b16 %v1277
      %v1289 = vunpack.c.h.b16 %v1277
      %v1290 = vpack.c.b16 %v1282, %v1282
      %v1291 = vpack.c.b16 %v1283, %v1283
      %v1292 = vpack.c.b16 %v1284, %v1284
      %v1293 = vpack.c.b16 %v1285, %v1285
      %v1294 = vpack.c.b16 %v1286, %v1286
      %v1295 = vpack.c.b16 %v1287, %v1287
      %v1296 = vpack.c.b16 %v1288, %v1288
      %v1297 = vpack.c.b16 %v1289, %v1289
      %1306 = vst [vmem:[%s175] sm:$0xf] %v1290
      %1307 = vst [vmem:[%s175 + $0x4] sm:$0xf] %v1291
      %1308 = vst [vmem:[%s175 + $0x8] sm:$0xf] %v1292
      %1309 = vst [vmem:[%s175 + $0xc] sm:$0xf] %v1293
      %1310 = vst [vmem:[%s175 + $0x10] sm:$0xf] %v1294
      %1311 = vst [vmem:[%s175 + $0x14] sm:$0xf] %v1295
      %1312 = vst [vmem:[%s175 + $0x18] sm:$0xf] %v1296
      %1313 = vst [vmem:[%s175 + $0x1c] sm:$0xf] %v1297
      %p1314 = scmp.lt.s32.totalorder %s14, 1
      %s1315 = scalar_select %p1314, %s14, 1
      %s1316 = smul.addr %s1315, 8
      %s1317 = smul.addr %s1316, 4
      %s1318 = scalar_lea.vmem %s3, %s1317
      // Predicated region
      $region33: #{fwd.6} parent=31 // pred_check
        %p1319 = pneg %p100
      $region34: #{fwd.6} parent=31 // pred_check_branch
        %1321 = sbr.rel (%p1319) target = $region36
      $region35: #{fwd.6} parent=31 // pred_region
        _
      $region36: #{fwd.6} parent=31 // pred_fallthru
        _
    $region32: #{fwd.6} parent=5 // pred_fallthru
      _
    %p1322 = scmp.le.s32.totalorder 2, %s9
    // Predicated region
    $region37: #{fwd.6} parent=5 // pred_check
      %p1323 = pneg %p1322
    $region38: #{fwd.6} parent=5 // pred_check_branch
      %1325 = sbr.rel (%p1323) target = $region40
    $region39: #{fwd.6} parent=5 // pred_region
      %s1326 = ssub.s32 %s9, 2
      // Predicated region
      $region41: #{fwd.6} parent=39 // pred_check
        %p1327 = pneg %p106
      $region42: #{fwd.6} parent=39 // pred_check_branch
        %1329 = sbr.rel (%p1327) target = $region44
      $region43: #{fwd.6} parent=39 // pred_region
        %p1330 = scmp.lt.s32.totalorder %s15, 1
        %s1331 = scalar_select %p1330, %s15, 1
        %s1332 = smul.addr %s1331, 8
        %s1333 = smul.addr %s1332, 4
        %s1334 = scalar_lea.vmem %s3, %s1333
      $region44: #{fwd.6} parent=39 // pred_fallthru
        _
    $region40: #{fwd.6} parent=5 // pred_fallthru
      _
  $region6: #{fwd.6} parent=0 // loop_footer
    %s13 = sadd.s32 1, %s9
  $region7: #{fwd.6} parent=0 // loop_footer_branch
    %8 = sbr.rel target = $region3
  $region8: #{fwd.6} parent=0 // loop_exit
    _

// kernel: fwd.8
$region0: #{fwd.8}
  #allocation0 [shape = 'u32[]', space=smem, size = 0x4, offset = 0x4, fixed_abs, tag = 'smem constant byte address 0x4 - core index']
  #allocation1 [shape = 'u32[144,128]{1,0:T(1,128)}', space=vmem, size = 0x12000, scoped, tag = 'internal scratch']
  %s0 = inlined_call_operand.vmem [shape: bf16[2,8,8,32], index: 0, kind: input, shape index: {}]
  %s1 = inlined_call_operand.vmem [shape: bf16[1,32,128], index: 1, kind: input, shape index: {}]
  %s2 = inlined_call_operand.vmem [shape: f32[1,128], index: 2, kind: input, shape index: {}]
  %s3 = inlined_call_operand.vmem [shape: f32[2,64,128], index: 3, kind: output, shape index: {}]
  %s4 = sld [smem:[#allocation0]]
  $region45: #{fwd.8} parent=0
    _
  %s6 = ssub.s32 1, %s4
  %s7 = scalar_select 0, %s6, %s4
  loop: start=0, step=1, limit=4
  $region2: #{fwd.8} parent=0 // loop_pre_header
    _
  $region3: #{fwd.8} parent=0 // loop_header
    %s9 = sphi 0, %s13
    %p10 = scmp.ge.s32.totalorder %s9, 4
    %s19 = sphi 0, %s21
    %s22 = sphi 0, %s19
    %s23 = sphi 0, %s22
    %s39 = sphi 0, %s23
    %s43 = sphi 0, %s43
    %s45 = sphi 0, %s43
    %s46 = sphi 0, %s45
    %s60 = sphi 0, %s46
    %s64 = sphi 0, %s64
    %s66 = sphi 0, %s64
    %s67 = sphi 0, %s66
    %s81 = sphi 0, %s67
    %s87 = sphi 0, %s89
    %s90 = sphi 0, %s87
    %s91 = sphi 0, %s90
    %s107 = sphi 0, %s91
  $region4: #{fwd.8} parent=0 // loop_header_branch
    %12 = sbr.rel (%p10) target = $region8
  $region5: #{fwd.8} parent=0 // loop_body
    %s14 = ssub.s32 %s9, 1
    %s15 = ssub.s32 %s9, 2
    %s16 = sadd.s32 %s9, 1
    %s17 = ssub.s32 %s9, %s16
    %p18 = scmp.eq.s32.totalorder %s17, 0
    %s20 = sadd.s32 %s19, 1
    %s21 = scalar_select %p18, %s19, %s20
    %p24 = pneg %p18
    %p25 = scmp.eq.s32.totalorder %s9, 1
    %p26 = por %p24, %p25
    %p27 = scmp.ne.s32.totalorder %s19, %s22
    %p28 = scmp.eq.s32.totalorder %s9, 0
    %p29 = por %p27, %p28
    %p30 = scmp.ne.s32.totalorder %s19, %s22
    %p31 = scmp.eq.s32.totalorder %s14, 1
    %p32 = por %p30, %p31
    %p33 = scmp.ne.s32.totalorder %s22, %s23
    %p34 = scmp.eq.s32.totalorder %s14, 0
    %p35 = por %p33, %p34
    %p36 = scmp.ne.s32.totalorder %s22, %s23
    %p37 = scmp.eq.s32.totalorder %s15, 1
    %p38 = por %p36, %p37
    %p40 = scmp.ne.s32.totalorder %s23, %s39
    %p41 = scmp.eq.s32.totalorder %s15, 0
    %p42 = por %p40, %p41
    %s44 = sadd.s32 %s43, 1
    %p47 = scmp.eq.s32.totalorder %s9, 1
    %p48 = scmp.ne.s32.totalorder %s43, %s45
    %p49 = scmp.eq.s32.totalorder %s9, 0
    %p50 = por %p48, %p49
    %p51 = scmp.ne.s32.totalorder %s43, %s45
    %p52 = scmp.eq.s32.totalorder %s14, 1
    %p53 = por %p51, %p52
    %p54 = scmp.ne.s32.totalorder %s45, %s46
    %p55 = scmp.eq.s32.totalorder %s14, 0
    %p56 = por %p54, %p55
    %p57 = scmp.ne.s32.totalorder %s45, %s46
    %p58 = scmp.eq.s32.totalorder %s15, 1
    %p59 = por %p57, %p58
    %p61 = scmp.ne.s32.totalorder %s46, %s60
    %p62 = scmp.eq.s32.totalorder %s15, 0
    %p63 = por %p61, %p62
    %s65 = sadd.s32 %s64, 1
    %p68 = scmp.eq.s32.totalorder %s9, 1
    %p69 = scmp.ne.s32.totalorder %s64, %s66
    %p70 = scmp.eq.s32.totalorder %s9, 0
    %p71 = por %p69, %p70
    %p72 = scmp.ne.s32.totalorder %s64, %s66
    %p73 = scmp.eq.s32.totalorder %s14, 1
    %p74 = por %p72, %p73
    %p75 = scmp.ne.s32.totalorder %s66, %s67
    %p76 = scmp.eq.s32.totalorder %s14, 0
    %p77 = por %p75, %p76
    %p78 = scmp.ne.s32.totalorder %s66, %s67
    %p79 = scmp.eq.s32.totalorder %s15, 1
    %p80 = por %p78, %p79
    %p82 = scmp.ne.s32.totalorder %s67, %s81
    %p83 = scmp.eq.s32.totalorder %s15, 0
    %p84 = por %p82, %p83
    %s85 = ssub.s32 %s9, %s16
    %p86 = scmp.eq.s32.totalorder %s85, 0
    %s88 = sadd.s32 %s87, 1
    %s89 = scalar_select %p86, %s87, %s88
    %p92 = pneg %p86
    %p93 = scmp.eq.s32.totalorder %s9, 1
    %p94 = por %p92, %p93
    %p95 = scmp.ne.s32.totalorder %s87, %s90
    %p96 = scmp.eq.s32.totalorder %s9, 0
    %p97 = por %p95, %p96
    %p98 = scmp.ne.s32.totalorder %s87, %s90
    %p99 = scmp.eq.s32.totalorder %s14, 1
    %p100 = por %p98, %p99
    %p101 = scmp.ne.s32.totalorder %s90, %s91
    %p102 = scmp.eq.s32.totalorder %s14, 0
    %p103 = por %p101, %p102
    %p104 = scmp.ne.s32.totalorder %s90, %s91
    %p105 = scmp.eq.s32.totalorder %s15, 1
    %p106 = por %p104, %p105
    %p108 = scmp.ne.s32.totalorder %s91, %s107
    %p109 = scmp.eq.s32.totalorder %s15, 0
    %p110 = por %p108, %p109
    %p111 = scmp.le.s32.totalorder 1, %s9
    %p112 = scmp.lt.s32.totalorder %s9, 3
    %p113 = pnand %p111, %p112
    %p114 = pneg %p113
    // Predicated region
    $region9: #{fwd.8} parent=5 // pred_check
      _
    $region10: #{fwd.8} parent=5 // pred_check_branch
      %116 = sbr.rel (%p113) target = $region12
    $region11: #{fwd.8} parent=5 // pred_region
      %s117 = ssub.s32 %s9, 1
      // Predicated region
      $region13: #{fwd.8} parent=11 // pred_check
        %p118 = pneg %p56
      $region14: #{fwd.8} parent=11 // pred_check_branch
        %120 = sbr.rel (%p118) target = $region16
      $region15: #{fwd.8} parent=11 // pred_region
        _
      $region16: #{fwd.8} parent=11 // pred_fallthru
        _
      // Predicated region
      $region17: #{fwd.8} parent=11 // pred_check
        %p121 = pneg %p77
      $region18: #{fwd.8} parent=11 // pred_check_branch
        %123 = sbr.rel (%p121) target = $region20
      $region19: #{fwd.8} parent=11 // pred_region
        _
      $region20: #{fwd.8} parent=11 // pred_fallthru
        _
    $region12: #{fwd.8} parent=5 // pred_fallthru
      _
    %p124 = scmp.lt.s32.totalorder %s9, 2
    // Predicated region
    $region21: #{fwd.8} parent=5 // pred_check
      %p125 = pneg %p124
    $region22: #{fwd.8} parent=5 // pred_check_branch
      %127 = sbr.rel (%p125) target = $region24
    $region23: #{fwd.8} parent=5 // pred_region
      // Predicated region
      $region25: #{fwd.8} parent=23 // pred_check
        %p128 = pneg %p29
      $region26: #{fwd.8} parent=23 // pred_check_branch
        %130 = sbr.rel (%p128) target = $region28
      $region27: #{fwd.8} parent=23 // pred_region
        %p131 = scmp.lt.s32.totalorder %s9, 1
        %s132 = scalar_select %p131, %s9, 1
        %s133 = smul.addr %s132, 8
        %s134 = smul.addr %s133, 4
        %s135 = scalar_lea.vmem %s0, %s134
      $region28: #{fwd.8} parent=23 // pred_fallthru
        _
    $region24: #{fwd.8} parent=5 // pred_fallthru
      _
    %p136 = scmp.le.s32.totalorder 1, %s9
    %p137 = scmp.lt.s32.totalorder %s9, 3
    %p138 = pnand %p136, %p137
    %p139 = pneg %p138
    // Predicated region
    $region29: #{fwd.8} parent=5 // pred_check
      _
    $region30: #{fwd.8} parent=5 // pred_check_branch
      %141 = sbr.rel (%p138) target = $region32
    $region31: #{fwd.8} parent=5 // pred_region
      %s142 = ssub.s32 %s9, 1
      %p143 = scmp.lt.s32.totalorder %s14, 1
      %s144 = scalar_select %p143, %s14, 1
      %s145 = smul.addr %s144, 8
      %s146 = smul.addr %s145, 4
      %s147 = scalar_lea.vmem %s0, %s146
      %p148 = pneg %p35
      %p149 = pneg %p32
      %p150 = pneg %p56
      %p151 = pneg %p53
      %p152 = pneg %p77
      %p153 = pneg %p74
      %p154 = pneg %p103
      %p155 = pneg %p100
      %p156 = scmp.lt.s32.totalorder %s14, 1
      %s157 = scalar_select %p156, %s14, 1
      %s158 = smul.addr %s157, 8
      %s159 = smul.addr %s158, 8
      %s160 = scalar_lea.vmem %s3, %s159
      %p161 = scmp.lt.s32.totalorder %s14, 1
      %s162 = scalar_select %p161, %s14, 1
      %s163 = smul.addr %s162, 8
      %s164 = smul.addr %s163, 4
      %s165 = scalar_lea.vmem %s0, %s164
      %p166 = scmp.lt.s32.totalorder %s14, 1
      %s167 = scalar_select %p166, %s14, 1
      %s168 = smul.addr %s167, 8
      %s169 = smul.addr %s168, 8
      %s170 = scalar_lea.vmem %s3, %s169
      %v172 = vld [vmem:[%s165] sm:$0xf]
      %v173 = vld [vmem:[%s165 + $0x4] sm:$0xf]
      %v174 = vld [vmem:[%s165 + $0x8] sm:$0xf]
      %v175 = vld [vmem:[%s165 + $0xc] sm:$0xf]
      %v176 = vld [vmem:[%s165 + $0x10] sm:$0xf]
      %v177 = vld [vmem:[%s165 + $0x14] sm:$0xf]
      %v178 = vld [vmem:[%s165 + $0x18] sm:$0xf]
      %v179 = vld [vmem:[%s165 + $0x1c] sm:$0xf]
      %v180 = vunpack.c.l.bf16 %v172
      %v181 = vunpack.c.l.bf16 %v173
      %v182 = vunpack.c.l.bf16 %v174
      %v183 = vunpack.c.l.bf16 %v175
      %v184 = vunpack.c.l.bf16 %v176
      %v185 = vunpack.c.l.bf16 %v177
      %v186 = vunpack.c.l.bf16 %v178
      %v187 = vunpack.c.l.bf16 %v179
      %v188 = vpack.c.bf16 %v181, %v180
      %v189 = vpack.c.bf16 %v183, %v182
      %v190 = vpack.c.bf16 %v185, %v184
      %v191 = vpack.c.bf16 %v187, %v186
      %v192 = vld [vmem:[%s1] sm:$0xf]
      %v193 = vld [vmem:[%s1 + $0x4] sm:$0xf]
      %v194 = vld [vmem:[%s1 + $0x8] sm:$0xf]
      %v195 = vld [vmem:[%s1 + $0xc] sm:$0xf]
      %v196 = vld [vmem:[%s2] sm:$0x1]
      %v198 = vlaneseq
      %v199 = vshrl.u32 %v198, 7
      %v200 = vsub.s32 0, %v199
      %v201 = vrot.slane %v196, %v200
      %v207 = vunpack.c.l.b16 %v192
      %v208 = vunpack.c.l.b16 %v193
      %v209 = vunpack.c.l.b16 %v194
      %v210 = vunpack.c.l.b16 %v195
      %v211 = vpack.c.b16 %v208, %v207
      %v212 = vpack.c.b16 %v210, %v209
      %vm215 = vcmask 261120
      %v217 = vsel %vm215, %v188, 0
      %v220 = vsel %vm215, %v189, 0
      %v223 = vsel %vm215, %v190, 0
      %v226 = vsel %vm215, %v191, 0
      %228 = vmatprep.subr.bf16.mxu0 0
      %229 = vmatpush1.bf16.msra.mxu0 %v211
      %230 = vmatprep.subr.bf16.mxu0 0
      %231 = vmatpush1.bf16.msra.mxu0 %v212
      %232 = vmatprep.subr.bf16.mxu0 0
      %233 = vmatpush1.bf16.msra.mxu0 0
      %234 = vmatprep.subr.bf16.mxu0 0
      %235 = vmatpush1.bf16.msra.mxu0 0
      %236 = vmatprep.subr.bf16.mxu0 0
      %237 = vmatpush1.bf16.msra.mxu0 0
      %238 = vmatprep.subr.bf16.mxu0 0
      %239 = vmatpush1.bf16.msra.mxu0 0
      %240 = vmatprep.subr.bf16.mxu0 0
      %241 = vmatpush1.bf16.msra.mxu0 0
      %242 = vmatprep.subr.bf16.mxu0 0
      %243 = vmatpush1.bf16.msra.mxu0 0
      %244 = vmatprep.subr.bf16.mxu0 0
      %245 = vmatpush1.bf16.msra.mxu0 0
      %246 = vmatprep.subr.bf16.mxu0 0
      %247 = vmatpush1.bf16.msra.mxu0 0
      %248 = vmatprep.subr.bf16.mxu0 0
      %249 = vmatpush1.bf16.msra.mxu0 0
      %250 = vmatprep.subr.bf16.mxu0 0
      %251 = vmatpush1.bf16.msra.mxu0 0
      %252 = vmatprep.subr.bf16.mxu0 0
      %253 = vmatpush1.bf16.msra.mxu0 0
      %254 = vmatprep.subr.bf16.mxu0 0
      %255 = vmatpush1.bf16.msra.mxu0 0
      %256 = vmatprep.subr.bf16.mxu0 0
      %257 = vmatpush1.bf16.msra.mxu0 0
      %258 = vmatprep.subr.bf16.mxu0 0
      %259 = vmatpush1.bf16.msra.mxu0 0
      %260 = vmatprep.mubr.bf16.mxu0 0
      %261 = vmatmul.mubr.bf16.gmra.mrb[0].mxu0 %v217
      %v262 = vpop.f32.mrb[0].mxu0
      %v263 = vadd.f32 %v201, %v262
      %v264 = vpop.f32.mrb[0].mxu0
      %v265 = vpop.f32.mrb[0].mxu0
      %v266 = vadd.f32 %v201, %v265
      %v267 = vpop.f32.mrb[0].mxu0
      %268 = vmatprep.mubr.bf16.mxu0 0
      %269 = vmatmul.mubr.bf16.gmra.mrb[0].mxu0 %v220
      %v270 = vpop.f32.mrb[0].mxu0
      %v271 = vadd.f32 %v201, %v270
      %v272 = vpop.f32.mrb[0].mxu0
      %v273 = vpop.f32.mrb[0].mxu0
      %v274 = vadd.f32 %v201, %v273
      %v275 = vpop.f32.mrb[0].mxu0
      %276 = vmatprep.mubr.bf16.mxu0 0
      %277 = vmatmul.mubr.bf16.gmra.mrb[0].mxu0 %v223
      %v278 = vpop.f32.mrb[0].mxu0
      %v279 = vadd.f32 %v201, %v278
      %v280 = vpop.f32.mrb[0].mxu0
      %v281 = vpop.f32.mrb[0].mxu0
      %v282 = vadd.f32 %v201, %v281
      %v283 = vpop.f32.mrb[0].mxu0
      %284 = vmatprep.mubr.bf16.mxu0 0
      %285 = vmatmul.mubr.bf16.gmra.mrb[0].mxu0 %v226
      %v286 = vpop.f32.mrb[0].mxu0
      %v287 = vadd.f32 %v201, %v286
      %v288 = vpop.f32.mrb[0].mxu0
      %v289 = vpop.f32.mrb[0].mxu0
      %v290 = vadd.f32 %v201, %v289
      %v291 = vpop.f32.mrb[0].mxu0
      %292 = vdwg.mxu0
      %293 = vst [vmem:[%s170] sm:$0xff] %v263
      %294 = vst [vmem:[%s170 + $0x8] sm:$0xff] %v266
      %295 = vst [vmem:[%s170 + $0x10] sm:$0xff] %v271
      %296 = vst [vmem:[%s170 + $0x18] sm:$0xff] %v274
      %297 = vst [vmem:[%s170 + $0x20] sm:$0xff] %v279
      %298 = vst [vmem:[%s170 + $0x28] sm:$0xff] %v282
      %299 = vst [vmem:[%s170 + $0x30] sm:$0xff] %v287
      %300 = vst [vmem:[%s170 + $0x38] sm:$0xff] %v290
      %p301 = scmp.lt.s32.totalorder %s14, 1
      %s302 = scalar_select %p301, %s14, 1
      %s303 = smul.addr %s302, 8
      %s304 = smul.addr %s303, 8
      %s305 = scalar_lea.vmem %s3, %s304
      // Predicated region
      $region33: #{fwd.8} parent=31 // pred_check
        %p306 = pneg %p100
      $region34: #{fwd.8} parent=31 // pred_check_branch
        %308 = sbr.rel (%p306) target = $region36
      $region35: #{fwd.8} parent=31 // pred_region
        _
      $region36: #{fwd.8} parent=31 // pred_fallthru
        _
    $region32: #{fwd.8} parent=5 // pred_fallthru
      _
    %p309 = scmp.le.s32.totalorder 2, %s9
    // Predicated region
    $region37: #{fwd.8} parent=5 // pred_check
      %p310 = pneg %p309
    $region38: #{fwd.8} parent=5 // pred_check_branch
      %312 = sbr.rel (%p310) target = $region40
    $region39: #{fwd.8} parent=5 // pred_region
      %s313 = ssub.s32 %s9, 2
      // Predicated region
      $region41: #{fwd.8} parent=39 // pred_check
        %p314 = pneg %p106
      $region42: #{fwd.8} parent=39 // pred_check_branch
        %316 = sbr.rel (%p314) target = $region44
      $region43: #{fwd.8} parent=39 // pred_region
        %p317 = scmp.lt.s32.totalorder %s15, 1
        %s318 = scalar_select %p317, %s15, 1
        %s319 = smul.addr %s318, 8
        %s320 = smul.addr %s319, 8
        %s321 = scalar_lea.vmem %s3, %s320
      $region44: #{fwd.8} parent=39 // pred_fallthru
        _
    $region40: #{fwd.8} parent=5 // pred_fallthru
      _
  $region6: #{fwd.8} parent=0 // loop_footer
    %s13 = sadd.s32 1, %s9
  $region7: #{fwd.8} parent=0 // loop_footer_branch
    %8 = sbr.rel target = $region3
  $region8: #{fwd.8} parent=0 // loop_exit
    _

// kernel: fwd.5
$region0: #{fwd.5}
  #allocation0 [shape = 'u32[]', space=smem, size = 0x4, offset = 0x4, fixed_abs, tag = 'smem constant byte address 0x4 - core index']
  #allocation1 [shape = 'u32[144,128]{1,0:T(1,128)}', space=vmem, size = 0x12000, scoped, tag = 'internal scratch']
  %s0 = inlined_call_operand.vmem [shape: bf16[2,18,18,16], index: 0, kind: input, shape index: {}]
  %s1 = inlined_call_operand.vmem [shape: bf16[9,16,128], index: 1, kind: input, shape index: {}]
  %s2 = inlined_call_operand.vmem [shape: f32[1,128], index: 2, kind: input, shape index: {}]
  %s3 = inlined_call_operand.vmem [shape: bf16[2,256,128], index: 3, kind: output, shape index: {}]
  %s4 = sld [smem:[#allocation0]]
  $region45: #{fwd.5} parent=0
    _
  %s6 = ssub.s32 1, %s4
  %s7 = scalar_select 0, %s6, %s4
  loop: start=0, step=1, limit=4
  $region2: #{fwd.5} parent=0 // loop_pre_header
    _
  $region3: #{fwd.5} parent=0 // loop_header
    %s9 = sphi 0, %s13
    %p10 = scmp.ge.s32.totalorder %s9, 4
    %s19 = sphi 0, %s21
    %s22 = sphi 0, %s19
    %s23 = sphi 0, %s22
    %s39 = sphi 0, %s23
    %s43 = sphi 0, %s43
    %s45 = sphi 0, %s43
    %s46 = sphi 0, %s45
    %s60 = sphi 0, %s46
    %s64 = sphi 0, %s64
    %s66 = sphi 0, %s64
    %s67 = sphi 0, %s66
    %s81 = sphi 0, %s67
    %s87 = sphi 0, %s89
    %s90 = sphi 0, %s87
    %s91 = sphi 0, %s90
    %s107 = sphi 0, %s91
  $region4: #{fwd.5} parent=0 // loop_header_branch
    %12 = sbr.rel (%p10) target = $region8
  $region5: #{fwd.5} parent=0 // loop_body
    %s14 = ssub.s32 %s9, 1
    %s15 = ssub.s32 %s9, 2
    %s16 = sadd.s32 %s9, 1
    %s17 = ssub.s32 %s9, %s16
    %p18 = scmp.eq.s32.totalorder %s17, 0
    %s20 = sadd.s32 %s19, 1
    %s21 = scalar_select %p18, %s19, %s20
    %p24 = pneg %p18
    %p25 = scmp.eq.s32.totalorder %s9, 1
    %p26 = por %p24, %p25
    %p27 = scmp.ne.s32.totalorder %s19, %s22
    %p28 = scmp.eq.s32.totalorder %s9, 0
    %p29 = por %p27, %p28
    %p30 = scmp.ne.s32.totalorder %s19, %s22
    %p31 = scmp.eq.s32.totalorder %s14, 1
    %p32 = por %p30, %p31
    %p33 = scmp.ne.s32.totalorder %s22, %s23
    %p34 = scmp.eq.s32.totalorder %s14, 0
    %p35 = por %p33, %p34
    %p36 = scmp.ne.s32.totalorder %s22, %s23
    %p37 = scmp.eq.s32.totalorder %s15, 1
    %p38 = por %p36, %p37
    %p40 = scmp.ne.s32.totalorder %s23, %s39
    %p41 = scmp.eq.s32.totalorder %s15, 0
    %p42 = por %p40, %p41
    %s44 = sadd.s32 %s43, 1
    %p47 = scmp.eq.s32.totalorder %s9, 1
    %p48 = scmp.ne.s32.totalorder %s43, %s45
    %p49 = scmp.eq.s32.totalorder %s9, 0
    %p50 = por %p48, %p49
    %p51 = scmp.ne.s32.totalorder %s43, %s45
    %p52 = scmp.eq.s32.totalorder %s14, 1
    %p53 = por %p51, %p52
    %p54 = scmp.ne.s32.totalorder %s45, %s46
    %p55 = scmp.eq.s32.totalorder %s14, 0
    %p56 = por %p54, %p55
    %p57 = scmp.ne.s32.totalorder %s45, %s46
    %p58 = scmp.eq.s32.totalorder %s15, 1
    %p59 = por %p57, %p58
    %p61 = scmp.ne.s32.totalorder %s46, %s60
    %p62 = scmp.eq.s32.totalorder %s15, 0
    %p63 = por %p61, %p62
    %s65 = sadd.s32 %s64, 1
    %p68 = scmp.eq.s32.totalorder %s9, 1
    %p69 = scmp.ne.s32.totalorder %s64, %s66
    %p70 = scmp.eq.s32.totalorder %s9, 0
    %p71 = por %p69, %p70
    %p72 = scmp.ne.s32.totalorder %s64, %s66
    %p73 = scmp.eq.s32.totalorder %s14, 1
    %p74 = por %p72, %p73
    %p75 = scmp.ne.s32.totalorder %s66, %s67
    %p76 = scmp.eq.s32.totalorder %s14, 0
    %p77 = por %p75, %p76
    %p78 = scmp.ne.s32.totalorder %s66, %s67
    %p79 = scmp.eq.s32.totalorder %s15, 1
    %p80 = por %p78, %p79
    %p82 = scmp.ne.s32.totalorder %s67, %s81
    %p83 = scmp.eq.s32.totalorder %s15, 0
    %p84 = por %p82, %p83
    %s85 = ssub.s32 %s9, %s16
    %p86 = scmp.eq.s32.totalorder %s85, 0
    %s88 = sadd.s32 %s87, 1
    %s89 = scalar_select %p86, %s87, %s88
    %p92 = pneg %p86
    %p93 = scmp.eq.s32.totalorder %s9, 1
    %p94 = por %p92, %p93
    %p95 = scmp.ne.s32.totalorder %s87, %s90
    %p96 = scmp.eq.s32.totalorder %s9, 0
    %p97 = por %p95, %p96
    %p98 = scmp.ne.s32.totalorder %s87, %s90
    %p99 = scmp.eq.s32.totalorder %s14, 1
    %p100 = por %p98, %p99
    %p101 = scmp.ne.s32.totalorder %s90, %s91
    %p102 = scmp.eq.s32.totalorder %s14, 0
    %p103 = por %p101, %p102
    %p104 = scmp.ne.s32.totalorder %s90, %s91
    %p105 = scmp.eq.s32.totalorder %s15, 1
    %p106 = por %p104, %p105
    %p108 = scmp.ne.s32.totalorder %s91, %s107
    %p109 = scmp.eq.s32.totalorder %s15, 0
    %p110 = por %p108, %p109
    %p111 = scmp.le.s32.totalorder 1, %s9
    %p112 = scmp.lt.s32.totalorder %s9, 3
    %p113 = pnand %p111, %p112
    %p114 = pneg %p113
    // Predicated region
    $region9: #{fwd.5} parent=5 // pred_check
      _
    $region10: #{fwd.5} parent=5 // pred_check_branch
      %116 = sbr.rel (%p113) target = $region12
    $region11: #{fwd.5} parent=5 // pred_region
      %s117 = ssub.s32 %s9, 1
      // Predicated region
      $region13: #{fwd.5} parent=11 // pred_check
        %p118 = pneg %p56
      $region14: #{fwd.5} parent=11 // pred_check_branch
        %120 = sbr.rel (%p118) target = $region16
      $region15: #{fwd.5} parent=11 // pred_region
        _
      $region16: #{fwd.5} parent=11 // pred_fallthru
        _
      // Predicated region
      $region17: #{fwd.5} parent=11 // pred_check
        %p121 = pneg %p77
      $region18: #{fwd.5} parent=11 // pred_check_branch
        %123 = sbr.rel (%p121) target = $region20
      $region19: #{fwd.5} parent=11 // pred_region
        _
      $region20: #{fwd.5} parent=11 // pred_fallthru
        _
    $region12: #{fwd.5} parent=5 // pred_fallthru
      _
    %p124 = scmp.lt.s32.totalorder %s9, 2
    // Predicated region
    $region21: #{fwd.5} parent=5 // pred_check
      %p125 = pneg %p124
    $region22: #{fwd.5} parent=5 // pred_check_branch
      %127 = sbr.rel (%p125) target = $region24
    $region23: #{fwd.5} parent=5 // pred_region
      // Predicated region
      $region25: #{fwd.5} parent=23 // pred_check
        %p128 = pneg %p29
      $region26: #{fwd.5} parent=23 // pred_check_branch
        %130 = sbr.rel (%p128) target = $region28
      $region27: #{fwd.5} parent=23 // pred_region
        %p131 = scmp.lt.s32.totalorder %s9, 1
        %s132 = scalar_select %p131, %s9, 1
        %s133 = smul.addr %s132, 54
        %s134 = smul.addr %s133, 4
        %s135 = scalar_lea.vmem %s0, %s134
      $region28: #{fwd.5} parent=23 // pred_fallthru
        _
    $region24: #{fwd.5} parent=5 // pred_fallthru
      _
    %p136 = scmp.le.s32.totalorder 1, %s9
    %p137 = scmp.lt.s32.totalorder %s9, 3
    %p138 = pnand %p136, %p137
    %p139 = pneg %p138
    // Predicated region
    $region29: #{fwd.5} parent=5 // pred_check
      _
    $region30: #{fwd.5} parent=5 // pred_check_branch
      %141 = sbr.rel (%p138) target = $region32
    $region31: #{fwd.5} parent=5 // pred_region
      %s142 = ssub.s32 %s9, 1
      %p143 = scmp.lt.s32.totalorder %s14, 1
      %s144 = scalar_select %p143, %s14, 1
      %s145 = smul.addr %s144, 54
      %s146 = smul.addr %s145, 4
      %s147 = scalar_lea.vmem %s0, %s146
      %p148 = pneg %p35
      %p149 = pneg %p32
      %p150 = pneg %p56
      %p151 = pneg %p53
      %p152 = pneg %p77
      %p153 = pneg %p74
      %p154 = pneg %p103
      %p155 = pneg %p100
      %p156 = scmp.lt.s32.totalorder %s14, 1
      %s157 = scalar_select %p156, %s14, 1
      %s158 = smul.addr %s157, 32
      %s159 = smul.addr %s158, 4
      %s160 = scalar_lea.vmem %s3, %s159
      %p161 = scmp.lt.s32.totalorder %s14, 1
      %s162 = scalar_select %p161, %s14, 1
      %s163 = smul.addr %s162, 54
      %s164 = smul.addr %s163, 4
      %s165 = scalar_lea.vmem %s0, %s164
      %p166 = scmp.lt.s32.totalorder %s14, 1
      %s167 = scalar_select %p166, %s14, 1
      %s168 = smul.addr %s167, 32
      %s169 = smul.addr %s168, 4
      %s170 = scalar_lea.vmem %s3, %s169
      %v172 = vld [vmem:[%s165] sm:$0xf]
      %v173 = vld [vmem:[%s165 + $0x4] sm:$0xf]
      %v174 = vld [vmem:[%s165 + $0x8] sm:$0x1]
      %v175 = vld [vmem:[%s165 + $0xc] sm:$0xf]
      %v176 = vld [vmem:[%s165 + $0x10] sm:$0xf]
      %v177 = vld [vmem:[%s165 + $0x14] sm:$0x1]
      %v178 = vld [vmem:[%s165 + $0x18] sm:$0xf]
      %v179 = vld [vmem:[%s165 + $0x1c] sm:$0xf]
      %v180 = vld [vmem:[%s165 + $0x20] sm:$0x1]
      %v181 = vld [vmem:[%s165 + $0x24] sm:$0xf]
      %v182 = vld [vmem:[%s165 + $0x28] sm:$0xf]
      %v183 = vld [vmem:[%s165 + $0x2c] sm:$0x1]
      %v184 = vld [vmem:[%s165 + $0x30] sm:$0xf]
      %v185 = vld [vmem:[%s165 + $0x34] sm:$0xf]
      %v186 = vld [vmem:[%s165 + $0x38] sm:$0x1]
      %v187 = vld [vmem:[%s165 + $0x3c] sm:$0xf]
      %v188 = vld [vmem:[%s165 + $0x40] sm:$0xf]
      %v189 = vld [vmem:[%s165 + $0x44] sm:$0x1]
      %v190 = vld [vmem:[%s165 + $0x48] sm:$0xf]
      %v191 = vld [vmem:[%s165 + $0x4c] sm:$0xf]
      %v192 = vld [vmem:[%s165 + $0x50] sm:$0x1]
      %v193 = vld [vmem:[%s165 + $0x54] sm:$0xf]
      %v194 = vld [vmem:[%s165 + $0x58] sm:$0xf]
      %v195 = vld [vmem:[%s165 + $0x5c] sm:$0x1]
      %v196 = vld [vmem:[%s165 + $0x60] sm:$0xf]
      %v197 = vld [vmem:[%s165 + $0x64] sm:$0xf]
      %v198 = vld [vmem:[%s165 + $0x68] sm:$0x1]
      %v199 = vld [vmem:[%s165 + $0x6c] sm:$0xf]
      %v200 = vld [vmem:[%s165 + $0x70] sm:$0xf]
      %v201 = vld [vmem:[%s165 + $0x74] sm:$0x1]
      %v202 = vld [vmem:[%s165 + $0x78] sm:$0xf]
      %v203 = vld [vmem:[%s165 + $0x7c] sm:$0xf]
      %v204 = vld [vmem:[%s165 + $0x80] sm:$0x1]
      %v205 = vld [vmem:[%s165 + $0x84] sm:$0xf]
      %v206 = vld [vmem:[%s165 + $0x88] sm:$0xf]
      %v207 = vld [vmem:[%s165 + $0x8c] sm:$0x1]
      %v208 = vld [vmem:[%s165 + $0x90] sm:$0xf]
      %v209 = vld [vmem:[%s165 + $0x94] sm:$0xf]
      %v210 = vld [vmem:[%s165 + $0x98] sm:$0x1]
      %v211 = vld [vmem:[%s165 + $0x9c] sm:$0xf]
      %v212 = vld [vmem:[%s165 + $0xa0] sm:$0xf]
      %v213 = vld [vmem:[%s165 + $0xa4] sm:$0x1]
      %v214 = vld [vmem:[%s165 + $0xa8] sm:$0xf]
      %v215 = vld [vmem:[%s165 + $0xac] sm:$0xf]
      %v216 = vld [vmem:[%s165 + $0xb0] sm:$0x1]
      %v217 = vld [vmem:[%s165 + $0xb4] sm:$0xf]
      %v218 = vld [vmem:[%s165 + $0xb8] sm:$0xf]
      %v219 = vld [vmem:[%s165 + $0xbc] sm:$0x1]
      %v220 = vld [vmem:[%s165 + $0xc0] sm:$0xf]
      %v221 = vld [vmem:[%s165 + $0xc4] sm:$0xf]
      %v222 = vld [vmem:[%s165 + $0xc8] sm:$0x1]
      %v223 = vld [vmem:[%s165 + $0xcc] sm:$0xf]
      %v224 = vld [vmem:[%s165 + $0xd0] sm:$0xf]
      %v225 = vld [vmem:[%s165 + $0xd4] sm:$0x1]
      %v226 = vunpack.c.l.bf16 %v172
      %v227 = vunpack.c.l.bf16 %v173
      %v228 = vunpack.c.l.bf16 %v174
      %v229 = vunpack.c.l.bf16 %v175
      %v230 = vunpack.c.l.bf16 %v176
      %v231 = vunpack.c.l.bf16 %v177
      %v232 = vunpack.c.l.bf16 %v178
      %v233 = vunpack.c.l.bf16 %v179
      %v234 = vunpack.c.l.bf16 %v180
      %v235 = vunpack.c.l.bf16 %v181
      %v236 = vunpack.c.l.bf16 %v182
      %v237 = vunpack.c.l.bf16 %v183
      %v238 = vunpack.c.l.bf16 %v184
      %v239 = vunpack.c.l.bf16 %v185
      %v240 = vunpack.c.l.bf16 %v186
      %v241 = vunpack.c.l.bf16 %v187
      %v242 = vunpack.c.l.bf16 %v188
      %v243 = vunpack.c.l.bf16 %v189
      %v244 = vunpack.c.l.bf16 %v190
      %v245 = vunpack.c.l.bf16 %v191
      %v246 = vunpack.c.l.bf16 %v192
      %v247 = vunpack.c.l.bf16 %v193
      %v248 = vunpack.c.l.bf16 %v194
      %v249 = vunpack.c.l.bf16 %v195
      %v250 = vunpack.c.l.bf16 %v196
      %v251 = vunpack.c.l.bf16 %v197
      %v252 = vunpack.c.l.bf16 %v198
      %v253 = vunpack.c.l.bf16 %v199
      %v254 = vunpack.c.l.bf16 %v200
      %v255 = vunpack.c.l.bf16 %v201
      %v256 = vunpack.c.l.bf16 %v202
      %v257 = vunpack.c.l.bf16 %v203
      %v258 = vunpack.c.l.bf16 %v204
      %v259 = vunpack.c.l.bf16 %v205
      %v260 = vunpack.c.l.bf16 %v206
      %v261 = vunpack.c.l.bf16 %v207
      %v262 = vunpack.c.l.bf16 %v208
      %v263 = vunpack.c.l.bf16 %v209
      %v264 = vunpack.c.l.bf16 %v210
      %v265 = vunpack.c.l.bf16 %v211
      %v266 = vunpack.c.l.bf16 %v212
      %v267 = vunpack.c.l.bf16 %v213
      %v268 = vunpack.c.l.bf16 %v214
      %v269 = vunpack.c.l.bf16 %v215
      %v270 = vunpack.c.l.bf16 %v216
      %v271 = vunpack.c.l.bf16 %v217
      %v272 = vunpack.c.l.bf16 %v218
      %v273 = vunpack.c.l.bf16 %v219
      %v274 = vunpack.c.l.bf16 %v220
      %v275 = vunpack.c.l.bf16 %v221
      %v276 = vunpack.c.l.bf16 %v222
      %v277 = vunpack.c.l.bf16 %v223
      %v278 = vunpack.c.l.bf16 %v224
      %v279 = vunpack.c.l.bf16 %v225
      %v280 = vpack.c.bf16 %v227, %v226
      %v281 = vpack.c.bf16 %v230, %v229
      %v282 = vpack.c.bf16 %v233, %v232
      %v283 = vpack.c.bf16 %v236, %v235
      %v284 = vpack.c.bf16 %v239, %v238
      %v285 = vpack.c.bf16 %v242, %v241
      %v286 = vpack.c.bf16 %v245, %v244
      %v287 = vpack.c.bf16 %v248, %v247
      %v288 = vpack.c.bf16 %v251, %v250
      %v289 = vpack.c.bf16 %v254, %v253
      %v290 = vpack.c.bf16 %v257, %v256
      %v291 = vpack.c.bf16 %v260, %v259
      %v292 = vpack.c.bf16 %v263, %v262
      %v293 = vpack.c.bf16 %v266, %v265
      %v294 = vpack.c.bf16 %v269, %v268
      %v295 = vpack.c.bf16 %v272, %v271
      %v296 = vld [vmem:[%s1] sm:$0xf]
      %v297 = vld [vmem:[%s1 + $0x4] sm:$0xf]
      %vm346 = vcmask 1046528
      %v347 = vrot.slane %v226, 1
      %v348 = vrot.slane %v227, 1
      %v349 = vsel %vm346, %v347, %v348
      %v350 = vrot.slane %v228, 1
      %v351 = vsel %vm346, %v348, %v350
      %v352 = vrot.slane %v229, 1
      %v353 = vrot.slane %v230, 1
      %v354 = vsel %vm346, %v352, %v353
      %v355 = vrot.slane %v231, 1
      %v356 = vsel %vm346, %v353, %v355
      %v357 = vrot.slane %v232, 1
      %v358 = vrot.slane %v233, 1
      %v359 = vsel %vm346, %v357, %v358
      %v360 = vrot.slane %v234, 1
      %v361 = vsel %vm346, %v358, %v360
      %v362 = vrot.slane %v235, 1
      %v363 = vrot.slane %v236, 1
      %v364 = vsel %vm346, %v362, %v363
      %v365 = vrot.slane %v237, 1
      %v366 = vsel %vm346, %v363, %v365
      %v367 = vrot.slane %v238, 1
      %v368 = vrot.slane %v239, 1
      %v369 = vsel %vm346, %v367, %v368
      %v370 = vrot.slane %v240, 1
      %v371 = vsel %vm346, %v368, %v370
      %v372 = vrot.slane %v241, 1
      %v373 = vrot.slane %v242, 1
      %v374 = vsel %vm346, %v372, %v373
      %v375 = vrot.slane %v243, 1
      %v376 = vsel %vm346, %v373, %v375
      %v377 = vrot.slane %v244, 1
      %v378 = vrot.slane %v245, 1
      %v379 = vsel %vm346, %v377, %v378
      %v380 = vrot.slane %v246, 1
      %v381 = vsel %vm346, %v378, %v380
      %v382 = vrot.slane %v247, 1
      %v383 = vrot.slane %v248, 1
      %v384 = vsel %vm346, %v382, %v383
      %v385 = vrot.slane %v249, 1
      %v386 = vsel %vm346, %v383, %v385
      %v387 = vrot.slane %v250, 1
      %v388 = vrot.slane %v251, 1
      %v389 = vsel %vm346, %v387, %v388
      %v390 = vrot.slane %v252, 1
      %v391 = vsel %vm346, %v388, %v390
      %v392 = vrot.slane %v253, 1
      %v393 = vrot.slane %v254, 1
      %v394 = vsel %vm346, %v392, %v393
      %v395 = vrot.slane %v255, 1
      %v396 = vsel %vm346, %v393, %v395
      %v397 = vrot.slane %v256, 1
      %v398 = vrot.slane %v257, 1
      %v399 = vsel %vm346, %v397, %v398
      %v400 = vrot.slane %v258, 1
      %v401 = vsel %vm346, %v398, %v400
      %v402 = vrot.slane %v259, 1
      %v403 = vrot.slane %v260, 1
      %v404 = vsel %vm346, %v402, %v403
      %v405 = vrot.slane %v261, 1
      %v406 = vsel %vm346, %v403, %v405
      %v407 = vrot.slane %v262, 1
      %v408 = vrot.slane %v263, 1
      %v409 = vsel %vm346, %v407, %v408
      %v410 = vrot.slane %v264, 1
      %v411 = vsel %vm346, %v408, %v410
      %v412 = vrot.slane %v265, 1
      %v413 = vrot.slane %v266, 1
      %v414 = vsel %vm346, %v412, %v413
      %v415 = vrot.slane %v267, 1
      %v416 = vsel %vm346, %v413, %v415
      %v417 = vrot.slane %v268, 1
      %v418 = vrot.slane %v269, 1
      %v419 = vsel %vm346, %v417, %v418
      %v420 = vrot.slane %v270, 1
      %v421 = vsel %vm346, %v418, %v420
      %v422 = vrot.slane %v271, 1
      %v423 = vrot.slane %v272, 1
      %v424 = vsel %vm346, %v422, %v423
      %v425 = vrot.slane %v273, 1
      %v426 = vsel %vm346, %v423, %v425
      %v459 = vpack.c.bf16 %v351, %v349
      %v460 = vpack.c.bf16 %v356, %v354
      %v461 = vpack.c.bf16 %v361, %v359
      %v462 = vpack.c.bf16 %v366, %v364
      %v463 = vpack.c.bf16 %v371, %v369
      %v464 = vpack.c.bf16 %v376, %v374
      %v465 = vpack.c.bf16 %v381, %v379
      %v466 = vpack.c.bf16 %v386, %v384
      %v467 = vpack.c.bf16 %v391, %v389
      %v468 = vpack.c.bf16 %v396, %v394
      %v469 = vpack.c.bf16 %v401, %v399
      %v470 = vpack.c.bf16 %v406, %v404
      %v471 = vpack.c.bf16 %v411, %v409
      %v472 = vpack.c.bf16 %v416, %v414
      %v473 = vpack.c.bf16 %v421, %v419
      %v474 = vpack.c.bf16 %v426, %v424
      %s475 = scalar_lea.vmem %s1, 8
      %v476 = vld [vmem:[%s475] sm:$0xf]
      %v477 = vld [vmem:[%s475 + $0x4] sm:$0xf]
      %v480 = vunpack.c.l.b16 %v476
      %v481 = vunpack.c.l.b16 %v477
      %v482 = vpack.c.b16 %v481, %v480
      %vm484 = vcmask 130048
      %v486 = vsel %vm484, %v459, 0
      %v489 = vsel %vm484, %v460, 0
      %v492 = vsel %vm484, %v461, 0
      %v495 = vsel %vm484, %v462, 0
      %v498 = vsel %vm484, %v463, 0
      %v501 = vsel %vm484, %v464, 0
      %v504 = vsel %vm484, %v465, 0
      %v507 = vsel %vm484, %v466, 0
      %v510 = vsel %vm484, %v467, 0
      %v513 = vsel %vm484, %v468, 0
      %v516 = vsel %vm484, %v469, 0
      %v519 = vsel %vm484, %v470, 0
      %v522 = vsel %vm484, %v471, 0
      %v525 = vsel %vm484, %v472, 0
      %v528 = vsel %vm484, %v473, 0
      %v531 = vsel %vm484, %v474, 0
      %533 = vmatprep.subr.bf16.mxu0 0
      %534 = vmatpush1.bf16.msra.mxu0 %v482
      %535 = vmatprep.subr.bf16.mxu0 0
      %536 = vmatpush1.bf16.msra.mxu0 0
      %537 = vmatprep.subr.bf16.mxu0 0
      %538 = vmatpush1.bf16.msra.mxu0 0
      %539 = vmatprep.subr.bf16.mxu0 0
      %540 = vmatpush1.bf16.msra.mxu0 0
      %541 = vmatprep.subr.bf16.mxu0 0
      %542 = vmatpush1.bf16.msra.mxu0 0
      %543 = vmatprep.subr.bf16.mxu0 0
      %544 = vmatpush1.bf16.msra.mxu0 0
      %545 = vmatprep.subr.bf16.mxu0 0
      %546 = vmatpush1.bf16.msra.mxu0 0
      %547 = vmatprep.subr.bf16.mxu0 0
      %548 = vmatpush1.bf16.msra.mxu0 0
      %549 = vmatprep.subr.bf16.mxu0 0
      %550 = vmatpush1.bf16.msra.mxu0 0
      %551 = vmatprep.subr.bf16.mxu0 0
      %552 = vmatpush1.bf16.msra.mxu0 0
      %553 = vmatprep.subr.bf16.mxu0 0
      %554 = vmatpush1.bf16.msra.mxu0 0
      %555 = vmatprep.subr.bf16.mxu0 0
      %556 = vmatpush1.bf16.msra.mxu0 0
      %557 = vmatprep.subr.bf16.mxu0 0
      %558 = vmatpush1.bf16.msra.mxu0 0
      %559 = vmatprep.subr.bf16.mxu0 0
      %560 = vmatpush1.bf16.msra.mxu0 0
      %561 = vmatprep.subr.bf16.mxu0 0
      %562 = vmatpush1.bf16.msra.mxu0 0
      %563 = vmatprep.subr.bf16.mxu0 0
      %564 = vmatpush1.bf16.msra.mxu0 0
      %565 = vmatprep.mubr.bf16.mxu0 0
      %566 = vmatmul.mubr.bf16.gmra.mrb[0].mxu0 %v486
      %v567 = vpop.f32.mrb[0].mxu0
      %v568 = vadd.f32 0.0, %v567
      %v569 = vpop.f32.mrb[0].mxu0
      %v570 = vpop.f32.mrb[0].mxu0
      %v571 = vadd.f32 0.0, %v570
      %v572 = vpop.f32.mrb[0].mxu0
      %573 = vmatprep.mubr.bf16.mxu0 0
      %574 = vmatmul.mubr.bf16.gmra.mrb[0].mxu0 %v489
      %v575 = vpop.f32.mrb[0].mxu0
      %v576 = vadd.f32 0.0, %v575
      %v577 = vpop.f32.mrb[0].mxu0
      %v578 = vpop.f32.mrb[0].mxu0
      %v579 = vadd.f32 0.0, %v578
      %v580 = vpop.f32.mrb[0].mxu0
      %581 = vmatprep.mubr.bf16.mxu0 0
      %582 = vmatmul.mubr.bf16.gmra.mrb[0].mxu0 %v492
      %v583 = vpop.f32.mrb[0].mxu0
      %v584 = vadd.f32 0.0, %v583
      %v585 = vpop.f32.mrb[0].mxu0
      %v586 = vpop.f32.mrb[0].mxu0
      %v587 = vadd.f32 0.0, %v586
      %v588 = vpop.f32.mrb[0].mxu0
      %589 = vmatprep.mubr.bf16.mxu0 0
      %590 = vmatmul.mubr.bf16.gmra.mrb[0].mxu0 %v495
      %v591 = vpop.f32.mrb[0].mxu0
      %v592 = vadd.f32 0.0, %v591
      %v593 = vpop.f32.mrb[0].mxu0
      %v594 = vpop.f32.mrb[0].mxu0
      %v595 = vadd.f32 0.0, %v594
      %v596 = vpop.f32.mrb[0].mxu0
      %597 = vmatprep.mubr.bf16.mxu0 0
      %598 = vmatmul.mubr.bf16.gmra.mrb[0].mxu0 %v498
      %v599 = vpop.f32.mrb[0].mxu0
      %v600 = vadd.f32 0.0, %v599
      %v601 = vpop.f32.mrb[0].mxu0
      %v602 = vpop.f32.mrb[0].mxu0
      %v603 = vadd.f32 0.0, %v602
      %v604 = vpop.f32.mrb[0].mxu0
      %605 = vmatprep.mubr.bf16.mxu0 0
      %606 = vmatmul.mubr.bf16.gmra.mrb[0].mxu0 %v501
      %v607 = vpop.f32.mrb[0].mxu0
      %v608 = vadd.f32 0.0, %v607
      %v609 = vpop.f32.mrb[0].mxu0
      %v610 = vpop.f32.mrb[0].mxu0
      %v611 = vadd.f32 0.0, %v610
      %v612 = vpop.f32.mrb[0].mxu0
      %613 = vmatprep.mubr.bf16.mxu0 0
      %614 = vmatmul.mubr.bf16.gmra.mrb[0].mxu0 %v504
      %v615 = vpop.f32.mrb[0].mxu0
      %v616 = vadd.f32 0.0, %v615
      %v617 = vpop.f32.mrb[0].mxu0
      %v618 = vpop.f32.mrb[0].mxu0
      %v619 = vadd.f32 0.0, %v618
      %v620 = vpop.f32.mrb[0].mxu0
      %621 = vmatprep.mubr.bf16.mxu0 0
      %622 = vmatmul.mubr.bf16.gmra.mrb[0].mxu0 %v507
      %v623 = vpop.f32.mrb[0].mxu0
      %v624 = vadd.f32 0.0, %v623
      %v625 = vpop.f32.mrb[0].mxu0
      %v626 = vpop.f32.mrb[0].mxu0
      %v627 = vadd.f32 0.0, %v626
      %v628 = vpop.f32.mrb[0].mxu0
      %629 = vmatprep.mubr.bf16.mxu0 0
      %630 = vmatmul.mubr.bf16.gmra.mrb[0].mxu0 %v510
      %v631 = vpop.f32.mrb[0].mxu0
      %v632 = vadd.f32 0.0, %v631
      %v633 = vpop.f32.mrb[0].mxu0
      %v634 = vpop.f32.mrb[0].mxu0
      %v635 = vadd.f32 0.0, %v634
      %v636 = vpop.f32.mrb[0].mxu0
      %637 = vmatprep.mubr.bf16.mxu0 0
      %638 = vmatmul.mubr.bf16.gmra.mrb[0].mxu0 %v513
      %v639 = vpop.f32.mrb[0].mxu0
      %v640 = vadd.f32 0.0, %v639
      %v641 = vpop.f32.mrb[0].mxu0
      %v642 = vpop.f32.mrb[0].mxu0
      %v643 = vadd.f32 0.0, %v642
      %v644 = vpop.f32.mrb[0].mxu0
      %645 = vmatprep.mubr.bf16.mxu0 0
      %646 = vmatmul.mubr.bf16.gmra.mrb[0].mxu0 %v516
      %v647 = vpop.f32.mrb[0].mxu0
      %v648 = vadd.f32 0.0, %v647
      %v649 = vpop.f32.mrb[0].mxu0
      %v650 = vpop.f32.mrb[0].mxu0
      %v651 = vadd.f32 0.0, %v650
      %v652 = vpop.f32.mrb[0].mxu0
      %653 = vmatprep.mubr.bf16.mxu0 0
      %654 = vmatmul.mubr.bf16.gmra.mrb[0].mxu0 %v519
      %v655 = vpop.f32.mrb[0].mxu0
      %v656 = vadd.f32 0.0, %v655
      %v657 = vpop.f32.mrb[0].mxu0
      %v658 = vpop.f32.mrb[0].mxu0
      %v659 = vadd.f32 0.0, %v658
      %v660 = vpop.f32.mrb[0].mxu0
      %661 = vmatprep.mubr.bf16.mxu0 0
      %662 = vmatmul.mubr.bf16.gmra.mrb[0].mxu0 %v522
      %v663 = vpop.f32.mrb[0].mxu0
      %v664 = vadd.f32 0.0, %v663
      %v665 = vpop.f32.mrb[0].mxu0
      %v666 = vpop.f32.mrb[0].mxu0
      %v667 = vadd.f32 0.0, %v666
      %v668 = vpop.f32.mrb[0].mxu0
      %669 = vmatprep.mubr.bf16.mxu0 0
      %670 = vmatmul.mubr.bf16.gmra.mrb[0].mxu0 %v525
      %v671 = vpop.f32.mrb[0].mxu0
      %v672 = vadd.f32 0.0, %v671
      %v673 = vpop.f32.mrb[0].mxu0
      %v674 = vpop.f32.mrb[0].mxu0
      %v675 = vadd.f32 0.0, %v674
      %v676 = vpop.f32.mrb[0].mxu0
      %677 = vmatprep.mubr.bf16.mxu0 0
      %678 = vmatmul.mubr.bf16.gmra.mrb[0].mxu0 %v528
      %v679 = vpop.f32.mrb[0].mxu0
      %v680 = vadd.f32 0.0, %v679
      %v681 = vpop.f32.mrb[0].mxu0
      %v682 = vpop.f32.mrb[0].mxu0
      %v683 = vadd.f32 0.0, %v682
      %v684 = vpop.f32.mrb[0].mxu0
      %685 = vmatprep.mubr.bf16.mxu0 0
      %686 = vmatmul.mubr.bf16.gmra.mrb[0].mxu0 %v531
      %v687 = vpop.f32.mrb[0].mxu0
      %v688 = vadd.f32 0.0, %v687
      %v689 = vpop.f32.mrb[0].mxu0
      %v690 = vpop.f32.mrb[0].mxu0
      %v691 = vadd.f32 0.0, %v690
      %v692 = vpop.f32.mrb[0].mxu0
      %693 = vdwg.mxu0
      %v696 = vunpack.c.l.b16 %v296
      %v697 = vunpack.c.l.b16 %v297
      %v698 = vpack.c.b16 %v697, %v696
      %v701 = vsel %vm484, %v280, 0
      %v704 = vsel %vm484, %v281, 0
      %v707 = vsel %vm484, %v282, 0
      %v710 = vsel %vm484, %v283, 0
      %v713 = vsel %vm484, %v284, 0
      %v716 = vsel %vm484, %v285, 0
      %v719 = vsel %vm484, %v286, 0
      %v722 = vsel %vm484, %v287, 0
      %v725 = vsel %vm484, %v288, 0
      %v728 = vsel %vm484, %v289, 0
      %v731 = vsel %vm484, %v290, 0
      %v734 = vsel %vm484, %v291, 0
      %v737 = vsel %vm484, %v292, 0
      %v740 = vsel %vm484, %v293, 0
      %v743 = vsel %vm484, %v294, 0
      %v746 = vsel %vm484, %v295, 0
      %748 = vmatprep.subr.bf16.mxu0 0
      %749 = vmatpush1.bf16.msra.mxu0 %v698
      %750 = vmatprep.subr.bf16.mxu0 0
      %751 = vmatpush1.bf16.msra.mxu0 0
      %752 = vmatprep.subr.bf16.mxu0 0
      %753 = vmatpush1.bf16.msra.mxu0 0
      %754 = vmatprep.subr.bf16.mxu0 0
      %755 = vmatpush1.bf16.msra.mxu0 0
      %756 = vmatprep.subr.bf16.mxu0 0
      %757 = vmatpush1.bf16.msra.mxu0 0
      %758 = vmatprep.subr.bf16.mxu0 0
      %759 = vmatpush1.bf16.msra.mxu0 0
      %760 = vmatprep.subr.bf16.mxu0 0
      %761 = vmatpush1.bf16.msra.mxu0 0
      %762 = vmatprep.subr.bf16.mxu0 0
      %763 = vmatpush1.bf16.msra.mxu0 0
      %764 = vmatprep.subr.bf16.mxu0 0
      %765 = vmatpush1.bf16.msra.mxu0 0
      %766 = vmatprep.subr.bf16.mxu0 0
      %767 = vmatpush1.bf16.msra.mxu0 0
      %768 = vmatprep.subr.bf16.mxu0 0
      %769 = vmatpush1.bf16.msra.mxu0 0
      %770 = vmatprep.subr.bf16.mxu0 0
      %771 = vmatpush1.bf16.msra.mxu0 0
      %772 = vmatprep.subr.bf16.mxu0 0
      %773 = vmatpush1.bf16.msra.mxu0 0
      %774 = vmatprep.subr.bf16.mxu0 0
      %775 = vmatpush1.bf16.msra.mxu0 0
      %776 = vmatprep.subr.bf16.mxu0 0
      %777 = vmatpush1.bf16.msra.mxu0 0
      %778 = vmatprep.subr.bf16.mxu0 0
      %779 = vmatpush1.bf16.msra.mxu0 0
      %780 = vmatprep.mubr.bf16.mxu0 0
      %781 = vmatmul.mubr.bf16.gmra.mrb[0].mxu0 %v701
      %v782 = vpop.f32.mrb[0].mxu0
      %v783 = vadd.f32 %v568, %v782
      %v784 = vpop.f32.mrb[0].mxu0
      %v785 = vpop.f32.mrb[0].mxu0
      %v786 = vadd.f32 %v571, %v785
      %v787 = vpop.f32.mrb[0].mxu0
      %788 = vmatprep.mubr.bf16.mxu0 0
      %789 = vmatmul.mubr.bf16.gmra.mrb[0].mxu0 %v704
      %v790 = vpop.f32.mrb[0].mxu0
      %v791 = vadd.f32 %v576, %v790
      %v792 = vpop.f32.mrb[0].mxu0
      %v793 = vpop.f32.mrb[0].mxu0
      %v794 = vadd.f32 %v579, %v793
      %v795 = vpop.f32.mrb[0].mxu0
      %796 = vmatprep.mubr.bf16.mxu0 0
      %797 = vmatmul.mubr.bf16.gmra.mrb[0].mxu0 %v707
      %v798 = vpop.f32.mrb[0].mxu0
      %v799 = vadd.f32 %v584, %v798
      %v800 = vpop.f32.mrb[0].mxu0
      %v801 = vpop.f32.mrb[0].mxu0
      %v802 = vadd.f32 %v587, %v801
      %v803 = vpop.f32.mrb[0].mxu0
      %804 = vmatprep.mubr.bf16.mxu0 0
      %805 = vmatmul.mubr.bf16.gmra.mrb[0].mxu0 %v710
      %v806 = vpop.f32.mrb[0].mxu0
      %v807 = vadd.f32 %v592, %v806
      %v808 = vpop.f32.mrb[0].mxu0
      %v809 = vpop.f32.mrb[0].mxu0
      %v810 = vadd.f32 %v595, %v809
      %v811 = vpop.f32.mrb[0].mxu0
      %812 = vmatprep.mubr.bf16.mxu0 0
      %813 = vmatmul.mubr.bf16.gmra.mrb[0].mxu0 %v713
      %v814 = vpop.f32.mrb[0].mxu0
      %v815 = vadd.f32 %v600, %v814
      %v816 = vpop.f32.mrb[0].mxu0
      %v817 = vpop.f32.mrb[0].mxu0
      %v818 = vadd.f32 %v603, %v817
      %v819 = vpop.f32.mrb[0].mxu0
      %820 = vmatprep.mubr.bf16.mxu0 0
      %821 = vmatmul.mubr.bf16.gmra.mrb[0].mxu0 %v716
      %v822 = vpop.f32.mrb[0].mxu0
      %v823 = vadd.f32 %v608, %v822
      %v824 = vpop.f32.mrb[0].mxu0
      %v825 = vpop.f32.mrb[0].mxu0
      %v826 = vadd.f32 %v611, %v825
      %v827 = vpop.f32.mrb[0].mxu0
      %828 = vmatprep.mubr.bf16.mxu0 0
      %829 = vmatmul.mubr.bf16.gmra.mrb[0].mxu0 %v719
      %v830 = vpop.f32.mrb[0].mxu0
      %v831 = vadd.f32 %v616, %v830
      %v832 = vpop.f32.mrb[0].mxu0
      %v833 = vpop.f32.mrb[0].mxu0
      %v834 = vadd.f32 %v619, %v833
      %v835 = vpop.f32.mrb[0].mxu0
      %836 = vmatprep.mubr.bf16.mxu0 0
      %837 = vmatmul.mubr.bf16.gmra.mrb[0].mxu0 %v722
      %v838 = vpop.f32.mrb[0].mxu0
      %v839 = vadd.f32 %v624, %v838
      %v840 = vpop.f32.mrb[0].mxu0
      %v841 = vpop.f32.mrb[0].mxu0
      %v842 = vadd.f32 %v627, %v841
      %v843 = vpop.f32.mrb[0].mxu0
      %844 = vmatprep.mubr.bf16.mxu0 0
      %845 = vmatmul.mubr.bf16.gmra.mrb[0].mxu0 %v725
      %v846 = vpop.f32.mrb[0].mxu0
      %v847 = vadd.f32 %v632, %v846
      %v848 = vpop.f32.mrb[0].mxu0
      %v849 = vpop.f32.mrb[0].mxu0
      %v850 = vadd.f32 %v635, %v849
      %v851 = vpop.f32.mrb[0].mxu0
      %852 = vmatprep.mubr.bf16.mxu0 0
      %853 = vmatmul.mubr.bf16.gmra.mrb[0].mxu0 %v728
      %v854 = vpop.f32.mrb[0].mxu0
      %v855 = vadd.f32 %v640, %v854
      %v856 = vpop.f32.mrb[0].mxu0
      %v857 = vpop.f32.mrb[0].mxu0
      %v858 = vadd.f32 %v643, %v857
      %v859 = vpop.f32.mrb[0].mxu0
      %860 = vmatprep.mubr.bf16.mxu0 0
      %861 = vmatmul.mubr.bf16.gmra.mrb[0].mxu0 %v731
      %v862 = vpop.f32.mrb[0].mxu0
      %v863 = vadd.f32 %v648, %v862
      %v864 = vpop.f32.mrb[0].mxu0
      %v865 = vpop.f32.mrb[0].mxu0
      %v866 = vadd.f32 %v651, %v865
      %v867 = vpop.f32.mrb[0].mxu0
      %868 = vmatprep.mubr.bf16.mxu0 0
      %869 = vmatmul.mubr.bf16.gmra.mrb[0].mxu0 %v734
      %v870 = vpop.f32.mrb[0].mxu0
      %v871 = vadd.f32 %v656, %v870
      %v872 = vpop.f32.mrb[0].mxu0
      %v873 = vpop.f32.mrb[0].mxu0
      %v874 = vadd.f32 %v659, %v873
      %v875 = vpop.f32.mrb[0].mxu0
      %876 = vmatprep.mubr.bf16.mxu0 0
      %877 = vmatmul.mubr.bf16.gmra.mrb[0].mxu0 %v737
      %v878 = vpop.f32.mrb[0].mxu0
      %v879 = vadd.f32 %v664, %v878
      %v880 = vpop.f32.mrb[0].mxu0
      %v881 = vpop.f32.mrb[0].mxu0
      %v882 = vadd.f32 %v667, %v881
      %v883 = vpop.f32.mrb[0].mxu0
      %884 = vmatprep.mubr.bf16.mxu0 0
      %885 = vmatmul.mubr.bf16.gmra.mrb[0].mxu0 %v740
      %v886 = vpop.f32.mrb[0].mxu0
      %v887 = vadd.f32 %v672, %v886
      %v888 = vpop.f32.mrb[0].mxu0
      %v889 = vpop.f32.mrb[0].mxu0
      %v890 = vadd.f32 %v675, %v889
      %v891 = vpop.f32.mrb[0].mxu0
      %892 = vmatprep.mubr.bf16.mxu0 0
      %893 = vmatmul.mubr.bf16.gmra.mrb[0].mxu0 %v743
      %v894 = vpop.f32.mrb[0].mxu0
      %v895 = vadd.f32 %v680, %v894
      %v896 = vpop.f32.mrb[0].mxu0
      %v897 = vpop.f32.mrb[0].mxu0
      %v898 = vadd.f32 %v683, %v897
      %v899 = vpop.f32.mrb[0].mxu0
      %900 = vmatprep.mubr.bf16.mxu0 0
      %901 = vmatmul.mubr.bf16.gmra.mrb[0].mxu0 %v746
      %v902 = vpop.f32.mrb[0].mxu0
      %v903 = vadd.f32 %v688, %v902
      %v904 = vpop.f32.mrb[0].mxu0
      %v905 = vpop.f32.mrb[0].mxu0
      %v906 = vadd.f32 %v691, %v905
      %v907 = vpop.f32.mrb[0].mxu0
      %908 = vdwg.mxu0
      %vm909 = vcmask 1045504
      %v910 = vrot.slane %v226, 2
      %v911 = vrot.slane %v227, 2
      %v912 = vsel %vm909, %v910, %v911
      %v913 = vrot.slane %v228, 2
      %v914 = vsel %vm909, %v911, %v913
      %v915 = vrot.slane %v229, 2
      %v916 = vrot.slane %v230, 2
      %v917 = vsel %vm909, %v915, %v916
      %v918 = vrot.slane %v231, 2
      %v919 = vsel %vm909, %v916, %v918
      %v920 = vrot.slane %v232, 2
      %v921 = vrot.slane %v233, 2
      %v922 = vsel %vm909, %v920, %v921
      %v923 = vrot.slane %v234, 2
      %v924 = vsel %vm909, %v921, %v923
      %v925 = vrot.slane %v235, 2
      %v926 = vrot.slane %v236, 2
      %v927 = vsel %vm909, %v925, %v926
      %v928 = vrot.slane %v237, 2
      %v929 = vsel %vm909, %v926, %v928
      %v930 = vrot.slane %v238, 2
      %v931 = vrot.slane %v239, 2
      %v932 = vsel %vm909, %v930, %v931
      %v933 = vrot.slane %v240, 2
      %v934 = vsel %vm909, %v931, %v933
      %v935 = vrot.slane %v241, 2
      %v936 = vrot.slane %v242, 2
      %v937 = vsel %vm909, %v935, %v936
      %v938 = vrot.slane %v243, 2
      %v939 = vsel %vm909, %v936, %v938
      %v940 = vrot.slane %v244, 2
      %v941 = vrot.slane %v245, 2
      %v942 = vsel %vm909, %v940, %v941
      %v943 = vrot.slane %v246, 2
      %v944 = vsel %vm909, %v941, %v943
      %v945 = vrot.slane %v247, 2
      %v946 = vrot.slane %v248, 2
      %v947 = vsel %vm909, %v945, %v946
      %v948 = vrot.slane %v249, 2
      %v949 = vsel %vm909, %v946, %v948
      %v950 = vrot.slane %v250, 2
      %v951 = vrot.slane %v251, 2
      %v952 = vsel %vm909, %v950, %v951
      %v953 = vrot.slane %v252, 2
      %v954 = vsel %vm909, %v951, %v953
      %v955 = vrot.slane %v253, 2
      %v956 = vrot.slane %v254, 2
      %v957 = vsel %vm909, %v955, %v956
      %v958 = vrot.slane %v255, 2
      %v959 = vsel %vm909, %v956, %v958
      %v960 = vrot.slane %v256, 2
      %v961 = vrot.slane %v257, 2
      %v962 = vsel %vm909, %v960, %v961
      %v963 = vrot.slane %v258, 2
      %v964 = vsel %vm909, %v961, %v963
      %v965 = vrot.slane %v259, 2
      %v966 = vrot.slane %v260, 2
      %v967 = vsel %vm909, %v965, %v966
      %v968 = vrot.slane %v261, 2
      %v969 = vsel %vm909, %v966, %v968
      %v970 = vrot.slane %v262, 2
      %v971 = vrot.slane %v263, 2
      %v972 = vsel %vm909, %v970, %v971
      %v973 = vrot.slane %v264, 2
      %v974 = vsel %vm909, %v971, %v973
      %v975 = vrot.slane %v265, 2
      %v976 = vrot.slane %v266, 2
      %v977 = vsel %vm909, %v975, %v976
      %v978 = vrot.slane %v267, 2
      %v979 = vsel %vm909, %v976, %v978
      %v980 = vrot.slane %v268, 2
      %v981 = vrot.slane %v269, 2
      %v982 = vsel %vm909, %v980, %v981
      %v983 = vrot.slane %v270, 2
      %v984 = vsel %vm909, %v981, %v983
      %v985 = vrot.slane %v271, 2
      %v986 = vrot.slane %v272, 2
      %v987 = vsel %vm909, %v985, %v986
      %v988 = vrot.slane %v273, 2
      %v989 = vsel %vm909, %v986, %v988
      %v1022 = vpack.c.bf16 %v914, %v912
      %v1023 = vpack.c.bf16 %v919, %v917
      %v1024 = vpack.c.bf16 %v924, %v922
      %v1025 = vpack.c.bf16 %v929, %v927
      %v1026 = vpack.c.bf16 %v934, %v932
      %v1027 = vpack.c.bf16 %v939, %v937
      %v1028 = vpack.c.bf16 %v944, %v942
      %v1029 = vpack.c.bf16 %v949, %v947
      %v1030 = vpack.c.bf16 %v954, %v952
      %v1031 = vpack.c.bf16 %v959, %v957
      %v1032 = vpack.c.bf16 %v964, %v962
      %v1033 = vpack.c.bf16 %v969, %v967
      %v1034 = vpack.c.bf16 %v974, %v972
      %v1035 = vpack.c.bf16 %v979, %v977
      %v1036 = vpack.c.bf16 %v984, %v982
      %v1037 = vpack.c.bf16 %v989, %v987
      %s1038 = scalar_lea.vmem %s1, 16
      %v1039 = vld [vmem:[%s1038] sm:$0xf]
      %v1040 = vld [vmem:[%s1038 + $0x4] sm:$0xf]
      %v1043 = vunpack.c.l.b16 %v1039
      %v1044 = vunpack.c.l.b16 %v1040
      %v1045 = vpack.c.b16 %v1044, %v1043
      %v1048 = vsel %vm484, %v1022, 0
      %v1051 = vsel %vm484, %v1023, 0
      %v1054 = vsel %vm484, %v1024, 0
      %v1057 = vsel %vm484, %v1025, 0
      %v1060 = vsel %vm484, %v1026, 0
      %v1063 = vsel %vm484, %v1027, 0
      %v1066 = vsel %vm484, %v1028, 0
      %v1069 = vsel %vm484, %v1029, 0
      %v1072 = vsel %vm484, %v1030, 0
      %v1075 = vsel %vm484, %v1031, 0
      %v1078 = vsel %vm484, %v1032, 0
      %v1081 = vsel %vm484, %v1033, 0
      %v1084 = vsel %vm484, %v1034, 0
      %v1087 = vsel %vm484, %v1035, 0
      %v1090 = vsel %vm484, %v1036, 0
      %v1093 = vsel %vm484, %v1037, 0
      %1095 = vmatprep.subr.bf16.mxu0 0
      %1096 = vmatpush1.bf16.msra.mxu0 %v1045
      %1097 = vmatprep.subr.bf16.mxu0 0
      %1098 = vmatpush1.bf16.msra.mxu0 0
      %1099 = vmatprep.subr.bf16.mxu0 0
      %1100 = vmatpush1.bf16.msra.mxu0 0
      %1101 = vmatprep.subr.bf16.mxu0 0
      %1102 = vmatpush1.bf16.msra.mxu0 0
      %1103 = vmatprep.subr.bf16.mxu0 0
      %1104 = vmatpush1.bf16.msra.mxu0 0
      %1105 = vmatprep.subr.bf16.mxu0 0
      %1106 = vmatpush1.bf16.msra.mxu0 0
      %1107 = vmatprep.subr.bf16.mxu0 0
      %1108 = vmatpush1.bf16.msra.mxu0 0
      %1109 = vmatprep.subr.bf16.mxu0 0
      %1110 = vmatpush1.bf16.msra.mxu0 0
      %1111 = vmatprep.subr.bf16.mxu0 0
      %1112 = vmatpush1.bf16.msra.mxu0 0
      %1113 = vmatprep.subr.bf16.mxu0 0
      %1114 = vmatpush1.bf16.msra.mxu0 0
      %1115 = vmatprep.subr.bf16.mxu0 0
      %1116 = vmatpush1.bf16.msra.mxu0 0
      %1117 = vmatprep.subr.bf16.mxu0 0
      %1118 = vmatpush1.bf16.msra.mxu0 0
      %1119 = vmatprep.subr.bf16.mxu0 0
      %1120 = vmatpush1.bf16.msra.mxu0 0
      %1121 = vmatprep.subr.bf16.mxu0 0
      %1122 = vmatpush1.bf16.msra.mxu0 0
      %1123 = vmatprep.subr.bf16.mxu0 0
      %1124 = vmatpush1.bf16.msra.mxu0 0
      %1125 = vmatprep.subr.bf16.mxu0 0
      %1126 = vmatpush1.bf16.msra.mxu0 0
      %1127 = vmatprep.mubr.bf16.mxu0 0
      %1128 = vmatmul.mubr.bf16.gmra.mrb[0].mxu0 %v1048
      %v1129 = vpop.f32.mrb[0].mxu0
      %v1130 = vadd.f32 0.0, %v1129
      %v1131 = vpop.f32.mrb[0].mxu0
      %v1132 = vpop.f32.mrb[0].mxu0
      %v1133 = vadd.f32 0.0, %v1132
      %v1134 = vpop.f32.mrb[0].mxu0
      %1135 = vmatprep.mubr.bf16.mxu0 0
      %1136 = vmatmul.mubr.bf16.gmra.mrb[0].mxu0 %v1051
      %v1137 = vpop.f32.mrb[0].mxu0
      %v1138 = vadd.f32 0.0, %v1137
      %v1139 = vpop.f32.mrb[0].mxu0
      %v1140 = vpop.f32.mrb[0].mxu0
      %v1141 = vadd.f32 0.0, %v1140
      %v1142 = vpop.f32.mrb[0].mxu0
      %1143 = vmatprep.mubr.bf16.mxu0 0
      %1144 = vmatmul.mubr.bf16.gmra.mrb[0].mxu0 %v1054
      %v1145 = vpop.f32.mrb[0].mxu0
      %v1146 = vadd.f32 0.0, %v1145
      %v1147 = vpop.f32.mrb[0].mxu0
      %v1148 = vpop.f32.mrb[0].mxu0
      %v1149 = vadd.f32 0.0, %v1148
      %v1150 = vpop.f32.mrb[0].mxu0
      %1151 = vmatprep.mubr.bf16.mxu0 0
      %1152 = vmatmul.mubr.bf16.gmra.mrb[0].mxu0 %v1057
      %v1153 = vpop.f32.mrb[0].mxu0
      %v1154 = vadd.f32 0.0, %v1153
      %v1155 = vpop.f32.mrb[0].mxu0
      %v1156 = vpop.f32.mrb[0].mxu0
      %v1157 = vadd.f32 0.0, %v1156
      %v1158 = vpop.f32.mrb[0].mxu0
      %1159 = vmatprep.mubr.bf16.mxu0 0
      %1160 = vmatmul.mubr.bf16.gmra.mrb[0].mxu0 %v1060
      %v1161 = vpop.f32.mrb[0].mxu0
      %v1162 = vadd.f32 0.0, %v1161
      %v1163 = vpop.f32.mrb[0].mxu0
      %v1164 = vpop.f32.mrb[0].mxu0
      %v1165 = vadd.f32 0.0, %v1164
      %v1166 = vpop.f32.mrb[0].mxu0
      %1167 = vmatprep.mubr.bf16.mxu0 0
      %1168 = vmatmul.mubr.bf16.gmra.mrb[0].mxu0 %v1063
      %v1169 = vpop.f32.mrb[0].mxu0
      %v1170 = vadd.f32 0.0, %v1169
      %v1171 = vpop.f32.mrb[0].mxu0
      %v1172 = vpop.f32.mrb[0].mxu0
      %v1173 = vadd.f32 0.0, %v1172
      %v1174 = vpop.f32.mrb[0].mxu0
      %1175 = vmatprep.mubr.bf16.mxu0 0
      %1176 = vmatmul.mubr.bf16.gmra.mrb[0].mxu0 %v1066
      %v1177 = vpop.f32.mrb[0].mxu0
      %v1178 = vadd.f32 0.0, %v1177
      %v1179 = vpop.f32.mrb[0].mxu0
      %v1180 = vpop.f32.mrb[0].mxu0
      %v1181 = vadd.f32 0.0, %v1180
      %v1182 = vpop.f32.mrb[0].mxu0
      %1183 = vmatprep.mubr.bf16.mxu0 0
      %1184 = vmatmul.mubr.bf16.gmra.mrb[0].mxu0 %v1069
      %v1185 = vpop.f32.mrb[0].mxu0
      %v1186 = vadd.f32 0.0, %v1185
      %v1187 = vpop.f32.mrb[0].mxu0
      %v1188 = vpop.f32.mrb[0].mxu0
      %v1189 = vadd.f32 0.0, %v1188
      %v1190 = vpop.f32.mrb[0].mxu0
      %1191 = vmatprep.mubr.bf16.mxu0 0
      %1192 = vmatmul.mubr.bf16.gmra.mrb[0].mxu0 %v1072
      %v1193 = vpop.f32.mrb[0].mxu0
      %v1194 = vadd.f32 0.0, %v1193
      %v1195 = vpop.f32.mrb[0].mxu0
      %v1196 = vpop.f32.mrb[0].mxu0
      %v1197 = vadd.f32 0.0, %v1196
      %v1198 = vpop.f32.mrb[0].mxu0
      %1199 = vmatprep.mubr.bf16.mxu0 0
      %1200 = vmatmul.mubr.bf16.gmra.mrb[0].mxu0 %v1075
      %v1201 = vpop.f32.mrb[0].mxu0
      %v1202 = vadd.f32 0.0, %v1201
      %v1203 = vpop.f32.mrb[0].mxu0
      %v1204 = vpop.f32.mrb[0].mxu0
      %v1205 = vadd.f32 0.0, %v1204
      %v1206 = vpop.f32.mrb[0].mxu0
      %1207 = vmatprep.mubr.bf16.mxu0 0
      %1208 = vmatmul.mubr.bf16.gmra.mrb[0].mxu0 %v1078
      %v1209 = vpop.f32.mrb[0].mxu0
      %v1210 = vadd.f32 0.0, %v1209
      %v1211 = vpop.f32.mrb[0].mxu0
      %v1212 = vpop.f32.mrb[0].mxu0
      %v1213 = vadd.f32 0.0, %v1212
      %v1214 = vpop.f32.mrb[0].mxu0
      %1215 = vmatprep.mubr.bf16.mxu0 0
      %1216 = vmatmul.mubr.bf16.gmra.mrb[0].mxu0 %v1081
      %v1217 = vpop.f32.mrb[0].mxu0
      %v1218 = vadd.f32 0.0, %v1217
      %v1219 = vpop.f32.mrb[0].mxu0
      %v1220 = vpop.f32.mrb[0].mxu0
      %v1221 = vadd.f32 0.0, %v1220
      %v1222 = vpop.f32.mrb[0].mxu0
      %1223 = vmatprep.mubr.bf16.mxu0 0
      %1224 = vmatmul.mubr.bf16.gmra.mrb[0].mxu0 %v1084
      %v1225 = vpop.f32.mrb[0].mxu0
      %v1226 = vadd.f32 0.0, %v1225
      %v1227 = vpop.f32.mrb[0].mxu0
      %v1228 = vpop.f32.mrb[0].mxu0
      %v1229 = vadd.f32 0.0, %v1228
      %v1230 = vpop.f32.mrb[0].mxu0
      %1231 = vmatprep.mubr.bf16.mxu0 0
      %1232 = vmatmul.mubr.bf16.gmra.mrb[0].mxu0 %v1087
      %v1233 = vpop.f32.mrb[0].mxu0
      %v1234 = vadd.f32 0.0, %v1233
      %v1235 = vpop.f32.mrb[0].mxu0
      %v1236 = vpop.f32.mrb[0].mxu0
      %v1237 = vadd.f32 0.0, %v1236
      %v1238 = vpop.f32.mrb[0].mxu0
      %1239 = vmatprep.mubr.bf16.mxu0 0
      %1240 = vmatmul.mubr.bf16.gmra.mrb[0].mxu0 %v1090
      %v1241 = vpop.f32.mrb[0].mxu0
      %v1242 = vadd.f32 0.0, %v1241
      %v1243 = vpop.f32.mrb[0].mxu0
      %v1244 = vpop.f32.mrb[0].mxu0
      %v1245 = vadd.f32 0.0, %v1244
      %v1246 = vpop.f32.mrb[0].mxu0
      %1247 = vmatprep.mubr.bf16.mxu0 0
      %1248 = vmatmul.mubr.bf16.gmra.mrb[0].mxu0 %v1093
      %v1249 = vpop.f32.mrb[0].mxu0
      %v1250 = vadd.f32 0.0, %v1249
      %v1251 = vpop.f32.mrb[0].mxu0
      %v1252 = vpop.f32.mrb[0].mxu0
      %v1253 = vadd.f32 0.0, %v1252
      %v1254 = vpop.f32.mrb[0].mxu0
      %1255 = vdwg.mxu0
      %v1256 = vadd.f32 %v783, %v1130
      %v1257 = vadd.f32 %v786, %v1133
      %v1258 = vadd.f32 %v791, %v1138
      %v1259 = vadd.f32 %v794, %v1141
      %v1260 = vadd.f32 %v799, %v1146
      %v1261 = vadd.f32 %v802, %v1149
      %v1262 = vadd.f32 %v807, %v1154
      %v1263 = vadd.f32 %v810, %v1157
      %v1264 = vadd.f32 %v815, %v1162
      %v1265 = vadd.f32 %v818, %v1165
      %v1266 = vadd.f32 %v823, %v1170
      %v1267 = vadd.f32 %v826, %v1173
      %v1268 = vadd.f32 %v831, %v1178
      %v1269 = vadd.f32 %v834, %v1181
      %v1270 = vadd.f32 %v839, %v1186
      %v1271 = vadd.f32 %v842, %v1189
      %v1272 = vadd.f32 %v847, %v1194
      %v1273 = vadd.f32 %v850, %v1197
      %v1274 = vadd.f32 %v855, %v1202
      %v1275 = vadd.f32 %v858, %v1205
      %v1276 = vadd.f32 %v863, %v1210
      %v1277 = vadd.f32 %v866, %v1213
      %v1278 = vadd.f32 %v871, %v1218
      %v1279 = vadd.f32 %v874, %v1221
      %v1280 = vadd.f32 %v879, %v1226
      %v1281 = vadd.f32 %v882, %v1229
      %v1282 = vadd.f32 %v887, %v1234
      %v1283 = vadd.f32 %v890, %v1237
      %v1284 = vadd.f32 %v895, %v1242
      %v1285 = vadd.f32 %v898, %v1245
      %v1286 = vadd.f32 %v903, %v1250
      %v1287 = vadd.f32 %v906, %v1253
      %v1288 = vpack.c.bf16 %v275, %v274
      %s1289 = scalar_lea.vmem %s1, 24
      %v1290 = vld [vmem:[%s1289] sm:$0xf]
      %v1291 = vld [vmem:[%s1289 + $0x4] sm:$0xf]
      %v1294 = vunpack.c.l.b16 %v1290
      %v1295 = vunpack.c.l.b16 %v1291
      %v1296 = vpack.c.b16 %v1295, %v1294
      %v1299 = vsel %vm484, %v1288, 0
      %1301 = vmatprep.subr.bf16.mxu0 0
      %1302 = vmatpush1.bf16.msra.mxu0 %v1296
      %1303 = vmatprep.subr.bf16.mxu0 0
      %1304 = vmatpush1.bf16.msra.mxu0 0
      %1305 = vmatprep.subr.bf16.mxu0 0
      %1306 = vmatpush1.bf16.msra.mxu0 0
      %1307 = vmatprep.subr.bf16.mxu0 0
      %1308 = vmatpush1.bf16.msra.mxu0 0
      %1309 = vmatprep.subr.bf16.mxu0 0
      %1310 = vmatpush1.bf16.msra.mxu0 0
      %1311 = vmatprep.subr.bf16.mxu0 0
      %1312 = vmatpush1.bf16.msra.mxu0 0
      %1313 = vmatprep.subr.bf16.mxu0 0
      %1314 = vmatpush1.bf16.msra.mxu0 0
      %1315 = vmatprep.subr.bf16.mxu0 0
      %1316 = vmatpush1.bf16.msra.mxu0 0
      %1317 = vmatprep.subr.bf16.mxu0 0
      %1318 = vmatpush1.bf16.msra.mxu0 0
      %1319 = vmatprep.subr.bf16.mxu0 0
      %1320 = vmatpush1.bf16.msra.mxu0 0
      %1321 = vmatprep.subr.bf16.mxu0 0
      %1322 = vmatpush1.bf16.msra.mxu0 0
      %1323 = vmatprep.subr.bf16.mxu0 0
      %1324 = vmatpush1.bf16.msra.mxu0 0
      %1325 = vmatprep.subr.bf16.mxu0 0
      %1326 = vmatpush1.bf16.msra.mxu0 0
      %1327 = vmatprep.subr.bf16.mxu0 0
      %1328 = vmatpush1.bf16.msra.mxu0 0
      %1329 = vmatprep.subr.bf16.mxu0 0
      %1330 = vmatpush1.bf16.msra.mxu0 0
      %1331 = vmatprep.subr.bf16.mxu0 0
      %1332 = vmatpush1.bf16.msra.mxu0 0
      %1333 = vmatprep.mubr.bf16.mxu0 0
      %1334 = vmatmul.mubr.bf16.gmra.mrb[0].mxu0 %v704
      %v1335 = vpop.f32.mrb[0].mxu0
      %v1336 = vadd.f32 0.0, %v1335
      %v1337 = vpop.f32.mrb[0].mxu0
      %v1338 = vpop.f32.mrb[0].mxu0
      %v1339 = vadd.f32 0.0, %v1338
      %v1340 = vpop.f32.mrb[0].mxu0
      %1341 = vmatprep.mubr.bf16.mxu0 0
      %1342 = vmatmul.mubr.bf16.gmra.mrb[0].mxu0 %v707
      %v1343 = vpop.f32.mrb[0].mxu0
      %v1344 = vadd.f32 0.0, %v1343
      %v1345 = vpop.f32.mrb[0].mxu0
      %v1346 = vpop.f32.mrb[0].mxu0
      %v1347 = vadd.f32 0.0, %v1346
      %v1348 = vpop.f32.mrb[0].mxu0
      %1349 = vmatprep.mubr.bf16.mxu0 0
      %1350 = vmatmul.mubr.bf16.gmra.mrb[0].mxu0 %v710
      %v1351 = vpop.f32.mrb[0].mxu0
      %v1352 = vadd.f32 0.0, %v1351
      %v1353 = vpop.f32.mrb[0].mxu0
      %v1354 = vpop.f32.mrb[0].mxu0
      %v1355 = vadd.f32 0.0, %v1354
      %v1356 = vpop.f32.mrb[0].mxu0
      %1357 = vmatprep.mubr.bf16.mxu0 0
      %1358 = vmatmul.mubr.bf16.gmra.mrb[0].mxu0 %v713
      %v1359 = vpop.f32.mrb[0].mxu0
      %v1360 = vadd.f32 0.0, %v1359
      %v1361 = vpop.f32.mrb[0].mxu0
      %v1362 = vpop.f32.mrb[0].mxu0
      %v1363 = vadd.f32 0.0, %v1362
      %v1364 = vpop.f32.mrb[0].mxu0
      %1365 = vmatprep.mubr.bf16.mxu0 0
      %1366 = vmatmul.mubr.bf16.gmra.mrb[0].mxu0 %v716
      %v1367 = vpop.f32.mrb[0].mxu0
      %v1368 = vadd.f32 0.0, %v1367
      %v1369 = vpop.f32.mrb[0].mxu0
      %v1370 = vpop.f32.mrb[0].mxu0
      %v1371 = vadd.f32 0.0, %v1370
      %v1372 = vpop.f32.mrb[0].mxu0
      %1373 = vmatprep.mubr.bf16.mxu0 0
      %1374 = vmatmul.mubr.bf16.gmra.mrb[0].mxu0 %v719
      %v1375 = vpop.f32.mrb[0].mxu0
      %v1376 = vadd.f32 0.0, %v1375
      %v1377 = vpop.f32.mrb[0].mxu0
      %v1378 = vpop.f32.mrb[0].mxu0
      %v1379 = vadd.f32 0.0, %v1378
      %v1380 = vpop.f32.mrb[0].mxu0
      %1381 = vmatprep.mubr.bf16.mxu0 0
      %1382 = vmatmul.mubr.bf16.gmra.mrb[0].mxu0 %v722
      %v1383 = vpop.f32.mrb[0].mxu0
      %v1384 = vadd.f32 0.0, %v1383
      %v1385 = vpop.f32.mrb[0].mxu0
      %v1386 = vpop.f32.mrb[0].mxu0
      %v1387 = vadd.f32 0.0, %v1386
      %v1388 = vpop.f32.mrb[0].mxu0
      %1389 = vmatprep.mubr.bf16.mxu0 0
      %1390 = vmatmul.mubr.bf16.gmra.mrb[0].mxu0 %v725
      %v1391 = vpop.f32.mrb[0].mxu0
      %v1392 = vadd.f32 0.0, %v1391
      %v1393 = vpop.f32.mrb[0].mxu0
      %v1394 = vpop.f32.mrb[0].mxu0
      %v1395 = vadd.f32 0.0, %v1394
      %v1396 = vpop.f32.mrb[0].mxu0
      %1397 = vmatprep.mubr.bf16.mxu0 0
      %1398 = vmatmul.mubr.bf16.gmra.mrb[0].mxu0 %v728
      %v1399 = vpop.f32.mrb[0].mxu0
      %v1400 = vadd.f32 0.0, %v1399
      %v1401 = vpop.f32.mrb[0].mxu0
      %v1402 = vpop.f32.mrb[0].mxu0
      %v1403 = vadd.f32 0.0, %v1402
      %v1404 = vpop.f32.mrb[0].mxu0
      %1405 = vmatprep.mubr.bf16.mxu0 0
      %1406 = vmatmul.mubr.bf16.gmra.mrb[0].mxu0 %v731
      %v1407 = vpop.f32.mrb[0].mxu0
      %v1408 = vadd.f32 0.0, %v1407
      %v1409 = vpop.f32.mrb[0].mxu0
      %v1410 = vpop.f32.mrb[0].mxu0
      %v1411 = vadd.f32 0.0, %v1410
      %v1412 = vpop.f32.mrb[0].mxu0
      %1413 = vmatprep.mubr.bf16.mxu0 0
      %1414 = vmatmul.mubr.bf16.gmra.mrb[0].mxu0 %v734
      %v1415 = vpop.f32.mrb[0].mxu0
      %v1416 = vadd.f32 0.0, %v1415
      %v1417 = vpop.f32.mrb[0].mxu0
      %v1418 = vpop.f32.mrb[0].mxu0
      %v1419 = vadd.f32 0.0, %v1418
      %v1420 = vpop.f32.mrb[0].mxu0
      %1421 = vmatprep.mubr.bf16.mxu0 0
      %1422 = vmatmul.mubr.bf16.gmra.mrb[0].mxu0 %v737
      %v1423 = vpop.f32.mrb[0].mxu0
      %v1424 = vadd.f32 0.0, %v1423
      %v1425 = vpop.f32.mrb[0].mxu0
      %v1426 = vpop.f32.mrb[0].mxu0
      %v1427 = vadd.f32 0.0, %v1426
      %v1428 = vpop.f32.mrb[0].mxu0
      %1429 = vmatprep.mubr.bf16.mxu0 0
      %1430 = vmatmul.mubr.bf16.gmra.mrb[0].mxu0 %v740
      %v1431 = vpop.f32.mrb[0].mxu0
      %v1432 = vadd.f32 0.0, %v1431
      %v1433 = vpop.f32.mrb[0].mxu0
      %v1434 = vpop.f32.mrb[0].mxu0
      %v1435 = vadd.f32 0.0, %v1434
      %v1436 = vpop.f32.mrb[0].mxu0
      %1437 = vmatprep.mubr.bf16.mxu0 0
      %1438 = vmatmul.mubr.bf16.gmra.mrb[0].mxu0 %v743
      %v1439 = vpop.f32.mrb[0].mxu0
      %v1440 = vadd.f32 0.0, %v1439
      %v1441 = vpop.f32.mrb[0].mxu0
      %v1442 = vpop.f32.mrb[0].mxu0
      %v1443 = vadd.f32 0.0, %v1442
      %v1444 = vpop.f32.mrb[0].mxu0
      %1445 = vmatprep.mubr.bf16.mxu0 0
      %1446 = vmatmul.mubr.bf16.gmra.mrb[0].mxu0 %v746
      %v1447 = vpop.f32.mrb[0].mxu0
      %v1448 = vadd.f32 0.0, %v1447
      %v1449 = vpop.f32.mrb[0].mxu0
      %v1450 = vpop.f32.mrb[0].mxu0
      %v1451 = vadd.f32 0.0, %v1450
      %v1452 = vpop.f32.mrb[0].mxu0
      %1453 = vmatprep.mubr.bf16.mxu0 0
      %1454 = vmatmul.mubr.bf16.gmra.mrb[0].mxu0 %v1299
      %v1455 = vpop.f32.mrb[0].mxu0
      %v1456 = vadd.f32 0.0, %v1455
      %v1457 = vpop.f32.mrb[0].mxu0
      %v1458 = vpop.f32.mrb[0].mxu0
      %v1459 = vadd.f32 0.0, %v1458
      %v1460 = vpop.f32.mrb[0].mxu0
      %1461 = vdwg.mxu0
      %v1462 = vadd.f32 %v1256, %v1336
      %v1463 = vadd.f32 %v1257, %v1339
      %v1464 = vadd.f32 %v1258, %v1344
      %v1465 = vadd.f32 %v1259, %v1347
      %v1466 = vadd.f32 %v1260, %v1352
      %v1467 = vadd.f32 %v1261, %v1355
      %v1468 = vadd.f32 %v1262, %v1360
      %v1469 = vadd.f32 %v1263, %v1363
      %v1470 = vadd.f32 %v1264, %v1368
      %v1471 = vadd.f32 %v1265, %v1371
      %v1472 = vadd.f32 %v1266, %v1376
      %v1473 = vadd.f32 %v1267, %v1379
      %v1474 = vadd.f32 %v1268, %v1384
      %v1475 = vadd.f32 %v1269, %v1387
      %v1476 = vadd.f32 %v1270, %v1392
      %v1477 = vadd.f32 %v1271, %v1395
      %v1478 = vadd.f32 %v1272, %v1400
      %v1479 = vadd.f32 %v1273, %v1403
      %v1480 = vadd.f32 %v1274, %v1408
      %v1481 = vadd.f32 %v1275, %v1411
      %v1482 = vadd.f32 %v1276, %v1416
      %v1483 = vadd.f32 %v1277, %v1419
      %v1484 = vadd.f32 %v1278, %v1424
      %v1485 = vadd.f32 %v1279, %v1427
      %v1486 = vadd.f32 %v1280, %v1432
      %v1487 = vadd.f32 %v1281, %v1435
      %v1488 = vadd.f32 %v1282, %v1440
      %v1489 = vadd.f32 %v1283, %v1443
      %v1490 = vadd.f32 %v1284, %v1448
      %v1491 = vadd.f32 %v1285, %v1451
      %v1492 = vadd.f32 %v1286, %v1456
      %v1493 = vadd.f32 %v1287, %v1459
      %v1497 = vrot.slane %v274, 1
      %v1498 = vrot.slane %v275, 1
      %v1499 = vsel %vm346, %v1497, %v1498
      %v1500 = vrot.slane %v276, 1
      %v1501 = vsel %vm346, %v1498, %v1500
      %v1504 = vpack.c.bf16 %v1501, %v1499
      %s1505 = scalar_lea.vmem %s1, 32
      %v1506 = vld [vmem:[%s1505] sm:$0xf]
      %v1507 = vld [vmem:[%s1505 + $0x4] sm:$0xf]
      %v1510 = vunpack.c.l.b16 %v1506
      %v1511 = vunpack.c.l.b16 %v1507
      %v1512 = vpack.c.b16 %v1511, %v1510
      %v1515 = vsel %vm484, %v1504, 0
      %1517 = vmatprep.subr.bf16.mxu0 0
      %1518 = vmatpush1.bf16.msra.mxu0 %v1512
      %1519 = vmatprep.subr.bf16.mxu0 0
      %1520 = vmatpush1.bf16.msra.mxu0 0
      %1521 = vmatprep.subr.bf16.mxu0 0
      %1522 = vmatpush1.bf16.msra.mxu0 0
      %1523 = vmatprep.subr.bf16.mxu0 0
      %1524 = vmatpush1.bf16.msra.mxu0 0
      %1525 = vmatprep.subr.bf16.mxu0 0
      %1526 = vmatpush1.bf16.msra.mxu0 0
      %1527 = vmatprep.subr.bf16.mxu0 0
      %1528 = vmatpush1.bf16.msra.mxu0 0
      %1529 = vmatprep.subr.bf16.mxu0 0
      %1530 = vmatpush1.bf16.msra.mxu0 0
      %1531 = vmatprep.subr.bf16.mxu0 0
      %1532 = vmatpush1.bf16.msra.mxu0 0
      %1533 = vmatprep.subr.bf16.mxu0 0
      %1534 = vmatpush1.bf16.msra.mxu0 0
      %1535 = vmatprep.subr.bf16.mxu0 0
      %1536 = vmatpush1.bf16.msra.mxu0 0
      %1537 = vmatprep.subr.bf16.mxu0 0
      %1538 = vmatpush1.bf16.msra.mxu0 0
      %1539 = vmatprep.subr.bf16.mxu0 0
      %1540 = vmatpush1.bf16.msra.mxu0 0
      %1541 = vmatprep.subr.bf16.mxu0 0
      %1542 = vmatpush1.bf16.msra.mxu0 0
      %1543 = vmatprep.subr.bf16.mxu0 0
      %1544 = vmatpush1.bf16.msra.mxu0 0
      %1545 = vmatprep.subr.bf16.mxu0 0
      %1546 = vmatpush1.bf16.msra.mxu0 0
      %1547 = vmatprep.subr.bf16.mxu0 0
      %1548 = vmatpush1.bf16.msra.mxu0 0
      %1549 = vmatprep.mubr.bf16.mxu0 0
      %1550 = vmatmul.mubr.bf16.gmra.mrb[0].mxu0 %v489
      %v1551 = vpop.f32.mrb[0].mxu0
      %v1552 = vadd.f32 0.0, %v1551
      %v1553 = vpop.f32.mrb[0].mxu0
      %v1554 = vpop.f32.mrb[0].mxu0
      %v1555 = vadd.f32 0.0, %v1554
      %v1556 = vpop.f32.mrb[0].mxu0
      %1557 = vmatprep.mubr.bf16.mxu0 0
      %1558 = vmatmul.mubr.bf16.gmra.mrb[0].mxu0 %v492
      %v1559 = vpop.f32.mrb[0].mxu0
      %v1560 = vadd.f32 0.0, %v1559
      %v1561 = vpop.f32.mrb[0].mxu0
      %v1562 = vpop.f32.mrb[0].mxu0
      %v1563 = vadd.f32 0.0, %v1562
      %v1564 = vpop.f32.mrb[0].mxu0
      %1565 = vmatprep.mubr.bf16.mxu0 0
      %1566 = vmatmul.mubr.bf16.gmra.mrb[0].mxu0 %v495
      %v1567 = vpop.f32.mrb[0].mxu0
      %v1568 = vadd.f32 0.0, %v1567
      %v1569 = vpop.f32.mrb[0].mxu0
      %v1570 = vpop.f32.mrb[0].mxu0
      %v1571 = vadd.f32 0.0, %v1570
      %v1572 = vpop.f32.mrb[0].mxu0
      %1573 = vmatprep.mubr.bf16.mxu0 0
      %1574 = vmatmul.mubr.bf16.gmra.mrb[0].mxu0 %v498
      %v1575 = vpop.f32.mrb[0].mxu0
      %v1576 = vadd.f32 0.0, %v1575
      %v1577 = vpop.f32.mrb[0].mxu0
      %v1578 = vpop.f32.mrb[0].mxu0
      %v1579 = vadd.f32 0.0, %v1578
      %v1580 = vpop.f32.mrb[0].mxu0
      %1581 = vmatprep.mubr.bf16.mxu0 0
      %1582 = vmatmul.mubr.bf16.gmra.mrb[0].mxu0 %v501
      %v1583 = vpop.f32.mrb[0].mxu0
      %v1584 = vadd.f32 0.0, %v1583
      %v1585 = vpop.f32.mrb[0].mxu0
      %v1586 = vpop.f32.mrb[0].mxu0
      %v1587 = vadd.f32 0.0, %v1586
      %v1588 = vpop.f32.mrb[0].mxu0
      %1589 = vmatprep.mubr.bf16.mxu0 0
      %1590 = vmatmul.mubr.bf16.gmra.mrb[0].mxu0 %v504
      %v1591 = vpop.f32.mrb[0].mxu0
      %v1592 = vadd.f32 0.0, %v1591
      %v1593 = vpop.f32.mrb[0].mxu0
      %v1594 = vpop.f32.mrb[0].mxu0
      %v1595 = vadd.f32 0.0, %v1594
      %v1596 = vpop.f32.mrb[0].mxu0
      %1597 = vmatprep.mubr.bf16.mxu0 0
      %1598 = vmatmul.mubr.bf16.gmra.mrb[0].mxu0 %v507
      %v1599 = vpop.f32.mrb[0].mxu0
      %v1600 = vadd.f32 0.0, %v1599
      %v1601 = vpop.f32.mrb[0].mxu0
      %v1602 = vpop.f32.mrb[0].mxu0
      %v1603 = vadd.f32 0.0, %v1602
      %v1604 = vpop.f32.mrb[0].mxu0
      %1605 = vmatprep.mubr.bf16.mxu0 0
      %1606 = vmatmul.mubr.bf16.gmra.mrb[0].mxu0 %v510
      %v1607 = vpop.f32.mrb[0].mxu0
      %v1608 = vadd.f32 0.0, %v1607
      %v1609 = vpop.f32.mrb[0].mxu0
      %v1610 = vpop.f32.mrb[0].mxu0
      %v1611 = vadd.f32 0.0, %v1610
      %v1612 = vpop.f32.mrb[0].mxu0
      %1613 = vmatprep.mubr.bf16.mxu0 0
      %1614 = vmatmul.mubr.bf16.gmra.mrb[0].mxu0 %v513
      %v1615 = vpop.f32.mrb[0].mxu0
      %v1616 = vadd.f32 0.0, %v1615
      %v1617 = vpop.f32.mrb[0].mxu0
      %v1618 = vpop.f32.mrb[0].mxu0
      %v1619 = vadd.f32 0.0, %v1618
      %v1620 = vpop.f32.mrb[0].mxu0
      %1621 = vmatprep.mubr.bf16.mxu0 0
      %1622 = vmatmul.mubr.bf16.gmra.mrb[0].mxu0 %v516
      %v1623 = vpop.f32.mrb[0].mxu0
      %v1624 = vadd.f32 0.0, %v1623
      %v1625 = vpop.f32.mrb[0].mxu0
      %v1626 = vpop.f32.mrb[0].mxu0
      %v1627 = vadd.f32 0.0, %v1626
      %v1628 = vpop.f32.mrb[0].mxu0
      %1629 = vmatprep.mubr.bf16.mxu0 0
      %1630 = vmatmul.mubr.bf16.gmra.mrb[0].mxu0 %v519
      %v1631 = vpop.f32.mrb[0].mxu0
      %v1632 = vadd.f32 0.0, %v1631
      %v1633 = vpop.f32.mrb[0].mxu0
      %v1634 = vpop.f32.mrb[0].mxu0
      %v1635 = vadd.f32 0.0, %v1634
      %v1636 = vpop.f32.mrb[0].mxu0
      %1637 = vmatprep.mubr.bf16.mxu0 0
      %1638 = vmatmul.mubr.bf16.gmra.mrb[0].mxu0 %v522
      %v1639 = vpop.f32.mrb[0].mxu0
      %v1640 = vadd.f32 0.0, %v1639
      %v1641 = vpop.f32.mrb[0].mxu0
      %v1642 = vpop.f32.mrb[0].mxu0
      %v1643 = vadd.f32 0.0, %v1642
      %v1644 = vpop.f32.mrb[0].mxu0
      %1645 = vmatprep.mubr.bf16.mxu0 0
      %1646 = vmatmul.mubr.bf16.gmra.mrb[0].mxu0 %v525
      %v1647 = vpop.f32.mrb[0].mxu0
      %v1648 = vadd.f32 0.0, %v1647
      %v1649 = vpop.f32.mrb[0].mxu0
      %v1650 = vpop.f32.mrb[0].mxu0
      %v1651 = vadd.f32 0.0, %v1650
      %v1652 = vpop.f32.mrb[0].mxu0
      %1653 = vmatprep.mubr.bf16.mxu0 0
      %1654 = vmatmul.mubr.bf16.gmra.mrb[0].mxu0 %v528
      %v1655 = vpop.f32.mrb[0].mxu0
      %v1656 = vadd.f32 0.0, %v1655
      %v1657 = vpop.f32.mrb[0].mxu0
      %v1658 = vpop.f32.mrb[0].mxu0
      %v1659 = vadd.f32 0.0, %v1658
      %v1660 = vpop.f32.mrb[0].mxu0
      %1661 = vmatprep.mubr.bf16.mxu0 0
      %1662 = vmatmul.mubr.bf16.gmra.mrb[0].mxu0 %v531
      %v1663 = vpop.f32.mrb[0].mxu0
      %v1664 = vadd.f32 0.0, %v1663
      %v1665 = vpop.f32.mrb[0].mxu0
      %v1666 = vpop.f32.mrb[0].mxu0
      %v1667 = vadd.f32 0.0, %v1666
      %v1668 = vpop.f32.mrb[0].mxu0
      %1669 = vmatprep.mubr.bf16.mxu0 0
      %1670 = vmatmul.mubr.bf16.gmra.mrb[0].mxu0 %v1515
      %v1671 = vpop.f32.mrb[0].mxu0
      %v1672 = vadd.f32 0.0, %v1671
      %v1673 = vpop.f32.mrb[0].mxu0
      %v1674 = vpop.f32.mrb[0].mxu0
      %v1675 = vadd.f32 0.0, %v1674
      %v1676 = vpop.f32.mrb[0].mxu0
      %1677 = vdwg.mxu0
      %v1678 = vadd.f32 %v1462, %v1552
      %v1679 = vadd.f32 %v1463, %v1555
      %v1680 = vadd.f32 %v1464, %v1560
      %v1681 = vadd.f32 %v1465, %v1563
      %v1682 = vadd.f32 %v1466, %v1568
      %v1683 = vadd.f32 %v1467, %v1571
      %v1684 = vadd.f32 %v1468, %v1576
      %v1685 = vadd.f32 %v1469, %v1579
      %v1686 = vadd.f32 %v1470, %v1584
      %v1687 = vadd.f32 %v1471, %v1587
      %v1688 = vadd.f32 %v1472, %v1592
      %v1689 = vadd.f32 %v1473, %v1595
      %v1690 = vadd.f32 %v1474, %v1600
      %v1691 = vadd.f32 %v1475, %v1603
      %v1692 = vadd.f32 %v1476, %v1608
      %v1693 = vadd.f32 %v1477, %v1611
      %v1694 = vadd.f32 %v1478, %v1616
      %v1695 = vadd.f32 %v1479, %v1619
      %v1696 = vadd.f32 %v1480, %v1624
      %v1697 = vadd.f32 %v1481, %v1627
      %v1698 = vadd.f32 %v1482, %v1632
      %v1699 = vadd.f32 %v1483, %v1635
      %v1700 = vadd.f32 %v1484, %v1640
      %v1701 = vadd.f32 %v1485, %v1643
      %v1702 = vadd.f32 %v1486, %v1648
      %v1703 = vadd.f32 %v1487, %v1651
      %v1704 = vadd.f32 %v1488, %v1656
      %v1705 = vadd.f32 %v1489, %v1659
      %v1706 = vadd.f32 %v1490, %v1664
      %v1707 = vadd.f32 %v1491, %v1667
      %v1708 = vadd.f32 %v1492, %v1672
      %v1709 = vadd.f32 %v1493, %v1675
      %v1710 = vrot.slane %v274, 2
      %v1711 = vrot.slane %v275, 2
      %v1712 = vsel %vm909, %v1710, %v1711
      %v1713 = vrot.slane %v276, 2
      %v1714 = vsel %vm909, %v1711, %v1713
      %v1717 = vpack.c.bf16 %v1714, %v1712
      %s1718 = scalar_lea.vmem %s1, 40
      %v1719 = vld [vmem:[%s1718] sm:$0xf]
      %v1720 = vld [vmem:[%s1718 + $0x4] sm:$0xf]
      %v1723 = vunpack.c.l.b16 %v1719
      %v1724 = vunpack.c.l.b16 %v1720
      %v1725 = vpack.c.b16 %v1724, %v1723
      %v1728 = vsel %vm484, %v1717, 0
      %1730 = vmatprep.subr.bf16.mxu0 0
      %1731 = vmatpush1.bf16.msra.mxu0 %v1725
      %1732 = vmatprep.subr.bf16.mxu0 0
      %1733 = vmatpush1.bf16.msra.mxu0 0
      %1734 = vmatprep.subr.bf16.mxu0 0
      %1735 = vmatpush1.bf16.msra.mxu0 0
      %1736 = vmatprep.subr.bf16.mxu0 0
      %1737 = vmatpush1.bf16.msra.mxu0 0
      %1738 = vmatprep.subr.bf16.mxu0 0
      %1739 = vmatpush1.bf16.msra.mxu0 0
      %1740 = vmatprep.subr.bf16.mxu0 0
      %1741 = vmatpush1.bf16.msra.mxu0 0
      %1742 = vmatprep.subr.bf16.mxu0 0
      %1743 = vmatpush1.bf16.msra.mxu0 0
      %1744 = vmatprep.subr.bf16.mxu0 0
      %1745 = vmatpush1.bf16.msra.mxu0 0
      %1746 = vmatprep.subr.bf16.mxu0 0
      %1747 = vmatpush1.bf16.msra.mxu0 0
      %1748 = vmatprep.subr.bf16.mxu0 0
      %1749 = vmatpush1.bf16.msra.mxu0 0
      %1750 = vmatprep.subr.bf16.mxu0 0
      %1751 = vmatpush1.bf16.msra.mxu0 0
      %1752 = vmatprep.subr.bf16.mxu0 0
      %1753 = vmatpush1.bf16.msra.mxu0 0
      %1754 = vmatprep.subr.bf16.mxu0 0
      %1755 = vmatpush1.bf16.msra.mxu0 0
      %1756 = vmatprep.subr.bf16.mxu0 0
      %1757 = vmatpush1.bf16.msra.mxu0 0
      %1758 = vmatprep.subr.bf16.mxu0 0
      %1759 = vmatpush1.bf16.msra.mxu0 0
      %1760 = vmatprep.subr.bf16.mxu0 0
      %1761 = vmatpush1.bf16.msra.mxu0 0
      %1762 = vmatprep.mubr.bf16.mxu0 0
      %1763 = vmatmul.mubr.bf16.gmra.mrb[0].mxu0 %v1051
      %v1764 = vpop.f32.mrb[0].mxu0
      %v1765 = vadd.f32 0.0, %v1764
      %v1766 = vpop.f32.mrb[0].mxu0
      %v1767 = vpop.f32.mrb[0].mxu0
      %v1768 = vadd.f32 0.0, %v1767
      %v1769 = vpop.f32.mrb[0].mxu0
      %1770 = vmatprep.mubr.bf16.mxu0 0
      %1771 = vmatmul.mubr.bf16.gmra.mrb[0].mxu0 %v1054
      %v1772 = vpop.f32.mrb[0].mxu0
      %v1773 = vadd.f32 0.0, %v1772
      %v1774 = vpop.f32.mrb[0].mxu0
      %v1775 = vpop.f32.mrb[0].mxu0
      %v1776 = vadd.f32 0.0, %v1775
      %v1777 = vpop.f32.mrb[0].mxu0
      %1778 = vmatprep.mubr.bf16.mxu0 0
      %1779 = vmatmul.mubr.bf16.gmra.mrb[0].mxu0 %v1057
      %v1780 = vpop.f32.mrb[0].mxu0
      %v1781 = vadd.f32 0.0, %v1780
      %v1782 = vpop.f32.mrb[0].mxu0
      %v1783 = vpop.f32.mrb[0].mxu0
      %v1784 = vadd.f32 0.0, %v1783
      %v1785 = vpop.f32.mrb[0].mxu0
      %1786 = vmatprep.mubr.bf16.mxu0 0
      %1787 = vmatmul.mubr.bf16.gmra.mrb[0].mxu0 %v1060
      %v1788 = vpop.f32.mrb[0].mxu0
      %v1789 = vadd.f32 0.0, %v1788
      %v1790 = vpop.f32.mrb[0].mxu0
      %v1791 = vpop.f32.mrb[0].mxu0
      %v1792 = vadd.f32 0.0, %v1791
      %v1793 = vpop.f32.mrb[0].mxu0
      %1794 = vmatprep.mubr.bf16.mxu0 0
      %1795 = vmatmul.mubr.bf16.gmra.mrb[0].mxu0 %v1063
      %v1796 = vpop.f32.mrb[0].mxu0
      %v1797 = vadd.f32 0.0, %v1796
      %v1798 = vpop.f32.mrb[0].mxu0
      %v1799 = vpop.f32.mrb[0].mxu0
      %v1800 = vadd.f32 0.0, %v1799
      %v1801 = vpop.f32.mrb[0].mxu0
      %1802 = vmatprep.mubr.bf16.mxu0 0
      %1803 = vmatmul.mubr.bf16.gmra.mrb[0].mxu0 %v1066
      %v1804 = vpop.f32.mrb[0].mxu0
      %v1805 = vadd.f32 0.0, %v1804
      %v1806 = vpop.f32.mrb[0].mxu0
      %v1807 = vpop.f32.mrb[0].mxu0
      %v1808 = vadd.f32 0.0, %v1807
      %v1809 = vpop.f32.mrb[0].mxu0
      %1810 = vmatprep.mubr.bf16.mxu0 0
      %1811 = vmatmul.mubr.bf16.gmra.mrb[0].mxu0 %v1069
      %v1812 = vpop.f32.mrb[0].mxu0
      %v1813 = vadd.f32 0.0, %v1812
      %v1814 = vpop.f32.mrb[0].mxu0
      %v1815 = vpop.f32.mrb[0].mxu0
      %v1816 = vadd.f32 0.0, %v1815
      %v1817 = vpop.f32.mrb[0].mxu0
      %1818 = vmatprep.mubr.bf16.mxu0 0
      %1819 = vmatmul.mubr.bf16.gmra.mrb[0].mxu0 %v1072
      %v1820 = vpop.f32.mrb[0].mxu0
      %v1821 = vadd.f32 0.0, %v1820
      %v1822 = vpop.f32.mrb[0].mxu0
      %v1823 = vpop.f32.mrb[0].mxu0
      %v1824 = vadd.f32 0.0, %v1823
      %v1825 = vpop.f32.mrb[0].mxu0
      %1826 = vmatprep.mubr.bf16.mxu0 0
      %1827 = vmatmul.mubr.bf16.gmra.mrb[0].mxu0 %v1075
      %v1828 = vpop.f32.mrb[0].mxu0
      %v1829 = vadd.f32 0.0, %v1828
      %v1830 = vpop.f32.mrb[0].mxu0
      %v1831 = vpop.f32.mrb[0].mxu0
      %v1832 = vadd.f32 0.0, %v1831
      %v1833 = vpop.f32.mrb[0].mxu0
      %1834 = vmatprep.mubr.bf16.mxu0 0
      %1835 = vmatmul.mubr.bf16.gmra.mrb[0].mxu0 %v1078
      %v1836 = vpop.f32.mrb[0].mxu0
      %v1837 = vadd.f32 0.0, %v1836
      %v1838 = vpop.f32.mrb[0].mxu0
      %v1839 = vpop.f32.mrb[0].mxu0
      %v1840 = vadd.f32 0.0, %v1839
      %v1841 = vpop.f32.mrb[0].mxu0
      %1842 = vmatprep.mubr.bf16.mxu0 0
      %1843 = vmatmul.mubr.bf16.gmra.mrb[0].mxu0 %v1081
      %v1844 = vpop.f32.mrb[0].mxu0
      %v1845 = vadd.f32 0.0, %v1844
      %v1846 = vpop.f32.mrb[0].mxu0
      %v1847 = vpop.f32.mrb[0].mxu0
      %v1848 = vadd.f32 0.0, %v1847
      %v1849 = vpop.f32.mrb[0].mxu0
      %1850 = vmatprep.mubr.bf16.mxu0 0
      %1851 = vmatmul.mubr.bf16.gmra.mrb[0].mxu0 %v1084
      %v1852 = vpop.f32.mrb[0].mxu0
      %v1853 = vadd.f32 0.0, %v1852
      %v1854 = vpop.f32.mrb[0].mxu0
      %v1855 = vpop.f32.mrb[0].mxu0
      %v1856 = vadd.f32 0.0, %v1855
      %v1857 = vpop.f32.mrb[0].mxu0
      %1858 = vmatprep.mubr.bf16.mxu0 0
      %1859 = vmatmul.mubr.bf16.gmra.mrb[0].mxu0 %v1087
      %v1860 = vpop.f32.mrb[0].mxu0
      %v1861 = vadd.f32 0.0, %v1860
      %v1862 = vpop.f32.mrb[0].mxu0
      %v1863 = vpop.f32.mrb[0].mxu0
      %v1864 = vadd.f32 0.0, %v1863
      %v1865 = vpop.f32.mrb[0].mxu0
      %1866 = vmatprep.mubr.bf16.mxu0 0
      %1867 = vmatmul.mubr.bf16.gmra.mrb[0].mxu0 %v1090
      %v1868 = vpop.f32.mrb[0].mxu0
      %v1869 = vadd.f32 0.0, %v1868
      %v1870 = vpop.f32.mrb[0].mxu0
      %v1871 = vpop.f32.mrb[0].mxu0
      %v1872 = vadd.f32 0.0, %v1871
      %v1873 = vpop.f32.mrb[0].mxu0
      %1874 = vmatprep.mubr.bf16.mxu0 0
      %1875 = vmatmul.mubr.bf16.gmra.mrb[0].mxu0 %v1093
      %v1876 = vpop.f32.mrb[0].mxu0
      %v1877 = vadd.f32 0.0, %v1876
      %v1878 = vpop.f32.mrb[0].mxu0
      %v1879 = vpop.f32.mrb[0].mxu0
      %v1880 = vadd.f32 0.0, %v1879
      %v1881 = vpop.f32.mrb[0].mxu0
      %1882 = vmatprep.mubr.bf16.mxu0 0
      %1883 = vmatmul.mubr.bf16.gmra.mrb[0].mxu0 %v1728
      %v1884 = vpop.f32.mrb[0].mxu0
      %v1885 = vadd.f32 0.0, %v1884
      %v1886 = vpop.f32.mrb[0].mxu0
      %v1887 = vpop.f32.mrb[0].mxu0
      %v1888 = vadd.f32 0.0, %v1887
      %v1889 = vpop.f32.mrb[0].mxu0
      %1890 = vdwg.mxu0
      %v1891 = vadd.f32 %v1678, %v1765
      %v1892 = vadd.f32 %v1679, %v1768
      %v1893 = vadd.f32 %v1680, %v1773
      %v1894 = vadd.f32 %v1681, %v1776
      %v1895 = vadd.f32 %v1682, %v1781
      %v1896 = vadd.f32 %v1683, %v1784
      %v1897 = vadd.f32 %v1684, %v1789
      %v1898 = vadd.f32 %v1685, %v1792
      %v1899 = vadd.f32 %v1686, %v1797
      %v1900 = vadd.f32 %v1687, %v1800
      %v1901 = vadd.f32 %v1688, %v1805
      %v1902 = vadd.f32 %v1689, %v1808
      %v1903 = vadd.f32 %v1690, %v1813
      %v1904 = vadd.f32 %v1691, %v1816
      %v1905 = vadd.f32 %v1692, %v1821
      %v1906 = vadd.f32 %v1693, %v1824
      %v1907 = vadd.f32 %v1694, %v1829
      %v1908 = vadd.f32 %v1695, %v1832
      %v1909 = vadd.f32 %v1696, %v1837
      %v1910 = vadd.f32 %v1697, %v1840
      %v1911 = vadd.f32 %v1698, %v1845
      %v1912 = vadd.f32 %v1699, %v1848
      %v1913 = vadd.f32 %v1700, %v1853
      %v1914 = vadd.f32 %v1701, %v1856
      %v1915 = vadd.f32 %v1702, %v1861
      %v1916 = vadd.f32 %v1703, %v1864
      %v1917 = vadd.f32 %v1704, %v1869
      %v1918 = vadd.f32 %v1705, %v1872
      %v1919 = vadd.f32 %v1706, %v1877
      %v1920 = vadd.f32 %v1707, %v1880
      %v1921 = vadd.f32 %v1708, %v1885
      %v1922 = vadd.f32 %v1709, %v1888
      %v1923 = vpack.c.bf16 %v278, %v277
      %s1924 = scalar_lea.vmem %s1, 48
      %v1925 = vld [vmem:[%s1924] sm:$0xf]
      %v1926 = vld [vmem:[%s1924 + $0x4] sm:$0xf]
      %v1929 = vunpack.c.l.b16 %v1925
      %v1930 = vunpack.c.l.b16 %v1926
      %v1931 = vpack.c.b16 %v1930, %v1929
      %v1934 = vsel %vm484, %v1923, 0
      %1936 = vmatprep.subr.bf16.mxu0 0
      %1937 = vmatpush1.bf16.msra.mxu0 %v1931
      %1938 = vmatprep.subr.bf16.mxu0 0
      %1939 = vmatpush1.bf16.msra.mxu0 0
      %1940 = vmatprep.subr.bf16.mxu0 0
      %1941 = vmatpush1.bf16.msra.mxu0 0
      %1942 = vmatprep.subr.bf16.mxu0 0
      %1943 = vmatpush1.bf16.msra.mxu0 0
      %1944 = vmatprep.subr.bf16.mxu0 0
      %1945 = vmatpush1.bf16.msra.mxu0 0
      %1946 = vmatprep.subr.bf16.mxu0 0
      %1947 = vmatpush1.bf16.msra.mxu0 0
      %1948 = vmatprep.subr.bf16.mxu0 0
      %1949 = vmatpush1.bf16.msra.mxu0 0
      %1950 = vmatprep.subr.bf16.mxu0 0
      %1951 = vmatpush1.bf16.msra.mxu0 0
      %1952 = vmatprep.subr.bf16.mxu0 0
      %1953 = vmatpush1.bf16.msra.mxu0 0
      %1954 = vmatprep.subr.bf16.mxu0 0
      %1955 = vmatpush1.bf16.msra.mxu0 0
      %1956 = vmatprep.subr.bf16.mxu0 0
      %1957 = vmatpush1.bf16.msra.mxu0 0
      %1958 = vmatprep.subr.bf16.mxu0 0
      %1959 = vmatpush1.bf16.msra.mxu0 0
      %1960 = vmatprep.subr.bf16.mxu0 0
      %1961 = vmatpush1.bf16.msra.mxu0 0
      %1962 = vmatprep.subr.bf16.mxu0 0
      %1963 = vmatpush1.bf16.msra.mxu0 0
      %1964 = vmatprep.subr.bf16.mxu0 0
      %1965 = vmatpush1.bf16.msra.mxu0 0
      %1966 = vmatprep.subr.bf16.mxu0 0
      %1967 = vmatpush1.bf16.msra.mxu0 0
      %1968 = vmatprep.mubr.bf16.mxu0 0
      %1969 = vmatmul.mubr.bf16.gmra.mrb[0].mxu0 %v707
      %v1970 = vpop.f32.mrb[0].mxu0
      %v1971 = vadd.f32 0.0, %v1970
      %v1972 = vpop.f32.mrb[0].mxu0
      %v1973 = vpop.f32.mrb[0].mxu0
      %v1974 = vadd.f32 0.0, %v1973
      %v1975 = vpop.f32.mrb[0].mxu0
      %1976 = vmatprep.mubr.bf16.mxu0 0
      %1977 = vmatmul.mubr.bf16.gmra.mrb[0].mxu0 %v710
      %v1978 = vpop.f32.mrb[0].mxu0
      %v1979 = vadd.f32 0.0, %v1978
      %v1980 = vpop.f32.mrb[0].mxu0
      %v1981 = vpop.f32.mrb[0].mxu0
      %v1982 = vadd.f32 0.0, %v1981
      %v1983 = vpop.f32.mrb[0].mxu0
      %1984 = vmatprep.mubr.bf16.mxu0 0
      %1985 = vmatmul.mubr.bf16.gmra.mrb[0].mxu0 %v713
      %v1986 = vpop.f32.mrb[0].mxu0
      %v1987 = vadd.f32 0.0, %v1986
      %v1988 = vpop.f32.mrb[0].mxu0
      %v1989 = vpop.f32.mrb[0].mxu0
      %v1990 = vadd.f32 0.0, %v1989
      %v1991 = vpop.f32.mrb[0].mxu0
      %1992 = vmatprep.mubr.bf16.mxu0 0
      %1993 = vmatmul.mubr.bf16.gmra.mrb[0].mxu0 %v716
      %v1994 = vpop.f32.mrb[0].mxu0
      %v1995 = vadd.f32 0.0, %v1994
      %v1996 = vpop.f32.mrb[0].mxu0
      %v1997 = vpop.f32.mrb[0].mxu0
      %v1998 = vadd.f32 0.0, %v1997
      %v1999 = vpop.f32.mrb[0].mxu0
      %2000 = vmatprep.mubr.bf16.mxu0 0
      %2001 = vmatmul.mubr.bf16.gmra.mrb[0].mxu0 %v719
      %v2002 = vpop.f32.mrb[0].mxu0
      %v2003 = vadd.f32 0.0, %v2002
      %v2004 = vpop.f32.mrb[0].mxu0
      %v2005 = vpop.f32.mrb[0].mxu0
      %v2006 = vadd.f32 0.0, %v2005
      %v2007 = vpop.f32.mrb[0].mxu0
      %2008 = vmatprep.mubr.bf16.mxu0 0
      %2009 = vmatmul.mubr.bf16.gmra.mrb[0].mxu0 %v722
      %v2010 = vpop.f32.mrb[0].mxu0
      %v2011 = vadd.f32 0.0, %v2010
      %v2012 = vpop.f32.mrb[0].mxu0
      %v2013 = vpop.f32.mrb[0].mxu0
      %v2014 = vadd.f32 0.0, %v2013
      %v2015 = vpop.f32.mrb[0].mxu0
      %2016 = vmatprep.mubr.bf16.mxu0 0
      %2017 = vmatmul.mubr.bf16.gmra.mrb[0].mxu0 %v725
      %v2018 = vpop.f32.mrb[0].mxu0
      %v2019 = vadd.f32 0.0, %v2018
      %v2020 = vpop.f32.mrb[0].mxu0
      %v2021 = vpop.f32.mrb[0].mxu0
      %v2022 = vadd.f32 0.0, %v2021
      %v2023 = vpop.f32.mrb[0].mxu0
      %2024 = vmatprep.mubr.bf16.mxu0 0
      %2025 = vmatmul.mubr.bf16.gmra.mrb[0].mxu0 %v728
      %v2026 = vpop.f32.mrb[0].mxu0
      %v2027 = vadd.f32 0.0, %v2026
      %v2028 = vpop.f32.mrb[0].mxu0
      %v2029 = vpop.f32.mrb[0].mxu0
      %v2030 = vadd.f32 0.0, %v2029
      %v2031 = vpop.f32.mrb[0].mxu0
      %2032 = vmatprep.mubr.bf16.mxu0 0
      %2033 = vmatmul.mubr.bf16.gmra.mrb[0].mxu0 %v731
      %v2034 = vpop.f32.mrb[0].mxu0
      %v2035 = vadd.f32 0.0, %v2034
      %v2036 = vpop.f32.mrb[0].mxu0
      %v2037 = vpop.f32.mrb[0].mxu0
      %v2038 = vadd.f32 0.0, %v2037
      %v2039 = vpop.f32.mrb[0].mxu0
      %2040 = vmatprep.mubr.bf16.mxu0 0
      %2041 = vmatmul.mubr.bf16.gmra.mrb[0].mxu0 %v734
      %v2042 = vpop.f32.mrb[0].mxu0
      %v2043 = vadd.f32 0.0, %v2042
      %v2044 = vpop.f32.mrb[0].mxu0
      %v2045 = vpop.f32.mrb[0].mxu0
      %v2046 = vadd.f32 0.0, %v2045
      %v2047 = vpop.f32.mrb[0].mxu0
      %2048 = vmatprep.mubr.bf16.mxu0 0
      %2049 = vmatmul.mubr.bf16.gmra.mrb[0].mxu0 %v737
      %v2050 = vpop.f32.mrb[0].mxu0
      %v2051 = vadd.f32 0.0, %v2050
      %v2052 = vpop.f32.mrb[0].mxu0
      %v2053 = vpop.f32.mrb[0].mxu0
      %v2054 = vadd.f32 0.0, %v2053
      %v2055 = vpop.f32.mrb[0].mxu0
      %2056 = vmatprep.mubr.bf16.mxu0 0
      %2057 = vmatmul.mubr.bf16.gmra.mrb[0].mxu0 %v740
      %v2058 = vpop.f32.mrb[0].mxu0
      %v2059 = vadd.f32 0.0, %v2058
      %v2060 = vpop.f32.mrb[0].mxu0
      %v2061 = vpop.f32.mrb[0].mxu0
      %v2062 = vadd.f32 0.0, %v2061
      %v2063 = vpop.f32.mrb[0].mxu0
      %2064 = vmatprep.mubr.bf16.mxu0 0
      %2065 = vmatmul.mubr.bf16.gmra.mrb[0].mxu0 %v743
      %v2066 = vpop.f32.mrb[0].mxu0
      %v2067 = vadd.f32 0.0, %v2066
      %v2068 = vpop.f32.mrb[0].mxu0
      %v2069 = vpop.f32.mrb[0].mxu0
      %v2070 = vadd.f32 0.0, %v2069
      %v2071 = vpop.f32.mrb[0].mxu0
      %2072 = vmatprep.mubr.bf16.mxu0 0
      %2073 = vmatmul.mubr.bf16.gmra.mrb[0].mxu0 %v746
      %v2074 = vpop.f32.mrb[0].mxu0
      %v2075 = vadd.f32 0.0, %v2074
      %v2076 = vpop.f32.mrb[0].mxu0
      %v2077 = vpop.f32.mrb[0].mxu0
      %v2078 = vadd.f32 0.0, %v2077
      %v2079 = vpop.f32.mrb[0].mxu0
      %2080 = vmatprep.mubr.bf16.mxu0 0
      %2081 = vmatmul.mubr.bf16.gmra.mrb[0].mxu0 %v1299
      %v2082 = vpop.f32.mrb[0].mxu0
      %v2083 = vadd.f32 0.0, %v2082
      %v2084 = vpop.f32.mrb[0].mxu0
      %v2085 = vpop.f32.mrb[0].mxu0
      %v2086 = vadd.f32 0.0, %v2085
      %v2087 = vpop.f32.mrb[0].mxu0
      %2088 = vmatprep.mubr.bf16.mxu0 0
      %2089 = vmatmul.mubr.bf16.gmra.mrb[0].mxu0 %v1934
      %v2090 = vpop.f32.mrb[0].mxu0
      %v2091 = vadd.f32 0.0, %v2090
      %v2092 = vpop.f32.mrb[0].mxu0
      %v2093 = vpop.f32.mrb[0].mxu0
      %v2094 = vadd.f32 0.0, %v2093
      %v2095 = vpop.f32.mrb[0].mxu0
      %2096 = vdwg.mxu0
      %v2097 = vadd.f32 %v1891, %v1971
      %v2098 = vadd.f32 %v1892, %v1974
      %v2099 = vadd.f32 %v1893, %v1979
      %v2100 = vadd.f32 %v1894, %v1982
      %v2101 = vadd.f32 %v1895, %v1987
      %v2102 = vadd.f32 %v1896, %v1990
      %v2103 = vadd.f32 %v1897, %v1995
      %v2104 = vadd.f32 %v1898, %v1998
      %v2105 = vadd.f32 %v1899, %v2003
      %v2106 = vadd.f32 %v1900, %v2006
      %v2107 = vadd.f32 %v1901, %v2011
      %v2108 = vadd.f32 %v1902, %v2014
      %v2109 = vadd.f32 %v1903, %v2019
      %v2110 = vadd.f32 %v1904, %v2022
      %v2111 = vadd.f32 %v1905, %v2027
      %v2112 = vadd.f32 %v1906, %v2030
      %v2113 = vadd.f32 %v1907, %v2035
      %v2114 = vadd.f32 %v1908, %v2038
      %v2115 = vadd.f32 %v1909, %v2043
      %v2116 = vadd.f32 %v1910, %v2046
      %v2117 = vadd.f32 %v1911, %v2051
      %v2118 = vadd.f32 %v1912, %v2054
      %v2119 = vadd.f32 %v1913, %v2059
      %v2120 = vadd.f32 %v1914, %v2062
      %v2121 = vadd.f32 %v1915, %v2067
      %v2122 = vadd.f32 %v1916, %v2070
      %v2123 = vadd.f32 %v1917, %v2075
      %v2124 = vadd.f32 %v1918, %v2078
      %v2125 = vadd.f32 %v1919, %v2083
      %v2126 = vadd.f32 %v1920, %v2086
      %v2127 = vadd.f32 %v1921, %v2091
      %v2128 = vadd.f32 %v1922, %v2094
      %v2132 = vrot.slane %v277, 1
      %v2133 = vrot.slane %v278, 1
      %v2134 = vsel %vm346, %v2132, %v2133
      %v2135 = vrot.slane %v279, 1
      %v2136 = vsel %vm346, %v2133, %v2135
      %v2139 = vpack.c.bf16 %v2136, %v2134
      %s2140 = scalar_lea.vmem %s1, 56
      %v2141 = vld [vmem:[%s2140] sm:$0xf]
      %v2142 = vld [vmem:[%s2140 + $0x4] sm:$0xf]
      %v2145 = vunpack.c.l.b16 %v2141
      %v2146 = vunpack.c.l.b16 %v2142
      %v2147 = vpack.c.b16 %v2146, %v2145
      %v2150 = vsel %vm484, %v2139, 0
      %2152 = vmatprep.subr.bf16.mxu0 0
      %2153 = vmatpush1.bf16.msra.mxu0 %v2147
      %2154 = vmatprep.subr.bf16.mxu0 0
      %2155 = vmatpush1.bf16.msra.mxu0 0
      %2156 = vmatprep.subr.bf16.mxu0 0
      %2157 = vmatpush1.bf16.msra.mxu0 0
      %2158 = vmatprep.subr.bf16.mxu0 0
      %2159 = vmatpush1.bf16.msra.mxu0 0
      %2160 = vmatprep.subr.bf16.mxu0 0
      %2161 = vmatpush1.bf16.msra.mxu0 0
      %2162 = vmatprep.subr.bf16.mxu0 0
      %2163 = vmatpush1.bf16.msra.mxu0 0
      %2164 = vmatprep.subr.bf16.mxu0 0
      %2165 = vmatpush1.bf16.msra.mxu0 0
      %2166 = vmatprep.subr.bf16.mxu0 0
      %2167 = vmatpush1.bf16.msra.mxu0 0
      %2168 = vmatprep.subr.bf16.mxu0 0
      %2169 = vmatpush1.bf16.msra.mxu0 0
      %2170 = vmatprep.subr.bf16.mxu0 0
      %2171 = vmatpush1.bf16.msra.mxu0 0
      %2172 = vmatprep.subr.bf16.mxu0 0
      %2173 = vmatpush1.bf16.msra.mxu0 0
      %2174 = vmatprep.subr.bf16.mxu0 0
      %2175 = vmatpush1.bf16.msra.mxu0 0
      %2176 = vmatprep.subr.bf16.mxu0 0
      %2177 = vmatpush1.bf16.msra.mxu0 0
      %2178 = vmatprep.subr.bf16.mxu0 0
      %2179 = vmatpush1.bf16.msra.mxu0 0
      %2180 = vmatprep.subr.bf16.mxu0 0
      %2181 = vmatpush1.bf16.msra.mxu0 0
      %2182 = vmatprep.subr.bf16.mxu0 0
      %2183 = vmatpush1.bf16.msra.mxu0 0
      %2184 = vmatprep.mubr.bf16.mxu0 0
      %2185 = vmatmul.mubr.bf16.gmra.mrb[0].mxu0 %v492
      %v2186 = vpop.f32.mrb[0].mxu0
      %v2187 = vadd.f32 0.0, %v2186
      %v2188 = vpop.f32.mrb[0].mxu0
      %v2189 = vpop.f32.mrb[0].mxu0
      %v2190 = vadd.f32 0.0, %v2189
      %v2191 = vpop.f32.mrb[0].mxu0
      %2192 = vmatprep.mubr.bf16.mxu0 0
      %2193 = vmatmul.mubr.bf16.gmra.mrb[0].mxu0 %v495
      %v2194 = vpop.f32.mrb[0].mxu0
      %v2195 = vadd.f32 0.0, %v2194
      %v2196 = vpop.f32.mrb[0].mxu0
      %v2197 = vpop.f32.mrb[0].mxu0
      %v2198 = vadd.f32 0.0, %v2197
      %v2199 = vpop.f32.mrb[0].mxu0
      %2200 = vmatprep.mubr.bf16.mxu0 0
      %2201 = vmatmul.mubr.bf16.gmra.mrb[0].mxu0 %v498
      %v2202 = vpop.f32.mrb[0].mxu0
      %v2203 = vadd.f32 0.0, %v2202
      %v2204 = vpop.f32.mrb[0].mxu0
      %v2205 = vpop.f32.mrb[0].mxu0
      %v2206 = vadd.f32 0.0, %v2205
      %v2207 = vpop.f32.mrb[0].mxu0
      %2208 = vmatprep.mubr.bf16.mxu0 0
      %2209 = vmatmul.mubr.bf16.gmra.mrb[0].mxu0 %v501
      %v2210 = vpop.f32.mrb[0].mxu0
      %v2211 = vadd.f32 0.0, %v2210
      %v2212 = vpop.f32.mrb[0].mxu0
      %v2213 = vpop.f32.mrb[0].mxu0
      %v2214 = vadd.f32 0.0, %v2213
      %v2215 = vpop.f32.mrb[0].mxu0
      %2216 = vmatprep.mubr.bf16.mxu0 0
      %2217 = vmatmul.mubr.bf16.gmra.mrb[0].mxu0 %v504
      %v2218 = vpop.f32.mrb[0].mxu0
      %v2219 = vadd.f32 0.0, %v2218
      %v2220 = vpop.f32.mrb[0].mxu0
      %v2221 = vpop.f32.mrb[0].mxu0
      %v2222 = vadd.f32 0.0, %v2221
      %v2223 = vpop.f32.mrb[0].mxu0
      %2224 = vmatprep.mubr.bf16.mxu0 0
      %2225 = vmatmul.mubr.bf16.gmra.mrb[0].mxu0 %v507
      %v2226 = vpop.f32.mrb[0].mxu0
      %v2227 = vadd.f32 0.0, %v2226
      %v2228 = vpop.f32.mrb[0].mxu0
      %v2229 = vpop.f32.mrb[0].mxu0
      %v2230 = vadd.f32 0.0, %v2229
      %v2231 = vpop.f32.mrb[0].mxu0
      %2232 = vmatprep.mubr.bf16.mxu0 0
      %2233 = vmatmul.mubr.bf16.gmra.mrb[0].mxu0 %v510
      %v2234 = vpop.f32.mrb[0].mxu0
      %v2235 = vadd.f32 0.0, %v2234
      %v2236 = vpop.f32.mrb[0].mxu0
      %v2237 = vpop.f32.mrb[0].mxu0
      %v2238 = vadd.f32 0.0, %v2237
      %v2239 = vpop.f32.mrb[0].mxu0
      %2240 = vmatprep.mubr.bf16.mxu0 0
      %2241 = vmatmul.mubr.bf16.gmra.mrb[0].mxu0 %v513
      %v2242 = vpop.f32.mrb[0].mxu0
      %v2243 = vadd.f32 0.0, %v2242
      %v2244 = vpop.f32.mrb[0].mxu0
      %v2245 = vpop.f32.mrb[0].mxu0
      %v2246 = vadd.f32 0.0, %v2245
      %v2247 = vpop.f32.mrb[0].mxu0
      %2248 = vmatprep.mubr.bf16.mxu0 0
      %2249 = vmatmul.mubr.bf16.gmra.mrb[0].mxu0 %v516
      %v2250 = vpop.f32.mrb[0].mxu0
      %v2251 = vadd.f32 0.0, %v2250
      %v2252 = vpop.f32.mrb[0].mxu0
      %v2253 = vpop.f32.mrb[0].mxu0
      %v2254 = vadd.f32 0.0, %v2253
      %v2255 = vpop.f32.mrb[0].mxu0
      %2256 = vmatprep.mubr.bf16.mxu0 0
      %2257 = vmatmul.mubr.bf16.gmra.mrb[0].mxu0 %v519
      %v2258 = vpop.f32.mrb[0].mxu0
      %v2259 = vadd.f32 0.0, %v2258
      %v2260 = vpop.f32.mrb[0].mxu0
      %v2261 = vpop.f32.mrb[0].mxu0
      %v2262 = vadd.f32 0.0, %v2261
      %v2263 = vpop.f32.mrb[0].mxu0
      %2264 = vmatprep.mubr.bf16.mxu0 0
      %2265 = vmatmul.mubr.bf16.gmra.mrb[0].mxu0 %v522
      %v2266 = vpop.f32.mrb[0].mxu0
      %v2267 = vadd.f32 0.0, %v2266
      %v2268 = vpop.f32.mrb[0].mxu0
      %v2269 = vpop.f32.mrb[0].mxu0
      %v2270 = vadd.f32 0.0, %v2269
      %v2271 = vpop.f32.mrb[0].mxu0
      %2272 = vmatprep.mubr.bf16.mxu0 0
      %2273 = vmatmul.mubr.bf16.gmra.mrb[0].mxu0 %v525
      %v2274 = vpop.f32.mrb[0].mxu0
      %v2275 = vadd.f32 0.0, %v2274
      %v2276 = vpop.f32.mrb[0].mxu0
      %v2277 = vpop.f32.mrb[0].mxu0
      %v2278 = vadd.f32 0.0, %v2277
      %v2279 = vpop.f32.mrb[0].mxu0
      %2280 = vmatprep.mubr.bf16.mxu0 0
      %2281 = vmatmul.mubr.bf16.gmra.mrb[0].mxu0 %v528
      %v2282 = vpop.f32.mrb[0].mxu0
      %v2283 = vadd.f32 0.0, %v2282
      %v2284 = vpop.f32.mrb[0].mxu0
      %v2285 = vpop.f32.mrb[0].mxu0
      %v2286 = vadd.f32 0.0, %v2285
      %v2287 = vpop.f32.mrb[0].mxu0
      %2288 = vmatprep.mubr.bf16.mxu0 0
      %2289 = vmatmul.mubr.bf16.gmra.mrb[0].mxu0 %v531
      %v2290 = vpop.f32.mrb[0].mxu0
      %v2291 = vadd.f32 0.0, %v2290
      %v2292 = vpop.f32.mrb[0].mxu0
      %v2293 = vpop.f32.mrb[0].mxu0
      %v2294 = vadd.f32 0.0, %v2293
      %v2295 = vpop.f32.mrb[0].mxu0
      %2296 = vmatprep.mubr.bf16.mxu0 0
      %2297 = vmatmul.mubr.bf16.gmra.mrb[0].mxu0 %v1515
      %v2298 = vpop.f32.mrb[0].mxu0
      %v2299 = vadd.f32 0.0, %v2298
      %v2300 = vpop.f32.mrb[0].mxu0
      %v2301 = vpop.f32.mrb[0].mxu0
      %v2302 = vadd.f32 0.0, %v2301
      %v2303 = vpop.f32.mrb[0].mxu0
      %2304 = vmatprep.mubr.bf16.mxu0 0
      %2305 = vmatmul.mubr.bf16.gmra.mrb[0].mxu0 %v2150
      %v2306 = vpop.f32.mrb[0].mxu0
      %v2307 = vadd.f32 0.0, %v2306
      %v2308 = vpop.f32.mrb[0].mxu0
      %v2309 = vpop.f32.mrb[0].mxu0
      %v2310 = vadd.f32 0.0, %v2309
      %v2311 = vpop.f32.mrb[0].mxu0
      %2312 = vdwg.mxu0
      %v2313 = vadd.f32 %v2097, %v2187
      %v2314 = vadd.f32 %v2098, %v2190
      %v2315 = vadd.f32 %v2099, %v2195
      %v2316 = vadd.f32 %v2100, %v2198
      %v2317 = vadd.f32 %v2101, %v2203
      %v2318 = vadd.f32 %v2102, %v2206
      %v2319 = vadd.f32 %v2103, %v2211
      %v2320 = vadd.f32 %v2104, %v2214
      %v2321 = vadd.f32 %v2105, %v2219
      %v2322 = vadd.f32 %v2106, %v2222
      %v2323 = vadd.f32 %v2107, %v2227
      %v2324 = vadd.f32 %v2108, %v2230
      %v2325 = vadd.f32 %v2109, %v2235
      %v2326 = vadd.f32 %v2110, %v2238
      %v2327 = vadd.f32 %v2111, %v2243
      %v2328 = vadd.f32 %v2112, %v2246
      %v2329 = vadd.f32 %v2113, %v2251
      %v2330 = vadd.f32 %v2114, %v2254
      %v2331 = vadd.f32 %v2115, %v2259
      %v2332 = vadd.f32 %v2116, %v2262
      %v2333 = vadd.f32 %v2117, %v2267
      %v2334 = vadd.f32 %v2118, %v2270
      %v2335 = vadd.f32 %v2119, %v2275
      %v2336 = vadd.f32 %v2120, %v2278
      %v2337 = vadd.f32 %v2121, %v2283
      %v2338 = vadd.f32 %v2122, %v2286
      %v2339 = vadd.f32 %v2123, %v2291
      %v2340 = vadd.f32 %v2124, %v2294
      %v2341 = vadd.f32 %v2125, %v2299
      %v2342 = vadd.f32 %v2126, %v2302
      %v2343 = vadd.f32 %v2127, %v2307
      %v2344 = vadd.f32 %v2128, %v2310
      %v2345 = vrot.slane %v277, 2
      %v2346 = vrot.slane %v278, 2
      %v2347 = vsel %vm909, %v2345, %v2346
      %v2348 = vrot.slane %v279, 2
      %v2349 = vsel %vm909, %v2346, %v2348
      %v2352 = vpack.c.bf16 %v2349, %v2347
      %s2353 = scalar_lea.vmem %s1, 64
      %v2354 = vld [vmem:[%s2353] sm:$0xf]
      %v2355 = vld [vmem:[%s2353 + $0x4] sm:$0xf]
      %v2358 = vunpack.c.l.b16 %v2354
      %v2359 = vunpack.c.l.b16 %v2355
      %v2360 = vpack.c.b16 %v2359, %v2358
      %v2363 = vsel %vm484, %v2352, 0
      %2365 = vmatprep.subr.bf16.mxu0 0
      %2366 = vmatpush1.bf16.msra.mxu0 %v2360
      %2367 = vmatprep.subr.bf16.mxu0 0
      %2368 = vmatpush1.bf16.msra.mxu0 0
      %2369 = vmatprep.subr.bf16.mxu0 0
      %2370 = vmatpush1.bf16.msra.mxu0 0
      %2371 = vmatprep.subr.bf16.mxu0 0
      %2372 = vmatpush1.bf16.msra.mxu0 0
      %2373 = vmatprep.subr.bf16.mxu0 0
      %2374 = vmatpush1.bf16.msra.mxu0 0
      %2375 = vmatprep.subr.bf16.mxu0 0
      %2376 = vmatpush1.bf16.msra.mxu0 0
      %2377 = vmatprep.subr.bf16.mxu0 0
      %2378 = vmatpush1.bf16.msra.mxu0 0
      %2379 = vmatprep.subr.bf16.mxu0 0
      %2380 = vmatpush1.bf16.msra.mxu0 0
      %2381 = vmatprep.subr.bf16.mxu0 0
      %2382 = vmatpush1.bf16.msra.mxu0 0
      %2383 = vmatprep.subr.bf16.mxu0 0
      %2384 = vmatpush1.bf16.msra.mxu0 0
      %2385 = vmatprep.subr.bf16.mxu0 0
      %2386 = vmatpush1.bf16.msra.mxu0 0
      %2387 = vmatprep.subr.bf16.mxu0 0
      %2388 = vmatpush1.bf16.msra.mxu0 0
      %2389 = vmatprep.subr.bf16.mxu0 0
      %2390 = vmatpush1.bf16.msra.mxu0 0
      %2391 = vmatprep.subr.bf16.mxu0 0
      %2392 = vmatpush1.bf16.msra.mxu0 0
      %2393 = vmatprep.subr.bf16.mxu0 0
      %2394 = vmatpush1.bf16.msra.mxu0 0
      %2395 = vmatprep.subr.bf16.mxu0 0
      %2396 = vmatpush1.bf16.msra.mxu0 0
      %2397 = vmatprep.mubr.bf16.mxu0 0
      %2398 = vmatmul.mubr.bf16.gmra.mrb[0].mxu0 %v1054
      %v2399 = vpop.f32.mrb[0].mxu0
      %v2400 = vadd.f32 0.0, %v2399
      %v2401 = vpop.f32.mrb[0].mxu0
      %v2402 = vpop.f32.mrb[0].mxu0
      %v2403 = vadd.f32 0.0, %v2402
      %v2404 = vpop.f32.mrb[0].mxu0
      %2405 = vmatprep.mubr.bf16.mxu0 0
      %2406 = vmatmul.mubr.bf16.gmra.mrb[0].mxu0 %v1057
      %v2407 = vpop.f32.mrb[0].mxu0
      %v2408 = vadd.f32 0.0, %v2407
      %v2409 = vpop.f32.mrb[0].mxu0
      %v2410 = vpop.f32.mrb[0].mxu0
      %v2411 = vadd.f32 0.0, %v2410
      %v2412 = vpop.f32.mrb[0].mxu0
      %2413 = vmatprep.mubr.bf16.mxu0 0
      %2414 = vmatmul.mubr.bf16.gmra.mrb[0].mxu0 %v1060
      %v2415 = vpop.f32.mrb[0].mxu0
      %v2416 = vadd.f32 0.0, %v2415
      %v2417 = vpop.f32.mrb[0].mxu0
      %v2418 = vpop.f32.mrb[0].mxu0
      %v2419 = vadd.f32 0.0, %v2418
      %v2420 = vpop.f32.mrb[0].mxu0
      %2421 = vmatprep.mubr.bf16.mxu0 0
      %2422 = vmatmul.mubr.bf16.gmra.mrb[0].mxu0 %v1063
      %v2423 = vpop.f32.mrb[0].mxu0
      %v2424 = vadd.f32 0.0, %v2423
      %v2425 = vpop.f32.mrb[0].mxu0
      %v2426 = vpop.f32.mrb[0].mxu0
      %v2427 = vadd.f32 0.0, %v2426
      %v2428 = vpop.f32.mrb[0].mxu0
      %2429 = vmatprep.mubr.bf16.mxu0 0
      %2430 = vmatmul.mubr.bf16.gmra.mrb[0].mxu0 %v1066
      %v2431 = vpop.f32.mrb[0].mxu0
      %v2432 = vadd.f32 0.0, %v2431
      %v2433 = vpop.f32.mrb[0].mxu0
      %v2434 = vpop.f32.mrb[0].mxu0
      %v2435 = vadd.f32 0.0, %v2434
      %v2436 = vpop.f32.mrb[0].mxu0
      %2437 = vmatprep.mubr.bf16.mxu0 0
      %2438 = vmatmul.mubr.bf16.gmra.mrb[0].mxu0 %v1069
      %v2439 = vpop.f32.mrb[0].mxu0
      %v2440 = vadd.f32 0.0, %v2439
      %v2441 = vpop.f32.mrb[0].mxu0
      %v2442 = vpop.f32.mrb[0].mxu0
      %v2443 = vadd.f32 0.0, %v2442
      %v2444 = vpop.f32.mrb[0].mxu0
      %2445 = vmatprep.mubr.bf16.mxu0 0
      %2446 = vmatmul.mubr.bf16.gmra.mrb[0].mxu0 %v1072
      %v2447 = vpop.f32.mrb[0].mxu0
      %v2448 = vadd.f32 0.0, %v2447
      %v2449 = vpop.f32.mrb[0].mxu0
      %v2450 = vpop.f32.mrb[0].mxu0
      %v2451 = vadd.f32 0.0, %v2450
      %v2452 = vpop.f32.mrb[0].mxu0
      %2453 = vmatprep.mubr.bf16.mxu0 0
      %2454 = vmatmul.mubr.bf16.gmra.mrb[0].mxu0 %v1075
      %v2455 = vpop.f32.mrb[0].mxu0
      %v2456 = vadd.f32 0.0, %v2455
      %v2457 = vpop.f32.mrb[0].mxu0
      %v2458 = vpop.f32.mrb[0].mxu0
      %v2459 = vadd.f32 0.0, %v2458
      %v2460 = vpop.f32.mrb[0].mxu0
      %2461 = vmatprep.mubr.bf16.mxu0 0
      %2462 = vmatmul.mubr.bf16.gmra.mrb[0].mxu0 %v1078
      %v2463 = vpop.f32.mrb[0].mxu0
      %v2464 = vadd.f32 0.0, %v2463
      %v2465 = vpop.f32.mrb[0].mxu0
      %v2466 = vpop.f32.mrb[0].mxu0
      %v2467 = vadd.f32 0.0, %v2466
      %v2468 = vpop.f32.mrb[0].mxu0
      %2469 = vmatprep.mubr.bf16.mxu0 0
      %2470 = vmatmul.mubr.bf16.gmra.mrb[0].mxu0 %v1081
      %v2471 = vpop.f32.mrb[0].mxu0
      %v2472 = vadd.f32 0.0, %v2471
      %v2473 = vpop.f32.mrb[0].mxu0
      %v2474 = vpop.f32.mrb[0].mxu0
      %v2475 = vadd.f32 0.0, %v2474
      %v2476 = vpop.f32.mrb[0].mxu0
      %2477 = vmatprep.mubr.bf16.mxu0 0
      %2478 = vmatmul.mubr.bf16.gmra.mrb[0].mxu0 %v1084
      %v2479 = vpop.f32.mrb[0].mxu0
      %v2480 = vadd.f32 0.0, %v2479
      %v2481 = vpop.f32.mrb[0].mxu0
      %v2482 = vpop.f32.mrb[0].mxu0
      %v2483 = vadd.f32 0.0, %v2482
      %v2484 = vpop.f32.mrb[0].mxu0
      %2485 = vmatprep.mubr.bf16.mxu0 0
      %2486 = vmatmul.mubr.bf16.gmra.mrb[0].mxu0 %v1087
      %v2487 = vpop.f32.mrb[0].mxu0
      %v2488 = vadd.f32 0.0, %v2487
      %v2489 = vpop.f32.mrb[0].mxu0
      %v2490 = vpop.f32.mrb[0].mxu0
      %v2491 = vadd.f32 0.0, %v2490
      %v2492 = vpop.f32.mrb[0].mxu0
      %2493 = vmatprep.mubr.bf16.mxu0 0
      %2494 = vmatmul.mubr.bf16.gmra.mrb[0].mxu0 %v1090
      %v2495 = vpop.f32.mrb[0].mxu0
      %v2496 = vadd.f32 0.0, %v2495
      %v2497 = vpop.f32.mrb[0].mxu0
      %v2498 = vpop.f32.mrb[0].mxu0
      %v2499 = vadd.f32 0.0, %v2498
      %v2500 = vpop.f32.mrb[0].mxu0
      %2501 = vmatprep.mubr.bf16.mxu0 0
      %2502 = vmatmul.mubr.bf16.gmra.mrb[0].mxu0 %v1093
      %v2503 = vpop.f32.mrb[0].mxu0
      %v2504 = vadd.f32 0.0, %v2503
      %v2505 = vpop.f32.mrb[0].mxu0
      %v2506 = vpop.f32.mrb[0].mxu0
      %v2507 = vadd.f32 0.0, %v2506
      %v2508 = vpop.f32.mrb[0].mxu0
      %2509 = vmatprep.mubr.bf16.mxu0 0
      %2510 = vmatmul.mubr.bf16.gmra.mrb[0].mxu0 %v1728
      %v2511 = vpop.f32.mrb[0].mxu0
      %v2512 = vadd.f32 0.0, %v2511
      %v2513 = vpop.f32.mrb[0].mxu0
      %v2514 = vpop.f32.mrb[0].mxu0
      %v2515 = vadd.f32 0.0, %v2514
      %v2516 = vpop.f32.mrb[0].mxu0
      %2517 = vmatprep.mubr.bf16.mxu0 0
      %2518 = vmatmul.mubr.bf16.gmra.mrb[0].mxu0 %v2363
      %v2519 = vpop.f32.mrb[0].mxu0
      %v2520 = vadd.f32 0.0, %v2519
      %v2521 = vpop.f32.mrb[0].mxu0
      %v2522 = vpop.f32.mrb[0].mxu0
      %v2523 = vadd.f32 0.0, %v2522
      %v2524 = vpop.f32.mrb[0].mxu0
      %2525 = vdwg.mxu0
      %v2526 = vadd.f32 %v2313, %v2400
      %v2527 = vadd.f32 %v2314, %v2403
      %v2528 = vadd.f32 %v2315, %v2408
      %v2529 = vadd.f32 %v2316, %v2411
      %v2530 = vadd.f32 %v2317, %v2416
      %v2531 = vadd.f32 %v2318, %v2419
      %v2532 = vadd.f32 %v2319, %v2424
      %v2533 = vadd.f32 %v2320, %v2427
      %v2534 = vadd.f32 %v2321, %v2432
      %v2535 = vadd.f32 %v2322, %v2435
      %v2536 = vadd.f32 %v2323, %v2440
      %v2537 = vadd.f32 %v2324, %v2443
      %v2538 = vadd.f32 %v2325, %v2448
      %v2539 = vadd.f32 %v2326, %v2451
      %v2540 = vadd.f32 %v2327, %v2456
      %v2541 = vadd.f32 %v2328, %v2459
      %v2542 = vadd.f32 %v2329, %v2464
      %v2543 = vadd.f32 %v2330, %v2467
      %v2544 = vadd.f32 %v2331, %v2472
      %v2545 = vadd.f32 %v2332, %v2475
      %v2546 = vadd.f32 %v2333, %v2480
      %v2547 = vadd.f32 %v2334, %v2483
      %v2548 = vadd.f32 %v2335, %v2488
      %v2549 = vadd.f32 %v2336, %v2491
      %v2550 = vadd.f32 %v2337, %v2496
      %v2551 = vadd.f32 %v2338, %v2499
      %v2552 = vadd.f32 %v2339, %v2504
      %v2553 = vadd.f32 %v2340, %v2507
      %v2554 = vadd.f32 %v2341, %v2512
      %v2555 = vadd.f32 %v2342, %v2515
      %v2556 = vadd.f32 %v2343, %v2520
      %v2557 = vadd.f32 %v2344, %v2523
      %v2558 = vld [vmem:[%s2] sm:$0x1]
      %v2560 = vlaneseq
      %v2561 = vshrl.u32 %v2560, 7
      %v2562 = vsub.s32 0, %v2561
      %v2563 = vrot.slane %v2558, %v2562
      %v2565 = vadd.f32 %v2526, %v2563
      %v2566 = vadd.f32 %v2527, %v2563
      %v2567 = vadd.f32 %v2528, %v2563
      %v2568 = vadd.f32 %v2529, %v2563
      %v2569 = vadd.f32 %v2530, %v2563
      %v2570 = vadd.f32 %v2531, %v2563
      %v2571 = vadd.f32 %v2532, %v2563
      %v2572 = vadd.f32 %v2533, %v2563
      %v2573 = vadd.f32 %v2534, %v2563
      %v2574 = vadd.f32 %v2535, %v2563
      %v2575 = vadd.f32 %v2536, %v2563
      %v2576 = vadd.f32 %v2537, %v2563
      %v2577 = vadd.f32 %v2538, %v2563
      %v2578 = vadd.f32 %v2539, %v2563
      %v2579 = vadd.f32 %v2540, %v2563
      %v2580 = vadd.f32 %v2541, %v2563
      %v2581 = vadd.f32 %v2542, %v2563
      %v2582 = vadd.f32 %v2543, %v2563
      %v2583 = vadd.f32 %v2544, %v2563
      %v2584 = vadd.f32 %v2545, %v2563
      %v2585 = vadd.f32 %v2546, %v2563
      %v2586 = vadd.f32 %v2547, %v2563
      %v2587 = vadd.f32 %v2548, %v2563
      %v2588 = vadd.f32 %v2549, %v2563
      %v2589 = vadd.f32 %v2550, %v2563
      %v2590 = vadd.f32 %v2551, %v2563
      %v2591 = vadd.f32 %v2552, %v2563
      %v2592 = vadd.f32 %v2553, %v2563
      %v2593 = vadd.f32 %v2554, %v2563
      %v2594 = vadd.f32 %v2555, %v2563
      %v2595 = vadd.f32 %v2556, %v2563
      %v2596 = vadd.f32 %v2557, %v2563
      %v2597 = vmax.f32 %v2565, 0.0
      %v2598 = vmax.f32 %v2566, 0.0
      %v2599 = vmax.f32 %v2567, 0.0
      %v2600 = vmax.f32 %v2568, 0.0
      %v2601 = vmax.f32 %v2569, 0.0
      %v2602 = vmax.f32 %v2570, 0.0
      %v2603 = vmax.f32 %v2571, 0.0
      %v2604 = vmax.f32 %v2572, 0.0
      %v2605 = vmax.f32 %v2573, 0.0
      %v2606 = vmax.f32 %v2574, 0.0
      %v2607 = vmax.f32 %v2575, 0.0
      %v2608 = vmax.f32 %v2576, 0.0
      %v2609 = vmax.f32 %v2577, 0.0
      %v2610 = vmax.f32 %v2578, 0.0
      %v2611 = vmax.f32 %v2579, 0.0
      %v2612 = vmax.f32 %v2580, 0.0
      %v2613 = vmax.f32 %v2581, 0.0
      %v2614 = vmax.f32 %v2582, 0.0
      %v2615 = vmax.f32 %v2583, 0.0
      %v2616 = vmax.f32 %v2584, 0.0
      %v2617 = vmax.f32 %v2585, 0.0
      %v2618 = vmax.f32 %v2586, 0.0
      %v2619 = vmax.f32 %v2587, 0.0
      %v2620 = vmax.f32 %v2588, 0.0
      %v2621 = vmax.f32 %v2589, 0.0
      %v2622 = vmax.f32 %v2590, 0.0
      %v2623 = vmax.f32 %v2591, 0.0
      %v2624 = vmax.f32 %v2592, 0.0
      %v2625 = vmax.f32 %v2593, 0.0
      %v2626 = vmax.f32 %v2594, 0.0
      %v2627 = vmax.f32 %v2595, 0.0
      %v2628 = vmax.f32 %v2596, 0.0
      %v2629 = vpack.c.bf16 %v2598, %v2597
      %v2630 = vpack.c.bf16 %v2600, %v2599
      %v2631 = vpack.c.bf16 %v2602, %v2601
      %v2632 = vpack.c.bf16 %v2604, %v2603
      %v2633 = vpack.c.bf16 %v2606, %v2605
      %v2634 = vpack.c.bf16 %v2608, %v2607
      %v2635 = vpack.c.bf16 %v2610, %v2609
      %v2636 = vpack.c.bf16 %v2612, %v2611
      %v2637 = vpack.c.bf16 %v2614, %v2613
      %v2638 = vpack.c.bf16 %v2616, %v2615
      %v2639 = vpack.c.bf16 %v2618, %v2617
      %v2640 = vpack.c.bf16 %v2620, %v2619
      %v2641 = vpack.c.bf16 %v2622, %v2621
      %v2642 = vpack.c.bf16 %v2624, %v2623
      %v2643 = vpack.c.bf16 %v2626, %v2625
      %v2644 = vpack.c.bf16 %v2628, %v2627
      %v2661 = vunpack.c.l.b16 %v2629
      %v2662 = vunpack.c.h.b16 %v2629
      %v2663 = vunpack.c.l.b16 %v2630
      %v2664 = vunpack.c.h.b16 %v2630
      %v2665 = vunpack.c.l.b16 %v2631
      %v2666 = vunpack.c.h.b16 %v2631
      %v2667 = vunpack.c.l.b16 %v2632
      %v2668 = vunpack.c.h.b16 %v2632
      %v2669 = vunpack.c.l.b16 %v2633
      %v2670 = vunpack.c.h.b16 %v2633
      %v2671 = vunpack.c.l.b16 %v2634
      %v2672 = vunpack.c.h.b16 %v2634
      %v2673 = vunpack.c.l.b16 %v2635
      %v2674 = vunpack.c.h.b16 %v2635
      %v2675 = vunpack.c.l.b16 %v2636
      %v2676 = vunpack.c.h.b16 %v2636
      %v2677 = vunpack.c.l.b16 %v2637
      %v2678 = vunpack.c.h.b16 %v2637
      %v2679 = vunpack.c.l.b16 %v2638
      %v2680 = vunpack.c.h.b16 %v2638
      %v2681 = vunpack.c.l.b16 %v2639
      %v2682 = vunpack.c.h.b16 %v2639
      %v2683 = vunpack.c.l.b16 %v2640
      %v2684 = vunpack.c.h.b16 %v2640
      %v2685 = vunpack.c.l.b16 %v2641
      %v2686 = vunpack.c.h.b16 %v2641
      %v2687 = vunpack.c.l.b16 %v2642
      %v2688 = vunpack.c.h.b16 %v2642
      %v2689 = vunpack.c.l.b16 %v2643
      %v2690 = vunpack.c.h.b16 %v2643
      %v2691 = vunpack.c.l.b16 %v2644
      %v2692 = vunpack.c.h.b16 %v2644
      %v2693 = vpack.c.b16 %v2661, %v2661
      %v2694 = vpack.c.b16 %v2662, %v2662
      %v2695 = vpack.c.b16 %v2663, %v2663
      %v2696 = vpack.c.b16 %v2664, %v2664
      %v2697 = vpack.c.b16 %v2665, %v2665
      %v2698 = vpack.c.b16 %v2666, %v2666
      %v2699 = vpack.c.b16 %v2667, %v2667
      %v2700 = vpack.c.b16 %v2668, %v2668
      %v2701 = vpack.c.b16 %v2669, %v2669
      %v2702 = vpack.c.b16 %v2670, %v2670
      %v2703 = vpack.c.b16 %v2671, %v2671
      %v2704 = vpack.c.b16 %v2672, %v2672
      %v2705 = vpack.c.b16 %v2673, %v2673
      %v2706 = vpack.c.b16 %v2674, %v2674
      %v2707 = vpack.c.b16 %v2675, %v2675
      %v2708 = vpack.c.b16 %v2676, %v2676
      %v2709 = vpack.c.b16 %v2677, %v2677
      %v2710 = vpack.c.b16 %v2678, %v2678
      %v2711 = vpack.c.b16 %v2679, %v2679
      %v2712 = vpack.c.b16 %v2680, %v2680
      %v2713 = vpack.c.b16 %v2681, %v2681
      %v2714 = vpack.c.b16 %v2682, %v2682
      %v2715 = vpack.c.b16 %v2683, %v2683
      %v2716 = vpack.c.b16 %v2684, %v2684
      %v2717 = vpack.c.b16 %v2685, %v2685
      %v2718 = vpack.c.b16 %v2686, %v2686
      %v2719 = vpack.c.b16 %v2687, %v2687
      %v2720 = vpack.c.b16 %v2688, %v2688
      %v2721 = vpack.c.b16 %v2689, %v2689
      %v2722 = vpack.c.b16 %v2690, %v2690
      %v2723 = vpack.c.b16 %v2691, %v2691
      %v2724 = vpack.c.b16 %v2692, %v2692
      %2757 = vst [vmem:[%s170] sm:$0xf] %v2693
      %2758 = vst [vmem:[%s170 + $0x4] sm:$0xf] %v2694
      %2759 = vst [vmem:[%s170 + $0x8] sm:$0xf] %v2695
      %2760 = vst [vmem:[%s170 + $0xc] sm:$0xf] %v2696
      %2761 = vst [vmem:[%s170 + $0x10] sm:$0xf] %v2697
      %2762 = vst [vmem:[%s170 + $0x14] sm:$0xf] %v2698
      %2763 = vst [vmem:[%s170 + $0x18] sm:$0xf] %v2699
      %2764 = vst [vmem:[%s170 + $0x1c] sm:$0xf] %v2700
      %2765 = vst [vmem:[%s170 + $0x20] sm:$0xf] %v2701
      %2766 = vst [vmem:[%s170 + $0x24] sm:$0xf] %v2702
      %2767 = vst [vmem:[%s170 + $0x28] sm:$0xf] %v2703
      %2768 = vst [vmem:[%s170 + $0x2c] sm:$0xf] %v2704
      %2769 = vst [vmem:[%s170 + $0x30] sm:$0xf] %v2705
      %2770 = vst [vmem:[%s170 + $0x34] sm:$0xf] %v2706
      %2771 = vst [vmem:[%s170 + $0x38] sm:$0xf] %v2707
      %2772 = vst [vmem:[%s170 + $0x3c] sm:$0xf] %v2708
      %2773 = vst [vmem:[%s170 + $0x40] sm:$0xf] %v2709
      %2774 = vst [vmem:[%s170 + $0x44] sm:$0xf] %v2710
      %2775 = vst [vmem:[%s170 + $0x48] sm:$0xf] %v2711
      %2776 = vst [vmem:[%s170 + $0x4c] sm:$0xf] %v2712
      %2777 = vst [vmem:[%s170 + $0x50] sm:$0xf] %v2713
      %2778 = vst [vmem:[%s170 + $0x54] sm:$0xf] %v2714
      %2779 = vst [vmem:[%s170 + $0x58] sm:$0xf] %v2715
      %2780 = vst [vmem:[%s170 + $0x5c] sm:$0xf] %v2716
      %2781 = vst [vmem:[%s170 + $0x60] sm:$0xf] %v2717
      %2782 = vst [vmem:[%s170 + $0x64] sm:$0xf] %v2718
      %2783 = vst [vmem:[%s170 + $0x68] sm:$0xf] %v2719
      %2784 = vst [vmem:[%s170 + $0x6c] sm:$0xf] %v2720
      %2785 = vst [vmem:[%s170 + $0x70] sm:$0xf] %v2721
      %2786 = vst [vmem:[%s170 + $0x74] sm:$0xf] %v2722
      %2787 = vst [vmem:[%s170 + $0x78] sm:$0xf] %v2723
      %2788 = vst [vmem:[%s170 + $0x7c] sm:$0xf] %v2724
      %p2789 = scmp.lt.s32.totalorder %s14, 1
      %s2790 = scalar_select %p2789, %s14, 1
      %s2791 = smul.addr %s2790, 32
      %s2792 = smul.addr %s2791, 4
      %s2793 = scalar_lea.vmem %s3, %s2792
      // Predicated region
      $region33: #{fwd.5} parent=31 // pred_check
        %p2794 = pneg %p100
      $region34: #{fwd.5} parent=31 // pred_check_branch
        %2796 = sbr.rel (%p2794) target = $region36
      $region35: #{fwd.5} parent=31 // pred_region
        _
      $region36: #{fwd.5} parent=31 // pred_fallthru
        _
    $region32: #{fwd.5} parent=5 // pred_fallthru
      _
    %p2797 = scmp.le.s32.totalorder 2, %s9
    // Predicated region
    $region37: #{fwd.5} parent=5 // pred_check
      %p2798 = pneg %p2797
    $region38: #{fwd.5} parent=5 // pred_check_branch
      %2800 = sbr.rel (%p2798) target = $region40
    $region39: #{fwd.5} parent=5 // pred_region
      %s2801 = ssub.s32 %s9, 2
      // Predicated region
      $region41: #{fwd.5} parent=39 // pred_check
        %p2802 = pneg %p106
      $region42: #{fwd.5} parent=39 // pred_check_branch
        %2804 = sbr.rel (%p2802) target = $region44
      $region43: #{fwd.5} parent=39 // pred_region
        %p2805 = scmp.lt.s32.totalorder %s15, 1
        %s2806 = scalar_select %p2805, %s15, 1
        %s2807 = smul.addr %s2806, 32
        %s2808 = smul.addr %s2807, 4
        %s2809 = scalar_lea.vmem %s3, %s2808
      $region44: #{fwd.5} parent=39 // pred_fallthru
        _
    $region40: #{fwd.5} parent=5 // pred_fallthru
      _
  $region6: #{fwd.5} parent=0 // loop_footer
    %s13 = sadd.s32 1, %s9
  $region7: #{fwd.5} parent=0 // loop_footer_branch
    %8 = sbr.rel target = $region3
  $region8: #{fwd.5} parent=0 // loop_exit
    _

// kernel: fwd.7
$region0: #{fwd.7}
  #allocation0 [shape = 'u32[]', space=smem, size = 0x4, offset = 0x4, fixed_abs, tag = 'smem constant byte address 0x4 - core index']
  #allocation1 [shape = 'u32[144,128]{1,0:T(1,128)}', space=vmem, size = 0x12000, scoped, tag = 'internal scratch']
  %s0 = inlined_call_operand.vmem [shape: bf16[2,10,10,32], index: 0, kind: input, shape index: {}]
  %s1 = inlined_call_operand.vmem [shape: bf16[9,32,128], index: 1, kind: input, shape index: {}]
  %s2 = inlined_call_operand.vmem [shape: f32[1,128], index: 2, kind: input, shape index: {}]
  %s3 = inlined_call_operand.vmem [shape: bf16[2,64,128], index: 3, kind: output, shape index: {}]
  %s4 = sld [smem:[#allocation0]]
  $region45: #{fwd.7} parent=0
    _
  %s6 = ssub.s32 1, %s4
  %s7 = scalar_select 0, %s6, %s4
  loop: start=0, step=1, limit=4
  $region2: #{fwd.7} parent=0 // loop_pre_header
    _
  $region3: #{fwd.7} parent=0 // loop_header
    %s9 = sphi 0, %s13
    %p10 = scmp.ge.s32.totalorder %s9, 4
    %s19 = sphi 0, %s21
    %s22 = sphi 0, %s19
    %s23 = sphi 0, %s22
    %s39 = sphi 0, %s23
    %s43 = sphi 0, %s43
    %s45 = sphi 0, %s43
    %s46 = sphi 0, %s45
    %s60 = sphi 0, %s46
    %s64 = sphi 0, %s64
    %s66 = sphi 0, %s64
    %s67 = sphi 0, %s66
    %s81 = sphi 0, %s67
    %s87 = sphi 0, %s89
    %s90 = sphi 0, %s87
    %s91 = sphi 0, %s90
    %s107 = sphi 0, %s91
  $region4: #{fwd.7} parent=0 // loop_header_branch
    %12 = sbr.rel (%p10) target = $region8
  $region5: #{fwd.7} parent=0 // loop_body
    %s14 = ssub.s32 %s9, 1
    %s15 = ssub.s32 %s9, 2
    %s16 = sadd.s32 %s9, 1
    %s17 = ssub.s32 %s9, %s16
    %p18 = scmp.eq.s32.totalorder %s17, 0
    %s20 = sadd.s32 %s19, 1
    %s21 = scalar_select %p18, %s19, %s20
    %p24 = pneg %p18
    %p25 = scmp.eq.s32.totalorder %s9, 1
    %p26 = por %p24, %p25
    %p27 = scmp.ne.s32.totalorder %s19, %s22
    %p28 = scmp.eq.s32.totalorder %s9, 0
    %p29 = por %p27, %p28
    %p30 = scmp.ne.s32.totalorder %s19, %s22
    %p31 = scmp.eq.s32.totalorder %s14, 1
    %p32 = por %p30, %p31
    %p33 = scmp.ne.s32.totalorder %s22, %s23
    %p34 = scmp.eq.s32.totalorder %s14, 0
    %p35 = por %p33, %p34
    %p36 = scmp.ne.s32.totalorder %s22, %s23
    %p37 = scmp.eq.s32.totalorder %s15, 1
    %p38 = por %p36, %p37
    %p40 = scmp.ne.s32.totalorder %s23, %s39
    %p41 = scmp.eq.s32.totalorder %s15, 0
    %p42 = por %p40, %p41
    %s44 = sadd.s32 %s43, 1
    %p47 = scmp.eq.s32.totalorder %s9, 1
    %p48 = scmp.ne.s32.totalorder %s43, %s45
    %p49 = scmp.eq.s32.totalorder %s9, 0
    %p50 = por %p48, %p49
    %p51 = scmp.ne.s32.totalorder %s43, %s45
    %p52 = scmp.eq.s32.totalorder %s14, 1
    %p53 = por %p51, %p52
    %p54 = scmp.ne.s32.totalorder %s45, %s46
    %p55 = scmp.eq.s32.totalorder %s14, 0
    %p56 = por %p54, %p55
    %p57 = scmp.ne.s32.totalorder %s45, %s46
    %p58 = scmp.eq.s32.totalorder %s15, 1
    %p59 = por %p57, %p58
    %p61 = scmp.ne.s32.totalorder %s46, %s60
    %p62 = scmp.eq.s32.totalorder %s15, 0
    %p63 = por %p61, %p62
    %s65 = sadd.s32 %s64, 1
    %p68 = scmp.eq.s32.totalorder %s9, 1
    %p69 = scmp.ne.s32.totalorder %s64, %s66
    %p70 = scmp.eq.s32.totalorder %s9, 0
    %p71 = por %p69, %p70
    %p72 = scmp.ne.s32.totalorder %s64, %s66
    %p73 = scmp.eq.s32.totalorder %s14, 1
    %p74 = por %p72, %p73
    %p75 = scmp.ne.s32.totalorder %s66, %s67
    %p76 = scmp.eq.s32.totalorder %s14, 0
    %p77 = por %p75, %p76
    %p78 = scmp.ne.s32.totalorder %s66, %s67
    %p79 = scmp.eq.s32.totalorder %s15, 1
    %p80 = por %p78, %p79
    %p82 = scmp.ne.s32.totalorder %s67, %s81
    %p83 = scmp.eq.s32.totalorder %s15, 0
    %p84 = por %p82, %p83
    %s85 = ssub.s32 %s9, %s16
    %p86 = scmp.eq.s32.totalorder %s85, 0
    %s88 = sadd.s32 %s87, 1
    %s89 = scalar_select %p86, %s87, %s88
    %p92 = pneg %p86
    %p93 = scmp.eq.s32.totalorder %s9, 1
    %p94 = por %p92, %p93
    %p95 = scmp.ne.s32.totalorder %s87, %s90
    %p96 = scmp.eq.s32.totalorder %s9, 0
    %p97 = por %p95, %p96
    %p98 = scmp.ne.s32.totalorder %s87, %s90
    %p99 = scmp.eq.s32.totalorder %s14, 1
    %p100 = por %p98, %p99
    %p101 = scmp.ne.s32.totalorder %s90, %s91
    %p102 = scmp.eq.s32.totalorder %s14, 0
    %p103 = por %p101, %p102
    %p104 = scmp.ne.s32.totalorder %s90, %s91
    %p105 = scmp.eq.s32.totalorder %s15, 1
    %p106 = por %p104, %p105
    %p108 = scmp.ne.s32.totalorder %s91, %s107
    %p109 = scmp.eq.s32.totalorder %s15, 0
    %p110 = por %p108, %p109
    %p111 = scmp.le.s32.totalorder 1, %s9
    %p112 = scmp.lt.s32.totalorder %s9, 3
    %p113 = pnand %p111, %p112
    %p114 = pneg %p113
    // Predicated region
    $region9: #{fwd.7} parent=5 // pred_check
      _
    $region10: #{fwd.7} parent=5 // pred_check_branch
      %116 = sbr.rel (%p113) target = $region12
    $region11: #{fwd.7} parent=5 // pred_region
      %s117 = ssub.s32 %s9, 1
      // Predicated region
      $region13: #{fwd.7} parent=11 // pred_check
        %p118 = pneg %p56
      $region14: #{fwd.7} parent=11 // pred_check_branch
        %120 = sbr.rel (%p118) target = $region16
      $region15: #{fwd.7} parent=11 // pred_region
        _
      $region16: #{fwd.7} parent=11 // pred_fallthru
        _
      // Predicated region
      $region17: #{fwd.7} parent=11 // pred_check
        %p121 = pneg %p77
      $region18: #{fwd.7} parent=11 // pred_check_branch
        %123 = sbr.rel (%p121) target = $region20
      $region19: #{fwd.7} parent=11 // pred_region
        _
      $region20: #{fwd.7} parent=11 // pred_fallthru
        _
    $region12: #{fwd.7} parent=5 // pred_fallthru
      _
    %p124 = scmp.lt.s32.totalorder %s9, 2
    // Predicated region
    $region21: #{fwd.7} parent=5 // pred_check
      %p125 = pneg %p124
    $region22: #{fwd.7} parent=5 // pred_check_branch
      %127 = sbr.rel (%p125) target = $region24
    $region23: #{fwd.7} parent=5 // pred_region
      // Predicated region
      $region25: #{fwd.7} parent=23 // pred_check
        %p128 = pneg %p29
      $region26: #{fwd.7} parent=23 // pred_check_branch
        %130 = sbr.rel (%p128) target = $region28
      $region27: #{fwd.7} parent=23 // pred_region
        %p131 = scmp.lt.s32.totalorder %s9, 1
        %s132 = scalar_select %p131, %s9, 1
        %s133 = smul.addr %s132, 20
        %s134 = smul.addr %s133, 4
        %s135 = scalar_lea.vmem %s0, %s134
      $region28: #{fwd.7} parent=23 // pred_fallthru
        _
    $region24: #{fwd.7} parent=5 // pred_fallthru
      _
    %p136 = scmp.le.s32.totalorder 1, %s9
    %p137 = scmp.lt.s32.totalorder %s9, 3
    %p138 = pnand %p136, %p137
    %p139 = pneg %p138
    // Predicated region
    $region29: #{fwd.7} parent=5 // pred_check
      _
    $region30: #{fwd.7} parent=5 // pred_check_branch
      %141 = sbr.rel (%p138) target = $region32
    $region31: #{fwd.7} parent=5 // pred_region
      %s142 = ssub.s32 %s9, 1
      %p143 = scmp.lt.s32.totalorder %s14, 1
      %s144 = scalar_select %p143, %s14, 1
      %s145 = smul.addr %s144, 20
      %s146 = smul.addr %s145, 4
      %s147 = scalar_lea.vmem %s0, %s146
      %p148 = pneg %p35
      %p149 = pneg %p32
      %p150 = pneg %p56
      %p151 = pneg %p53
      %p152 = pneg %p77
      %p153 = pneg %p74
      %p154 = pneg %p103
      %p155 = pneg %p100
      %p156 = scmp.lt.s32.totalorder %s14, 1
      %s157 = scalar_select %p156, %s14, 1
      %s158 = smul.addr %s157, 8
      %s159 = smul.addr %s158, 4
      %s160 = scalar_lea.vmem %s3, %s159
      %p161 = scmp.lt.s32.totalorder %s14, 1
      %s162 = scalar_select %p161, %s14, 1
      %s163 = smul.addr %s162, 20
      %s164 = smul.addr %s163, 4
      %s165 = scalar_lea.vmem %s0, %s164
      %p166 = scmp.lt.s32.totalorder %s14, 1
      %s167 = scalar_select %p166, %s14, 1
      %s168 = smul.addr %s167, 8
      %s169 = smul.addr %s168, 4
      %s170 = scalar_lea.vmem %s3, %s169
      %v172 = vld [vmem:[%s165] sm:$0xf]
      %v173 = vld [vmem:[%s165 + $0x4] sm:$0x1]
      %v174 = vld [vmem:[%s165 + $0x8] sm:$0xf]
      %v175 = vld [vmem:[%s165 + $0xc] sm:$0x1]
      %v176 = vld [vmem:[%s165 + $0x10] sm:$0xf]
      %v177 = vld [vmem:[%s165 + $0x14] sm:$0x1]
      %v178 = vld [vmem:[%s165 + $0x18] sm:$0xf]
      %v179 = vld [vmem:[%s165 + $0x1c] sm:$0x1]
      %v180 = vld [vmem:[%s165 + $0x20] sm:$0xf]
      %v181 = vld [vmem:[%s165 + $0x24] sm:$0x1]
      %v182 = vld [vmem:[%s165 + $0x28] sm:$0xf]
      %v183 = vld [vmem:[%s165 + $0x2c] sm:$0x1]
      %v184 = vld [vmem:[%s165 + $0x30] sm:$0xf]
      %v185 = vld [vmem:[%s165 + $0x34] sm:$0x1]
      %v186 = vld [vmem:[%s165 + $0x38] sm:$0xf]
      %v187 = vld [vmem:[%s165 + $0x3c] sm:$0x1]
      %v188 = vld [vmem:[%s165 + $0x40] sm:$0xf]
      %v189 = vld [vmem:[%s165 + $0x44] sm:$0x1]
      %v190 = vld [vmem:[%s165 + $0x48] sm:$0xf]
      %v191 = vld [vmem:[%s165 + $0x4c] sm:$0x1]
      %v192 = vunpack.c.l.bf16 %v172
      %v193 = vunpack.c.l.bf16 %v173
      %v194 = vunpack.c.l.bf16 %v174
      %v195 = vunpack.c.l.bf16 %v175
      %v196 = vunpack.c.l.bf16 %v176
      %v197 = vunpack.c.l.bf16 %v177
      %v198 = vunpack.c.l.bf16 %v178
      %v199 = vunpack.c.l.bf16 %v179
      %v200 = vunpack.c.l.bf16 %v180
      %v201 = vunpack.c.l.bf16 %v181
      %v202 = vunpack.c.l.bf16 %v182
      %v203 = vunpack.c.l.bf16 %v183
      %v204 = vunpack.c.l.bf16 %v184
      %v205 = vunpack.c.l.bf16 %v185
      %v206 = vunpack.c.l.bf16 %v186
      %v207 = vunpack.c.l.bf16 %v187
      %v208 = vunpack.c.l.bf16 %v188
      %v209 = vunpack.c.l.bf16 %v189
      %v210 = vunpack.c.l.bf16 %v190
      %v211 = vunpack.c.l.bf16 %v191
      %v212 = vpack.c.bf16 %v194, %v192
      %v213 = vpack.c.bf16 %v198, %v196
      %v214 = vpack.c.bf16 %v202, %v200
      %v215 = vpack.c.bf16 %v206, %v204
      %v216 = vld [vmem:[%s1] sm:$0xf]
      %v217 = vld [vmem:[%s1 + $0x4] sm:$0xf]
      %v218 = vld [vmem:[%s1 + $0x8] sm:$0xf]
      %v219 = vld [vmem:[%s1 + $0xc] sm:$0xf]
      %vm236 = vcmask 1046528
      %v237 = vrot.slane %v192, 1
      %v238 = vrot.slane %v193, 1
      %v239 = vsel %vm236, %v237, %v238
      %v240 = vrot.slane %v194, 1
      %v241 = vrot.slane %v195, 1
      %v242 = vsel %vm236, %v240, %v241
      %v243 = vrot.slane %v196, 1
      %v244 = vrot.slane %v197, 1
      %v245 = vsel %vm236, %v243, %v244
      %v246 = vrot.slane %v198, 1
      %v247 = vrot.slane %v199, 1
      %v248 = vsel %vm236, %v246, %v247
      %v249 = vrot.slane %v200, 1
      %v250 = vrot.slane %v201, 1
      %v251 = vsel %vm236, %v249, %v250
      %v252 = vrot.slane %v202, 1
      %v253 = vrot.slane %v203, 1
      %v254 = vsel %vm236, %v252, %v253
      %v255 = vrot.slane %v204, 1
      %v256 = vrot.slane %v205, 1
      %v257 = vsel %vm236, %v255, %v256
      %v258 = vrot.slane %v206, 1
      %v259 = vrot.slane %v207, 1
      %v260 = vsel %vm236, %v258, %v259
      %v269 = vpack.c.bf16 %v242, %v239
      %v270 = vpack.c.bf16 %v248, %v245
      %v271 = vpack.c.bf16 %v254, %v251
      %v272 = vpack.c.bf16 %v260, %v257
      %s273 = scalar_lea.vmem %s1, 16
      %v274 = vld [vmem:[%s273] sm:$0xf]
      %v275 = vld [vmem:[%s273 + $0x4] sm:$0xf]
      %v276 = vld [vmem:[%s273 + $0x8] sm:$0xf]
      %v277 = vld [vmem:[%s273 + $0xc] sm:$0xf]
      %v282 = vunpack.c.l.b16 %v274
      %v283 = vunpack.c.l.b16 %v275
      %v284 = vunpack.c.l.b16 %v276
      %v285 = vunpack.c.l.b16 %v277
      %v286 = vpack.c.b16 %v283, %v282
      %v287 = vpack.c.b16 %v285, %v284
      %vm290 = vcmask 261120
      %v292 = vsel %vm290, %v269, 0
      %v295 = vsel %vm290, %v270, 0
      %v298 = vsel %vm290, %v271, 0
      %v301 = vsel %vm290, %v272, 0
      %303 = vmatprep.subr.bf16.mxu0 0
      %304 = vmatpush1.bf16.msra.mxu0 %v286
      %305 = vmatprep.subr.bf16.mxu0 0
      %306 = vmatpush1.bf16.msra.mxu0 %v287
      %307 = vmatprep.subr.bf16.mxu0 0
      %308 = vmatpush1.bf16.msra.mxu0 0
      %309 = vmatprep.subr.bf16.mxu0 0
      %310 = vmatpush1.bf16.msra.mxu0 0
      %311 = vmatprep.subr.bf16.mxu0 0
      %312 = vmatpush1.bf16.msra.mxu0 0
      %313 = vmatprep.subr.bf16.mxu0 0
      %314 = vmatpush1.bf16.msra.mxu0 0
      %315 = vmatprep.subr.bf16.mxu0 0
      %316 = vmatpush1.bf16.msra.mxu0 0
      %317 = vmatprep.subr.bf16.mxu0 0
      %318 = vmatpush1.bf16.msra.mxu0 0
      %319 = vmatprep.subr.bf16.mxu0 0
      %320 = vmatpush1.bf16.msra.mxu0 0
      %321 = vmatprep.subr.bf16.mxu0 0
      %322 = vmatpush1.bf16.msra.mxu0 0
      %323 = vmatprep.subr.bf16.mxu0 0
      %324 = vmatpush1.bf16.msra.mxu0 0
      %325 = vmatprep.subr.bf16.mxu0 0
      %326 = vmatpush1.bf16.msra.mxu0 0
      %327 = vmatprep.subr.bf16.mxu0 0
      %328 = vmatpush1.bf16.msra.mxu0 0
      %329 = vmatprep.subr.bf16.mxu0 0
      %330 = vmatpush1.bf16.msra.mxu0 0
      %331 = vmatprep.subr.bf16.mxu0 0
      %332 = vmatpush1.bf16.msra.mxu0 0
      %333 = vmatprep.subr.bf16.mxu0 0
      %334 = vmatpush1.bf16.msra.mxu0 0
      %335 = vmatprep.mubr.bf16.mxu0 0
      %336 = vmatmul.mubr.bf16.gmra.mrb[0].mxu0 %v292
      %v337 = vpop.f32.mrb[0].mxu0
      %v338 = vadd.f32 0.0, %v337
      %v339 = vpop.f32.mrb[0].mxu0
      %v340 = vpop.f32.mrb[0].mxu0
      %v341 = vadd.f32 0.0, %v340
      %v342 = vpop.f32.mrb[0].mxu0
      %343 = vmatprep.mubr.bf16.mxu0 0
      %344 = vmatmul.mubr.bf16.gmra.mrb[0].mxu0 %v295
      %v345 = vpop.f32.mrb[0].mxu0
      %v346 = vadd.f32 0.0, %v345
      %v347 = vpop.f32.mrb[0].mxu0
      %v348 = vpop.f32.mrb[0].mxu0
      %v349 = vadd.f32 0.0, %v348
      %v350 = vpop.f32.mrb[0].mxu0
      %351 = vmatprep.mubr.bf16.mxu0 0
      %352 = vmatmul.mubr.bf16.gmra.mrb[0].mxu0 %v298
      %v353 = vpop.f32.mrb[0].mxu0
      %v354 = vadd.f32 0.0, %v353
      %v355 = vpop.f32.mrb[0].mxu0
      %v356 = vpop.f32.mrb[0].mxu0
      %v357 = vadd.f32 0.0, %v356
      %v358 = vpop.f32.mrb[0].mxu0
      %359 = vmatprep.mubr.bf16.mxu0 0
      %360 = vmatmul.mubr.bf16.gmra.mrb[0].mxu0 %v301
      %v361 = vpop.f32.mrb[0].mxu0
      %v362 = vadd.f32 0.0, %v361
      %v363 = vpop.f32.mrb[0].mxu0
      %v364 = vpop.f32.mrb[0].mxu0
      %v365 = vadd.f32 0.0, %v364
      %v366 = vpop.f32.mrb[0].mxu0
      %367 = vdwg.mxu0
      %v372 = vunpack.c.l.b16 %v216
      %v373 = vunpack.c.l.b16 %v217
      %v374 = vunpack.c.l.b16 %v218
      %v375 = vunpack.c.l.b16 %v219
      %v376 = vpack.c.b16 %v373, %v372
      %v377 = vpack.c.b16 %v375, %v374
      %v381 = vsel %vm290, %v212, 0
      %v384 = vsel %vm290, %v213, 0
      %v387 = vsel %vm290, %v214, 0
      %v390 = vsel %vm290, %v215, 0
      %392 = vmatprep.subr.bf16.mxu0 0
      %393 = vmatpush1.bf16.msra.mxu0 %v376
      %394 = vmatprep.subr.bf16.mxu0 0
      %395 = vmatpush1.bf16.msra.mxu0 %v377
      %396 = vmatprep.subr.bf16.mxu0 0
      %397 = vmatpush1.bf16.msra.mxu0 0
      %398 = vmatprep.subr.bf16.mxu0 0
      %399 = vmatpush1.bf16.msra.mxu0 0
      %400 = vmatprep.subr.bf16.mxu0 0
      %401 = vmatpush1.bf16.msra.mxu0 0
      %402 = vmatprep.subr.bf16.mxu0 0
      %403 = vmatpush1.bf16.msra.mxu0 0
      %404 = vmatprep.subr.bf16.mxu0 0
      %405 = vmatpush1.bf16.msra.mxu0 0
      %406 = vmatprep.subr.bf16.mxu0 0
      %407 = vmatpush1.bf16.msra.mxu0 0
      %408 = vmatprep.subr.bf16.mxu0 0
      %409 = vmatpush1.bf16.msra.mxu0 0
      %410 = vmatprep.subr.bf16.mxu0 0
      %411 = vmatpush1.bf16.msra.mxu0 0
      %412 = vmatprep.subr.bf16.mxu0 0
      %413 = vmatpush1.bf16.msra.mxu0 0
      %414 = vmatprep.subr.bf16.mxu0 0
      %415 = vmatpush1.bf16.msra.mxu0 0
      %416 = vmatprep.subr.bf16.mxu0 0
      %417 = vmatpush1.bf16.msra.mxu0 0
      %418 = vmatprep.subr.bf16.mxu0 0
      %419 = vmatpush1.bf16.msra.mxu0 0
      %420 = vmatprep.subr.bf16.mxu0 0
      %421 = vmatpush1.bf16.msra.mxu0 0
      %422 = vmatprep.subr.bf16.mxu0 0
      %423 = vmatpush1.bf16.msra.mxu0 0
      %424 = vmatprep.mubr.bf16.mxu0 0
      %425 = vmatmul.mubr.bf16.gmra.mrb[0].mxu0 %v381
      %v426 = vpop.f32.mrb[0].mxu0
      %v427 = vadd.f32 %v338, %v426
      %v428 = vpop.f32.mrb[0].mxu0
      %v429 = vpop.f32.mrb[0].mxu0
      %v430 = vadd.f32 %v341, %v429
      %v431 = vpop.f32.mrb[0].mxu0
      %432 = vmatprep.mubr.bf16.mxu0 0
      %433 = vmatmul.mubr.bf16.gmra.mrb[0].mxu0 %v384
      %v434 = vpop.f32.mrb[0].mxu0
      %v435 = vadd.f32 %v346, %v434
      %v436 = vpop.f32.mrb[0].mxu0
      %v437 = vpop.f32.mrb[0].mxu0
      %v438 = vadd.f32 %v349, %v437
      %v439 = vpop.f32.mrb[0].mxu0
      %440 = vmatprep.mubr.bf16.mxu0 0
      %441 = vmatmul.mubr.bf16.gmra.mrb[0].mxu0 %v387
      %v442 = vpop.f32.mrb[0].mxu0
      %v443 = vadd.f32 %v354, %v442
      %v444 = vpop.f32.mrb[0].mxu0
      %v445 = vpop.f32.mrb[0].mxu0
      %v446 = vadd.f32 %v357, %v445
      %v447 = vpop.f32.mrb[0].mxu0
      %448 = vmatprep.mubr.bf16.mxu0 0
      %449 = vmatmul.mubr.bf16.gmra.mrb[0].mxu0 %v390
      %v450 = vpop.f32.mrb[0].mxu0
      %v451 = vadd.f32 %v362, %v450
      %v452 = vpop.f32.mrb[0].mxu0
      %v453 = vpop.f32.mrb[0].mxu0
      %v454 = vadd.f32 %v365, %v453
      %v455 = vpop.f32.mrb[0].mxu0
      %456 = vdwg.mxu0
      %vm457 = vcmask 1045504
      %v458 = vrot.slane %v192, 2
      %v459 = vrot.slane %v193, 2
      %v460 = vsel %vm457, %v458, %v459
      %v461 = vrot.slane %v194, 2
      %v462 = vrot.slane %v195, 2
      %v463 = vsel %vm457, %v461, %v462
      %v464 = vrot.slane %v196, 2
      %v465 = vrot.slane %v197, 2
      %v466 = vsel %vm457, %v464, %v465
      %v467 = vrot.slane %v198, 2
      %v468 = vrot.slane %v199, 2
      %v469 = vsel %vm457, %v467, %v468
      %v470 = vrot.slane %v200, 2
      %v471 = vrot.slane %v201, 2
      %v472 = vsel %vm457, %v470, %v471
      %v473 = vrot.slane %v202, 2
      %v474 = vrot.slane %v203, 2
      %v475 = vsel %vm457, %v473, %v474
      %v476 = vrot.slane %v204, 2
      %v477 = vrot.slane %v205, 2
      %v478 = vsel %vm457, %v476, %v477
      %v479 = vrot.slane %v206, 2
      %v480 = vrot.slane %v207, 2
      %v481 = vsel %vm457, %v479, %v480
      %v490 = vpack.c.bf16 %v463, %v460
      %v491 = vpack.c.bf16 %v469, %v466
      %v492 = vpack.c.bf16 %v475, %v472
      %v493 = vpack.c.bf16 %v481, %v478
      %s494 = scalar_lea.vmem %s1, 32
      %v495 = vld [vmem:[%s494] sm:$0xf]
      %v496 = vld [vmem:[%s494 + $0x4] sm:$0xf]
      %v497 = vld [vmem:[%s494 + $0x8] sm:$0xf]
      %v498 = vld [vmem:[%s494 + $0xc] sm:$0xf]
      %v503 = vunpack.c.l.b16 %v495
      %v504 = vunpack.c.l.b16 %v496
      %v505 = vunpack.c.l.b16 %v497
      %v506 = vunpack.c.l.b16 %v498
      %v507 = vpack.c.b16 %v504, %v503
      %v508 = vpack.c.b16 %v506, %v505
      %v512 = vsel %vm290, %v490, 0
      %v515 = vsel %vm290, %v491, 0
      %v518 = vsel %vm290, %v492, 0
      %v521 = vsel %vm290, %v493, 0
      %523 = vmatprep.subr.bf16.mxu0 0
      %524 = vmatpush1.bf16.msra.mxu0 %v507
      %525 = vmatprep.subr.bf16.mxu0 0
      %526 = vmatpush1.bf16.msra.mxu0 %v508
      %527 = vmatprep.subr.bf16.mxu0 0
      %528 = vmatpush1.bf16.msra.mxu0 0
      %529 = vmatprep.subr.bf16.mxu0 0
      %530 = vmatpush1.bf16.msra.mxu0 0
      %531 = vmatprep.subr.bf16.mxu0 0
      %532 = vmatpush1.bf16.msra.mxu0 0
      %533 = vmatprep.subr.bf16.mxu0 0
      %534 = vmatpush1.bf16.msra.mxu0 0
      %535 = vmatprep.subr.bf16.mxu0 0
      %536 = vmatpush1.bf16.msra.mxu0 0
      %537 = vmatprep.subr.bf16.mxu0 0
      %538 = vmatpush1.bf16.msra.mxu0 0
      %539 = vmatprep.subr.bf16.mxu0 0
      %540 = vmatpush1.bf16.msra.mxu0 0
      %541 = vmatprep.subr.bf16.mxu0 0
      %542 = vmatpush1.bf16.msra.mxu0 0
      %543 = vmatprep.subr.bf16.mxu0 0
      %544 = vmatpush1.bf16.msra.mxu0 0
      %545 = vmatprep.subr.bf16.mxu0 0
      %546 = vmatpush1.bf16.msra.mxu0 0
      %547 = vmatprep.subr.bf16.mxu0 0
      %548 = vmatpush1.bf16.msra.mxu0 0
      %549 = vmatprep.subr.bf16.mxu0 0
      %550 = vmatpush1.bf16.msra.mxu0 0
      %551 = vmatprep.subr.bf16.mxu0 0
      %552 = vmatpush1.bf16.msra.mxu0 0
      %553 = vmatprep.subr.bf16.mxu0 0
      %554 = vmatpush1.bf16.msra.mxu0 0
      %555 = vmatprep.mubr.bf16.mxu0 0
      %556 = vmatmul.mubr.bf16.gmra.mrb[0].mxu0 %v512
      %v557 = vpop.f32.mrb[0].mxu0
      %v558 = vadd.f32 0.0, %v557
      %v559 = vpop.f32.mrb[0].mxu0
      %v560 = vpop.f32.mrb[0].mxu0
      %v561 = vadd.f32 0.0, %v560
      %v562 = vpop.f32.mrb[0].mxu0
      %563 = vmatprep.mubr.bf16.mxu0 0
      %564 = vmatmul.mubr.bf16.gmra.mrb[0].mxu0 %v515
      %v565 = vpop.f32.mrb[0].mxu0
      %v566 = vadd.f32 0.0, %v565
      %v567 = vpop.f32.mrb[0].mxu0
      %v568 = vpop.f32.mrb[0].mxu0
      %v569 = vadd.f32 0.0, %v568
      %v570 = vpop.f32.mrb[0].mxu0
      %571 = vmatprep.mubr.bf16.mxu0 0
      %572 = vmatmul.mubr.bf16.gmra.mrb[0].mxu0 %v518
      %v573 = vpop.f32.mrb[0].mxu0
      %v574 = vadd.f32 0.0, %v573
      %v575 = vpop.f32.mrb[0].mxu0
      %v576 = vpop.f32.mrb[0].mxu0
      %v577 = vadd.f32 0.0, %v576
      %v578 = vpop.f32.mrb[0].mxu0
      %579 = vmatprep.mubr.bf16.mxu0 0
      %580 = vmatmul.mubr.bf16.gmra.mrb[0].mxu0 %v521
      %v581 = vpop.f32.mrb[0].mxu0
      %v582 = vadd.f32 0.0, %v581
      %v583 = vpop.f32.mrb[0].mxu0
      %v584 = vpop.f32.mrb[0].mxu0
      %v585 = vadd.f32 0.0, %v584
      %v586 = vpop.f32.mrb[0].mxu0
      %587 = vdwg.mxu0
      %v588 = vadd.f32 %v427, %v558
      %v589 = vadd.f32 %v430, %v561
      %v590 = vadd.f32 %v435, %v566
      %v591 = vadd.f32 %v438, %v569
      %v592 = vadd.f32 %v443, %v574
      %v593 = vadd.f32 %v446, %v577
      %v594 = vadd.f32 %v451, %v582
      %v595 = vadd.f32 %v454, %v585
      %v596 = vpack.c.bf16 %v196, %v194
      %v597 = vpack.c.bf16 %v200, %v198
      %v598 = vpack.c.bf16 %v204, %v202
      %v599 = vpack.c.bf16 %v208, %v206
      %s600 = scalar_lea.vmem %s1, 48
      %v601 = vld [vmem:[%s600] sm:$0xf]
      %v602 = vld [vmem:[%s600 + $0x4] sm:$0xf]
      %v603 = vld [vmem:[%s600 + $0x8] sm:$0xf]
      %v604 = vld [vmem:[%s600 + $0xc] sm:$0xf]
      %v609 = vunpack.c.l.b16 %v601
      %v610 = vunpack.c.l.b16 %v602
      %v611 = vunpack.c.l.b16 %v603
      %v612 = vunpack.c.l.b16 %v604
      %v613 = vpack.c.b16 %v610, %v609
      %v614 = vpack.c.b16 %v612, %v611
      %v618 = vsel %vm290, %v596, 0
      %v621 = vsel %vm290, %v597, 0
      %v624 = vsel %vm290, %v598, 0
      %v627 = vsel %vm290, %v599, 0
      %629 = vmatprep.subr.bf16.mxu0 0
      %630 = vmatpush1.bf16.msra.mxu0 %v613
      %631 = vmatprep.subr.bf16.mxu0 0
      %632 = vmatpush1.bf16.msra.mxu0 %v614
      %633 = vmatprep.subr.bf16.mxu0 0
      %634 = vmatpush1.bf16.msra.mxu0 0
      %635 = vmatprep.subr.bf16.mxu0 0
      %636 = vmatpush1.bf16.msra.mxu0 0
      %637 = vmatprep.subr.bf16.mxu0 0
      %638 = vmatpush1.bf16.msra.mxu0 0
      %639 = vmatprep.subr.bf16.mxu0 0
      %640 = vmatpush1.bf16.msra.mxu0 0
      %641 = vmatprep.subr.bf16.mxu0 0
      %642 = vmatpush1.bf16.msra.mxu0 0
      %643 = vmatprep.subr.bf16.mxu0 0
      %644 = vmatpush1.bf16.msra.mxu0 0
      %645 = vmatprep.subr.bf16.mxu0 0
      %646 = vmatpush1.bf16.msra.mxu0 0
      %647 = vmatprep.subr.bf16.mxu0 0
      %648 = vmatpush1.bf16.msra.mxu0 0
      %649 = vmatprep.subr.bf16.mxu0 0
      %650 = vmatpush1.bf16.msra.mxu0 0
      %651 = vmatprep.subr.bf16.mxu0 0
      %652 = vmatpush1.bf16.msra.mxu0 0
      %653 = vmatprep.subr.bf16.mxu0 0
      %654 = vmatpush1.bf16.msra.mxu0 0
      %655 = vmatprep.subr.bf16.mxu0 0
      %656 = vmatpush1.bf16.msra.mxu0 0
      %657 = vmatprep.subr.bf16.mxu0 0
      %658 = vmatpush1.bf16.msra.mxu0 0
      %659 = vmatprep.subr.bf16.mxu0 0
      %660 = vmatpush1.bf16.msra.mxu0 0
      %661 = vmatprep.mubr.bf16.mxu0 0
      %662 = vmatmul.mubr.bf16.gmra.mrb[0].mxu0 %v618
      %v663 = vpop.f32.mrb[0].mxu0
      %v664 = vadd.f32 0.0, %v663
      %v665 = vpop.f32.mrb[0].mxu0
      %v666 = vpop.f32.mrb[0].mxu0
      %v667 = vadd.f32 0.0, %v666
      %v668 = vpop.f32.mrb[0].mxu0
      %669 = vmatprep.mubr.bf16.mxu0 0
      %670 = vmatmul.mubr.bf16.gmra.mrb[0].mxu0 %v621
      %v671 = vpop.f32.mrb[0].mxu0
      %v672 = vadd.f32 0.0, %v671
      %v673 = vpop.f32.mrb[0].mxu0
      %v674 = vpop.f32.mrb[0].mxu0
      %v675 = vadd.f32 0.0, %v674
      %v676 = vpop.f32.mrb[0].mxu0
      %677 = vmatprep.mubr.bf16.mxu0 0
      %678 = vmatmul.mubr.bf16.gmra.mrb[0].mxu0 %v624
      %v679 = vpop.f32.mrb[0].mxu0
      %v680 = vadd.f32 0.0, %v679
      %v681 = vpop.f32.mrb[0].mxu0
      %v682 = vpop.f32.mrb[0].mxu0
      %v683 = vadd.f32 0.0, %v682
      %v684 = vpop.f32.mrb[0].mxu0
      %685 = vmatprep.mubr.bf16.mxu0 0
      %686 = vmatmul.mubr.bf16.gmra.mrb[0].mxu0 %v627
      %v687 = vpop.f32.mrb[0].mxu0
      %v688 = vadd.f32 0.0, %v687
      %v689 = vpop.f32.mrb[0].mxu0
      %v690 = vpop.f32.mrb[0].mxu0
      %v691 = vadd.f32 0.0, %v690
      %v692 = vpop.f32.mrb[0].mxu0
      %693 = vdwg.mxu0
      %v694 = vadd.f32 %v588, %v664
      %v695 = vadd.f32 %v589, %v667
      %v696 = vadd.f32 %v590, %v672
      %v697 = vadd.f32 %v591, %v675
      %v698 = vadd.f32 %v592, %v680
      %v699 = vadd.f32 %v593, %v683
      %v700 = vadd.f32 %v594, %v688
      %v701 = vadd.f32 %v595, %v691
      %v704 = vrot.slane %v208, 1
      %v705 = vrot.slane %v209, 1
      %v706 = vsel %vm236, %v704, %v705
      %v708 = vpack.c.bf16 %v245, %v242
      %v709 = vpack.c.bf16 %v251, %v248
      %v710 = vpack.c.bf16 %v257, %v254
      %v711 = vpack.c.bf16 %v706, %v260
      %s712 = scalar_lea.vmem %s1, 64
      %v713 = vld [vmem:[%s712] sm:$0xf]
      %v714 = vld [vmem:[%s712 + $0x4] sm:$0xf]
      %v715 = vld [vmem:[%s712 + $0x8] sm:$0xf]
      %v716 = vld [vmem:[%s712 + $0xc] sm:$0xf]
      %v721 = vunpack.c.l.b16 %v713
      %v722 = vunpack.c.l.b16 %v714
      %v723 = vunpack.c.l.b16 %v715
      %v724 = vunpack.c.l.b16 %v716
      %v725 = vpack.c.b16 %v722, %v721
      %v726 = vpack.c.b16 %v724, %v723
      %v730 = vsel %vm290, %v708, 0
      %v733 = vsel %vm290, %v709, 0
      %v736 = vsel %vm290, %v710, 0
      %v739 = vsel %vm290, %v711, 0
      %741 = vmatprep.subr.bf16.mxu0 0
      %742 = vmatpush1.bf16.msra.mxu0 %v725
      %743 = vmatprep.subr.bf16.mxu0 0
      %744 = vmatpush1.bf16.msra.mxu0 %v726
      %745 = vmatprep.subr.bf16.mxu0 0
      %746 = vmatpush1.bf16.msra.mxu0 0
      %747 = vmatprep.subr.bf16.mxu0 0
      %748 = vmatpush1.bf16.msra.mxu0 0
      %749 = vmatprep.subr.bf16.mxu0 0
      %750 = vmatpush1.bf16.msra.mxu0 0
      %751 = vmatprep.subr.bf16.mxu0 0
      %752 = vmatpush1.bf16.msra.mxu0 0
      %753 = vmatprep.subr.bf16.mxu0 0
      %754 = vmatpush1.bf16.msra.mxu0 0
      %755 = vmatprep.subr.bf16.mxu0 0
      %756 = vmatpush1.bf16.msra.mxu0 0
      %757 = vmatprep.subr.bf16.mxu0 0
      %758 = vmatpush1.bf16.msra.mxu0 0
      %759 = vmatprep.subr.bf16.mxu0 0
      %760 = vmatpush1.bf16.msra.mxu0 0
      %761 = vmatprep.subr.bf16.mxu0 0
      %762 = vmatpush1.bf16.msra.mxu0 0
      %763 = vmatprep.subr.bf16.mxu0 0
      %764 = vmatpush1.bf16.msra.mxu0 0
      %765 = vmatprep.subr.bf16.mxu0 0
      %766 = vmatpush1.bf16.msra.mxu0 0
      %767 = vmatprep.subr.bf16.mxu0 0
      %768 = vmatpush1.bf16.msra.mxu0 0
      %769 = vmatprep.subr.bf16.mxu0 0
      %770 = vmatpush1.bf16.msra.mxu0 0
      %771 = vmatprep.subr.bf16.mxu0 0
      %772 = vmatpush1.bf16.msra.mxu0 0
      %773 = vmatprep.mubr.bf16.mxu0 0
      %774 = vmatmul.mubr.bf16.gmra.mrb[0].mxu0 %v730
      %v775 = vpop.f32.mrb[0].mxu0
      %v776 = vadd.f32 0.0, %v775
      %v777 = vpop.f32.mrb[0].mxu0
      %v778 = vpop.f32.mrb[0].mxu0
      %v779 = vadd.f32 0.0, %v778
      %v780 = vpop.f32.mrb[0].mxu0
      %781 = vmatprep.mubr.bf16.mxu0 0
      %782 = vmatmul.mubr.bf16.gmra.mrb[0].mxu0 %v733
      %v783 = vpop.f32.mrb[0].mxu0
      %v784 = vadd.f32 0.0, %v783
      %v785 = vpop.f32.mrb[0].mxu0
      %v786 = vpop.f32.mrb[0].mxu0
      %v787 = vadd.f32 0.0, %v786
      %v788 = vpop.f32.mrb[0].mxu0
      %789 = vmatprep.mubr.bf16.mxu0 0
      %790 = vmatmul.mubr.bf16.gmra.mrb[0].mxu0 %v736
      %v791 = vpop.f32.mrb[0].mxu0
      %v792 = vadd.f32 0.0, %v791
      %v793 = vpop.f32.mrb[0].mxu0
      %v794 = vpop.f32.mrb[0].mxu0
      %v795 = vadd.f32 0.0, %v794
      %v796 = vpop.f32.mrb[0].mxu0
      %797 = vmatprep.mubr.bf16.mxu0 0
      %798 = vmatmul.mubr.bf16.gmra.mrb[0].mxu0 %v739
      %v799 = vpop.f32.mrb[0].mxu0
      %v800 = vadd.f32 0.0, %v799
      %v801 = vpop.f32.mrb[0].mxu0
      %v802 = vpop.f32.mrb[0].mxu0
      %v803 = vadd.f32 0.0, %v802
      %v804 = vpop.f32.mrb[0].mxu0
      %805 = vdwg.mxu0
      %v806 = vadd.f32 %v694, %v776
      %v807 = vadd.f32 %v695, %v779
      %v808 = vadd.f32 %v696, %v784
      %v809 = vadd.f32 %v697, %v787
      %v810 = vadd.f32 %v698, %v792
      %v811 = vadd.f32 %v699, %v795
      %v812 = vadd.f32 %v700, %v800
      %v813 = vadd.f32 %v701, %v803
      %v814 = vrot.slane %v208, 2
      %v815 = vrot.slane %v209, 2
      %v816 = vsel %vm457, %v814, %v815
      %v818 = vpack.c.bf16 %v466, %v463
      %v819 = vpack.c.bf16 %v472, %v469
      %v820 = vpack.c.bf16 %v478, %v475
      %v821 = vpack.c.bf16 %v816, %v481
      %s822 = scalar_lea.vmem %s1, 80
      %v823 = vld [vmem:[%s822] sm:$0xf]
      %v824 = vld [vmem:[%s822 + $0x4] sm:$0xf]
      %v825 = vld [vmem:[%s822 + $0x8] sm:$0xf]
      %v826 = vld [vmem:[%s822 + $0xc] sm:$0xf]
      %v831 = vunpack.c.l.b16 %v823
      %v832 = vunpack.c.l.b16 %v824
      %v833 = vunpack.c.l.b16 %v825
      %v834 = vunpack.c.l.b16 %v826
      %v835 = vpack.c.b16 %v832, %v831
      %v836 = vpack.c.b16 %v834, %v833
      %v840 = vsel %vm290, %v818, 0
      %v843 = vsel %vm290, %v819, 0
      %v846 = vsel %vm290, %v820, 0
      %v849 = vsel %vm290, %v821, 0
      %851 = vmatprep.subr.bf16.mxu0 0
      %852 = vmatpush1.bf16.msra.mxu0 %v835
      %853 = vmatprep.subr.bf16.mxu0 0
      %854 = vmatpush1.bf16.msra.mxu0 %v836
      %855 = vmatprep.subr.bf16.mxu0 0
      %856 = vmatpush1.bf16.msra.mxu0 0
      %857 = vmatprep.subr.bf16.mxu0 0
      %858 = vmatpush1.bf16.msra.mxu0 0
      %859 = vmatprep.subr.bf16.mxu0 0
      %860 = vmatpush1.bf16.msra.mxu0 0
      %861 = vmatprep.subr.bf16.mxu0 0
      %862 = vmatpush1.bf16.msra.mxu0 0
      %863 = vmatprep.subr.bf16.mxu0 0
      %864 = vmatpush1.bf16.msra.mxu0 0
      %865 = vmatprep.subr.bf16.mxu0 0
      %866 = vmatpush1.bf16.msra.mxu0 0
      %867 = vmatprep.subr.bf16.mxu0 0
      %868 = vmatpush1.bf16.msra.mxu0 0
      %869 = vmatprep.subr.bf16.mxu0 0
      %870 = vmatpush1.bf16.msra.mxu0 0
      %871 = vmatprep.subr.bf16.mxu0 0
      %872 = vmatpush1.bf16.msra.mxu0 0
      %873 = vmatprep.subr.bf16.mxu0 0
      %874 = vmatpush1.bf16.msra.mxu0 0
      %875 = vmatprep.subr.bf16.mxu0 0
      %876 = vmatpush1.bf16.msra.mxu0 0
      %877 = vmatprep.subr.bf16.mxu0 0
      %878 = vmatpush1.bf16.msra.mxu0 0
      %879 = vmatprep.subr.bf16.mxu0 0
      %880 = vmatpush1.bf16.msra.mxu0 0
      %881 = vmatprep.subr.bf16.mxu0 0
      %882 = vmatpush1.bf16.msra.mxu0 0
      %883 = vmatprep.mubr.bf16.mxu0 0
      %884 = vmatmul.mubr.bf16.gmra.mrb[0].mxu0 %v840
      %v885 = vpop.f32.mrb[0].mxu0
      %v886 = vadd.f32 0.0, %v885
      %v887 = vpop.f32.mrb[0].mxu0
      %v888 = vpop.f32.mrb[0].mxu0
      %v889 = vadd.f32 0.0, %v888
      %v890 = vpop.f32.mrb[0].mxu0
      %891 = vmatprep.mubr.bf16.mxu0 0
      %892 = vmatmul.mubr.bf16.gmra.mrb[0].mxu0 %v843
      %v893 = vpop.f32.mrb[0].mxu0
      %v894 = vadd.f32 0.0, %v893
      %v895 = vpop.f32.mrb[0].mxu0
      %v896 = vpop.f32.mrb[0].mxu0
      %v897 = vadd.f32 0.0, %v896
      %v898 = vpop.f32.mrb[0].mxu0
      %899 = vmatprep.mubr.bf16.mxu0 0
      %900 = vmatmul.mubr.bf16.gmra.mrb[0].mxu0 %v846
      %v901 = vpop.f32.mrb[0].mxu0
      %v902 = vadd.f32 0.0, %v901
      %v903 = vpop.f32.mrb[0].mxu0
      %v904 = vpop.f32.mrb[0].mxu0
      %v905 = vadd.f32 0.0, %v904
      %v906 = vpop.f32.mrb[0].mxu0
      %907 = vmatprep.mubr.bf16.mxu0 0
      %908 = vmatmul.mubr.bf16.gmra.mrb[0].mxu0 %v849
      %v909 = vpop.f32.mrb[0].mxu0
      %v910 = vadd.f32 0.0, %v909
      %v911 = vpop.f32.mrb[0].mxu0
      %v912 = vpop.f32.mrb[0].mxu0
      %v913 = vadd.f32 0.0, %v912
      %v914 = vpop.f32.mrb[0].mxu0
      %915 = vdwg.mxu0
      %v916 = vadd.f32 %v806, %v886
      %v917 = vadd.f32 %v807, %v889
      %v918 = vadd.f32 %v808, %v894
      %v919 = vadd.f32 %v809, %v897
      %v920 = vadd.f32 %v810, %v902
      %v921 = vadd.f32 %v811, %v905
      %v922 = vadd.f32 %v812, %v910
      %v923 = vadd.f32 %v813, %v913
      %v924 = vpack.c.bf16 %v210, %v208
      %s925 = scalar_lea.vmem %s1, 96
      %v926 = vld [vmem:[%s925] sm:$0xf]
      %v927 = vld [vmem:[%s925 + $0x4] sm:$0xf]
      %v928 = vld [vmem:[%s925 + $0x8] sm:$0xf]
      %v929 = vld [vmem:[%s925 + $0xc] sm:$0xf]
      %v934 = vunpack.c.l.b16 %v926
      %v935 = vunpack.c.l.b16 %v927
      %v936 = vunpack.c.l.b16 %v928
      %v937 = vunpack.c.l.b16 %v929
      %v938 = vpack.c.b16 %v935, %v934
      %v939 = vpack.c.b16 %v937, %v936
      %v943 = vsel %vm290, %v924, 0
      %945 = vmatprep.subr.bf16.mxu0 0
      %946 = vmatpush1.bf16.msra.mxu0 %v938
      %947 = vmatprep.subr.bf16.mxu0 0
      %948 = vmatpush1.bf16.msra.mxu0 %v939
      %949 = vmatprep.subr.bf16.mxu0 0
      %950 = vmatpush1.bf16.msra.mxu0 0
      %951 = vmatprep.subr.bf16.mxu0 0
      %952 = vmatpush1.bf16.msra.mxu0 0
      %953 = vmatprep.subr.bf16.mxu0 0
      %954 = vmatpush1.bf16.msra.mxu0 0
      %955 = vmatprep.subr.bf16.mxu0 0
      %956 = vmatpush1.bf16.msra.mxu0 0
      %957 = vmatprep.subr.bf16.mxu0 0
      %958 = vmatpush1.bf16.msra.mxu0 0
      %959 = vmatprep.subr.bf16.mxu0 0
      %960 = vmatpush1.bf16.msra.mxu0 0
      %961 = vmatprep.subr.bf16.mxu0 0
      %962 = vmatpush1.bf16.msra.mxu0 0
      %963 = vmatprep.subr.bf16.mxu0 0
      %964 = vmatpush1.bf16.msra.mxu0 0
      %965 = vmatprep.subr.bf16.mxu0 0
      %966 = vmatpush1.bf16.msra.mxu0 0
      %967 = vmatprep.subr.bf16.mxu0 0
      %968 = vmatpush1.bf16.msra.mxu0 0
      %969 = vmatprep.subr.bf16.mxu0 0
      %970 = vmatpush1.bf16.msra.mxu0 0
      %971 = vmatprep.subr.bf16.mxu0 0
      %972 = vmatpush1.bf16.msra.mxu0 0
      %973 = vmatprep.subr.bf16.mxu0 0
      %974 = vmatpush1.bf16.msra.mxu0 0
      %975 = vmatprep.subr.bf16.mxu0 0
      %976 = vmatpush1.bf16.msra.mxu0 0
      %977 = vmatprep.mubr.bf16.mxu0 0
      %978 = vmatmul.mubr.bf16.gmra.mrb[0].mxu0 %v384
      %v979 = vpop.f32.mrb[0].mxu0
      %v980 = vadd.f32 0.0, %v979
      %v981 = vpop.f32.mrb[0].mxu0
      %v982 = vpop.f32.mrb[0].mxu0
      %v983 = vadd.f32 0.0, %v982
      %v984 = vpop.f32.mrb[0].mxu0
      %985 = vmatprep.mubr.bf16.mxu0 0
      %986 = vmatmul.mubr.bf16.gmra.mrb[0].mxu0 %v387
      %v987 = vpop.f32.mrb[0].mxu0
      %v988 = vadd.f32 0.0, %v987
      %v989 = vpop.f32.mrb[0].mxu0
      %v990 = vpop.f32.mrb[0].mxu0
      %v991 = vadd.f32 0.0, %v990
      %v992 = vpop.f32.mrb[0].mxu0
      %993 = vmatprep.mubr.bf16.mxu0 0
      %994 = vmatmul.mubr.bf16.gmra.mrb[0].mxu0 %v390
      %v995 = vpop.f32.mrb[0].mxu0
      %v996 = vadd.f32 0.0, %v995
      %v997 = vpop.f32.mrb[0].mxu0
      %v998 = vpop.f32.mrb[0].mxu0
      %v999 = vadd.f32 0.0, %v998
      %v1000 = vpop.f32.mrb[0].mxu0
      %1001 = vmatprep.mubr.bf16.mxu0 0
      %1002 = vmatmul.mubr.bf16.gmra.mrb[0].mxu0 %v943
      %v1003 = vpop.f32.mrb[0].mxu0
      %v1004 = vadd.f32 0.0, %v1003
      %v1005 = vpop.f32.mrb[0].mxu0
      %v1006 = vpop.f32.mrb[0].mxu0
      %v1007 = vadd.f32 0.0, %v1006
      %v1008 = vpop.f32.mrb[0].mxu0
      %1009 = vdwg.mxu0
      %v1010 = vadd.f32 %v916, %v980
      %v1011 = vadd.f32 %v917, %v983
      %v1012 = vadd.f32 %v918, %v988
      %v1013 = vadd.f32 %v919, %v991
      %v1014 = vadd.f32 %v920, %v996
      %v1015 = vadd.f32 %v921, %v999
      %v1016 = vadd.f32 %v922, %v1004
      %v1017 = vadd.f32 %v923, %v1007
      %v1020 = vrot.slane %v210, 1
      %v1021 = vrot.slane %v211, 1
      %v1022 = vsel %vm236, %v1020, %v1021
      %v1024 = vpack.c.bf16 %v1022, %v706
      %s1025 = scalar_lea.vmem %s1, 112
      %v1026 = vld [vmem:[%s1025] sm:$0xf]
      %v1027 = vld [vmem:[%s1025 + $0x4] sm:$0xf]
      %v1028 = vld [vmem:[%s1025 + $0x8] sm:$0xf]
      %v1029 = vld [vmem:[%s1025 + $0xc] sm:$0xf]
      %v1034 = vunpack.c.l.b16 %v1026
      %v1035 = vunpack.c.l.b16 %v1027
      %v1036 = vunpack.c.l.b16 %v1028
      %v1037 = vunpack.c.l.b16 %v1029
      %v1038 = vpack.c.b16 %v1035, %v1034
      %v1039 = vpack.c.b16 %v1037, %v1036
      %v1043 = vsel %vm290, %v1024, 0
      %1045 = vmatprep.subr.bf16.mxu0 0
      %1046 = vmatpush1.bf16.msra.mxu0 %v1038
      %1047 = vmatprep.subr.bf16.mxu0 0
      %1048 = vmatpush1.bf16.msra.mxu0 %v1039
      %1049 = vmatprep.subr.bf16.mxu0 0
      %1050 = vmatpush1.bf16.msra.mxu0 0
      %1051 = vmatprep.subr.bf16.mxu0 0
      %1052 = vmatpush1.bf16.msra.mxu0 0
      %1053 = vmatprep.subr.bf16.mxu0 0
      %1054 = vmatpush1.bf16.msra.mxu0 0
      %1055 = vmatprep.subr.bf16.mxu0 0
      %1056 = vmatpush1.bf16.msra.mxu0 0
      %1057 = vmatprep.subr.bf16.mxu0 0
      %1058 = vmatpush1.bf16.msra.mxu0 0
      %1059 = vmatprep.subr.bf16.mxu0 0
      %1060 = vmatpush1.bf16.msra.mxu0 0
      %1061 = vmatprep.subr.bf16.mxu0 0
      %1062 = vmatpush1.bf16.msra.mxu0 0
      %1063 = vmatprep.subr.bf16.mxu0 0
      %1064 = vmatpush1.bf16.msra.mxu0 0
      %1065 = vmatprep.subr.bf16.mxu0 0
      %1066 = vmatpush1.bf16.msra.mxu0 0
      %1067 = vmatprep.subr.bf16.mxu0 0
      %1068 = vmatpush1.bf16.msra.mxu0 0
      %1069 = vmatprep.subr.bf16.mxu0 0
      %1070 = vmatpush1.bf16.msra.mxu0 0
      %1071 = vmatprep.subr.bf16.mxu0 0
      %1072 = vmatpush1.bf16.msra.mxu0 0
      %1073 = vmatprep.subr.bf16.mxu0 0
      %1074 = vmatpush1.bf16.msra.mxu0 0
      %1075 = vmatprep.subr.bf16.mxu0 0
      %1076 = vmatpush1.bf16.msra.mxu0 0
      %1077 = vmatprep.mubr.bf16.mxu0 0
      %1078 = vmatmul.mubr.bf16.gmra.mrb[0].mxu0 %v295
      %v1079 = vpop.f32.mrb[0].mxu0
      %v1080 = vadd.f32 0.0, %v1079
      %v1081 = vpop.f32.mrb[0].mxu0
      %v1082 = vpop.f32.mrb[0].mxu0
      %v1083 = vadd.f32 0.0, %v1082
      %v1084 = vpop.f32.mrb[0].mxu0
      %1085 = vmatprep.mubr.bf16.mxu0 0
      %1086 = vmatmul.mubr.bf16.gmra.mrb[0].mxu0 %v298
      %v1087 = vpop.f32.mrb[0].mxu0
      %v1088 = vadd.f32 0.0, %v1087
      %v1089 = vpop.f32.mrb[0].mxu0
      %v1090 = vpop.f32.mrb[0].mxu0
      %v1091 = vadd.f32 0.0, %v1090
      %v1092 = vpop.f32.mrb[0].mxu0
      %1093 = vmatprep.mubr.bf16.mxu0 0
      %1094 = vmatmul.mubr.bf16.gmra.mrb[0].mxu0 %v301
      %v1095 = vpop.f32.mrb[0].mxu0
      %v1096 = vadd.f32 0.0, %v1095
      %v1097 = vpop.f32.mrb[0].mxu0
      %v1098 = vpop.f32.mrb[0].mxu0
      %v1099 = vadd.f32 0.0, %v1098
      %v1100 = vpop.f32.mrb[0].mxu0
      %1101 = vmatprep.mubr.bf16.mxu0 0
      %1102 = vmatmul.mubr.bf16.gmra.mrb[0].mxu0 %v1043
      %v1103 = vpop.f32.mrb[0].mxu0
      %v1104 = vadd.f32 0.0, %v1103
      %v1105 = vpop.f32.mrb[0].mxu0
      %v1106 = vpop.f32.mrb[0].mxu0
      %v1107 = vadd.f32 0.0, %v1106
      %v1108 = vpop.f32.mrb[0].mxu0
      %1109 = vdwg.mxu0
      %v1110 = vadd.f32 %v1010, %v1080
      %v1111 = vadd.f32 %v1011, %v1083
      %v1112 = vadd.f32 %v1012, %v1088
      %v1113 = vadd.f32 %v1013, %v1091
      %v1114 = vadd.f32 %v1014, %v1096
      %v1115 = vadd.f32 %v1015, %v1099
      %v1116 = vadd.f32 %v1016, %v1104
      %v1117 = vadd.f32 %v1017, %v1107
      %v1118 = vrot.slane %v210, 2
      %v1119 = vrot.slane %v211, 2
      %v1120 = vsel %vm457, %v1118, %v1119
      %v1122 = vpack.c.bf16 %v1120, %v816
      %s1123 = scalar_lea.vmem %s1, 128
      %v1124 = vld [vmem:[%s1123] sm:$0xf]
      %v1125 = vld [vmem:[%s1123 + $0x4] sm:$0xf]
      %v1126 = vld [vmem:[%s1123 + $0x8] sm:$0xf]
      %v1127 = vld [vmem:[%s1123 + $0xc] sm:$0xf]
      %v1132 = vunpack.c.l.b16 %v1124
      %v1133 = vunpack.c.l.b16 %v1125
      %v1134 = vunpack.c.l.b16 %v1126
      %v1135 = vunpack.c.l.b16 %v1127
      %v1136 = vpack.c.b16 %v1133, %v1132
      %v1137 = vpack.c.b16 %v1135, %v1134
      %v1141 = vsel %vm290, %v1122, 0
      %1143 = vmatprep.subr.bf16.mxu0 0
      %1144 = vmatpush1.bf16.msra.mxu0 %v1136
      %1145 = vmatprep.subr.bf16.mxu0 0
      %1146 = vmatpush1.bf16.msra.mxu0 %v1137
      %1147 = vmatprep.subr.bf16.mxu0 0
      %1148 = vmatpush1.bf16.msra.mxu0 0
      %1149 = vmatprep.subr.bf16.mxu0 0
      %1150 = vmatpush1.bf16.msra.mxu0 0
      %1151 = vmatprep.subr.bf16.mxu0 0
      %1152 = vmatpush1.bf16.msra.mxu0 0
      %1153 = vmatprep.subr.bf16.mxu0 0
      %1154 = vmatpush1.bf16.msra.mxu0 0
      %1155 = vmatprep.subr.bf16.mxu0 0
      %1156 = vmatpush1.bf16.msra.mxu0 0
      %1157 = vmatprep.subr.bf16.mxu0 0
      %1158 = vmatpush1.bf16.msra.mxu0 0
      %1159 = vmatprep.subr.bf16.mxu0 0
      %1160 = vmatpush1.bf16.msra.mxu0 0
      %1161 = vmatprep.subr.bf16.mxu0 0
      %1162 = vmatpush1.bf16.msra.mxu0 0
      %1163 = vmatprep.subr.bf16.mxu0 0
      %1164 = vmatpush1.bf16.msra.mxu0 0
      %1165 = vmatprep.subr.bf16.mxu0 0
      %1166 = vmatpush1.bf16.msra.mxu0 0
      %1167 = vmatprep.subr.bf16.mxu0 0
      %1168 = vmatpush1.bf16.msra.mxu0 0
      %1169 = vmatprep.subr.bf16.mxu0 0
      %1170 = vmatpush1.bf16.msra.mxu0 0
      %1171 = vmatprep.subr.bf16.mxu0 0
      %1172 = vmatpush1.bf16.msra.mxu0 0
      %1173 = vmatprep.subr.bf16.mxu0 0
      %1174 = vmatpush1.bf16.msra.mxu0 0
      %1175 = vmatprep.mubr.bf16.mxu0 0
      %1176 = vmatmul.mubr.bf16.gmra.mrb[0].mxu0 %v515
      %v1177 = vpop.f32.mrb[0].mxu0
      %v1178 = vadd.f32 0.0, %v1177
      %v1179 = vpop.f32.mrb[0].mxu0
      %v1180 = vpop.f32.mrb[0].mxu0
      %v1181 = vadd.f32 0.0, %v1180
      %v1182 = vpop.f32.mrb[0].mxu0
      %1183 = vmatprep.mubr.bf16.mxu0 0
      %1184 = vmatmul.mubr.bf16.gmra.mrb[0].mxu0 %v518
      %v1185 = vpop.f32.mrb[0].mxu0
      %v1186 = vadd.f32 0.0, %v1185
      %v1187 = vpop.f32.mrb[0].mxu0
      %v1188 = vpop.f32.mrb[0].mxu0
      %v1189 = vadd.f32 0.0, %v1188
      %v1190 = vpop.f32.mrb[0].mxu0
      %1191 = vmatprep.mubr.bf16.mxu0 0
      %1192 = vmatmul.mubr.bf16.gmra.mrb[0].mxu0 %v521
      %v1193 = vpop.f32.mrb[0].mxu0
      %v1194 = vadd.f32 0.0, %v1193
      %v1195 = vpop.f32.mrb[0].mxu0
      %v1196 = vpop.f32.mrb[0].mxu0
      %v1197 = vadd.f32 0.0, %v1196
      %v1198 = vpop.f32.mrb[0].mxu0
      %1199 = vmatprep.mubr.bf16.mxu0 0
      %1200 = vmatmul.mubr.bf16.gmra.mrb[0].mxu0 %v1141
      %v1201 = vpop.f32.mrb[0].mxu0
      %v1202 = vadd.f32 0.0, %v1201
      %v1203 = vpop.f32.mrb[0].mxu0
      %v1204 = vpop.f32.mrb[0].mxu0
      %v1205 = vadd.f32 0.0, %v1204
      %v1206 = vpop.f32.mrb[0].mxu0
      %1207 = vdwg.mxu0
      %v1208 = vadd.f32 %v1110, %v1178
      %v1209 = vadd.f32 %v1111, %v1181
      %v1210 = vadd.f32 %v1112, %v1186
      %v1211 = vadd.f32 %v1113, %v1189
      %v1212 = vadd.f32 %v1114, %v1194
      %v1213 = vadd.f32 %v1115, %v1197
      %v1214 = vadd.f32 %v1116, %v1202
      %v1215 = vadd.f32 %v1117, %v1205
      %v1216 = vld [vmem:[%s2] sm:$0x1]
      %v1218 = vlaneseq
      %v1219 = vshrl.u32 %v1218, 7
      %v1220 = vsub.s32 0, %v1219
      %v1221 = vrot.slane %v1216, %v1220
      %v1223 = vadd.f32 %v1208, %v1221
      %v1224 = vadd.f32 %v1209, %v1221
      %v1225 = vadd.f32 %v1210, %v1221
      %v1226 = vadd.f32 %v1211, %v1221
      %v1227 = vadd.f32 %v1212, %v1221
      %v1228 = vadd.f32 %v1213, %v1221
      %v1229 = vadd.f32 %v1214, %v1221
      %v1230 = vadd.f32 %v1215, %v1221
      %v1231 = vmax.f32 %v1223, 0.0
      %v1232 = vmax.f32 %v1224, 0.0
      %v1233 = vmax.f32 %v1225, 0.0
      %v1234 = vmax.f32 %v1226, 0.0
      %v1235 = vmax.f32 %v1227, 0.0
      %v1236 = vmax.f32 %v1228, 0.0
      %v1237 = vmax.f32 %v1229, 0.0
      %v1238 = vmax.f32 %v1230, 0.0
      %v1239 = vpack.c.bf16 %v1232, %v1231
      %v1240 = vpack.c.bf16 %v1234, %v1233
      %v1241 = vpack.c.bf16 %v1236, %v1235
      %v1242 = vpack.c.bf16 %v1238, %v1237
      %v1247 = vunpack.c.l.b16 %v1239
      %v1248 = vunpack.c.h.b16 %v1239
      %v1249 = vunpack.c.l.b16 %v1240
      %v1250 = vunpack.c.h.b16 %v1240
      %v1251 = vunpack.c.l.b16 %v1241
      %v1252 = vunpack.c.h.b16 %v1241
      %v1253 = vunpack.c.l.b16 %v1242
      %v1254 = vunpack.c.h.b16 %v1242
      %v1255 = vpack.c.b16 %v1247, %v1247
      %v1256 = vpack.c.b16 %v1248, %v1248
      %v1257 = vpack.c.b16 %v1249, %v1249
      %v1258 = vpack.c.b16 %v1250, %v1250
      %v1259 = vpack.c.b16 %v1251, %v1251
      %v1260 = vpack.c.b16 %v1252, %v1252
      %v1261 = vpack.c.b16 %v1253, %v1253
      %v1262 = vpack.c.b16 %v1254, %v1254
      %1271 = vst [vmem:[%s170] sm:$0xf] %v1255
      %1272 = vst [vmem:[%s170 + $0x4] sm:$0xf] %v1256
      %1273 = vst [vmem:[%s170 + $0x8] sm:$0xf] %v1257
      %1274 = vst [vmem:[%s170 + $0xc] sm:$0xf] %v1258
      %1275 = vst [vmem:[%s170 + $0x10] sm:$0xf] %v1259
      %1276 = vst [vmem:[%s170 + $0x14] sm:$0xf] %v1260
      %1277 = vst [vmem:[%s170 + $0x18] sm:$0xf] %v1261
      %1278 = vst [vmem:[%s170 + $0x1c] sm:$0xf] %v1262
      %p1279 = scmp.lt.s32.totalorder %s14, 1
      %s1280 = scalar_select %p1279, %s14, 1
      %s1281 = smul.addr %s1280, 8
      %s1282 = smul.addr %s1281, 4
      %s1283 = scalar_lea.vmem %s3, %s1282
      // Predicated region
      $region33: #{fwd.7} parent=31 // pred_check
        %p1284 = pneg %p100
      $region34: #{fwd.7} parent=31 // pred_check_branch
        %1286 = sbr.rel (%p1284) target = $region36
      $region35: #{fwd.7} parent=31 // pred_region
        _
      $region36: #{fwd.7} parent=31 // pred_fallthru
        _
    $region32: #{fwd.7} parent=5 // pred_fallthru
      _
    %p1287 = scmp.le.s32.totalorder 2, %s9
    // Predicated region
    $region37: #{fwd.7} parent=5 // pred_check
      %p1288 = pneg %p1287
    $region38: #{fwd.7} parent=5 // pred_check_branch
      %1290 = sbr.rel (%p1288) target = $region40
    $region39: #{fwd.7} parent=5 // pred_region
      %s1291 = ssub.s32 %s9, 2
      // Predicated region
      $region41: #{fwd.7} parent=39 // pred_check
        %p1292 = pneg %p106
      $region42: #{fwd.7} parent=39 // pred_check_branch
        %1294 = sbr.rel (%p1292) target = $region44
      $region43: #{fwd.7} parent=39 // pred_region
        %p1295 = scmp.lt.s32.totalorder %s15, 1
        %s1296 = scalar_select %p1295, %s15, 1
        %s1297 = smul.addr %s1296, 8
        %s1298 = smul.addr %s1297, 4
        %s1299 = scalar_lea.vmem %s3, %s1298
      $region44: #{fwd.7} parent=39 // pred_fallthru
        _
    $region40: #{fwd.7} parent=5 // pred_fallthru
      _
  $region6: #{fwd.7} parent=0 // loop_footer
    %s13 = sadd.s32 1, %s9
  $region7: #{fwd.7} parent=0 // loop_footer_branch
    %8 = sbr.rel target = $region3
  $region8: #{fwd.7} parent=0 // loop_exit
    _

// kernel: fwd.9
$region0: #{fwd.9}
  #allocation0 [shape = 'u32[]', space=smem, size = 0x4, offset = 0x4, fixed_abs, tag = 'smem constant byte address 0x4 - core index']
  #allocation1 [shape = 'u32[144,128]{1,0:T(1,128)}', space=vmem, size = 0x12000, scoped, tag = 'internal scratch']
  %s0 = inlined_call_operand.vmem [shape: f32[2,8,256], index: 0, kind: input, shape index: {}]
  %s1 = inlined_call_operand.vmem [shape: f32[2,256,8], index: 1, kind: input, shape index: {}]
  %s2 = inlined_call_operand.vmem [shape: f32[2,256,256], index: 2, kind: output, shape index: {}]
  %s3 = sld [smem:[#allocation0]]
  $region41: #{fwd.9} parent=0
    _
  %s5 = ssub.s32 1, %s3
  %s6 = scalar_select 0, %s5, %s3
  loop: start=0, step=1, limit=4
  $region2: #{fwd.9} parent=0 // loop_pre_header
    _
  $region3: #{fwd.9} parent=0 // loop_header
    %s8 = sphi 0, %s12
    %p9 = scmp.ge.s32.totalorder %s8, 4
    %s18 = sphi 0, %s20
    %s21 = sphi 0, %s18
    %s22 = sphi 0, %s21
    %s38 = sphi 0, %s22
    %s44 = sphi 0, %s46
    %s47 = sphi 0, %s44
    %s48 = sphi 0, %s47
    %s64 = sphi 0, %s48
    %s70 = sphi 0, %s72
    %s73 = sphi 0, %s70
    %s74 = sphi 0, %s73
    %s90 = sphi 0, %s74
  $region4: #{fwd.9} parent=0 // loop_header_branch
    %11 = sbr.rel (%p9) target = $region8
  $region5: #{fwd.9} parent=0 // loop_body
    %s13 = ssub.s32 %s8, 1
    %s14 = ssub.s32 %s8, 2
    %s15 = sadd.s32 %s8, 1
    %s16 = ssub.s32 %s8, %s15
    %p17 = scmp.eq.s32.totalorder %s16, 0
    %s19 = sadd.s32 %s18, 1
    %s20 = scalar_select %p17, %s18, %s19
    %p23 = pneg %p17
    %p24 = scmp.eq.s32.totalorder %s8, 1
    %p25 = por %p23, %p24
    %p26 = scmp.ne.s32.totalorder %s18, %s21
    %p27 = scmp.eq.s32.totalorder %s8, 0
    %p28 = por %p26, %p27
    %p29 = scmp.ne.s32.totalorder %s18, %s21
    %p30 = scmp.eq.s32.totalorder %s13, 1
    %p31 = por %p29, %p30
    %p32 = scmp.ne.s32.totalorder %s21, %s22
    %p33 = scmp.eq.s32.totalorder %s13, 0
    %p34 = por %p32, %p33
    %p35 = scmp.ne.s32.totalorder %s21, %s22
    %p36 = scmp.eq.s32.totalorder %s14, 1
    %p37 = por %p35, %p36
    %p39 = scmp.ne.s32.totalorder %s22, %s38
    %p40 = scmp.eq.s32.totalorder %s14, 0
    %p41 = por %p39, %p40
    %s42 = ssub.s32 %s8, %s15
    %p43 = scmp.eq.s32.totalorder %s42, 0
    %s45 = sadd.s32 %s44, 1
    %s46 = scalar_select %p43, %s44, %s45
    %p49 = pneg %p43
    %p50 = scmp.eq.s32.totalorder %s8, 1
    %p51 = por %p49, %p50
    %p52 = scmp.ne.s32.totalorder %s44, %s47
    %p53 = scmp.eq.s32.totalorder %s8, 0
    %p54 = por %p52, %p53
    %p55 = scmp.ne.s32.totalorder %s44, %s47
    %p56 = scmp.eq.s32.totalorder %s13, 1
    %p57 = por %p55, %p56
    %p58 = scmp.ne.s32.totalorder %s47, %s48
    %p59 = scmp.eq.s32.totalorder %s13, 0
    %p60 = por %p58, %p59
    %p61 = scmp.ne.s32.totalorder %s47, %s48
    %p62 = scmp.eq.s32.totalorder %s14, 1
    %p63 = por %p61, %p62
    %p65 = scmp.ne.s32.totalorder %s48, %s64
    %p66 = scmp.eq.s32.totalorder %s14, 0
    %p67 = por %p65, %p66
    %s68 = ssub.s32 %s8, %s15
    %p69 = scmp.eq.s32.totalorder %s68, 0
    %s71 = sadd.s32 %s70, 1
    %s72 = scalar_select %p69, %s70, %s71
    %p75 = pneg %p69
    %p76 = scmp.eq.s32.totalorder %s8, 1
    %p77 = por %p75, %p76
    %p78 = scmp.ne.s32.totalorder %s70, %s73
    %p79 = scmp.eq.s32.totalorder %s8, 0
    %p80 = por %p78, %p79
    %p81 = scmp.ne.s32.totalorder %s70, %s73
    %p82 = scmp.eq.s32.totalorder %s13, 1
    %p83 = por %p81, %p82
    %p84 = scmp.ne.s32.totalorder %s73, %s74
    %p85 = scmp.eq.s32.totalorder %s13, 0
    %p86 = por %p84, %p85
    %p87 = scmp.ne.s32.totalorder %s73, %s74
    %p88 = scmp.eq.s32.totalorder %s14, 1
    %p89 = por %p87, %p88
    %p91 = scmp.ne.s32.totalorder %s74, %s90
    %p92 = scmp.eq.s32.totalorder %s14, 0
    %p93 = por %p91, %p92
    %p94 = scmp.le.s32.totalorder 1, %s8
    %p95 = scmp.lt.s32.totalorder %s8, 3
    %p96 = pnand %p94, %p95
    %p97 = pneg %p96
    // Predicated region
    $region9: #{fwd.9} parent=5 // pred_check
      _
    $region10: #{fwd.9} parent=5 // pred_check_branch
      %99 = sbr.rel (%p96) target = $region12
    $region11: #{fwd.9} parent=5 // pred_region
      %s100 = ssub.s32 %s8, 1
    $region12: #{fwd.9} parent=5 // pred_fallthru
      _
    %p101 = scmp.lt.s32.totalorder %s8, 2
    // Predicated region
    $region13: #{fwd.9} parent=5 // pred_check
      %p102 = pneg %p101
    $region14: #{fwd.9} parent=5 // pred_check_branch
      %104 = sbr.rel (%p102) target = $region16
    $region15: #{fwd.9} parent=5 // pred_region
      // Predicated region
      $region17: #{fwd.9} parent=15 // pred_check
        %p105 = pneg %p28
      $region18: #{fwd.9} parent=15 // pred_check_branch
        %107 = sbr.rel (%p105) target = $region20
      $region19: #{fwd.9} parent=15 // pred_region
        %p108 = scmp.lt.s32.totalorder %s8, 1
        %s109 = scalar_select %p108, %s8, 1
        %s110 = smul.addr %s109, 2
        %s111 = smul.addr %s110, 8
        %s112 = scalar_lea.vmem %s0, %s111
      $region20: #{fwd.9} parent=15 // pred_fallthru
        _
      // Predicated region
      $region21: #{fwd.9} parent=15 // pred_check
        %p113 = pneg %p54
      $region22: #{fwd.9} parent=15 // pred_check_branch
        %115 = sbr.rel (%p113) target = $region24
      $region23: #{fwd.9} parent=15 // pred_region
        %p116 = scmp.lt.s32.totalorder %s8, 1
        %s117 = scalar_select %p116, %s8, 1
        %s118 = smul.addr %s117, 32
        %s119 = smul.addr %s118, 8
        %s120 = scalar_lea.vmem %s1, %s119
      $region24: #{fwd.9} parent=15 // pred_fallthru
        _
    $region16: #{fwd.9} parent=5 // pred_fallthru
      _
    %p121 = scmp.le.s32.totalorder 1, %s8
    %p122 = scmp.lt.s32.totalorder %s8, 3
    %p123 = pnand %p121, %p122
    %p124 = pneg %p123
    // Predicated region
    $region25: #{fwd.9} parent=5 // pred_check
      _
    $region26: #{fwd.9} parent=5 // pred_check_branch
      %126 = sbr.rel (%p123) target = $region28
    $region27: #{fwd.9} parent=5 // pred_region
      %s127 = ssub.s32 %s8, 1
      %p128 = scmp.lt.s32.totalorder %s13, 1
      %s129 = scalar_select %p128, %s13, 1
      %s130 = smul.addr %s129, 2
      %s131 = smul.addr %s130, 8
      %s132 = scalar_lea.vmem %s0, %s131
      %p133 = pneg %p34
      %p134 = pneg %p31
      %p135 = scmp.lt.s32.totalorder %s13, 1
      %s136 = scalar_select %p135, %s13, 1
      %s137 = smul.addr %s136, 32
      %s138 = smul.addr %s137, 8
      %s139 = scalar_lea.vmem %s1, %s138
      %p140 = pneg %p60
      %p141 = pneg %p57
      %p142 = pneg %p86
      %p143 = pneg %p83
      %p144 = scmp.lt.s32.totalorder %s13, 1
      %s145 = scalar_select %p144, %s13, 1
      %s146 = smul.addr %s145, 64
      %s147 = smul.addr %s146, 8
      %s148 = scalar_lea.vmem %s2, %s147
      %p149 = scmp.lt.s32.totalorder %s13, 1
      %s150 = scalar_select %p149, %s13, 1
      %s151 = smul.addr %s150, 2
      %s152 = smul.addr %s151, 8
      %s153 = scalar_lea.vmem %s0, %s152
      %p154 = scmp.lt.s32.totalorder %s13, 1
      %s155 = scalar_select %p154, %s13, 1
      %s156 = smul.addr %s155, 32
      %s157 = smul.addr %s156, 8
      %s158 = scalar_lea.vmem %s1, %s157
      %p159 = scmp.lt.s32.totalorder %s13, 1
      %s160 = scalar_select %p159, %s13, 1
      %s161 = smul.addr %s160, 64
      %s162 = smul.addr %s161, 8
      %s163 = scalar_lea.vmem %s2, %s162
      %v164 = vld [vmem:[%s153] sm:$0xff]
      %v165 = vld [vmem:[%s153 + $0x8] sm:$0xff]
      %v166 = vld [vmem:[%s158] sm:$0xff]
      %v167 = vld [vmem:[%s158 + $0x8] sm:$0xff]
      %v168 = vld [vmem:[%s158 + $0x10] sm:$0xff]
      %v169 = vld [vmem:[%s158 + $0x18] sm:$0xff]
      %v170 = vld [vmem:[%s158 + $0x20] sm:$0xff]
      %v171 = vld [vmem:[%s158 + $0x28] sm:$0xff]
      %v172 = vld [vmem:[%s158 + $0x30] sm:$0xff]
      %v173 = vld [vmem:[%s158 + $0x38] sm:$0xff]
      %v174 = vld [vmem:[%s158 + $0x40] sm:$0xff]
      %v175 = vld [vmem:[%s158 + $0x48] sm:$0xff]
      %v176 = vld [vmem:[%s158 + $0x50] sm:$0xff]
      %v177 = vld [vmem:[%s158 + $0x58] sm:$0xff]
      %v178 = vld [vmem:[%s158 + $0x60] sm:$0xff]
      %v179 = vld [vmem:[%s158 + $0x68] sm:$0xff]
      %v180 = vld [vmem:[%s158 + $0x70] sm:$0xff]
      %v181 = vld [vmem:[%s158 + $0x78] sm:$0xff]
      %v182 = vld [vmem:[%s158 + $0x80] sm:$0xff]
      %v183 = vld [vmem:[%s158 + $0x88] sm:$0xff]
      %v184 = vld [vmem:[%s158 + $0x90] sm:$0xff]
      %v185 = vld [vmem:[%s158 + $0x98] sm:$0xff]
      %v186 = vld [vmem:[%s158 + $0xa0] sm:$0xff]
      %v187 = vld [vmem:[%s158 + $0xa8] sm:$0xff]
      %v188 = vld [vmem:[%s158 + $0xb0] sm:$0xff]
      %v189 = vld [vmem:[%s158 + $0xb8] sm:$0xff]
      %v190 = vld [vmem:[%s158 + $0xc0] sm:$0xff]
      %v191 = vld [vmem:[%s158 + $0xc8] sm:$0xff]
      %v192 = vld [vmem:[%s158 + $0xd0] sm:$0xff]
      %v193 = vld [vmem:[%s158 + $0xd8] sm:$0xff]
      %v194 = vld [vmem:[%s158 + $0xe0] sm:$0xff]
      %v195 = vld [vmem:[%s158 + $0xe8] sm:$0xff]
      %v196 = vld [vmem:[%s158 + $0xf0] sm:$0xff]
      %v197 = vld [vmem:[%s158 + $0xf8] sm:$0xff]
      %v200 = vrot.slane %v164, 6
      %v201 = vrot.slane %v165, 6
      %v204 = vsub.f32 %v164, %v200
      %v205 = vsub.f32 %v165, %v201
      %v206 = vadd.f32 %v204, 0.01
      %v207 = vadd.f32 %v205, 0.01
      %v210 = vrot.slane %v206, 1
      %v211 = vrot.slane %v207, 1
      %v214 = vmul.f32 %v206, %v210
      %v215 = vmul.f32 %v207, %v211
      %248 = vrot.lane.b32.xlu0 %v166, 2
      %v249 = vpop.permute.xlu0 %248
      %250 = vrot.lane.b32.xlu0 %v167, 2
      %v251 = vpop.permute.xlu0 %250
      %252 = vrot.lane.b32.xlu0 %v168, 2
      %v253 = vpop.permute.xlu0 %252
      %254 = vrot.lane.b32.xlu0 %v169, 2
      %v255 = vpop.permute.xlu0 %254
      %256 = vrot.lane.b32.xlu0 %v170, 2
      %v257 = vpop.permute.xlu0 %256
      %258 = vrot.lane.b32.xlu0 %v171, 2
      %v259 = vpop.permute.xlu0 %258
      %260 = vrot.lane.b32.xlu0 %v172, 2
      %v261 = vpop.permute.xlu0 %260
      %262 = vrot.lane.b32.xlu0 %v173, 2
      %v263 = vpop.permute.xlu0 %262
      %264 = vrot.lane.b32.xlu0 %v174, 2
      %v265 = vpop.permute.xlu0 %264
      %266 = vrot.lane.b32.xlu0 %v175, 2
      %v267 = vpop.permute.xlu0 %266
      %268 = vrot.lane.b32.xlu0 %v176, 2
      %v269 = vpop.permute.xlu0 %268
      %270 = vrot.lane.b32.xlu0 %v177, 2
      %v271 = vpop.permute.xlu0 %270
      %272 = vrot.lane.b32.xlu0 %v178, 2
      %v273 = vpop.permute.xlu0 %272
      %274 = vrot.lane.b32.xlu0 %v179, 2
      %v275 = vpop.permute.xlu0 %274
      %276 = vrot.lane.b32.xlu0 %v180, 2
      %v277 = vpop.permute.xlu0 %276
      %278 = vrot.lane.b32.xlu0 %v181, 2
      %v279 = vpop.permute.xlu0 %278
      %280 = vrot.lane.b32.xlu0 %v182, 2
      %v281 = vpop.permute.xlu0 %280
      %282 = vrot.lane.b32.xlu0 %v183, 2
      %v283 = vpop.permute.xlu0 %282
      %284 = vrot.lane.b32.xlu0 %v184, 2
      %v285 = vpop.permute.xlu0 %284
      %286 = vrot.lane.b32.xlu0 %v185, 2
      %v287 = vpop.permute.xlu0 %286
      %288 = vrot.lane.b32.xlu0 %v186, 2
      %v289 = vpop.permute.xlu0 %288
      %290 = vrot.lane.b32.xlu0 %v187, 2
      %v291 = vpop.permute.xlu0 %290
      %292 = vrot.lane.b32.xlu0 %v188, 2
      %v293 = vpop.permute.xlu0 %292
      %294 = vrot.lane.b32.xlu0 %v189, 2
      %v295 = vpop.permute.xlu0 %294
      %296 = vrot.lane.b32.xlu0 %v190, 2
      %v297 = vpop.permute.xlu0 %296
      %298 = vrot.lane.b32.xlu0 %v191, 2
      %v299 = vpop.permute.xlu0 %298
      %300 = vrot.lane.b32.xlu0 %v192, 2
      %v301 = vpop.permute.xlu0 %300
      %302 = vrot.lane.b32.xlu0 %v193, 2
      %v303 = vpop.permute.xlu0 %302
      %304 = vrot.lane.b32.xlu0 %v194, 2
      %v305 = vpop.permute.xlu0 %304
      %306 = vrot.lane.b32.xlu0 %v195, 2
      %v307 = vpop.permute.xlu0 %306
      %308 = vrot.lane.b32.xlu0 %v196, 2
      %v309 = vpop.permute.xlu0 %308
      %310 = vrot.lane.b32.xlu0 %v197, 2
      %v311 = vpop.permute.xlu0 %310
      %v344 = vsub.f32 %v166, %v249
      %v345 = vsub.f32 %v167, %v251
      %v346 = vsub.f32 %v168, %v253
      %v347 = vsub.f32 %v169, %v255
      %v348 = vsub.f32 %v170, %v257
      %v349 = vsub.f32 %v171, %v259
      %v350 = vsub.f32 %v172, %v261
      %v351 = vsub.f32 %v173, %v263
      %v352 = vsub.f32 %v174, %v265
      %v353 = vsub.f32 %v175, %v267
      %v354 = vsub.f32 %v176, %v269
      %v355 = vsub.f32 %v177, %v271
      %v356 = vsub.f32 %v178, %v273
      %v357 = vsub.f32 %v179, %v275
      %v358 = vsub.f32 %v180, %v277
      %v359 = vsub.f32 %v181, %v279
      %v360 = vsub.f32 %v182, %v281
      %v361 = vsub.f32 %v183, %v283
      %v362 = vsub.f32 %v184, %v285
      %v363 = vsub.f32 %v185, %v287
      %v364 = vsub.f32 %v186, %v289
      %v365 = vsub.f32 %v187, %v291
      %v366 = vsub.f32 %v188, %v293
      %v367 = vsub.f32 %v189, %v295
      %v368 = vsub.f32 %v190, %v297
      %v369 = vsub.f32 %v191, %v299
      %v370 = vsub.f32 %v192, %v301
      %v371 = vsub.f32 %v193, %v303
      %v372 = vsub.f32 %v194, %v305
      %v373 = vsub.f32 %v195, %v307
      %v374 = vsub.f32 %v196, %v309
      %v375 = vsub.f32 %v197, %v311
      %v376 = vadd.f32 %v344, 0.01
      %v377 = vadd.f32 %v345, 0.01
      %v378 = vadd.f32 %v346, 0.01
      %v379 = vadd.f32 %v347, 0.01
      %v380 = vadd.f32 %v348, 0.01
      %v381 = vadd.f32 %v349, 0.01
      %v382 = vadd.f32 %v350, 0.01
      %v383 = vadd.f32 %v351, 0.01
      %v384 = vadd.f32 %v352, 0.01
      %v385 = vadd.f32 %v353, 0.01
      %v386 = vadd.f32 %v354, 0.01
      %v387 = vadd.f32 %v355, 0.01
      %v388 = vadd.f32 %v356, 0.01
      %v389 = vadd.f32 %v357, 0.01
      %v390 = vadd.f32 %v358, 0.01
      %v391 = vadd.f32 %v359, 0.01
      %v392 = vadd.f32 %v360, 0.01
      %v393 = vadd.f32 %v361, 0.01
      %v394 = vadd.f32 %v362, 0.01
      %v395 = vadd.f32 %v363, 0.01
      %v396 = vadd.f32 %v364, 0.01
      %v397 = vadd.f32 %v365, 0.01
      %v398 = vadd.f32 %v366, 0.01
      %v399 = vadd.f32 %v367, 0.01
      %v400 = vadd.f32 %v368, 0.01
      %v401 = vadd.f32 %v369, 0.01
      %v402 = vadd.f32 %v370, 0.01
      %v403 = vadd.f32 %v371, 0.01
      %v404 = vadd.f32 %v372, 0.01
      %v405 = vadd.f32 %v373, 0.01
      %v406 = vadd.f32 %v374, 0.01
      %v407 = vadd.f32 %v375, 0.01
      %440 = vrot.lane.b32.xlu0 %v376, 127
      %v441 = vpop.permute.xlu0 %440
      %442 = vrot.lane.b32.xlu0 %v377, 127
      %v443 = vpop.permute.xlu0 %442
      %444 = vrot.lane.b32.xlu0 %v378, 127
      %v445 = vpop.permute.xlu0 %444
      %446 = vrot.lane.b32.xlu0 %v379, 127
      %v447 = vpop.permute.xlu0 %446
      %448 = vrot.lane.b32.xlu0 %v380, 127
      %v449 = vpop.permute.xlu0 %448
      %450 = vrot.lane.b32.xlu0 %v381, 127
      %v451 = vpop.permute.xlu0 %450
      %452 = vrot.lane.b32.xlu0 %v382, 127
      %v453 = vpop.permute.xlu0 %452
      %454 = vrot.lane.b32.xlu0 %v383, 127
      %v455 = vpop.permute.xlu0 %454
      %456 = vrot.lane.b32.xlu0 %v384, 127
      %v457 = vpop.permute.xlu0 %456
      %458 = vrot.lane.b32.xlu0 %v385, 127
      %v459 = vpop.permute.xlu0 %458
      %460 = vrot.lane.b32.xlu0 %v386, 127
      %v461 = vpop.permute.xlu0 %460
      %462 = vrot.lane.b32.xlu0 %v387, 127
      %v463 = vpop.permute.xlu0 %462
      %464 = vrot.lane.b32.xlu0 %v388, 127
      %v465 = vpop.permute.xlu0 %464
      %466 = vrot.lane.b32.xlu0 %v389, 127
      %v467 = vpop.permute.xlu0 %466
      %468 = vrot.lane.b32.xlu0 %v390, 127
      %v469 = vpop.permute.xlu0 %468
      %470 = vrot.lane.b32.xlu0 %v391, 127
      %v471 = vpop.permute.xlu0 %470
      %472 = vrot.lane.b32.xlu0 %v392, 127
      %v473 = vpop.permute.xlu0 %472
      %474 = vrot.lane.b32.xlu0 %v393, 127
      %v475 = vpop.permute.xlu0 %474
      %476 = vrot.lane.b32.xlu0 %v394, 127
      %v477 = vpop.permute.xlu0 %476
      %478 = vrot.lane.b32.xlu0 %v395, 127
      %v479 = vpop.permute.xlu0 %478
      %480 = vrot.lane.b32.xlu0 %v396, 127
      %v481 = vpop.permute.xlu0 %480
      %482 = vrot.lane.b32.xlu0 %v397, 127
      %v483 = vpop.permute.xlu0 %482
      %484 = vrot.lane.b32.xlu0 %v398, 127
      %v485 = vpop.permute.xlu0 %484
      %486 = vrot.lane.b32.xlu0 %v399, 127
      %v487 = vpop.permute.xlu0 %486
      %488 = vrot.lane.b32.xlu0 %v400, 127
      %v489 = vpop.permute.xlu0 %488
      %490 = vrot.lane.b32.xlu0 %v401, 127
      %v491 = vpop.permute.xlu0 %490
      %492 = vrot.lane.b32.xlu0 %v402, 127
      %v493 = vpop.permute.xlu0 %492
      %494 = vrot.lane.b32.xlu0 %v403, 127
      %v495 = vpop.permute.xlu0 %494
      %496 = vrot.lane.b32.xlu0 %v404, 127
      %v497 = vpop.permute.xlu0 %496
      %498 = vrot.lane.b32.xlu0 %v405, 127
      %v499 = vpop.permute.xlu0 %498
      %500 = vrot.lane.b32.xlu0 %v406, 127
      %v501 = vpop.permute.xlu0 %500
      %502 = vrot.lane.b32.xlu0 %v407, 127
      %v503 = vpop.permute.xlu0 %502
      %v536 = vmul.f32 %v376, %v441
      %v537 = vmul.f32 %v377, %v443
      %v538 = vmul.f32 %v378, %v445
      %v539 = vmul.f32 %v379, %v447
      %v540 = vmul.f32 %v380, %v449
      %v541 = vmul.f32 %v381, %v451
      %v542 = vmul.f32 %v382, %v453
      %v543 = vmul.f32 %v383, %v455
      %v544 = vmul.f32 %v384, %v457
      %v545 = vmul.f32 %v385, %v459
      %v546 = vmul.f32 %v386, %v461
      %v547 = vmul.f32 %v387, %v463
      %v548 = vmul.f32 %v388, %v465
      %v549 = vmul.f32 %v389, %v467
      %v550 = vmul.f32 %v390, %v469
      %v551 = vmul.f32 %v391, %v471
      %v552 = vmul.f32 %v392, %v473
      %v553 = vmul.f32 %v393, %v475
      %v554 = vmul.f32 %v394, %v477
      %v555 = vmul.f32 %v395, %v479
      %v556 = vmul.f32 %v396, %v481
      %v557 = vmul.f32 %v397, %v483
      %v558 = vmul.f32 %v398, %v485
      %v559 = vmul.f32 %v399, %v487
      %v560 = vmul.f32 %v400, %v489
      %v561 = vmul.f32 %v401, %v491
      %v562 = vmul.f32 %v402, %v493
      %v563 = vmul.f32 %v403, %v495
      %v564 = vmul.f32 %v404, %v497
      %v565 = vmul.f32 %v405, %v499
      %v566 = vmul.f32 %v406, %v501
      %v567 = vmul.f32 %v407, %v503
      %568 = vset.pattern.permute.xlu0 0
      %569 = vperm.xlu0 %568, %v166
      %v570 = vpop.permute.xlu0 %569
      %572 = vset.pattern.permute.xlu0 0
      %573 = vperm.xlu0 %572, %v167
      %v574 = vpop.permute.xlu0 %573
      %576 = vset.pattern.permute.xlu0 0
      %577 = vperm.xlu0 %576, %v168
      %v578 = vpop.permute.xlu0 %577
      %580 = vset.pattern.permute.xlu0 0
      %581 = vperm.xlu0 %580, %v169
      %v582 = vpop.permute.xlu0 %581
      %584 = vset.pattern.permute.xlu0 0
      %585 = vperm.xlu0 %584, %v170
      %v586 = vpop.permute.xlu0 %585
      %588 = vset.pattern.permute.xlu0 0
      %589 = vperm.xlu0 %588, %v171
      %v590 = vpop.permute.xlu0 %589
      %592 = vset.pattern.permute.xlu0 0
      %593 = vperm.xlu0 %592, %v172
      %v594 = vpop.permute.xlu0 %593
      %596 = vset.pattern.permute.xlu0 0
      %597 = vperm.xlu0 %596, %v173
      %v598 = vpop.permute.xlu0 %597
      %600 = vset.pattern.permute.xlu0 0
      %601 = vperm.xlu0 %600, %v174
      %v602 = vpop.permute.xlu0 %601
      %604 = vset.pattern.permute.xlu0 0
      %605 = vperm.xlu0 %604, %v175
      %v606 = vpop.permute.xlu0 %605
      %608 = vset.pattern.permute.xlu0 0
      %609 = vperm.xlu0 %608, %v176
      %v610 = vpop.permute.xlu0 %609
      %612 = vset.pattern.permute.xlu0 0
      %613 = vperm.xlu0 %612, %v177
      %v614 = vpop.permute.xlu0 %613
      %616 = vset.pattern.permute.xlu0 0
      %617 = vperm.xlu0 %616, %v178
      %v618 = vpop.permute.xlu0 %617
      %620 = vset.pattern.permute.xlu0 0
      %621 = vperm.xlu0 %620, %v179
      %v622 = vpop.permute.xlu0 %621
      %624 = vset.pattern.permute.xlu0 0
      %625 = vperm.xlu0 %624, %v180
      %v626 = vpop.permute.xlu0 %625
      %628 = vset.pattern.permute.xlu0 0
      %629 = vperm.xlu0 %628, %v181
      %v630 = vpop.permute.xlu0 %629
      %632 = vset.pattern.permute.xlu0 0
      %633 = vperm.xlu0 %632, %v182
      %v634 = vpop.permute.xlu0 %633
      %636 = vset.pattern.permute.xlu0 0
      %637 = vperm.xlu0 %636, %v183
      %v638 = vpop.permute.xlu0 %637
      %640 = vset.pattern.permute.xlu0 0
      %641 = vperm.xlu0 %640, %v184
      %v642 = vpop.permute.xlu0 %641
      %644 = vset.pattern.permute.xlu0 0
      %645 = vperm.xlu0 %644, %v185
      %v646 = vpop.permute.xlu0 %645
      %648 = vset.pattern.permute.xlu0 0
      %649 = vperm.xlu0 %648, %v186
      %v650 = vpop.permute.xlu0 %649
      %652 = vset.pattern.permute.xlu0 0
      %653 = vperm.xlu0 %652, %v187
      %v654 = vpop.permute.xlu0 %653
      %656 = vset.pattern.permute.xlu0 0
      %657 = vperm.xlu0 %656, %v188
      %v658 = vpop.permute.xlu0 %657
      %660 = vset.pattern.permute.xlu0 0
      %661 = vperm.xlu0 %660, %v189
      %v662 = vpop.permute.xlu0 %661
      %664 = vset.pattern.permute.xlu0 0
      %665 = vperm.xlu0 %664, %v190
      %v666 = vpop.permute.xlu0 %665
      %668 = vset.pattern.permute.xlu0 0
      %669 = vperm.xlu0 %668, %v191
      %v670 = vpop.permute.xlu0 %669
      %672 = vset.pattern.permute.xlu0 0
      %673 = vperm.xlu0 %672, %v192
      %v674 = vpop.permute.xlu0 %673
      %676 = vset.pattern.permute.xlu0 0
      %677 = vperm.xlu0 %676, %v193
      %v678 = vpop.permute.xlu0 %677
      %680 = vset.pattern.permute.xlu0 0
      %681 = vperm.xlu0 %680, %v194
      %v682 = vpop.permute.xlu0 %681
      %684 = vset.pattern.permute.xlu0 0
      %685 = vperm.xlu0 %684, %v195
      %v686 = vpop.permute.xlu0 %685
      %688 = vset.pattern.permute.xlu0 0
      %689 = vperm.xlu0 %688, %v196
      %v690 = vpop.permute.xlu0 %689
      %692 = vset.pattern.permute.xlu0 0
      %693 = vperm.xlu0 %692, %v197
      %v694 = vpop.permute.xlu0 %693
      %v696 = vlaneseq
      %v697 = vshrl.u32 %v696, 7
      %v698 = vsub.s32 0, %v697
      %v699 = vrot.slane %v164, %v698
      %v700 = vlaneseq
      %v701 = vshrl.u32 %v700, 7
      %v702 = vsub.s32 0, %v701
      %v703 = vrot.slane %v165, %v702
      %v704 = vmax.f32 %v570, %v699
      %v705 = vmax.f32 %v570, %v703
      %v706 = vmax.f32 %v574, %v699
      %v707 = vmax.f32 %v574, %v703
      %v708 = vmax.f32 %v578, %v699
      %v709 = vmax.f32 %v578, %v703
      %v710 = vmax.f32 %v582, %v699
      %v711 = vmax.f32 %v582, %v703
      %v712 = vmax.f32 %v586, %v699
      %v713 = vmax.f32 %v586, %v703
      %v714 = vmax.f32 %v590, %v699
      %v715 = vmax.f32 %v590, %v703
      %v716 = vmax.f32 %v594, %v699
      %v717 = vmax.f32 %v594, %v703
      %v718 = vmax.f32 %v598, %v699
      %v719 = vmax.f32 %v598, %v703
      %v720 = vmax.f32 %v602, %v699
      %v721 = vmax.f32 %v602, %v703
      %v722 = vmax.f32 %v606, %v699
      %v723 = vmax.f32 %v606, %v703
      %v724 = vmax.f32 %v610, %v699
      %v725 = vmax.f32 %v610, %v703
      %v726 = vmax.f32 %v614, %v699
      %v727 = vmax.f32 %v614, %v703
      %v728 = vmax.f32 %v618, %v699
      %v729 = vmax.f32 %v618, %v703
      %v730 = vmax.f32 %v622, %v699
      %v731 = vmax.f32 %v622, %v703
      %v732 = vmax.f32 %v626, %v699
      %v733 = vmax.f32 %v626, %v703
      %v734 = vmax.f32 %v630, %v699
      %v735 = vmax.f32 %v630, %v703
      %v736 = vmax.f32 %v634, %v699
      %v737 = vmax.f32 %v634, %v703
      %v738 = vmax.f32 %v638, %v699
      %v739 = vmax.f32 %v638, %v703
      %v740 = vmax.f32 %v642, %v699
      %v741 = vmax.f32 %v642, %v703
      %v742 = vmax.f32 %v646, %v699
      %v743 = vmax.f32 %v646, %v703
      %v744 = vmax.f32 %v650, %v699
      %v745 = vmax.f32 %v650, %v703
      %v746 = vmax.f32 %v654, %v699
      %v747 = vmax.f32 %v654, %v703
      %v748 = vmax.f32 %v658, %v699
      %v749 = vmax.f32 %v658, %v703
      %v750 = vmax.f32 %v662, %v699
      %v751 = vmax.f32 %v662, %v703
      %v752 = vmax.f32 %v666, %v699
      %v753 = vmax.f32 %v666, %v703
      %v754 = vmax.f32 %v670, %v699
      %v755 = vmax.f32 %v670, %v703
      %v756 = vmax.f32 %v674, %v699
      %v757 = vmax.f32 %v674, %v703
      %v758 = vmax.f32 %v678, %v699
      %v759 = vmax.f32 %v678, %v703
      %v760 = vmax.f32 %v682, %v699
      %v761 = vmax.f32 %v682, %v703
      %v762 = vmax.f32 %v686, %v699
      %v763 = vmax.f32 %v686, %v703
      %v764 = vmax.f32 %v690, %v699
      %v765 = vmax.f32 %v690, %v703
      %v766 = vmax.f32 %v694, %v699
      %v767 = vmax.f32 %v694, %v703
      %768 = vset.pattern.permute.xlu0 1
      %769 = vperm.xlu0 %768, %v166
      %v770 = vpop.permute.xlu0 %769
      %772 = vset.pattern.permute.xlu0 1
      %773 = vperm.xlu0 %772, %v167
      %v774 = vpop.permute.xlu0 %773
      %776 = vset.pattern.permute.xlu0 1
      %777 = vperm.xlu0 %776, %v168
      %v778 = vpop.permute.xlu0 %777
      %780 = vset.pattern.permute.xlu0 1
      %781 = vperm.xlu0 %780, %v169
      %v782 = vpop.permute.xlu0 %781
      %784 = vset.pattern.permute.xlu0 1
      %785 = vperm.xlu0 %784, %v170
      %v786 = vpop.permute.xlu0 %785
      %788 = vset.pattern.permute.xlu0 1
      %789 = vperm.xlu0 %788, %v171
      %v790 = vpop.permute.xlu0 %789
      %792 = vset.pattern.permute.xlu0 1
      %793 = vperm.xlu0 %792, %v172
      %v794 = vpop.permute.xlu0 %793
      %796 = vset.pattern.permute.xlu0 1
      %797 = vperm.xlu0 %796, %v173
      %v798 = vpop.permute.xlu0 %797
      %800 = vset.pattern.permute.xlu0 1
      %801 = vperm.xlu0 %800, %v174
      %v802 = vpop.permute.xlu0 %801
      %804 = vset.pattern.permute.xlu0 1
      %805 = vperm.xlu0 %804, %v175
      %v806 = vpop.permute.xlu0 %805
      %808 = vset.pattern.permute.xlu0 1
      %809 = vperm.xlu0 %808, %v176
      %v810 = vpop.permute.xlu0 %809
      %812 = vset.pattern.permute.xlu0 1
      %813 = vperm.xlu0 %812, %v177
      %v814 = vpop.permute.xlu0 %813
      %816 = vset.pattern.permute.xlu0 1
      %817 = vperm.xlu0 %816, %v178
      %v818 = vpop.permute.xlu0 %817
      %820 = vset.pattern.permute.xlu0 1
      %821 = vperm.xlu0 %820, %v179
      %v822 = vpop.permute.xlu0 %821
      %824 = vset.pattern.permute.xlu0 1
      %825 = vperm.xlu0 %824, %v180
      %v826 = vpop.permute.xlu0 %825
      %828 = vset.pattern.permute.xlu0 1
      %829 = vperm.xlu0 %828, %v181
      %v830 = vpop.permute.xlu0 %829
      %832 = vset.pattern.permute.xlu0 1
      %833 = vperm.xlu0 %832, %v182
      %v834 = vpop.permute.xlu0 %833
      %836 = vset.pattern.permute.xlu0 1
      %837 = vperm.xlu0 %836, %v183
      %v838 = vpop.permute.xlu0 %837
      %840 = vset.pattern.permute.xlu0 1
      %841 = vperm.xlu0 %840, %v184
      %v842 = vpop.permute.xlu0 %841
      %844 = vset.pattern.permute.xlu0 1
      %845 = vperm.xlu0 %844, %v185
      %v846 = vpop.permute.xlu0 %845
      %848 = vset.pattern.permute.xlu0 1
      %849 = vperm.xlu0 %848, %v186
      %v850 = vpop.permute.xlu0 %849
      %852 = vset.pattern.permute.xlu0 1
      %853 = vperm.xlu0 %852, %v187
      %v854 = vpop.permute.xlu0 %853
      %856 = vset.pattern.permute.xlu0 1
      %857 = vperm.xlu0 %856, %v188
      %v858 = vpop.permute.xlu0 %857
      %860 = vset.pattern.permute.xlu0 1
      %861 = vperm.xlu0 %860, %v189
      %v862 = vpop.permute.xlu0 %861
      %864 = vset.pattern.permute.xlu0 1
      %865 = vperm.xlu0 %864, %v190
      %v866 = vpop.permute.xlu0 %865
      %868 = vset.pattern.permute.xlu0 1
      %869 = vperm.xlu0 %868, %v191
      %v870 = vpop.permute.xlu0 %869
      %872 = vset.pattern.permute.xlu0 1
      %873 = vperm.xlu0 %872, %v192
      %v874 = vpop.permute.xlu0 %873
      %876 = vset.pattern.permute.xlu0 1
      %877 = vperm.xlu0 %876, %v193
      %v878 = vpop.permute.xlu0 %877
      %880 = vset.pattern.permute.xlu0 1
      %881 = vperm.xlu0 %880, %v194
      %v882 = vpop.permute.xlu0 %881
      %884 = vset.pattern.permute.xlu0 1
      %885 = vperm.xlu0 %884, %v195
      %v886 = vpop.permute.xlu0 %885
      %888 = vset.pattern.permute.xlu0 1
      %889 = vperm.xlu0 %888, %v196
      %v890 = vpop.permute.xlu0 %889
      %892 = vset.pattern.permute.xlu0 1
      %893 = vperm.xlu0 %892, %v197
      %v894 = vpop.permute.xlu0 %893
      %v896 = vlaneseq
      %v897 = vshrl.u32 %v896, 7
      %v898 = vsub.s32 1, %v897
      %v899 = vrot.slane %v164, %v898
      %v900 = vlaneseq
      %v901 = vshrl.u32 %v900, 7
      %v902 = vsub.s32 1, %v901
      %v903 = vrot.slane %v165, %v902
      %v904 = vmax.f32 %v770, %v899
      %v905 = vmax.f32 %v770, %v903
      %v906 = vmax.f32 %v774, %v899
      %v907 = vmax.f32 %v774, %v903
      %v908 = vmax.f32 %v778, %v899
      %v909 = vmax.f32 %v778, %v903
      %v910 = vmax.f32 %v782, %v899
      %v911 = vmax.f32 %v782, %v903
      %v912 = vmax.f32 %v786, %v899
      %v913 = vmax.f32 %v786, %v903
      %v914 = vmax.f32 %v790, %v899
      %v915 = vmax.f32 %v790, %v903
      %v916 = vmax.f32 %v794, %v899
      %v917 = vmax.f32 %v794, %v903
      %v918 = vmax.f32 %v798, %v899
      %v919 = vmax.f32 %v798, %v903
      %v920 = vmax.f32 %v802, %v899
      %v921 = vmax.f32 %v802, %v903
      %v922 = vmax.f32 %v806, %v899
      %v923 = vmax.f32 %v806, %v903
      %v924 = vmax.f32 %v810, %v899
      %v925 = vmax.f32 %v810, %v903
      %v926 = vmax.f32 %v814, %v899
      %v927 = vmax.f32 %v814, %v903
      %v928 = vmax.f32 %v818, %v899
      %v929 = vmax.f32 %v818, %v903
      %v930 = vmax.f32 %v822, %v899
      %v931 = vmax.f32 %v822, %v903
      %v932 = vmax.f32 %v826, %v899
      %v933 = vmax.f32 %v826, %v903
      %v934 = vmax.f32 %v830, %v899
      %v935 = vmax.f32 %v830, %v903
      %v936 = vmax.f32 %v834, %v899
      %v937 = vmax.f32 %v834, %v903
      %v938 = vmax.f32 %v838, %v899
      %v939 = vmax.f32 %v838, %v903
      %v940 = vmax.f32 %v842, %v899
      %v941 = vmax.f32 %v842, %v903
      %v942 = vmax.f32 %v846, %v899
      %v943 = vmax.f32 %v846, %v903
      %v944 = vmax.f32 %v850, %v899
      %v945 = vmax.f32 %v850, %v903
      %v946 = vmax.f32 %v854, %v899
      %v947 = vmax.f32 %v854, %v903
      %v948 = vmax.f32 %v858, %v899
      %v949 = vmax.f32 %v858, %v903
      %v950 = vmax.f32 %v862, %v899
      %v951 = vmax.f32 %v862, %v903
      %v952 = vmax.f32 %v866, %v899
      %v953 = vmax.f32 %v866, %v903
      %v954 = vmax.f32 %v870, %v899
      %v955 = vmax.f32 %v870, %v903
      %v956 = vmax.f32 %v874, %v899
      %v957 = vmax.f32 %v874, %v903
      %v958 = vmax.f32 %v878, %v899
      %v959 = vmax.f32 %v878, %v903
      %v960 = vmax.f32 %v882, %v899
      %v961 = vmax.f32 %v882, %v903
      %v962 = vmax.f32 %v886, %v899
      %v963 = vmax.f32 %v886, %v903
      %v964 = vmax.f32 %v890, %v899
      %v965 = vmax.f32 %v890, %v903
      %v966 = vmax.f32 %v894, %v899
      %v967 = vmax.f32 %v894, %v903
      %968 = vset.pattern.permute.xlu0 2
      %969 = vperm.xlu0 %968, %v166
      %v970 = vpop.permute.xlu0 %969
      %972 = vset.pattern.permute.xlu0 2
      %973 = vperm.xlu0 %972, %v167
      %v974 = vpop.permute.xlu0 %973
      %976 = vset.pattern.permute.xlu0 2
      %977 = vperm.xlu0 %976, %v168
      %v978 = vpop.permute.xlu0 %977
      %980 = vset.pattern.permute.xlu0 2
      %981 = vperm.xlu0 %980, %v169
      %v982 = vpop.permute.xlu0 %981
      %984 = vset.pattern.permute.xlu0 2
      %985 = vperm.xlu0 %984, %v170
      %v986 = vpop.permute.xlu0 %985
      %988 = vset.pattern.permute.xlu0 2
      %989 = vperm.xlu0 %988, %v171
      %v990 = vpop.permute.xlu0 %989
      %992 = vset.pattern.permute.xlu0 2
      %993 = vperm.xlu0 %992, %v172
      %v994 = vpop.permute.xlu0 %993
      %996 = vset.pattern.permute.xlu0 2
      %997 = vperm.xlu0 %996, %v173
      %v998 = vpop.permute.xlu0 %997
      %1000 = vset.pattern.permute.xlu0 2
      %1001 = vperm.xlu0 %1000, %v174
      %v1002 = vpop.permute.xlu0 %1001
      %1004 = vset.pattern.permute.xlu0 2
      %1005 = vperm.xlu0 %1004, %v175
      %v1006 = vpop.permute.xlu0 %1005
      %1008 = vset.pattern.permute.xlu0 2
      %1009 = vperm.xlu0 %1008, %v176
      %v1010 = vpop.permute.xlu0 %1009
      %1012 = vset.pattern.permute.xlu0 2
      %1013 = vperm.xlu0 %1012, %v177
      %v1014 = vpop.permute.xlu0 %1013
      %1016 = vset.pattern.permute.xlu0 2
      %1017 = vperm.xlu0 %1016, %v178
      %v1018 = vpop.permute.xlu0 %1017
      %1020 = vset.pattern.permute.xlu0 2
      %1021 = vperm.xlu0 %1020, %v179
      %v1022 = vpop.permute.xlu0 %1021
      %1024 = vset.pattern.permute.xlu0 2
      %1025 = vperm.xlu0 %1024, %v180
      %v1026 = vpop.permute.xlu0 %1025
      %1028 = vset.pattern.permute.xlu0 2
      %1029 = vperm.xlu0 %1028, %v181
      %v1030 = vpop.permute.xlu0 %1029
      %1032 = vset.pattern.permute.xlu0 2
      %1033 = vperm.xlu0 %1032, %v182
      %v1034 = vpop.permute.xlu0 %1033
      %1036 = vset.pattern.permute.xlu0 2
      %1037 = vperm.xlu0 %1036, %v183
      %v1038 = vpop.permute.xlu0 %1037
      %1040 = vset.pattern.permute.xlu0 2
      %1041 = vperm.xlu0 %1040, %v184
      %v1042 = vpop.permute.xlu0 %1041
      %1044 = vset.pattern.permute.xlu0 2
      %1045 = vperm.xlu0 %1044, %v185
      %v1046 = vpop.permute.xlu0 %1045
      %1048 = vset.pattern.permute.xlu0 2
      %1049 = vperm.xlu0 %1048, %v186
      %v1050 = vpop.permute.xlu0 %1049
      %1052 = vset.pattern.permute.xlu0 2
      %1053 = vperm.xlu0 %1052, %v187
      %v1054 = vpop.permute.xlu0 %1053
      %1056 = vset.pattern.permute.xlu0 2
      %1057 = vperm.xlu0 %1056, %v188
      %v1058 = vpop.permute.xlu0 %1057
      %1060 = vset.pattern.permute.xlu0 2
      %1061 = vperm.xlu0 %1060, %v189
      %v1062 = vpop.permute.xlu0 %1061
      %1064 = vset.pattern.permute.xlu0 2
      %1065 = vperm.xlu0 %1064, %v190
      %v1066 = vpop.permute.xlu0 %1065
      %1068 = vset.pattern.permute.xlu0 2
      %1069 = vperm.xlu0 %1068, %v191
      %v1070 = vpop.permute.xlu0 %1069
      %1072 = vset.pattern.permute.xlu0 2
      %1073 = vperm.xlu0 %1072, %v192
      %v1074 = vpop.permute.xlu0 %1073
      %1076 = vset.pattern.permute.xlu0 2
      %1077 = vperm.xlu0 %1076, %v193
      %v1078 = vpop.permute.xlu0 %1077
      %1080 = vset.pattern.permute.xlu0 2
      %1081 = vperm.xlu0 %1080, %v194
      %v1082 = vpop.permute.xlu0 %1081
      %1084 = vset.pattern.permute.xlu0 2
      %1085 = vperm.xlu0 %1084, %v195
      %v1086 = vpop.permute.xlu0 %1085
      %1088 = vset.pattern.permute.xlu0 2
      %1089 = vperm.xlu0 %1088, %v196
      %v1090 = vpop.permute.xlu0 %1089
      %1092 = vset.pattern.permute.xlu0 2
      %1093 = vperm.xlu0 %1092, %v197
      %v1094 = vpop.permute.xlu0 %1093
      %v1096 = vlaneseq
      %v1097 = vshrl.u32 %v1096, 7
      %v1098 = vsub.s32 2, %v1097
      %v1099 = vrot.slane %v164, %v1098
      %v1100 = vlaneseq
      %v1101 = vshrl.u32 %v1100, 7
      %v1102 = vsub.s32 2, %v1101
      %v1103 = vrot.slane %v165, %v1102
      %v1104 = vmin.f32 %v970, %v1099
      %v1105 = vmin.f32 %v970, %v1103
      %v1106 = vmin.f32 %v974, %v1099
      %v1107 = vmin.f32 %v974, %v1103
      %v1108 = vmin.f32 %v978, %v1099
      %v1109 = vmin.f32 %v978, %v1103
      %v1110 = vmin.f32 %v982, %v1099
      %v1111 = vmin.f32 %v982, %v1103
      %v1112 = vmin.f32 %v986, %v1099
      %v1113 = vmin.f32 %v986, %v1103
      %v1114 = vmin.f32 %v990, %v1099
      %v1115 = vmin.f32 %v990, %v1103
      %v1116 = vmin.f32 %v994, %v1099
      %v1117 = vmin.f32 %v994, %v1103
      %v1118 = vmin.f32 %v998, %v1099
      %v1119 = vmin.f32 %v998, %v1103
      %v1120 = vmin.f32 %v1002, %v1099
      %v1121 = vmin.f32 %v1002, %v1103
      %v1122 = vmin.f32 %v1006, %v1099
      %v1123 = vmin.f32 %v1006, %v1103
      %v1124 = vmin.f32 %v1010, %v1099
      %v1125 = vmin.f32 %v1010, %v1103
      %v1126 = vmin.f32 %v1014, %v1099
      %v1127 = vmin.f32 %v1014, %v1103
      %v1128 = vmin.f32 %v1018, %v1099
      %v1129 = vmin.f32 %v1018, %v1103
      %v1130 = vmin.f32 %v1022, %v1099
      %v1131 = vmin.f32 %v1022, %v1103
      %v1132 = vmin.f32 %v1026, %v1099
      %v1133 = vmin.f32 %v1026, %v1103
      %v1134 = vmin.f32 %v1030, %v1099
      %v1135 = vmin.f32 %v1030, %v1103
      %v1136 = vmin.f32 %v1034, %v1099
      %v1137 = vmin.f32 %v1034, %v1103
      %v1138 = vmin.f32 %v1038, %v1099
      %v1139 = vmin.f32 %v1038, %v1103
      %v1140 = vmin.f32 %v1042, %v1099
      %v1141 = vmin.f32 %v1042, %v1103
      %v1142 = vmin.f32 %v1046, %v1099
      %v1143 = vmin.f32 %v1046, %v1103
      %v1144 = vmin.f32 %v1050, %v1099
      %v1145 = vmin.f32 %v1050, %v1103
      %v1146 = vmin.f32 %v1054, %v1099
      %v1147 = vmin.f32 %v1054, %v1103
      %v1148 = vmin.f32 %v1058, %v1099
      %v1149 = vmin.f32 %v1058, %v1103
      %v1150 = vmin.f32 %v1062, %v1099
      %v1151 = vmin.f32 %v1062, %v1103
      %v1152 = vmin.f32 %v1066, %v1099
      %v1153 = vmin.f32 %v1066, %v1103
      %v1154 = vmin.f32 %v1070, %v1099
      %v1155 = vmin.f32 %v1070, %v1103
      %v1156 = vmin.f32 %v1074, %v1099
      %v1157 = vmin.f32 %v1074, %v1103
      %v1158 = vmin.f32 %v1078, %v1099
      %v1159 = vmin.f32 %v1078, %v1103
      %v1160 = vmin.f32 %v1082, %v1099
      %v1161 = vmin.f32 %v1082, %v1103
      %v1162 = vmin.f32 %v1086, %v1099
      %v1163 = vmin.f32 %v1086, %v1103
      %v1164 = vmin.f32 %v1090, %v1099
      %v1165 = vmin.f32 %v1090, %v1103
      %v1166 = vmin.f32 %v1094, %v1099
      %v1167 = vmin.f32 %v1094, %v1103
      %1168 = vset.pattern.permute.xlu0 3
      %1169 = vperm.xlu0 %1168, %v166
      %v1170 = vpop.permute.xlu0 %1169
      %1172 = vset.pattern.permute.xlu0 3
      %1173 = vperm.xlu0 %1172, %v167
      %v1174 = vpop.permute.xlu0 %1173
      %1176 = vset.pattern.permute.xlu0 3
      %1177 = vperm.xlu0 %1176, %v168
      %v1178 = vpop.permute.xlu0 %1177
      %1180 = vset.pattern.permute.xlu0 3
      %1181 = vperm.xlu0 %1180, %v169
      %v1182 = vpop.permute.xlu0 %1181
      %1184 = vset.pattern.permute.xlu0 3
      %1185 = vperm.xlu0 %1184, %v170
      %v1186 = vpop.permute.xlu0 %1185
      %1188 = vset.pattern.permute.xlu0 3
      %1189 = vperm.xlu0 %1188, %v171
      %v1190 = vpop.permute.xlu0 %1189
      %1192 = vset.pattern.permute.xlu0 3
      %1193 = vperm.xlu0 %1192, %v172
      %v1194 = vpop.permute.xlu0 %1193
      %1196 = vset.pattern.permute.xlu0 3
      %1197 = vperm.xlu0 %1196, %v173
      %v1198 = vpop.permute.xlu0 %1197
      %1200 = vset.pattern.permute.xlu0 3
      %1201 = vperm.xlu0 %1200, %v174
      %v1202 = vpop.permute.xlu0 %1201
      %1204 = vset.pattern.permute.xlu0 3
      %1205 = vperm.xlu0 %1204, %v175
      %v1206 = vpop.permute.xlu0 %1205
      %1208 = vset.pattern.permute.xlu0 3
      %1209 = vperm.xlu0 %1208, %v176
      %v1210 = vpop.permute.xlu0 %1209
      %1212 = vset.pattern.permute.xlu0 3
      %1213 = vperm.xlu0 %1212, %v177
      %v1214 = vpop.permute.xlu0 %1213
      %1216 = vset.pattern.permute.xlu0 3
      %1217 = vperm.xlu0 %1216, %v178
      %v1218 = vpop.permute.xlu0 %1217
      %1220 = vset.pattern.permute.xlu0 3
      %1221 = vperm.xlu0 %1220, %v179
      %v1222 = vpop.permute.xlu0 %1221
      %1224 = vset.pattern.permute.xlu0 3
      %1225 = vperm.xlu0 %1224, %v180
      %v1226 = vpop.permute.xlu0 %1225
      %1228 = vset.pattern.permute.xlu0 3
      %1229 = vperm.xlu0 %1228, %v181
      %v1230 = vpop.permute.xlu0 %1229
      %1232 = vset.pattern.permute.xlu0 3
      %1233 = vperm.xlu0 %1232, %v182
      %v1234 = vpop.permute.xlu0 %1233
      %1236 = vset.pattern.permute.xlu0 3
      %1237 = vperm.xlu0 %1236, %v183
      %v1238 = vpop.permute.xlu0 %1237
      %1240 = vset.pattern.permute.xlu0 3
      %1241 = vperm.xlu0 %1240, %v184
      %v1242 = vpop.permute.xlu0 %1241
      %1244 = vset.pattern.permute.xlu0 3
      %1245 = vperm.xlu0 %1244, %v185
      %v1246 = vpop.permute.xlu0 %1245
      %1248 = vset.pattern.permute.xlu0 3
      %1249 = vperm.xlu0 %1248, %v186
      %v1250 = vpop.permute.xlu0 %1249
      %1252 = vset.pattern.permute.xlu0 3
      %1253 = vperm.xlu0 %1252, %v187
      %v1254 = vpop.permute.xlu0 %1253
      %1256 = vset.pattern.permute.xlu0 3
      %1257 = vperm.xlu0 %1256, %v188
      %v1258 = vpop.permute.xlu0 %1257
      %1260 = vset.pattern.permute.xlu0 3
      %1261 = vperm.xlu0 %1260, %v189
      %v1262 = vpop.permute.xlu0 %1261
      %1264 = vset.pattern.permute.xlu0 3
      %1265 = vperm.xlu0 %1264, %v190
      %v1266 = vpop.permute.xlu0 %1265
      %1268 = vset.pattern.permute.xlu0 3
      %1269 = vperm.xlu0 %1268, %v191
      %v1270 = vpop.permute.xlu0 %1269
      %1272 = vset.pattern.permute.xlu0 3
      %1273 = vperm.xlu0 %1272, %v192
      %v1274 = vpop.permute.xlu0 %1273
      %1276 = vset.pattern.permute.xlu0 3
      %1277 = vperm.xlu0 %1276, %v193
      %v1278 = vpop.permute.xlu0 %1277
      %1280 = vset.pattern.permute.xlu0 3
      %1281 = vperm.xlu0 %1280, %v194
      %v1282 = vpop.permute.xlu0 %1281
      %1284 = vset.pattern.permute.xlu0 3
      %1285 = vperm.xlu0 %1284, %v195
      %v1286 = vpop.permute.xlu0 %1285
      %1288 = vset.pattern.permute.xlu0 3
      %1289 = vperm.xlu0 %1288, %v196
      %v1290 = vpop.permute.xlu0 %1289
      %1292 = vset.pattern.permute.xlu0 3
      %1293 = vperm.xlu0 %1292, %v197
      %v1294 = vpop.permute.xlu0 %1293
      %v1296 = vlaneseq
      %v1297 = vshrl.u32 %v1296, 7
      %v1298 = vsub.s32 3, %v1297
      %v1299 = vrot.slane %v164, %v1298
      %v1300 = vlaneseq
      %v1301 = vshrl.u32 %v1300, 7
      %v1302 = vsub.s32 3, %v1301
      %v1303 = vrot.slane %v165, %v1302
      %v1304 = vmin.f32 %v1170, %v1299
      %v1305 = vmin.f32 %v1170, %v1303
      %v1306 = vmin.f32 %v1174, %v1299
      %v1307 = vmin.f32 %v1174, %v1303
      %v1308 = vmin.f32 %v1178, %v1299
      %v1309 = vmin.f32 %v1178, %v1303
      %v1310 = vmin.f32 %v1182, %v1299
      %v1311 = vmin.f32 %v1182, %v1303
      %v1312 = vmin.f32 %v1186, %v1299
      %v1313 = vmin.f32 %v1186, %v1303
      %v1314 = vmin.f32 %v1190, %v1299
      %v1315 = vmin.f32 %v1190, %v1303
      %v1316 = vmin.f32 %v1194, %v1299
      %v1317 = vmin.f32 %v1194, %v1303
      %v1318 = vmin.f32 %v1198, %v1299
      %v1319 = vmin.f32 %v1198, %v1303
      %v1320 = vmin.f32 %v1202, %v1299
      %v1321 = vmin.f32 %v1202, %v1303
      %v1322 = vmin.f32 %v1206, %v1299
      %v1323 = vmin.f32 %v1206, %v1303
      %v1324 = vmin.f32 %v1210, %v1299
      %v1325 = vmin.f32 %v1210, %v1303
      %v1326 = vmin.f32 %v1214, %v1299
      %v1327 = vmin.f32 %v1214, %v1303
      %v1328 = vmin.f32 %v1218, %v1299
      %v1329 = vmin.f32 %v1218, %v1303
      %v1330 = vmin.f32 %v1222, %v1299
      %v1331 = vmin.f32 %v1222, %v1303
      %v1332 = vmin.f32 %v1226, %v1299
      %v1333 = vmin.f32 %v1226, %v1303
      %v1334 = vmin.f32 %v1230, %v1299
      %v1335 = vmin.f32 %v1230, %v1303
      %v1336 = vmin.f32 %v1234, %v1299
      %v1337 = vmin.f32 %v1234, %v1303
      %v1338 = vmin.f32 %v1238, %v1299
      %v1339 = vmin.f32 %v1238, %v1303
      %v1340 = vmin.f32 %v1242, %v1299
      %v1341 = vmin.f32 %v1242, %v1303
      %v1342 = vmin.f32 %v1246, %v1299
      %v1343 = vmin.f32 %v1246, %v1303
      %v1344 = vmin.f32 %v1250, %v1299
      %v1345 = vmin.f32 %v1250, %v1303
      %v1346 = vmin.f32 %v1254, %v1299
      %v1347 = vmin.f32 %v1254, %v1303
      %v1348 = vmin.f32 %v1258, %v1299
      %v1349 = vmin.f32 %v1258, %v1303
      %v1350 = vmin.f32 %v1262, %v1299
      %v1351 = vmin.f32 %v1262, %v1303
      %v1352 = vmin.f32 %v1266, %v1299
      %v1353 = vmin.f32 %v1266, %v1303
      %v1354 = vmin.f32 %v1270, %v1299
      %v1355 = vmin.f32 %v1270, %v1303
      %v1356 = vmin.f32 %v1274, %v1299
      %v1357 = vmin.f32 %v1274, %v1303
      %v1358 = vmin.f32 %v1278, %v1299
      %v1359 = vmin.f32 %v1278, %v1303
      %v1360 = vmin.f32 %v1282, %v1299
      %v1361 = vmin.f32 %v1282, %v1303
      %v1362 = vmin.f32 %v1286, %v1299
      %v1363 = vmin.f32 %v1286, %v1303
      %v1364 = vmin.f32 %v1290, %v1299
      %v1365 = vmin.f32 %v1290, %v1303
      %v1366 = vmin.f32 %v1294, %v1299
      %v1367 = vmin.f32 %v1294, %v1303
      %v1368 = vsub.f32 %v1104, %v704
      %v1369 = vsub.f32 %v1105, %v705
      %v1370 = vsub.f32 %v1106, %v706
      %v1371 = vsub.f32 %v1107, %v707
      %v1372 = vsub.f32 %v1108, %v708
      %v1373 = vsub.f32 %v1109, %v709
      %v1374 = vsub.f32 %v1110, %v710
      %v1375 = vsub.f32 %v1111, %v711
      %v1376 = vsub.f32 %v1112, %v712
      %v1377 = vsub.f32 %v1113, %v713
      %v1378 = vsub.f32 %v1114, %v714
      %v1379 = vsub.f32 %v1115, %v715
      %v1380 = vsub.f32 %v1116, %v716
      %v1381 = vsub.f32 %v1117, %v717
      %v1382 = vsub.f32 %v1118, %v718
      %v1383 = vsub.f32 %v1119, %v719
      %v1384 = vsub.f32 %v1120, %v720
      %v1385 = vsub.f32 %v1121, %v721
      %v1386 = vsub.f32 %v1122, %v722
      %v1387 = vsub.f32 %v1123, %v723
      %v1388 = vsub.f32 %v1124, %v724
      %v1389 = vsub.f32 %v1125, %v725
      %v1390 = vsub.f32 %v1126, %v726
      %v1391 = vsub.f32 %v1127, %v727
      %v1392 = vsub.f32 %v1128, %v728
      %v1393 = vsub.f32 %v1129, %v729
      %v1394 = vsub.f32 %v1130, %v730
      %v1395 = vsub.f32 %v1131, %v731
      %v1396 = vsub.f32 %v1132, %v732
      %v1397 = vsub.f32 %v1133, %v733
      %v1398 = vsub.f32 %v1134, %v734
      %v1399 = vsub.f32 %v1135, %v735
      %v1400 = vsub.f32 %v1136, %v736
      %v1401 = vsub.f32 %v1137, %v737
      %v1402 = vsub.f32 %v1138, %v738
      %v1403 = vsub.f32 %v1139, %v739
      %v1404 = vsub.f32 %v1140, %v740
      %v1405 = vsub.f32 %v1141, %v741
      %v1406 = vsub.f32 %v1142, %v742
      %v1407 = vsub.f32 %v1143, %v743
      %v1408 = vsub.f32 %v1144, %v744
      %v1409 = vsub.f32 %v1145, %v745
      %v1410 = vsub.f32 %v1146, %v746
      %v1411 = vsub.f32 %v1147, %v747
      %v1412 = vsub.f32 %v1148, %v748
      %v1413 = vsub.f32 %v1149, %v749
      %v1414 = vsub.f32 %v1150, %v750
      %v1415 = vsub.f32 %v1151, %v751
      %v1416 = vsub.f32 %v1152, %v752
      %v1417 = vsub.f32 %v1153, %v753
      %v1418 = vsub.f32 %v1154, %v754
      %v1419 = vsub.f32 %v1155, %v755
      %v1420 = vsub.f32 %v1156, %v756
      %v1421 = vsub.f32 %v1157, %v757
      %v1422 = vsub.f32 %v1158, %v758
      %v1423 = vsub.f32 %v1159, %v759
      %v1424 = vsub.f32 %v1160, %v760
      %v1425 = vsub.f32 %v1161, %v761
      %v1426 = vsub.f32 %v1162, %v762
      %v1427 = vsub.f32 %v1163, %v763
      %v1428 = vsub.f32 %v1164, %v764
      %v1429 = vsub.f32 %v1165, %v765
      %v1430 = vsub.f32 %v1166, %v766
      %v1431 = vsub.f32 %v1167, %v767
      %v1432 = vadd.f32 %v1368, 0.01
      %v1433 = vadd.f32 %v1369, 0.01
      %v1434 = vadd.f32 %v1370, 0.01
      %v1435 = vadd.f32 %v1371, 0.01
      %v1436 = vadd.f32 %v1372, 0.01
      %v1437 = vadd.f32 %v1373, 0.01
      %v1438 = vadd.f32 %v1374, 0.01
      %v1439 = vadd.f32 %v1375, 0.01
      %v1440 = vadd.f32 %v1376, 0.01
      %v1441 = vadd.f32 %v1377, 0.01
      %v1442 = vadd.f32 %v1378, 0.01
      %v1443 = vadd.f32 %v1379, 0.01
      %v1444 = vadd.f32 %v1380, 0.01
      %v1445 = vadd.f32 %v1381, 0.01
      %v1446 = vadd.f32 %v1382, 0.01
      %v1447 = vadd.f32 %v1383, 0.01
      %v1448 = vadd.f32 %v1384, 0.01
      %v1449 = vadd.f32 %v1385, 0.01
      %v1450 = vadd.f32 %v1386, 0.01
      %v1451 = vadd.f32 %v1387, 0.01
      %v1452 = vadd.f32 %v1388, 0.01
      %v1453 = vadd.f32 %v1389, 0.01
      %v1454 = vadd.f32 %v1390, 0.01
      %v1455 = vadd.f32 %v1391, 0.01
      %v1456 = vadd.f32 %v1392, 0.01
      %v1457 = vadd.f32 %v1393, 0.01
      %v1458 = vadd.f32 %v1394, 0.01
      %v1459 = vadd.f32 %v1395, 0.01
      %v1460 = vadd.f32 %v1396, 0.01
      %v1461 = vadd.f32 %v1397, 0.01
      %v1462 = vadd.f32 %v1398, 0.01
      %v1463 = vadd.f32 %v1399, 0.01
      %v1464 = vadd.f32 %v1400, 0.01
      %v1465 = vadd.f32 %v1401, 0.01
      %v1466 = vadd.f32 %v1402, 0.01
      %v1467 = vadd.f32 %v1403, 0.01
      %v1468 = vadd.f32 %v1404, 0.01
      %v1469 = vadd.f32 %v1405, 0.01
      %v1470 = vadd.f32 %v1406, 0.01
      %v1471 = vadd.f32 %v1407, 0.01
      %v1472 = vadd.f32 %v1408, 0.01
      %v1473 = vadd.f32 %v1409, 0.01
      %v1474 = vadd.f32 %v1410, 0.01
      %v1475 = vadd.f32 %v1411, 0.01
      %v1476 = vadd.f32 %v1412, 0.01
      %v1477 = vadd.f32 %v1413, 0.01
      %v1478 = vadd.f32 %v1414, 0.01
      %v1479 = vadd.f32 %v1415, 0.01
      %v1480 = vadd.f32 %v1416, 0.01
      %v1481 = vadd.f32 %v1417, 0.01
      %v1482 = vadd.f32 %v1418, 0.01
      %v1483 = vadd.f32 %v1419, 0.01
      %v1484 = vadd.f32 %v1420, 0.01
      %v1485 = vadd.f32 %v1421, 0.01
      %v1486 = vadd.f32 %v1422, 0.01
      %v1487 = vadd.f32 %v1423, 0.01
      %v1488 = vadd.f32 %v1424, 0.01
      %v1489 = vadd.f32 %v1425, 0.01
      %v1490 = vadd.f32 %v1426, 0.01
      %v1491 = vadd.f32 %v1427, 0.01
      %v1492 = vadd.f32 %v1428, 0.01
      %v1493 = vadd.f32 %v1429, 0.01
      %v1494 = vadd.f32 %v1430, 0.01
      %v1495 = vadd.f32 %v1431, 0.01
      %v1496 = vmax.f32 %v1432, 0.0
      %v1497 = vmax.f32 %v1433, 0.0
      %v1498 = vmax.f32 %v1434, 0.0
      %v1499 = vmax.f32 %v1435, 0.0
      %v1500 = vmax.f32 %v1436, 0.0
      %v1501 = vmax.f32 %v1437, 0.0
      %v1502 = vmax.f32 %v1438, 0.0
      %v1503 = vmax.f32 %v1439, 0.0
      %v1504 = vmax.f32 %v1440, 0.0
      %v1505 = vmax.f32 %v1441, 0.0
      %v1506 = vmax.f32 %v1442, 0.0
      %v1507 = vmax.f32 %v1443, 0.0
      %v1508 = vmax.f32 %v1444, 0.0
      %v1509 = vmax.f32 %v1445, 0.0
      %v1510 = vmax.f32 %v1446, 0.0
      %v1511 = vmax.f32 %v1447, 0.0
      %v1512 = vmax.f32 %v1448, 0.0
      %v1513 = vmax.f32 %v1449, 0.0
      %v1514 = vmax.f32 %v1450, 0.0
      %v1515 = vmax.f32 %v1451, 0.0
      %v1516 = vmax.f32 %v1452, 0.0
      %v1517 = vmax.f32 %v1453, 0.0
      %v1518 = vmax.f32 %v1454, 0.0
      %v1519 = vmax.f32 %v1455, 0.0
      %v1520 = vmax.f32 %v1456, 0.0
      %v1521 = vmax.f32 %v1457, 0.0
      %v1522 = vmax.f32 %v1458, 0.0
      %v1523 = vmax.f32 %v1459, 0.0
      %v1524 = vmax.f32 %v1460, 0.0
      %v1525 = vmax.f32 %v1461, 0.0
      %v1526 = vmax.f32 %v1462, 0.0
      %v1527 = vmax.f32 %v1463, 0.0
      %v1528 = vmax.f32 %v1464, 0.0
      %v1529 = vmax.f32 %v1465, 0.0
      %v1530 = vmax.f32 %v1466, 0.0
      %v1531 = vmax.f32 %v1467, 0.0
      %v1532 = vmax.f32 %v1468, 0.0
      %v1533 = vmax.f32 %v1469, 0.0
      %v1534 = vmax.f32 %v1470, 0.0
      %v1535 = vmax.f32 %v1471, 0.0
      %v1536 = vmax.f32 %v1472, 0.0
      %v1537 = vmax.f32 %v1473, 0.0
      %v1538 = vmax.f32 %v1474, 0.0
      %v1539 = vmax.f32 %v1475, 0.0
      %v1540 = vmax.f32 %v1476, 0.0
      %v1541 = vmax.f32 %v1477, 0.0
      %v1542 = vmax.f32 %v1478, 0.0
      %v1543 = vmax.f32 %v1479, 0.0
      %v1544 = vmax.f32 %v1480, 0.0
      %v1545 = vmax.f32 %v1481, 0.0
      %v1546 = vmax.f32 %v1482, 0.0
      %v1547 = vmax.f32 %v1483, 0.0
      %v1548 = vmax.f32 %v1484, 0.0
      %v1549 = vmax.f32 %v1485, 0.0
      %v1550 = vmax.f32 %v1486, 0.0
      %v1551 = vmax.f32 %v1487, 0.0
      %v1552 = vmax.f32 %v1488, 0.0
      %v1553 = vmax.f32 %v1489, 0.0
      %v1554 = vmax.f32 %v1490, 0.0
      %v1555 = vmax.f32 %v1491, 0.0
      %v1556 = vmax.f32 %v1492, 0.0
      %v1557 = vmax.f32 %v1493, 0.0
      %v1558 = vmax.f32 %v1494, 0.0
      %v1559 = vmax.f32 %v1495, 0.0
      %v1560 = vsub.f32 %v1304, %v904
      %v1561 = vsub.f32 %v1305, %v905
      %v1562 = vsub.f32 %v1306, %v906
      %v1563 = vsub.f32 %v1307, %v907
      %v1564 = vsub.f32 %v1308, %v908
      %v1565 = vsub.f32 %v1309, %v909
      %v1566 = vsub.f32 %v1310, %v910
      %v1567 = vsub.f32 %v1311, %v911
      %v1568 = vsub.f32 %v1312, %v912
      %v1569 = vsub.f32 %v1313, %v913
      %v1570 = vsub.f32 %v1314, %v914
      %v1571 = vsub.f32 %v1315, %v915
      %v1572 = vsub.f32 %v1316, %v916
      %v1573 = vsub.f32 %v1317, %v917
      %v1574 = vsub.f32 %v1318, %v918
      %v1575 = vsub.f32 %v1319, %v919
      %v1576 = vsub.f32 %v1320, %v920
      %v1577 = vsub.f32 %v1321, %v921
      %v1578 = vsub.f32 %v1322, %v922
      %v1579 = vsub.f32 %v1323, %v923
      %v1580 = vsub.f32 %v1324, %v924
      %v1581 = vsub.f32 %v1325, %v925
      %v1582 = vsub.f32 %v1326, %v926
      %v1583 = vsub.f32 %v1327, %v927
      %v1584 = vsub.f32 %v1328, %v928
      %v1585 = vsub.f32 %v1329, %v929
      %v1586 = vsub.f32 %v1330, %v930
      %v1587 = vsub.f32 %v1331, %v931
      %v1588 = vsub.f32 %v1332, %v932
      %v1589 = vsub.f32 %v1333, %v933
      %v1590 = vsub.f32 %v1334, %v934
      %v1591 = vsub.f32 %v1335, %v935
      %v1592 = vsub.f32 %v1336, %v936
      %v1593 = vsub.f32 %v1337, %v937
      %v1594 = vsub.f32 %v1338, %v938
      %v1595 = vsub.f32 %v1339, %v939
      %v1596 = vsub.f32 %v1340, %v940
      %v1597 = vsub.f32 %v1341, %v941
      %v1598 = vsub.f32 %v1342, %v942
      %v1599 = vsub.f32 %v1343, %v943
      %v1600 = vsub.f32 %v1344, %v944
      %v1601 = vsub.f32 %v1345, %v945
      %v1602 = vsub.f32 %v1346, %v946
      %v1603 = vsub.f32 %v1347, %v947
      %v1604 = vsub.f32 %v1348, %v948
      %v1605 = vsub.f32 %v1349, %v949
      %v1606 = vsub.f32 %v1350, %v950
      %v1607 = vsub.f32 %v1351, %v951
      %v1608 = vsub.f32 %v1352, %v952
      %v1609 = vsub.f32 %v1353, %v953
      %v1610 = vsub.f32 %v1354, %v954
      %v1611 = vsub.f32 %v1355, %v955
      %v1612 = vsub.f32 %v1356, %v956
      %v1613 = vsub.f32 %v1357, %v957
      %v1614 = vsub.f32 %v1358, %v958
      %v1615 = vsub.f32 %v1359, %v959
      %v1616 = vsub.f32 %v1360, %v960
      %v1617 = vsub.f32 %v1361, %v961
      %v1618 = vsub.f32 %v1362, %v962
      %v1619 = vsub.f32 %v1363, %v963
      %v1620 = vsub.f32 %v1364, %v964
      %v1621 = vsub.f32 %v1365, %v965
      %v1622 = vsub.f32 %v1366, %v966
      %v1623 = vsub.f32 %v1367, %v967
      %v1624 = vadd.f32 %v1560, 0.01
      %v1625 = vadd.f32 %v1561, 0.01
      %v1626 = vadd.f32 %v1562, 0.01
      %v1627 = vadd.f32 %v1563, 0.01
      %v1628 = vadd.f32 %v1564, 0.01
      %v1629 = vadd.f32 %v1565, 0.01
      %v1630 = vadd.f32 %v1566, 0.01
      %v1631 = vadd.f32 %v1567, 0.01
      %v1632 = vadd.f32 %v1568, 0.01
      %v1633 = vadd.f32 %v1569, 0.01
      %v1634 = vadd.f32 %v1570, 0.01
      %v1635 = vadd.f32 %v1571, 0.01
      %v1636 = vadd.f32 %v1572, 0.01
      %v1637 = vadd.f32 %v1573, 0.01
      %v1638 = vadd.f32 %v1574, 0.01
      %v1639 = vadd.f32 %v1575, 0.01
      %v1640 = vadd.f32 %v1576, 0.01
      %v1641 = vadd.f32 %v1577, 0.01
      %v1642 = vadd.f32 %v1578, 0.01
      %v1643 = vadd.f32 %v1579, 0.01
      %v1644 = vadd.f32 %v1580, 0.01
      %v1645 = vadd.f32 %v1581, 0.01
      %v1646 = vadd.f32 %v1582, 0.01
      %v1647 = vadd.f32 %v1583, 0.01
      %v1648 = vadd.f32 %v1584, 0.01
      %v1649 = vadd.f32 %v1585, 0.01
      %v1650 = vadd.f32 %v1586, 0.01
      %v1651 = vadd.f32 %v1587, 0.01
      %v1652 = vadd.f32 %v1588, 0.01
      %v1653 = vadd.f32 %v1589, 0.01
      %v1654 = vadd.f32 %v1590, 0.01
      %v1655 = vadd.f32 %v1591, 0.01
      %v1656 = vadd.f32 %v1592, 0.01
      %v1657 = vadd.f32 %v1593, 0.01
      %v1658 = vadd.f32 %v1594, 0.01
      %v1659 = vadd.f32 %v1595, 0.01
      %v1660 = vadd.f32 %v1596, 0.01
      %v1661 = vadd.f32 %v1597, 0.01
      %v1662 = vadd.f32 %v1598, 0.01
      %v1663 = vadd.f32 %v1599, 0.01
      %v1664 = vadd.f32 %v1600, 0.01
      %v1665 = vadd.f32 %v1601, 0.01
      %v1666 = vadd.f32 %v1602, 0.01
      %v1667 = vadd.f32 %v1603, 0.01
      %v1668 = vadd.f32 %v1604, 0.01
      %v1669 = vadd.f32 %v1605, 0.01
      %v1670 = vadd.f32 %v1606, 0.01
      %v1671 = vadd.f32 %v1607, 0.01
      %v1672 = vadd.f32 %v1608, 0.01
      %v1673 = vadd.f32 %v1609, 0.01
      %v1674 = vadd.f32 %v1610, 0.01
      %v1675 = vadd.f32 %v1611, 0.01
      %v1676 = vadd.f32 %v1612, 0.01
      %v1677 = vadd.f32 %v1613, 0.01
      %v1678 = vadd.f32 %v1614, 0.01
      %v1679 = vadd.f32 %v1615, 0.01
      %v1680 = vadd.f32 %v1616, 0.01
      %v1681 = vadd.f32 %v1617, 0.01
      %v1682 = vadd.f32 %v1618, 0.01
      %v1683 = vadd.f32 %v1619, 0.01
      %v1684 = vadd.f32 %v1620, 0.01
      %v1685 = vadd.f32 %v1621, 0.01
      %v1686 = vadd.f32 %v1622, 0.01
      %v1687 = vadd.f32 %v1623, 0.01
      %v1688 = vmax.f32 %v1624, 0.0
      %v1689 = vmax.f32 %v1625, 0.0
      %v1690 = vmax.f32 %v1626, 0.0
      %v1691 = vmax.f32 %v1627, 0.0
      %v1692 = vmax.f32 %v1628, 0.0
      %v1693 = vmax.f32 %v1629, 0.0
      %v1694 = vmax.f32 %v1630, 0.0
      %v1695 = vmax.f32 %v1631, 0.0
      %v1696 = vmax.f32 %v1632, 0.0
      %v1697 = vmax.f32 %v1633, 0.0
      %v1698 = vmax.f32 %v1634, 0.0
      %v1699 = vmax.f32 %v1635, 0.0
      %v1700 = vmax.f32 %v1636, 0.0
      %v1701 = vmax.f32 %v1637, 0.0
      %v1702 = vmax.f32 %v1638, 0.0
      %v1703 = vmax.f32 %v1639, 0.0
      %v1704 = vmax.f32 %v1640, 0.0
      %v1705 = vmax.f32 %v1641, 0.0
      %v1706 = vmax.f32 %v1642, 0.0
      %v1707 = vmax.f32 %v1643, 0.0
      %v1708 = vmax.f32 %v1644, 0.0
      %v1709 = vmax.f32 %v1645, 0.0
      %v1710 = vmax.f32 %v1646, 0.0
      %v1711 = vmax.f32 %v1647, 0.0
      %v1712 = vmax.f32 %v1648, 0.0
      %v1713 = vmax.f32 %v1649, 0.0
      %v1714 = vmax.f32 %v1650, 0.0
      %v1715 = vmax.f32 %v1651, 0.0
      %v1716 = vmax.f32 %v1652, 0.0
      %v1717 = vmax.f32 %v1653, 0.0
      %v1718 = vmax.f32 %v1654, 0.0
      %v1719 = vmax.f32 %v1655, 0.0
      %v1720 = vmax.f32 %v1656, 0.0
      %v1721 = vmax.f32 %v1657, 0.0
      %v1722 = vmax.f32 %v1658, 0.0
      %v1723 = vmax.f32 %v1659, 0.0
      %v1724 = vmax.f32 %v1660, 0.0
      %v1725 = vmax.f32 %v1661, 0.0
      %v1726 = vmax.f32 %v1662, 0.0
      %v1727 = vmax.f32 %v1663, 0.0
      %v1728 = vmax.f32 %v1664, 0.0
      %v1729 = vmax.f32 %v1665, 0.0
      %v1730 = vmax.f32 %v1666, 0.0
      %v1731 = vmax.f32 %v1667, 0.0
      %v1732 = vmax.f32 %v1668, 0.0
      %v1733 = vmax.f32 %v1669, 0.0
      %v1734 = vmax.f32 %v1670, 0.0
      %v1735 = vmax.f32 %v1671, 0.0
      %v1736 = vmax.f32 %v1672, 0.0
      %v1737 = vmax.f32 %v1673, 0.0
      %v1738 = vmax.f32 %v1674, 0.0
      %v1739 = vmax.f32 %v1675, 0.0
      %v1740 = vmax.f32 %v1676, 0.0
      %v1741 = vmax.f32 %v1677, 0.0
      %v1742 = vmax.f32 %v1678, 0.0
      %v1743 = vmax.f32 %v1679, 0.0
      %v1744 = vmax.f32 %v1680, 0.0
      %v1745 = vmax.f32 %v1681, 0.0
      %v1746 = vmax.f32 %v1682, 0.0
      %v1747 = vmax.f32 %v1683, 0.0
      %v1748 = vmax.f32 %v1684, 0.0
      %v1749 = vmax.f32 %v1685, 0.0
      %v1750 = vmax.f32 %v1686, 0.0
      %v1751 = vmax.f32 %v1687, 0.0
      %v1752 = vmul.f32 %v1496, %v1688
      %v1753 = vmul.f32 %v1497, %v1689
      %v1754 = vmul.f32 %v1498, %v1690
      %v1755 = vmul.f32 %v1499, %v1691
      %v1756 = vmul.f32 %v1500, %v1692
      %v1757 = vmul.f32 %v1501, %v1693
      %v1758 = vmul.f32 %v1502, %v1694
      %v1759 = vmul.f32 %v1503, %v1695
      %v1760 = vmul.f32 %v1504, %v1696
      %v1761 = vmul.f32 %v1505, %v1697
      %v1762 = vmul.f32 %v1506, %v1698
      %v1763 = vmul.f32 %v1507, %v1699
      %v1764 = vmul.f32 %v1508, %v1700
      %v1765 = vmul.f32 %v1509, %v1701
      %v1766 = vmul.f32 %v1510, %v1702
      %v1767 = vmul.f32 %v1511, %v1703
      %v1768 = vmul.f32 %v1512, %v1704
      %v1769 = vmul.f32 %v1513, %v1705
      %v1770 = vmul.f32 %v1514, %v1706
      %v1771 = vmul.f32 %v1515, %v1707
      %v1772 = vmul.f32 %v1516, %v1708
      %v1773 = vmul.f32 %v1517, %v1709
      %v1774 = vmul.f32 %v1518, %v1710
      %v1775 = vmul.f32 %v1519, %v1711
      %v1776 = vmul.f32 %v1520, %v1712
      %v1777 = vmul.f32 %v1521, %v1713
      %v1778 = vmul.f32 %v1522, %v1714
      %v1779 = vmul.f32 %v1523, %v1715
      %v1780 = vmul.f32 %v1524, %v1716
      %v1781 = vmul.f32 %v1525, %v1717
      %v1782 = vmul.f32 %v1526, %v1718
      %v1783 = vmul.f32 %v1527, %v1719
      %v1784 = vmul.f32 %v1528, %v1720
      %v1785 = vmul.f32 %v1529, %v1721
      %v1786 = vmul.f32 %v1530, %v1722
      %v1787 = vmul.f32 %v1531, %v1723
      %v1788 = vmul.f32 %v1532, %v1724
      %v1789 = vmul.f32 %v1533, %v1725
      %v1790 = vmul.f32 %v1534, %v1726
      %v1791 = vmul.f32 %v1535, %v1727
      %v1792 = vmul.f32 %v1536, %v1728
      %v1793 = vmul.f32 %v1537, %v1729
      %v1794 = vmul.f32 %v1538, %v1730
      %v1795 = vmul.f32 %v1539, %v1731
      %v1796 = vmul.f32 %v1540, %v1732
      %v1797 = vmul.f32 %v1541, %v1733
      %v1798 = vmul.f32 %v1542, %v1734
      %v1799 = vmul.f32 %v1543, %v1735
      %v1800 = vmul.f32 %v1544, %v1736
      %v1801 = vmul.f32 %v1545, %v1737
      %v1802 = vmul.f32 %v1546, %v1738
      %v1803 = vmul.f32 %v1547, %v1739
      %v1804 = vmul.f32 %v1548, %v1740
      %v1805 = vmul.f32 %v1549, %v1741
      %v1806 = vmul.f32 %v1550, %v1742
      %v1807 = vmul.f32 %v1551, %v1743
      %v1808 = vmul.f32 %v1552, %v1744
      %v1809 = vmul.f32 %v1553, %v1745
      %v1810 = vmul.f32 %v1554, %v1746
      %v1811 = vmul.f32 %v1555, %v1747
      %v1812 = vmul.f32 %v1556, %v1748
      %v1813 = vmul.f32 %v1557, %v1749
      %v1814 = vmul.f32 %v1558, %v1750
      %v1815 = vmul.f32 %v1559, %v1751
      %1817 = vset.pattern.permute.xlu0 2
      %1818 = vperm.xlu0 %1817, %v536
      %v1819 = vpop.permute.xlu0 %1818
      %1822 = vset.pattern.permute.xlu0 2
      %1823 = vperm.xlu0 %1822, %v537
      %v1824 = vpop.permute.xlu0 %1823
      %1827 = vset.pattern.permute.xlu0 2
      %1828 = vperm.xlu0 %1827, %v538
      %v1829 = vpop.permute.xlu0 %1828
      %1832 = vset.pattern.permute.xlu0 2
      %1833 = vperm.xlu0 %1832, %v539
      %v1834 = vpop.permute.xlu0 %1833
      %1837 = vset.pattern.permute.xlu0 2
      %1838 = vperm.xlu0 %1837, %v540
      %v1839 = vpop.permute.xlu0 %1838
      %1842 = vset.pattern.permute.xlu0 2
      %1843 = vperm.xlu0 %1842, %v541
      %v1844 = vpop.permute.xlu0 %1843
      %1847 = vset.pattern.permute.xlu0 2
      %1848 = vperm.xlu0 %1847, %v542
      %v1849 = vpop.permute.xlu0 %1848
      %1852 = vset.pattern.permute.xlu0 2
      %1853 = vperm.xlu0 %1852, %v543
      %v1854 = vpop.permute.xlu0 %1853
      %1857 = vset.pattern.permute.xlu0 2
      %1858 = vperm.xlu0 %1857, %v544
      %v1859 = vpop.permute.xlu0 %1858
      %1862 = vset.pattern.permute.xlu0 2
      %1863 = vperm.xlu0 %1862, %v545
      %v1864 = vpop.permute.xlu0 %1863
      %1867 = vset.pattern.permute.xlu0 2
      %1868 = vperm.xlu0 %1867, %v546
      %v1869 = vpop.permute.xlu0 %1868
      %1872 = vset.pattern.permute.xlu0 2
      %1873 = vperm.xlu0 %1872, %v547
      %v1874 = vpop.permute.xlu0 %1873
      %1877 = vset.pattern.permute.xlu0 2
      %1878 = vperm.xlu0 %1877, %v548
      %v1879 = vpop.permute.xlu0 %1878
      %1882 = vset.pattern.permute.xlu0 2
      %1883 = vperm.xlu0 %1882, %v549
      %v1884 = vpop.permute.xlu0 %1883
      %1887 = vset.pattern.permute.xlu0 2
      %1888 = vperm.xlu0 %1887, %v550
      %v1889 = vpop.permute.xlu0 %1888
      %1892 = vset.pattern.permute.xlu0 2
      %1893 = vperm.xlu0 %1892, %v551
      %v1894 = vpop.permute.xlu0 %1893
      %1897 = vset.pattern.permute.xlu0 2
      %1898 = vperm.xlu0 %1897, %v552
      %v1899 = vpop.permute.xlu0 %1898
      %1902 = vset.pattern.permute.xlu0 2
      %1903 = vperm.xlu0 %1902, %v553
      %v1904 = vpop.permute.xlu0 %1903
      %1907 = vset.pattern.permute.xlu0 2
      %1908 = vperm.xlu0 %1907, %v554
      %v1909 = vpop.permute.xlu0 %1908
      %1912 = vset.pattern.permute.xlu0 2
      %1913 = vperm.xlu0 %1912, %v555
      %v1914 = vpop.permute.xlu0 %1913
      %1917 = vset.pattern.permute.xlu0 2
      %1918 = vperm.xlu0 %1917, %v556
      %v1919 = vpop.permute.xlu0 %1918
      %1922 = vset.pattern.permute.xlu0 2
      %1923 = vperm.xlu0 %1922, %v557
      %v1924 = vpop.permute.xlu0 %1923
      %1927 = vset.pattern.permute.xlu0 2
      %1928 = vperm.xlu0 %1927, %v558
      %v1929 = vpop.permute.xlu0 %1928
      %1932 = vset.pattern.permute.xlu0 2
      %1933 = vperm.xlu0 %1932, %v559
      %v1934 = vpop.permute.xlu0 %1933
      %1937 = vset.pattern.permute.xlu0 2
      %1938 = vperm.xlu0 %1937, %v560
      %v1939 = vpop.permute.xlu0 %1938
      %1942 = vset.pattern.permute.xlu0 2
      %1943 = vperm.xlu0 %1942, %v561
      %v1944 = vpop.permute.xlu0 %1943
      %1947 = vset.pattern.permute.xlu0 2
      %1948 = vperm.xlu0 %1947, %v562
      %v1949 = vpop.permute.xlu0 %1948
      %1952 = vset.pattern.permute.xlu0 2
      %1953 = vperm.xlu0 %1952, %v563
      %v1954 = vpop.permute.xlu0 %1953
      %1957 = vset.pattern.permute.xlu0 2
      %1958 = vperm.xlu0 %1957, %v564
      %v1959 = vpop.permute.xlu0 %1958
      %1962 = vset.pattern.permute.xlu0 2
      %1963 = vperm.xlu0 %1962, %v565
      %v1964 = vpop.permute.xlu0 %1963
      %1967 = vset.pattern.permute.xlu0 2
      %1968 = vperm.xlu0 %1967, %v566
      %v1969 = vpop.permute.xlu0 %1968
      %1972 = vset.pattern.permute.xlu0 2
      %1973 = vperm.xlu0 %1972, %v567
      %v1974 = vpop.permute.xlu0 %1973
      %v1976 = vlaneseq
      %v1977 = vshrl.u32 %v1976, 7
      %v1978 = vsub.s32 2, %v1977
      %v1979 = vrot.slane %v214, %v1978
      %v1980 = vlaneseq
      %v1981 = vshrl.u32 %v1980, 7
      %v1982 = vsub.s32 2, %v1981
      %v1983 = vrot.slane %v215, %v1982
      %v1984 = vadd.f32 %v1819, %v1979
      %v1985 = vadd.f32 %v1819, %v1983
      %v1986 = vadd.f32 %v1824, %v1979
      %v1987 = vadd.f32 %v1824, %v1983
      %v1988 = vadd.f32 %v1829, %v1979
      %v1989 = vadd.f32 %v1829, %v1983
      %v1990 = vadd.f32 %v1834, %v1979
      %v1991 = vadd.f32 %v1834, %v1983
      %v1992 = vadd.f32 %v1839, %v1979
      %v1993 = vadd.f32 %v1839, %v1983
      %v1994 = vadd.f32 %v1844, %v1979
      %v1995 = vadd.f32 %v1844, %v1983
      %v1996 = vadd.f32 %v1849, %v1979
      %v1997 = vadd.f32 %v1849, %v1983
      %v1998 = vadd.f32 %v1854, %v1979
      %v1999 = vadd.f32 %v1854, %v1983
      %v2000 = vadd.f32 %v1859, %v1979
      %v2001 = vadd.f32 %v1859, %v1983
      %v2002 = vadd.f32 %v1864, %v1979
      %v2003 = vadd.f32 %v1864, %v1983
      %v2004 = vadd.f32 %v1869, %v1979
      %v2005 = vadd.f32 %v1869, %v1983
      %v2006 = vadd.f32 %v1874, %v1979
      %v2007 = vadd.f32 %v1874, %v1983
      %v2008 = vadd.f32 %v1879, %v1979
      %v2009 = vadd.f32 %v1879, %v1983
      %v2010 = vadd.f32 %v1884, %v1979
      %v2011 = vadd.f32 %v1884, %v1983
      %v2012 = vadd.f32 %v1889, %v1979
      %v2013 = vadd.f32 %v1889, %v1983
      %v2014 = vadd.f32 %v1894, %v1979
      %v2015 = vadd.f32 %v1894, %v1983
      %v2016 = vadd.f32 %v1899, %v1979
      %v2017 = vadd.f32 %v1899, %v1983
      %v2018 = vadd.f32 %v1904, %v1979
      %v2019 = vadd.f32 %v1904, %v1983
      %v2020 = vadd.f32 %v1909, %v1979
      %v2021 = vadd.f32 %v1909, %v1983
      %v2022 = vadd.f32 %v1914, %v1979
      %v2023 = vadd.f32 %v1914, %v1983
      %v2024 = vadd.f32 %v1919, %v1979
      %v2025 = vadd.f32 %v1919, %v1983
      %v2026 = vadd.f32 %v1924, %v1979
      %v2027 = vadd.f32 %v1924, %v1983
      %v2028 = vadd.f32 %v1929, %v1979
      %v2029 = vadd.f32 %v1929, %v1983
      %v2030 = vadd.f32 %v1934, %v1979
      %v2031 = vadd.f32 %v1934, %v1983
      %v2032 = vadd.f32 %v1939, %v1979
      %v2033 = vadd.f32 %v1939, %v1983
      %v2034 = vadd.f32 %v1944, %v1979
      %v2035 = vadd.f32 %v1944, %v1983
      %v2036 = vadd.f32 %v1949, %v1979
      %v2037 = vadd.f32 %v1949, %v1983
      %v2038 = vadd.f32 %v1954, %v1979
      %v2039 = vadd.f32 %v1954, %v1983
      %v2040 = vadd.f32 %v1959, %v1979
      %v2041 = vadd.f32 %v1959, %v1983
      %v2042 = vadd.f32 %v1964, %v1979
      %v2043 = vadd.f32 %v1964, %v1983
      %v2044 = vadd.f32 %v1969, %v1979
      %v2045 = vadd.f32 %v1969, %v1983
      %v2046 = vadd.f32 %v1974, %v1979
      %v2047 = vadd.f32 %v1974, %v1983
      %v2048 = vsub.f32 %v1984, %v1752
      %v2049 = vsub.f32 %v1985, %v1753
      %v2050 = vsub.f32 %v1986, %v1754
      %v2051 = vsub.f32 %v1987, %v1755
      %v2052 = vsub.f32 %v1988, %v1756
      %v2053 = vsub.f32 %v1989, %v1757
      %v2054 = vsub.f32 %v1990, %v1758
      %v2055 = vsub.f32 %v1991, %v1759
      %v2056 = vsub.f32 %v1992, %v1760
      %v2057 = vsub.f32 %v1993, %v1761
      %v2058 = vsub.f32 %v1994, %v1762
      %v2059 = vsub.f32 %v1995, %v1763
      %v2060 = vsub.f32 %v1996, %v1764
      %v2061 = vsub.f32 %v1997, %v1765
      %v2062 = vsub.f32 %v1998, %v1766
      %v2063 = vsub.f32 %v1999, %v1767
      %v2064 = vsub.f32 %v2000, %v1768
      %v2065 = vsub.f32 %v2001, %v1769
      %v2066 = vsub.f32 %v2002, %v1770
      %v2067 = vsub.f32 %v2003, %v1771
      %v2068 = vsub.f32 %v2004, %v1772
      %v2069 = vsub.f32 %v2005, %v1773
      %v2070 = vsub.f32 %v2006, %v1774
      %v2071 = vsub.f32 %v2007, %v1775
      %v2072 = vsub.f32 %v2008, %v1776
      %v2073 = vsub.f32 %v2009, %v1777
      %v2074 = vsub.f32 %v2010, %v1778
      %v2075 = vsub.f32 %v2011, %v1779
      %v2076 = vsub.f32 %v2012, %v1780
      %v2077 = vsub.f32 %v2013, %v1781
      %v2078 = vsub.f32 %v2014, %v1782
      %v2079 = vsub.f32 %v2015, %v1783
      %v2080 = vsub.f32 %v2016, %v1784
      %v2081 = vsub.f32 %v2017, %v1785
      %v2082 = vsub.f32 %v2018, %v1786
      %v2083 = vsub.f32 %v2019, %v1787
      %v2084 = vsub.f32 %v2020, %v1788
      %v2085 = vsub.f32 %v2021, %v1789
      %v2086 = vsub.f32 %v2022, %v1790
      %v2087 = vsub.f32 %v2023, %v1791
      %v2088 = vsub.f32 %v2024, %v1792
      %v2089 = vsub.f32 %v2025, %v1793
      %v2090 = vsub.f32 %v2026, %v1794
      %v2091 = vsub.f32 %v2027, %v1795
      %v2092 = vsub.f32 %v2028, %v1796
      %v2093 = vsub.f32 %v2029, %v1797
      %v2094 = vsub.f32 %v2030, %v1798
      %v2095 = vsub.f32 %v2031, %v1799
      %v2096 = vsub.f32 %v2032, %v1800
      %v2097 = vsub.f32 %v2033, %v1801
      %v2098 = vsub.f32 %v2034, %v1802
      %v2099 = vsub.f32 %v2035, %v1803
      %v2100 = vsub.f32 %v2036, %v1804
      %v2101 = vsub.f32 %v2037, %v1805
      %v2102 = vsub.f32 %v2038, %v1806
      %v2103 = vsub.f32 %v2039, %v1807
      %v2104 = vsub.f32 %v2040, %v1808
      %v2105 = vsub.f32 %v2041, %v1809
      %v2106 = vsub.f32 %v2042, %v1810
      %v2107 = vsub.f32 %v2043, %v1811
      %v2108 = vsub.f32 %v2044, %v1812
      %v2109 = vsub.f32 %v2045, %v1813
      %v2110 = vsub.f32 %v2046, %v1814
      %v2111 = vsub.f32 %v2047, %v1815
      %v2112 = vrcp.pop %v2048
      %v2113 = vmul.f32 %v1752, %v2112
      %v2114 = vrcp.pop %v2049
      %v2115 = vmul.f32 %v1753, %v2114
      %v2116 = vrcp.pop %v2050
      %v2117 = vmul.f32 %v1754, %v2116
      %v2118 = vrcp.pop %v2051
      %v2119 = vmul.f32 %v1755, %v2118
      %v2120 = vrcp.pop %v2052
      %v2121 = vmul.f32 %v1756, %v2120
      %v2122 = vrcp.pop %v2053
      %v2123 = vmul.f32 %v1757, %v2122
      %v2124 = vrcp.pop %v2054
      %v2125 = vmul.f32 %v1758, %v2124
      %v2126 = vrcp.pop %v2055
      %v2127 = vmul.f32 %v1759, %v2126
      %v2128 = vrcp.pop %v2056
      %v2129 = vmul.f32 %v1760, %v2128
      %v2130 = vrcp.pop %v2057
      %v2131 = vmul.f32 %v1761, %v2130
      %v2132 = vrcp.pop %v2058
      %v2133 = vmul.f32 %v1762, %v2132
      %v2134 = vrcp.pop %v2059
      %v2135 = vmul.f32 %v1763, %v2134
      %v2136 = vrcp.pop %v2060
      %v2137 = vmul.f32 %v1764, %v2136
      %v2138 = vrcp.pop %v2061
      %v2139 = vmul.f32 %v1765, %v2138
      %v2140 = vrcp.pop %v2062
      %v2141 = vmul.f32 %v1766, %v2140
      %v2142 = vrcp.pop %v2063
      %v2143 = vmul.f32 %v1767, %v2142
      %v2144 = vrcp.pop %v2064
      %v2145 = vmul.f32 %v1768, %v2144
      %v2146 = vrcp.pop %v2065
      %v2147 = vmul.f32 %v1769, %v2146
      %v2148 = vrcp.pop %v2066
      %v2149 = vmul.f32 %v1770, %v2148
      %v2150 = vrcp.pop %v2067
      %v2151 = vmul.f32 %v1771, %v2150
      %v2152 = vrcp.pop %v2068
      %v2153 = vmul.f32 %v1772, %v2152
      %v2154 = vrcp.pop %v2069
      %v2155 = vmul.f32 %v1773, %v2154
      %v2156 = vrcp.pop %v2070
      %v2157 = vmul.f32 %v1774, %v2156
      %v2158 = vrcp.pop %v2071
      %v2159 = vmul.f32 %v1775, %v2158
      %v2160 = vrcp.pop %v2072
      %v2161 = vmul.f32 %v1776, %v2160
      %v2162 = vrcp.pop %v2073
      %v2163 = vmul.f32 %v1777, %v2162
      %v2164 = vrcp.pop %v2074
      %v2165 = vmul.f32 %v1778, %v2164
      %v2166 = vrcp.pop %v2075
      %v2167 = vmul.f32 %v1779, %v2166
      %v2168 = vrcp.pop %v2076
      %v2169 = vmul.f32 %v1780, %v2168
      %v2170 = vrcp.pop %v2077
      %v2171 = vmul.f32 %v1781, %v2170
      %v2172 = vrcp.pop %v2078
      %v2173 = vmul.f32 %v1782, %v2172
      %v2174 = vrcp.pop %v2079
      %v2175 = vmul.f32 %v1783, %v2174
      %v2176 = vrcp.pop %v2080
      %v2177 = vmul.f32 %v1784, %v2176
      %v2178 = vrcp.pop %v2081
      %v2179 = vmul.f32 %v1785, %v2178
      %v2180 = vrcp.pop %v2082
      %v2181 = vmul.f32 %v1786, %v2180
      %v2182 = vrcp.pop %v2083
      %v2183 = vmul.f32 %v1787, %v2182
      %v2184 = vrcp.pop %v2084
      %v2185 = vmul.f32 %v1788, %v2184
      %v2186 = vrcp.pop %v2085
      %v2187 = vmul.f32 %v1789, %v2186
      %v2188 = vrcp.pop %v2086
      %v2189 = vmul.f32 %v1790, %v2188
      %v2190 = vrcp.pop %v2087
      %v2191 = vmul.f32 %v1791, %v2190
      %v2192 = vrcp.pop %v2088
      %v2193 = vmul.f32 %v1792, %v2192
      %v2194 = vrcp.pop %v2089
      %v2195 = vmul.f32 %v1793, %v2194
      %v2196 = vrcp.pop %v2090
      %v2197 = vmul.f32 %v1794, %v2196
      %v2198 = vrcp.pop %v2091
      %v2199 = vmul.f32 %v1795, %v2198
      %v2200 = vrcp.pop %v2092
      %v2201 = vmul.f32 %v1796, %v2200
      %v2202 = vrcp.pop %v2093
      %v2203 = vmul.f32 %v1797, %v2202
      %v2204 = vrcp.pop %v2094
      %v2205 = vmul.f32 %v1798, %v2204
      %v2206 = vrcp.pop %v2095
      %v2207 = vmul.f32 %v1799, %v2206
      %v2208 = vrcp.pop %v2096
      %v2209 = vmul.f32 %v1800, %v2208
      %v2210 = vrcp.pop %v2097
      %v2211 = vmul.f32 %v1801, %v2210
      %v2212 = vrcp.pop %v2098
      %v2213 = vmul.f32 %v1802, %v2212
      %v2214 = vrcp.pop %v2099
      %v2215 = vmul.f32 %v1803, %v2214
      %v2216 = vrcp.pop %v2100
      %v2217 = vmul.f32 %v1804, %v2216
      %v2218 = vrcp.pop %v2101
      %v2219 = vmul.f32 %v1805, %v2218
      %v2220 = vrcp.pop %v2102
      %v2221 = vmul.f32 %v1806, %v2220
      %v2222 = vrcp.pop %v2103
      %v2223 = vmul.f32 %v1807, %v2222
      %v2224 = vrcp.pop %v2104
      %v2225 = vmul.f32 %v1808, %v2224
      %v2226 = vrcp.pop %v2105
      %v2227 = vmul.f32 %v1809, %v2226
      %v2228 = vrcp.pop %v2106
      %v2229 = vmul.f32 %v1810, %v2228
      %v2230 = vrcp.pop %v2107
      %v2231 = vmul.f32 %v1811, %v2230
      %v2232 = vrcp.pop %v2108
      %v2233 = vmul.f32 %v1812, %v2232
      %v2234 = vrcp.pop %v2109
      %v2235 = vmul.f32 %v1813, %v2234
      %v2236 = vrcp.pop %v2110
      %v2237 = vmul.f32 %v1814, %v2236
      %v2238 = vrcp.pop %v2111
      %v2239 = vmul.f32 %v1815, %v2238
      %v2240 = vlaneseq
      %v2241 = vand.u32 %v2240, 127
      %v2242 = vadd.s32 %v2241, 128
      %v2243 = vlaneseq
      %v2244 = vshrl.u32 %v2243, 7
      %v2245 = vadd.s32 %v2244, 8
      %v2246 = vadd.s32 %v2244, 16
      %v2247 = vadd.s32 %v2244, 24
      %v2248 = vadd.s32 %v2244, 32
      %v2249 = vadd.s32 %v2244, 40
      %v2250 = vadd.s32 %v2244, 48
      %v2251 = vadd.s32 %v2244, 56
      %v2252 = vadd.s32 %v2244, 64
      %v2253 = vadd.s32 %v2244, 72
      %v2254 = vadd.s32 %v2244, 80
      %v2255 = vadd.s32 %v2244, 88
      %v2256 = vadd.s32 %v2244, 96
      %v2257 = vadd.s32 %v2244, 104
      %v2258 = vadd.s32 %v2244, 112
      %v2259 = vadd.s32 %v2244, 120
      %v2260 = vadd.s32 %v2244, 128
      %v2261 = vadd.s32 %v2244, 136
      %v2262 = vadd.s32 %v2244, 144
      %v2263 = vadd.s32 %v2244, 152
      %v2264 = vadd.s32 %v2244, 160
      %v2265 = vadd.s32 %v2244, 168
      %v2266 = vadd.s32 %v2244, 176
      %v2267 = vadd.s32 %v2244, 184
      %v2268 = vadd.s32 %v2244, 192
      %v2269 = vadd.s32 %v2244, 200
      %v2270 = vadd.s32 %v2244, 208
      %v2271 = vadd.s32 %v2244, 216
      %v2272 = vadd.s32 %v2244, 224
      %v2273 = vadd.s32 %v2244, 232
      %v2274 = vadd.s32 %v2244, 240
      %v2275 = vadd.s32 %v2244, 248
      %vm2276 = vcmp.lt.s32.totalorder %v2241, 192
      %vm2277 = vcmp.lt.s32.totalorder %v2242, 192
      %vm2278 = vcmp.lt.s32.totalorder %v2244, 192
      %vm2279 = vcmp.lt.s32.totalorder %v2245, 192
      %vm2280 = vcmp.lt.s32.totalorder %v2246, 192
      %vm2281 = vcmp.lt.s32.totalorder %v2247, 192
      %vm2282 = vcmp.lt.s32.totalorder %v2248, 192
      %vm2283 = vcmp.lt.s32.totalorder %v2249, 192
      %vm2284 = vcmp.lt.s32.totalorder %v2250, 192
      %vm2285 = vcmp.lt.s32.totalorder %v2251, 192
      %vm2286 = vcmp.lt.s32.totalorder %v2252, 192
      %vm2287 = vcmp.lt.s32.totalorder %v2253, 192
      %vm2288 = vcmp.lt.s32.totalorder %v2254, 192
      %vm2289 = vcmp.lt.s32.totalorder %v2255, 192
      %vm2290 = vcmp.lt.s32.totalorder %v2256, 192
      %vm2291 = vcmp.lt.s32.totalorder %v2257, 192
      %vm2292 = vcmp.lt.s32.totalorder %v2258, 192
      %vm2293 = vcmp.lt.s32.totalorder %v2259, 192
      %vm2294 = vcmp.lt.s32.totalorder %v2260, 192
      %vm2295 = vcmp.lt.s32.totalorder %v2261, 192
      %vm2296 = vcmp.lt.s32.totalorder %v2262, 192
      %vm2297 = vcmp.lt.s32.totalorder %v2263, 192
      %vm2298 = vcmp.lt.s32.totalorder %v2264, 192
      %vm2299 = vcmp.lt.s32.totalorder %v2265, 192
      %vm2300 = vcmp.lt.s32.totalorder %v2266, 192
      %vm2301 = vcmp.lt.s32.totalorder %v2267, 192
      %vm2302 = vcmp.lt.s32.totalorder %v2268, 192
      %vm2303 = vcmp.lt.s32.totalorder %v2269, 192
      %vm2304 = vcmp.lt.s32.totalorder %v2270, 192
      %vm2305 = vcmp.lt.s32.totalorder %v2271, 192
      %vm2306 = vcmp.lt.s32.totalorder %v2272, 192
      %vm2307 = vcmp.lt.s32.totalorder %v2273, 192
      %vm2308 = vcmp.lt.s32.totalorder %v2274, 192
      %vm2309 = vcmp.lt.s32.totalorder %v2275, 192
      %vm2310 = vmand %vm2276, %vm2278
      %vm2311 = vmand %vm2277, %vm2278
      %vm2312 = vmand %vm2276, %vm2279
      %vm2313 = vmand %vm2277, %vm2279
      %vm2314 = vmand %vm2276, %vm2280
      %vm2315 = vmand %vm2277, %vm2280
      %vm2316 = vmand %vm2276, %vm2281
      %vm2317 = vmand %vm2277, %vm2281
      %vm2318 = vmand %vm2276, %vm2282
      %vm2319 = vmand %vm2277, %vm2282
      %vm2320 = vmand %vm2276, %vm2283
      %vm2321 = vmand %vm2277, %vm2283
      %vm2322 = vmand %vm2276, %vm2284
      %vm2323 = vmand %vm2277, %vm2284
      %vm2324 = vmand %vm2276, %vm2285
      %vm2325 = vmand %vm2277, %vm2285
      %vm2326 = vmand %vm2276, %vm2286
      %vm2327 = vmand %vm2277, %vm2286
      %vm2328 = vmand %vm2276, %vm2287
      %vm2329 = vmand %vm2277, %vm2287
      %vm2330 = vmand %vm2276, %vm2288
      %vm2331 = vmand %vm2277, %vm2288
      %vm2332 = vmand %vm2276, %vm2289
      %vm2333 = vmand %vm2277, %vm2289
      %vm2334 = vmand %vm2276, %vm2290
      %vm2335 = vmand %vm2277, %vm2290
      %vm2336 = vmand %vm2276, %vm2291
      %vm2337 = vmand %vm2277, %vm2291
      %vm2338 = vmand %vm2276, %vm2292
      %vm2339 = vmand %vm2277, %vm2292
      %vm2340 = vmand %vm2276, %vm2293
      %vm2341 = vmand %vm2277, %vm2293
      %vm2342 = vmand %vm2276, %vm2294
      %vm2343 = vmand %vm2277, %vm2294
      %vm2344 = vmand %vm2276, %vm2295
      %vm2345 = vmand %vm2277, %vm2295
      %vm2346 = vmand %vm2276, %vm2296
      %vm2347 = vmand %vm2277, %vm2296
      %vm2348 = vmand %vm2276, %vm2297
      %vm2349 = vmand %vm2277, %vm2297
      %vm2350 = vmand %vm2276, %vm2298
      %vm2351 = vmand %vm2277, %vm2298
      %vm2352 = vmand %vm2276, %vm2299
      %vm2353 = vmand %vm2277, %vm2299
      %vm2354 = vmand %vm2276, %vm2300
      %vm2355 = vmand %vm2277, %vm2300
      %vm2356 = vmand %vm2276, %vm2301
      %vm2357 = vmand %vm2277, %vm2301
      %vm2358 = vmand %vm2276, %vm2302
      %vm2359 = vmand %vm2277, %vm2302
      %vm2360 = vmand %vm2276, %vm2303
      %vm2361 = vmand %vm2277, %vm2303
      %vm2362 = vmand %vm2276, %vm2304
      %vm2363 = vmand %vm2277, %vm2304
      %vm2364 = vmand %vm2276, %vm2305
      %vm2365 = vmand %vm2277, %vm2305
      %vm2366 = vmand %vm2276, %vm2306
      %vm2367 = vmand %vm2277, %vm2306
      %vm2368 = vmand %vm2276, %vm2307
      %vm2369 = vmand %vm2277, %vm2307
      %vm2370 = vmand %vm2276, %vm2308
      %vm2371 = vmand %vm2277, %vm2308
      %vm2372 = vmand %vm2276, %vm2309
      %vm2373 = vmand %vm2277, %vm2309
      %v2374 = vsel %vm2310, %v2113, 0.0
      %v2375 = vsel %vm2311, %v2115, 0.0
      %v2376 = vsel %vm2312, %v2117, 0.0
      %v2377 = vsel %vm2313, %v2119, 0.0
      %v2378 = vsel %vm2314, %v2121, 0.0
      %v2379 = vsel %vm2315, %v2123, 0.0
      %v2380 = vsel %vm2316, %v2125, 0.0
      %v2381 = vsel %vm2317, %v2127, 0.0
      %v2382 = vsel %vm2318, %v2129, 0.0
      %v2383 = vsel %vm2319, %v2131, 0.0
      %v2384 = vsel %vm2320, %v2133, 0.0
      %v2385 = vsel %vm2321, %v2135, 0.0
      %v2386 = vsel %vm2322, %v2137, 0.0
      %v2387 = vsel %vm2323, %v2139, 0.0
      %v2388 = vsel %vm2324, %v2141, 0.0
      %v2389 = vsel %vm2325, %v2143, 0.0
      %v2390 = vsel %vm2326, %v2145, 0.0
      %v2391 = vsel %vm2327, %v2147, 0.0
      %v2392 = vsel %vm2328, %v2149, 0.0
      %v2393 = vsel %vm2329, %v2151, 0.0
      %v2394 = vsel %vm2330, %v2153, 0.0
      %v2395 = vsel %vm2331, %v2155, 0.0
      %v2396 = vsel %vm2332, %v2157, 0.0
      %v2397 = vsel %vm2333, %v2159, 0.0
      %v2398 = vsel %vm2334, %v2161, 0.0
      %v2399 = vsel %vm2335, %v2163, 0.0
      %v2400 = vsel %vm2336, %v2165, 0.0
      %v2401 = vsel %vm2337, %v2167, 0.0
      %v2402 = vsel %vm2338, %v2169, 0.0
      %v2403 = vsel %vm2339, %v2171, 0.0
      %v2404 = vsel %vm2340, %v2173, 0.0
      %v2405 = vsel %vm2341, %v2175, 0.0
      %v2406 = vsel %vm2342, %v2177, 0.0
      %v2407 = vsel %vm2343, %v2179, 0.0
      %v2408 = vsel %vm2344, %v2181, 0.0
      %v2409 = vsel %vm2345, %v2183, 0.0
      %v2410 = vsel %vm2346, %v2185, 0.0
      %v2411 = vsel %vm2347, %v2187, 0.0
      %v2412 = vsel %vm2348, %v2189, 0.0
      %v2413 = vsel %vm2349, %v2191, 0.0
      %v2414 = vsel %vm2350, %v2193, 0.0
      %v2415 = vsel %vm2351, %v2195, 0.0
      %v2416 = vsel %vm2352, %v2197, 0.0
      %v2417 = vsel %vm2353, %v2199, 0.0
      %v2418 = vsel %vm2354, %v2201, 0.0
      %v2419 = vsel %vm2355, %v2203, 0.0
      %v2420 = vsel %vm2356, %v2205, 0.0
      %v2421 = vsel %vm2357, %v2207, 0.0
      %v2422 = vsel %vm2358, %v2209, 0.0
      %v2423 = vsel %vm2359, %v2211, 0.0
      %v2424 = vsel %vm2360, %v2213, 0.0
      %v2425 = vsel %vm2361, %v2215, 0.0
      %v2426 = vsel %vm2362, %v2217, 0.0
      %v2427 = vsel %vm2363, %v2219, 0.0
      %v2428 = vsel %vm2364, %v2221, 0.0
      %v2429 = vsel %vm2365, %v2223, 0.0
      %v2430 = vsel %vm2366, %v2225, 0.0
      %v2431 = vsel %vm2367, %v2227, 0.0
      %v2432 = vsel %vm2368, %v2229, 0.0
      %v2433 = vsel %vm2369, %v2231, 0.0
      %v2434 = vsel %vm2370, %v2233, 0.0
      %v2435 = vsel %vm2371, %v2235, 0.0
      %v2436 = vsel %vm2372, %v2237, 0.0
      %v2437 = vsel %vm2373, %v2239, 0.0
      %2438 = vst [vmem:[%s163] sm:$0xff] %v2374
      %2439 = vst [vmem:[%s163 + $0x8] sm:$0xff] %v2375
      %2440 = vst [vmem:[%s163 + $0x10] sm:$0xff] %v2376
      %2441 = vst [vmem:[%s163 + $0x18] sm:$0xff] %v2377
      %2442 = vst [vmem:[%s163 + $0x20] sm:$0xff] %v2378
      %2443 = vst [vmem:[%s163 + $0x28] sm:$0xff] %v2379
      %2444 = vst [vmem:[%s163 + $0x30] sm:$0xff] %v2380
      %2445 = vst [vmem:[%s163 + $0x38] sm:$0xff] %v2381
      %2446 = vst [vmem:[%s163 + $0x40] sm:$0xff] %v2382
      %2447 = vst [vmem:[%s163 + $0x48] sm:$0xff] %v2383
      %2448 = vst [vmem:[%s163 + $0x50] sm:$0xff] %v2384
      %2449 = vst [vmem:[%s163 + $0x58] sm:$0xff] %v2385
      %2450 = vst [vmem:[%s163 + $0x60] sm:$0xff] %v2386
      %2451 = vst [vmem:[%s163 + $0x68] sm:$0xff] %v2387
      %2452 = vst [vmem:[%s163 + $0x70] sm:$0xff] %v2388
      %2453 = vst [vmem:[%s163 + $0x78] sm:$0xff] %v2389
      %2454 = vst [vmem:[%s163 + $0x80] sm:$0xff] %v2390
      %2455 = vst [vmem:[%s163 + $0x88] sm:$0xff] %v2391
      %2456 = vst [vmem:[%s163 + $0x90] sm:$0xff] %v2392
      %2457 = vst [vmem:[%s163 + $0x98] sm:$0xff] %v2393
      %2458 = vst [vmem:[%s163 + $0xa0] sm:$0xff] %v2394
      %2459 = vst [vmem:[%s163 + $0xa8] sm:$0xff] %v2395
      %2460 = vst [vmem:[%s163 + $0xb0] sm:$0xff] %v2396
      %2461 = vst [vmem:[%s163 + $0xb8] sm:$0xff] %v2397
      %2462 = vst [vmem:[%s163 + $0xc0] sm:$0xff] %v2398
      %2463 = vst [vmem:[%s163 + $0xc8] sm:$0xff] %v2399
      %2464 = vst [vmem:[%s163 + $0xd0] sm:$0xff] %v2400
      %2465 = vst [vmem:[%s163 + $0xd8] sm:$0xff] %v2401
      %2466 = vst [vmem:[%s163 + $0xe0] sm:$0xff] %v2402
      %2467 = vst [vmem:[%s163 + $0xe8] sm:$0xff] %v2403
      %2468 = vst [vmem:[%s163 + $0xf0] sm:$0xff] %v2404
      %2469 = vst [vmem:[%s163 + $0xf8] sm:$0xff] %v2405
      %2470 = vst [vmem:[%s163 + $0x100] sm:$0xff] %v2406
      %2471 = vst [vmem:[%s163 + $0x108] sm:$0xff] %v2407
      %2472 = vst [vmem:[%s163 + $0x110] sm:$0xff] %v2408
      %2473 = vst [vmem:[%s163 + $0x118] sm:$0xff] %v2409
      %2474 = vst [vmem:[%s163 + $0x120] sm:$0xff] %v2410
      %2475 = vst [vmem:[%s163 + $0x128] sm:$0xff] %v2411
      %2476 = vst [vmem:[%s163 + $0x130] sm:$0xff] %v2412
      %2477 = vst [vmem:[%s163 + $0x138] sm:$0xff] %v2413
      %2478 = vst [vmem:[%s163 + $0x140] sm:$0xff] %v2414
      %2479 = vst [vmem:[%s163 + $0x148] sm:$0xff] %v2415
      %2480 = vst [vmem:[%s163 + $0x150] sm:$0xff] %v2416
      %2481 = vst [vmem:[%s163 + $0x158] sm:$0xff] %v2417
      %2482 = vst [vmem:[%s163 + $0x160] sm:$0xff] %v2418
      %2483 = vst [vmem:[%s163 + $0x168] sm:$0xff] %v2419
      %2484 = vst [vmem:[%s163 + $0x170] sm:$0xff] %v2420
      %2485 = vst [vmem:[%s163 + $0x178] sm:$0xff] %v2421
      %2486 = vst [vmem:[%s163 + $0x180] sm:$0xff] %v2422
      %2487 = vst [vmem:[%s163 + $0x188] sm:$0xff] %v2423
      %2488 = vst [vmem:[%s163 + $0x190] sm:$0xff] %v2424
      %2489 = vst [vmem:[%s163 + $0x198] sm:$0xff] %v2425
      %2490 = vst [vmem:[%s163 + $0x1a0] sm:$0xff] %v2426
      %2491 = vst [vmem:[%s163 + $0x1a8] sm:$0xff] %v2427
      %2492 = vst [vmem:[%s163 + $0x1b0] sm:$0xff] %v2428
      %2493 = vst [vmem:[%s163 + $0x1b8] sm:$0xff] %v2429
      %2494 = vst [vmem:[%s163 + $0x1c0] sm:$0xff] %v2430
      %2495 = vst [vmem:[%s163 + $0x1c8] sm:$0xff] %v2431
      %2496 = vst [vmem:[%s163 + $0x1d0] sm:$0xff] %v2432
      %2497 = vst [vmem:[%s163 + $0x1d8] sm:$0xff] %v2433
      %2498 = vst [vmem:[%s163 + $0x1e0] sm:$0xff] %v2434
      %2499 = vst [vmem:[%s163 + $0x1e8] sm:$0xff] %v2435
      %2500 = vst [vmem:[%s163 + $0x1f0] sm:$0xff] %v2436
      %2501 = vst [vmem:[%s163 + $0x1f8] sm:$0xff] %v2437
      %p2502 = scmp.lt.s32.totalorder %s13, 1
      %s2503 = scalar_select %p2502, %s13, 1
      %s2504 = smul.addr %s2503, 64
      %s2505 = smul.addr %s2504, 8
      %s2506 = scalar_lea.vmem %s2, %s2505
      // Predicated region
      $region29: #{fwd.9} parent=27 // pred_check
        %p2507 = pneg %p83
      $region30: #{fwd.9} parent=27 // pred_check_branch
        %2509 = sbr.rel (%p2507) target = $region32
      $region31: #{fwd.9} parent=27 // pred_region
        _
      $region32: #{fwd.9} parent=27 // pred_fallthru
        _
    $region28: #{fwd.9} parent=5 // pred_fallthru
      _
    %p2510 = scmp.le.s32.totalorder 2, %s8
    // Predicated region
    $region33: #{fwd.9} parent=5 // pred_check
      %p2511 = pneg %p2510
    $region34: #{fwd.9} parent=5 // pred_check_branch
      %2513 = sbr.rel (%p2511) target = $region36
    $region35: #{fwd.9} parent=5 // pred_region
      %s2514 = ssub.s32 %s8, 2
      // Predicated region
      $region37: #{fwd.9} parent=35 // pred_check
        %p2515 = pneg %p89
      $region38: #{fwd.9} parent=35 // pred_check_branch
        %2517 = sbr.rel (%p2515) target = $region40
      $region39: #{fwd.9} parent=35 // pred_region
        %p2518 = scmp.lt.s32.totalorder %s14, 1
        %s2519 = scalar_select %p2518, %s14, 1
        %s2520 = smul.addr %s2519, 64
        %s2521 = smul.addr %s2520, 8
        %s2522 = scalar_lea.vmem %s2, %s2521
      $region40: #{fwd.9} parent=35 // pred_fallthru
        _
    $region36: #{fwd.9} parent=5 // pred_fallthru
      _
  $region6: #{fwd.9} parent=0 // loop_footer
    %s12 = sadd.s32 1, %s8
  $region7: #{fwd.9} parent=0 // loop_footer_branch
    %7 = sbr.rel target = $region3
  $region8: #{fwd.9} parent=0 // loop_exit
    _

</llo_original>
